<compile_context>
chip_gen: v6e
topology: v6e:2x2x1
jax: 0.10.0
libtpu: 0.0.40
codegen_flags: <defaults>
</compile_context>

<pallas_src>
import functools

import jax
import jax.numpy as jnp
import numpy as np
from jax.experimental import pallas as pl
from jax.experimental.pallas import tpu as pltpu

LANES = 128


def _rup(x, m):
    return (x + m - 1) // m * m


def _conv3x3_taps(src_ref, w_ref, C, H, W):
    """SAME 3x3 conv over a zero-padded (H+2, W+2, C) bf16 scratch ref with
    tap-folded weights w_ref of shape (9*C, N); returns (H*W, N) in f32.

    Per-tap MXU matmuls: C is lane-padded to >=128, so each tap already fills
    the MXU contraction depth — folding all 9 taps into one K=9*C matmul adds
    no MXU efficiency, only a large im2col temp and minor-dim concatenates.
    """
    acc = None
    t = 0
    for dy in range(3):
        for dx in range(3):
            win = src_ref[dy:dy + H, dx:dx + W, :].reshape(H * W, C)  # bf16
            part = jnp.dot(win, w_ref[t * C:(t + 1) * C, :],
                           preferred_element_type=jnp.float32)
            acc = part if acc is None else acc + part
            t += 1
    return acc


def _conv_block_kernel(x_ref, w1_ref, w2_ref, o_ref, xpad_ref, midp_ref,
                       *, H, W, Cin_p, Cmid_p):
    # ---- in-kernel SAME padding of the input (bf16 scratch) ----
    # One dense, lane-dense zero + interior overwrite instead of four masked
    # border stores; correct on every grid step and every core.
    xpad_ref[...] = jnp.zeros_like(xpad_ref)
    xpad_ref[1:H + 1, 1:W + 1, :] = x_ref[0]

    # ---- conv1 + ReLU (bf16 MXU operands, f32 accumulate/epilogue) ----
    mid = _conv3x3_taps(xpad_ref, w1_ref, Cin_p, H, W)       # (H*W, Cmid_p) f32
    mid = jnp.maximum(mid, 0.0)

    # ---- pad the intermediate for the second SAME conv (bf16 scratch) ----
    midp_ref[...] = jnp.zeros_like(midp_ref)
    midp_ref[1:H + 1, 1:W + 1, :] = (
        mid.reshape(H, W, Cmid_p).astype(midp_ref.dtype))

    # ---- conv2 + ReLU, store exactly Cout channels (no padded writeback) ----
    out = _conv3x3_taps(midp_ref, w2_ref, Cmid_p, H, W)      # (H*W, Cout) f32
    o_ref[0] = jnp.maximum(out, 0.0).astype(o_ref.dtype)


def conv_forward(x_nchw, w1_oihw, w2_oihw):
    """Forward pass of the `conv` module. Returns (B, H*W, embed_dim) f32."""
    B, Cin, H, W = map(int, x_nchw.shape)
    Cmid = int(w1_oihw.shape[0])
    Cout = int(w2_oihw.shape[0])
    assert tuple(w1_oihw.shape) == (Cmid, Cin, 3, 3)
    assert tuple(w2_oihw.shape) == (Cout, Cmid, 3, 3)

    Cin_p = _rup(Cin, LANES)      # lane-dense activation channels
    Cmid_p = _rup(Cmid, LANES)

    # NCHW -> NHWC, zero-pad channels to the lane width, bf16 MXU operands.
    x_nhwc = jnp.transpose(x_nchw, (0, 2, 3, 1)).astype(jnp.bfloat16)
    if Cin_p != Cin:
        x_nhwc = jnp.pad(x_nhwc, ((0, 0), (0, 0), (0, 0), (0, Cin_p - Cin)))

    # OIHW -> HWIO, zero-pad channels, fold the 9 taps into the K dimension:
    #   w_f[(dy*3 + dx)*C + c, o] = w[o, c, dy, dx]   (matches the tap order)
    w1_hwio = jnp.transpose(w1_oihw, (2, 3, 1, 0))            # (3,3,Cin,Cmid)
    w1_hwio = jnp.pad(w1_hwio, ((0, 0), (0, 0),
                                (0, Cin_p - Cin), (0, Cmid_p - Cmid)))
    w1_f = w1_hwio.reshape(9 * Cin_p, Cmid_p).astype(jnp.bfloat16)

    w2_hwio = jnp.transpose(w2_oihw, (2, 3, 1, 0))            # (3,3,Cmid,Cout)
    w2_hwio = jnp.pad(w2_hwio, ((0, 0), (0, 0), (0, Cmid_p - Cmid), (0, 0)))
    w2_f = w2_hwio.reshape(9 * Cmid_p, Cout).astype(jnp.bfloat16)

    # ---- accurate scoped-VMEM budget (inputs x2 bufs, weights x1, scratch,
    #      f32 matmul accumulators) with modest headroom ----
    def vmem_bytes(shape, dtype, bufs=1):
        item = np.dtype(dtype).itemsize
        sub = 8 * (4 // item)                       # sublane packing
        lead = int(np.prod(shape[:-2])) if len(shape) > 2 else 1
        return bufs * lead * _rup(shape[-2], sub) * _rup(shape[-1], LANES) * item

    footprint = (
        vmem_bytes((1, H, W, Cin_p), jnp.bfloat16, bufs=2)        # x block
        + vmem_bytes((9 * Cin_p, Cmid_p), jnp.bfloat16, bufs=1)   # w1 (single)
        + vmem_bytes((9 * Cmid_p, Cout), jnp.bfloat16, bufs=1)    # w2 (single)
        + vmem_bytes((1, H * W, Cout), jnp.float32, bufs=2)       # out block
        + vmem_bytes((H + 2, W + 2, Cin_p), jnp.bfloat16)         # xpad scratch
        + vmem_bytes((H + 2, W + 2, Cmid_p), jnp.bfloat16)        # midp scratch
        + vmem_bytes((H * W, Cmid_p), jnp.float32)                # conv1 f32 acc
        + vmem_bytes((H * W, Cout), jnp.float32)                  # conv2 f32 acc
        + vmem_bytes((H * W, max(Cin_p, Cmid_p)), jnp.bfloat16, bufs=2)  # windows
    )
    vmem_limit = int(min(max(footprint * 3 // 2 + (2 << 20), 16 << 20), 56 << 20))

    # Grid-invariant weight blocks: single-buffer them (constant index_map, so
    # extra buffering only doubles weight VMEM). Guarded for older jax that
    # lacks pipeline_mode / Buffered.
    try:
        w1_spec = pl.BlockSpec((9 * Cin_p, Cmid_p), lambda b: (0, 0),
                               pipeline_mode=pl.Buffered(1))
        w2_spec = pl.BlockSpec((9 * Cmid_p, Cout), lambda b: (0, 0),
                               pipeline_mode=pl.Buffered(1))
    except (AttributeError, TypeError, ValueError):
        w1_spec = pl.BlockSpec((9 * Cin_p, Cmid_p), lambda b: (0, 0))
        w2_spec = pl.BlockSpec((9 * Cmid_p, Cout), lambda b: (0, 0))

    kernel = functools.partial(_conv_block_kernel, H=H, W=W,
                               Cin_p=Cin_p, Cmid_p=Cmid_p)

    out = pl.pallas_call(
        kernel,
        out_shape=jax.ShapeDtypeStruct((B, H * W, Cout), jnp.float32),
        grid_spec=pltpu.PrefetchScalarGridSpec(
            num_scalar_prefetch=0,
            grid=(B,),
            in_specs=[
                pl.BlockSpec((1, H, W, Cin_p), lambda b: (b, 0, 0, 0)),
                w1_spec,
                w2_spec,
            ],
            out_specs=pl.BlockSpec((1, H * W, Cout), lambda b: (b, 0, 0)),
            scratch_shapes=[
                pltpu.VMEM((H + 2, W + 2, Cin_p), jnp.bfloat16),   # padded x
                pltpu.VMEM((H + 2, W + 2, Cmid_p), jnp.bfloat16),  # padded mid
            ],
        ),
        compiler_params=pltpu.CompilerParams(
            dimension_semantics=("parallel",),
            vmem_limit_bytes=vmem_limit),
    )(x_nhwc, w1_f, w2_f)
    return out


def _reference(x_nchw, w1_oihw, w2_oihw):
    dn = ("NCHW", "OIHW", "NCHW")
    y = jax.lax.conv_general_dilated(x_nchw, w1_oihw, (1, 1), "SAME",
                                     dimension_numbers=dn)
    y = jnp.maximum(y, 0.0)
    y = jax.lax.conv_general_dilated(y, w2_oihw, (1, 1), "SAME",
                                     dimension_numbers=dn)
    y = jnp.maximum(y, 0.0)
    B, C, H, W = y.shape
    return jnp.transpose(y.reshape(B, C, H * W), (0, 2, 1))


if __name__ == "__main__":
    # small shapes consistent with the module's forward
    B, Cin, H, W = 2, 8, 16, 16     # input_dim = 8
    Cemb = 32                       # embed_dim = 32

    key = jax.random.PRNGKey(0)
    kx, k1, k2 = jax.random.split(key, 3)
    x = jax.random.normal(kx, (B, Cin, H, W), dtype=jnp.float32)
    # deterministic weight init (kaiming-ish scale), OIHW like nn.Conv2d
    w1 = jax.random.normal(k1, (Cemb, Cin, 3, 3), dtype=jnp.float32) * (
        1.0 / float(np.sqrt(Cin * 9)))
    w2 = jax.random.normal(k2, (Cemb, Cemb, 3, 3), dtype=jnp.float32) * (
        1.0 / float(np.sqrt(Cemb * 9)))

    out = jax.block_until_ready(conv_forward(x, w1, w2))
    ref = jax.block_until_ready(_reference(x, w1, w2))

    assert out.shape == (B, H * W, Cemb), out.shape
    # bf16 MXU operands (f32 accumulation) -> loosened tolerance vs f32 ref.
    np.testing.assert_allclose(np.asarray(out), np.asarray(ref),
                               rtol=5e-2, atol=5e-2)
    print("KERNEL_OK")
</pallas_src>

<mosaic_0001>
module attributes {stable_mosaic.version = 11 : i64} {
  func.func @_conv_block_kernel(%arg0: i32, %arg1: memref<1x16x16x128xbf16, #tpu.memory_space<vmem>>, %arg2: memref<1152x128xbf16, #tpu.memory_space<vmem>>, %arg3: memref<1152x32xbf16, #tpu.memory_space<vmem>>, %arg4: memref<1x256x32xf32, #tpu.memory_space<vmem>>, %arg5: memref<18x18x128xbf16, #tpu.memory_space<vmem>>, %arg6: memref<18x18x128xbf16, #tpu.memory_space<vmem>>) attributes {dimension_semantics = [#tpu.dimension_semantics<parallel>], iteration_bounds = array<i64: 2>, scalar_prefetch = 0 : i64, scratch_operands = 2 : i64, tpu.core_type = #tpu.core_type<tc>, window_params = [{transform_indices = @transform_0, window_bounds = array<i64: 1, 16, 16, 128>}, {pipeline_mode = #tpu.pipeline_mode<synchronous>, transform_indices = @transform_1, window_bounds = array<i64: 1152, 128>}, {pipeline_mode = #tpu.pipeline_mode<synchronous>, transform_indices = @transform_2, window_bounds = array<i64: 1152, 32>}, {transform_indices = @transform_3, window_bounds = array<i64: 1, 256, 32>}]} {
    %cst = arith.constant 0.000000e+00 : bf16
    %0 = vector.broadcast %cst : bf16 to vector<18x18x128xbf16>
    %c0 = arith.constant 0 : index
    %c0_0 = arith.constant 0 : index
    %c0_1 = arith.constant 0 : index
    %1 = vector.load %arg5[%c0, %c0_0, %c0_1] : memref<18x18x128xbf16, #tpu.memory_space<vmem>>, vector<18x18x128xbf16>
    tpu.vector_store %arg5[%c0, %c0_0, %c0_1], %0 {strides = array<i32>} : memref<18x18x128xbf16, #tpu.memory_space<vmem>>, vector<18x18x128xbf16>,
    %c0_2 = arith.constant 0 : index
    %c0_3 = arith.constant 0 : index
    %c0_4 = arith.constant 0 : index
    %c0_5 = arith.constant 0 : index
    %2 = vector.load %arg1[%c0_2, %c0_3, %c0_4, %c0_5] : memref<1x16x16x128xbf16, #tpu.memory_space<vmem>>, vector<1x16x16x128xbf16>
    %3 = vector.shape_cast %2 : vector<1x16x16x128xbf16> to vector<16x16x128xbf16>
    %c1 = arith.constant 1 : index
    %c1_6 = arith.constant 1 : index
    %c0_7 = arith.constant 0 : index
    %4 = vector.load %arg5[%c1, %c1_6, %c0_7] : memref<18x18x128xbf16, #tpu.memory_space<vmem>>, vector<16x16x128xbf16>
    tpu.vector_store %arg5[%c1, %c1_6, %c0_7], %3 {strides = array<i32>} : memref<18x18x128xbf16, #tpu.memory_space<vmem>>, vector<16x16x128xbf16>,
    %c0_8 = arith.constant 0 : index
    %c0_9 = arith.constant 0 : index
    %c0_10 = arith.constant 0 : index
    %5 = vector.load %arg5[%c0_8, %c0_9, %c0_10] : memref<18x18x128xbf16, #tpu.memory_space<vmem>>, vector<16x16x128xbf16>
    %6 = vector.shape_cast %5 : vector<16x16x128xbf16> to vector<256x128xbf16>
    %c0_11 = arith.constant 0 : index
    %c0_12 = arith.constant 0 : index
    %7 = vector.load %arg2[%c0_11, %c0_12] : memref<1152x128xbf16, #tpu.memory_space<vmem>>, vector<128x128xbf16>
    %cst_13 = arith.constant dense<0.000000e+00> : vector<256x128xf32>
    %8 = tpu.matmul %6, %7, %cst_13 {dimension_numbers = #tpu.dot_dimension_numbers<[1], [0], [0], [1], [0, 0, 1, 1], [], []>} : vector<256x128xbf16>, vector<128x128xbf16>, vector<256x128xf32> -> vector<256x128xf32>
    %c0_14 = arith.constant 0 : index
    %c1_15 = arith.constant 1 : index
    %c0_16 = arith.constant 0 : index
    %9 = vector.load %arg5[%c0_14, %c1_15, %c0_16] : memref<18x18x128xbf16, #tpu.memory_space<vmem>>, vector<16x16x128xbf16>
    %10 = vector.shape_cast %9 : vector<16x16x128xbf16> to vector<256x128xbf16>
    %c128 = arith.constant 128 : index
    %c0_17 = arith.constant 0 : index
    %11 = vector.load %arg2[%c128, %c0_17] : memref<1152x128xbf16, #tpu.memory_space<vmem>>, vector<128x128xbf16>
    %cst_18 = arith.constant dense<0.000000e+00> : vector<256x128xf32>
    %12 = tpu.matmul %10, %11, %cst_18 {dimension_numbers = #tpu.dot_dimension_numbers<[1], [0], [0], [1], [0, 0, 1, 1], [], []>} : vector<256x128xbf16>, vector<128x128xbf16>, vector<256x128xf32> -> vector<256x128xf32>
    %13 = arith.addf %8, %12 : vector<256x128xf32>
    %c0_19 = arith.constant 0 : index
    %c2 = arith.constant 2 : index
    %c0_20 = arith.constant 0 : index
    %14 = vector.load %arg5[%c0_19, %c2, %c0_20] : memref<18x18x128xbf16, #tpu.memory_space<vmem>>, vector<16x16x128xbf16>
    %15 = vector.shape_cast %14 : vector<16x16x128xbf16> to vector<256x128xbf16>
    %c256 = arith.constant 256 : index
    %c0_21 = arith.constant 0 : index
    %16 = vector.load %arg2[%c256, %c0_21] : memref<1152x128xbf16, #tpu.memory_space<vmem>>, vector<128x128xbf16>
    %cst_22 = arith.constant dense<0.000000e+00> : vector<256x128xf32>
    %17 = tpu.matmul %15, %16, %cst_22 {dimension_numbers = #tpu.dot_dimension_numbers<[1], [0], [0], [1], [0, 0, 1, 1], [], []>} : vector<256x128xbf16>, vector<128x128xbf16>, vector<256x128xf32> -> vector<256x128xf32>
    %18 = arith.addf %13, %17 : vector<256x128xf32>
    %c1_23 = arith.constant 1 : index
    %c0_24 = arith.constant 0 : index
    %c0_25 = arith.constant 0 : index
    %19 = vector.load %arg5[%c1_23, %c0_24, %c0_25] : memref<18x18x128xbf16, #tpu.memory_space<vmem>>, vector<16x16x128xbf16>
    %20 = vector.shape_cast %19 : vector<16x16x128xbf16> to vector<256x128xbf16>
    %c384 = arith.constant 384 : index
    %c0_26 = arith.constant 0 : index
    %21 = vector.load %arg2[%c384, %c0_26] : memref<1152x128xbf16, #tpu.memory_space<vmem>>, vector<128x128xbf16>
    %cst_27 = arith.constant dense<0.000000e+00> : vector<256x128xf32>
    %22 = tpu.matmul %20, %21, %cst_27 {dimension_numbers = #tpu.dot_dimension_numbers<[1], [0], [0], [1], [0, 0, 1, 1], [], []>} : vector<256x128xbf16>, vector<128x128xbf16>, vector<256x128xf32> -> vector<256x128xf32>
    %23 = arith.addf %18, %22 : vector<256x128xf32>
    %c1_28 = arith.constant 1 : index
    %c1_29 = arith.constant 1 : index
    %c0_30 = arith.constant 0 : index
    %24 = vector.load %arg5[%c1_28, %c1_29, %c0_30] : memref<18x18x128xbf16, #tpu.memory_space<vmem>>, vector<16x16x128xbf16>
    %25 = vector.shape_cast %24 : vector<16x16x128xbf16> to vector<256x128xbf16>
    %c512 = arith.constant 512 : index
    %c0_31 = arith.constant 0 : index
    %26 = vector.load %arg2[%c512, %c0_31] : memref<1152x128xbf16, #tpu.memory_space<vmem>>, vector<128x128xbf16>
    %cst_32 = arith.constant dense<0.000000e+00> : vector<256x128xf32>
    %27 = tpu.matmul %25, %26, %cst_32 {dimension_numbers = #tpu.dot_dimension_numbers<[1], [0], [0], [1], [0, 0, 1, 1], [], []>} : vector<256x128xbf16>, vector<128x128xbf16>, vector<256x128xf32> -> vector<256x128xf32>
    %28 = arith.addf %23, %27 : vector<256x128xf32>
    %c1_33 = arith.constant 1 : index
    %c2_34 = arith.constant 2 : index
    %c0_35 = arith.constant 0 : index
    %29 = vector.load %arg5[%c1_33, %c2_34, %c0_35] : memref<18x18x128xbf16, #tpu.memory_space<vmem>>, vector<16x16x128xbf16>
    %30 = vector.shape_cast %29 : vector<16x16x128xbf16> to vector<256x128xbf16>
    %c640 = arith.constant 640 : index
    %c0_36 = arith.constant 0 : index
    %31 = vector.load %arg2[%c640, %c0_36] : memref<1152x128xbf16, #tpu.memory_space<vmem>>, vector<128x128xbf16>
    %cst_37 = arith.constant dense<0.000000e+00> : vector<256x128xf32>
    %32 = tpu.matmul %30, %31, %cst_37 {dimension_numbers = #tpu.dot_dimension_numbers<[1], [0], [0], [1], [0, 0, 1, 1], [], []>} : vector<256x128xbf16>, vector<128x128xbf16>, vector<256x128xf32> -> vector<256x128xf32>
    %33 = arith.addf %28, %32 : vector<256x128xf32>
    %c2_38 = arith.constant 2 : index
    %c0_39 = arith.constant 0 : index
    %c0_40 = arith.constant 0 : index
    %34 = vector.load %arg5[%c2_38, %c0_39, %c0_40] : memref<18x18x128xbf16, #tpu.memory_space<vmem>>, vector<16x16x128xbf16>
    %35 = vector.shape_cast %34 : vector<16x16x128xbf16> to vector<256x128xbf16>
    %c768 = arith.constant 768 : index
    %c0_41 = arith.constant 0 : index
    %36 = vector.load %arg2[%c768, %c0_41] : memref<1152x128xbf16, #tpu.memory_space<vmem>>, vector<128x128xbf16>
    %cst_42 = arith.constant dense<0.000000e+00> : vector<256x128xf32>
    %37 = tpu.matmul %35, %36, %cst_42 {dimension_numbers = #tpu.dot_dimension_numbers<[1], [0], [0], [1], [0, 0, 1, 1], [], []>} : vector<256x128xbf16>, vector<128x128xbf16>, vector<256x128xf32> -> vector<256x128xf32>
    %38 = arith.addf %33, %37 : vector<256x128xf32>
    %c2_43 = arith.constant 2 : index
    %c1_44 = arith.constant 1 : index
    %c0_45 = arith.constant 0 : index
    %39 = vector.load %arg5[%c2_43, %c1_44, %c0_45] : memref<18x18x128xbf16, #tpu.memory_space<vmem>>, vector<16x16x128xbf16>
    %40 = vector.shape_cast %39 : vector<16x16x128xbf16> to vector<256x128xbf16>
    %c896 = arith.constant 896 : index
    %c0_46 = arith.constant 0 : index
    %41 = vector.load %arg2[%c896, %c0_46] : memref<1152x128xbf16, #tpu.memory_space<vmem>>, vector<128x128xbf16>
    %cst_47 = arith.constant dense<0.000000e+00> : vector<256x128xf32>
    %42 = tpu.matmul %40, %41, %cst_47 {dimension_numbers = #tpu.dot_dimension_numbers<[1], [0], [0], [1], [0, 0, 1, 1], [], []>} : vector<256x128xbf16>, vector<128x128xbf16>, vector<256x128xf32> -> vector<256x128xf32>
    %43 = arith.addf %38, %42 : vector<256x128xf32>
    %c2_48 = arith.constant 2 : index
    %c2_49 = arith.constant 2 : index
    %c0_50 = arith.constant 0 : index
    %44 = vector.load %arg5[%c2_48, %c2_49, %c0_50] : memref<18x18x128xbf16, #tpu.memory_space<vmem>>, vector<16x16x128xbf16>
    %45 = vector.shape_cast %44 : vector<16x16x128xbf16> to vector<256x128xbf16>
    %c1024 = arith.constant 1024 : index
    %c0_51 = arith.constant 0 : index
    %46 = vector.load %arg2[%c1024, %c0_51] : memref<1152x128xbf16, #tpu.memory_space<vmem>>, vector<128x128xbf16>
    %cst_52 = arith.constant dense<0.000000e+00> : vector<256x128xf32>
    %47 = tpu.matmul %45, %46, %cst_52 {dimension_numbers = #tpu.dot_dimension_numbers<[1], [0], [0], [1], [0, 0, 1, 1], [], []>} : vector<256x128xbf16>, vector<128x128xbf16>, vector<256x128xf32> -> vector<256x128xf32>
    %48 = arith.addf %43, %47 : vector<256x128xf32>
    %cst_53 = arith.constant 0.000000e+00 : f32
    %49 = vector.broadcast %cst_53 : f32 to vector<256x128xf32>
    %50 = arith.maximumf %48, %49 : vector<256x128xf32>
    %cst_54 = arith.constant 0.000000e+00 : bf16
    %51 = vector.broadcast %cst_54 : bf16 to vector<18x18x128xbf16>
    %c0_55 = arith.constant 0 : index
    %c0_56 = arith.constant 0 : index
    %c0_57 = arith.constant 0 : index
    %52 = vector.load %arg6[%c0_55, %c0_56, %c0_57] : memref<18x18x128xbf16, #tpu.memory_space<vmem>>, vector<18x18x128xbf16>
    tpu.vector_store %arg6[%c0_55, %c0_56, %c0_57], %51 {strides = array<i32>} : memref<18x18x128xbf16, #tpu.memory_space<vmem>>, vector<18x18x128xbf16>,
    %53 = vector.shape_cast %50 : vector<256x128xf32> to vector<16x16x128xf32>
    %54 = arith.truncf %53 : vector<16x16x128xf32> to vector<16x16x128xbf16>
    %c1_58 = arith.constant 1 : index
    %c1_59 = arith.constant 1 : index
    %c0_60 = arith.constant 0 : index
    %55 = vector.load %arg6[%c1_58, %c1_59, %c0_60] : memref<18x18x128xbf16, #tpu.memory_space<vmem>>, vector<16x16x128xbf16>
    tpu.vector_store %arg6[%c1_58, %c1_59, %c0_60], %54 {strides = array<i32>} : memref<18x18x128xbf16, #tpu.memory_space<vmem>>, vector<16x16x128xbf16>,
    %c0_61 = arith.constant 0 : index
    %c0_62 = arith.constant 0 : index
    %c0_63 = arith.constant 0 : index
    %56 = vector.load %arg6[%c0_61, %c0_62, %c0_63] : memref<18x18x128xbf16, #tpu.memory_space<vmem>>, vector<16x16x128xbf16>
    %57 = vector.shape_cast %56 : vector<16x16x128xbf16> to vector<256x128xbf16>
    %c0_64 = arith.constant 0 : index
    %c0_65 = arith.constant 0 : index
    %58 = vector.load %arg3[%c0_64, %c0_65] : memref<1152x32xbf16, #tpu.memory_space<vmem>>, vector<128x32xbf16>
    %cst_66 = arith.constant dense<0.000000e+00> : vector<256x32xf32>
    %59 = tpu.matmul %57, %58, %cst_66 {dimension_numbers = #tpu.dot_dimension_numbers<[1], [0], [0], [1], [0, 0, 1, 1], [], []>} : vector<256x128xbf16>, vector<128x32xbf16>, vector<256x32xf32> -> vector<256x32xf32>
    %c0_67 = arith.constant 0 : index
    %c1_68 = arith.constant 1 : index
    %c0_69 = arith.constant 0 : index
    %60 = vector.load %arg6[%c0_67, %c1_68, %c0_69] : memref<18x18x128xbf16, #tpu.memory_space<vmem>>, vector<16x16x128xbf16>
    %61 = vector.shape_cast %60 : vector<16x16x128xbf16> to vector<256x128xbf16>
    %c128_70 = arith.constant 128 : index
    %c0_71 = arith.constant 0 : index
    %62 = vector.load %arg3[%c128_70, %c0_71] : memref<1152x32xbf16, #tpu.memory_space<vmem>>, vector<128x32xbf16>
    %cst_72 = arith.constant dense<0.000000e+00> : vector<256x32xf32>
    %63 = tpu.matmul %61, %62, %cst_72 {dimension_numbers = #tpu.dot_dimension_numbers<[1], [0], [0], [1], [0, 0, 1, 1], [], []>} : vector<256x128xbf16>, vector<128x32xbf16>, vector<256x32xf32> -> vector<256x32xf32>
    %64 = arith.addf %59, %63 : vector<256x32xf32>
    %c0_73 = arith.constant 0 : index
    %c2_74 = arith.constant 2 : index
    %c0_75 = arith.constant 0 : index
    %65 = vector.load %arg6[%c0_73, %c2_74, %c0_75] : memref<18x18x128xbf16, #tpu.memory_space<vmem>>, vector<16x16x128xbf16>
    %66 = vector.shape_cast %65 : vector<16x16x128xbf16> to vector<256x128xbf16>
    %c256_76 = arith.constant 256 : index
    %c0_77 = arith.constant 0 : index
    %67 = vector.load %arg3[%c256_76, %c0_77] : memref<1152x32xbf16, #tpu.memory_space<vmem>>, vector<128x32xbf16>
    %cst_78 = arith.constant dense<0.000000e+00> : vector<256x32xf32>
    %68 = tpu.matmul %66, %67, %cst_78 {dimension_numbers = #tpu.dot_dimension_numbers<[1], [0], [0], [1], [0, 0, 1, 1], [], []>} : vector<256x128xbf16>, vector<128x32xbf16>, vector<256x32xf32> -> vector<256x32xf32>
    %69 = arith.addf %64, %68 : vector<256x32xf32>
    %c1_79 = arith.constant 1 : index
    %c0_80 = arith.constant 0 : index
    %c0_81 = arith.constant 0 : index
    %70 = vector.load %arg6[%c1_79, %c0_80, %c0_81] : memref<18x18x128xbf16, #tpu.memory_space<vmem>>, vector<16x16x128xbf16>
    %71 = vector.shape_cast %70 : vector<16x16x128xbf16> to vector<256x128xbf16>
    %c384_82 = arith.constant 384 : index
    %c0_83 = arith.constant 0 : index
    %72 = vector.load %arg3[%c384_82, %c0_83] : memref<1152x32xbf16, #tpu.memory_space<vmem>>, vector<128x32xbf16>
    %cst_84 = arith.constant dense<0.000000e+00> : vector<256x32xf32>
    %73 = tpu.matmul %71, %72, %cst_84 {dimension_numbers = #tpu.dot_dimension_numbers<[1], [0], [0], [1], [0, 0, 1, 1], [], []>} : vector<256x128xbf16>, vector<128x32xbf16>, vector<256x32xf32> -> vector<256x32xf32>
    %74 = arith.addf %69, %73 : vector<256x32xf32>
    %c1_85 = arith.constant 1 : index
    %c1_86 = arith.constant 1 : index
    %c0_87 = arith.constant 0 : index
    %75 = vector.load %arg6[%c1_85, %c1_86, %c0_87] : memref<18x18x128xbf16, #tpu.memory_space<vmem>>, vector<16x16x128xbf16>
    %76 = vector.shape_cast %75 : vector<16x16x128xbf16> to vector<256x128xbf16>
    %c512_88 = arith.constant 512 : index
    %c0_89 = arith.constant 0 : index
    %77 = vector.load %arg3[%c512_88, %c0_89] : memref<1152x32xbf16, #tpu.memory_space<vmem>>, vector<128x32xbf16>
    %cst_90 = arith.constant dense<0.000000e+00> : vector<256x32xf32>
    %78 = tpu.matmul %76, %77, %cst_90 {dimension_numbers = #tpu.dot_dimension_numbers<[1], [0], [0], [1], [0, 0, 1, 1], [], []>} : vector<256x128xbf16>, vector<128x32xbf16>, vector<256x32xf32> -> vector<256x32xf32>
    %79 = arith.addf %74, %78 : vector<256x32xf32>
    %c1_91 = arith.constant 1 : index
    %c2_92 = arith.constant 2 : index
    %c0_93 = arith.constant 0 : index
    %80 = vector.load %arg6[%c1_91, %c2_92, %c0_93] : memref<18x18x128xbf16, #tpu.memory_space<vmem>>, vector<16x16x128xbf16>
    %81 = vector.shape_cast %80 : vector<16x16x128xbf16> to vector<256x128xbf16>
    %c640_94 = arith.constant 640 : index
    %c0_95 = arith.constant 0 : index
    %82 = vector.load %arg3[%c640_94, %c0_95] : memref<1152x32xbf16, #tpu.memory_space<vmem>>, vector<128x32xbf16>
    %cst_96 = arith.constant dense<0.000000e+00> : vector<256x32xf32>
    %83 = tpu.matmul %81, %82, %cst_96 {dimension_numbers = #tpu.dot_dimension_numbers<[1], [0], [0], [1], [0, 0, 1, 1], [], []>} : vector<256x128xbf16>, vector<128x32xbf16>, vector<256x32xf32> -> vector<256x32xf32>
    %84 = arith.addf %79, %83 : vector<256x32xf32>
    %c2_97 = arith.constant 2 : index
    %c0_98 = arith.constant 0 : index
    %c0_99 = arith.constant 0 : index
    %85 = vector.load %arg6[%c2_97, %c0_98, %c0_99] : memref<18x18x128xbf16, #tpu.memory_space<vmem>>, vector<16x16x128xbf16>
    %86 = vector.shape_cast %85 : vector<16x16x128xbf16> to vector<256x128xbf16>
    %c768_100 = arith.constant 768 : index
    %c0_101 = arith.constant 0 : index
    %87 = vector.load %arg3[%c768_100, %c0_101] : memref<1152x32xbf16, #tpu.memory_space<vmem>>, vector<128x32xbf16>
    %cst_102 = arith.constant dense<0.000000e+00> : vector<256x32xf32>
    %88 = tpu.matmul %86, %87, %cst_102 {dimension_numbers = #tpu.dot_dimension_numbers<[1], [0], [0], [1], [0, 0, 1, 1], [], []>} : vector<256x128xbf16>, vector<128x32xbf16>, vector<256x32xf32> -> vector<256x32xf32>
    %89 = arith.addf %84, %88 : vector<256x32xf32>
    %c2_103 = arith.constant 2 : index
    %c1_104 = arith.constant 1 : index
    %c0_105 = arith.constant 0 : index
    %90 = vector.load %arg6[%c2_103, %c1_104, %c0_105] : memref<18x18x128xbf16, #tpu.memory_space<vmem>>, vector<16x16x128xbf16>
    %91 = vector.shape_cast %90 : vector<16x16x128xbf16> to vector<256x128xbf16>
    %c896_106 = arith.constant 896 : index
    %c0_107 = arith.constant 0 : index
    %92 = vector.load %arg3[%c896_106, %c0_107] : memref<1152x32xbf16, #tpu.memory_space<vmem>>, vector<128x32xbf16>
    %cst_108 = arith.constant dense<0.000000e+00> : vector<256x32xf32>
    %93 = tpu.matmul %91, %92, %cst_108 {dimension_numbers = #tpu.dot_dimension_numbers<[1], [0], [0], [1], [0, 0, 1, 1], [], []>} : vector<256x128xbf16>, vector<128x32xbf16>, vector<256x32xf32> -> vector<256x32xf32>
    %94 = arith.addf %89, %93 : vector<256x32xf32>
    %c2_109 = arith.constant 2 : index
    %c2_110 = arith.constant 2 : index
    %c0_111 = arith.constant 0 : index
    %95 = vector.load %arg6[%c2_109, %c2_110, %c0_111] : memref<18x18x128xbf16, #tpu.memory_space<vmem>>, vector<16x16x128xbf16>
    %96 = vector.shape_cast %95 : vector<16x16x128xbf16> to vector<256x128xbf16>
    %c1024_112 = arith.constant 1024 : index
    %c0_113 = arith.constant 0 : index
    %97 = vector.load %arg3[%c1024_112, %c0_113] : memref<1152x32xbf16, #tpu.memory_space<vmem>>, vector<128x32xbf16>
    %cst_114 = arith.constant dense<0.000000e+00> : vector<256x32xf32>
    %98 = tpu.matmul %96, %97, %cst_114 {dimension_numbers = #tpu.dot_dimension_numbers<[1], [0], [0], [1], [0, 0, 1, 1], [], []>} : vector<256x128xbf16>, vector<128x32xbf16>, vector<256x32xf32> -> vector<256x32xf32>
    %99 = arith.addf %94, %98 : vector<256x32xf32>
    %cst_115 = arith.constant 0.000000e+00 : f32
    %100 = vector.broadcast %cst_115 : f32 to vector<256x32xf32>
    %101 = arith.maximumf %99, %100 : vector<256x32xf32>
    %c0_116 = arith.constant 0 : index
    %c0_117 = arith.constant 0 : index
    %c0_118 = arith.constant 0 : index
    %102 = vector.load %arg4[%c0_116, %c0_117, %c0_118] : memref<1x256x32xf32, #tpu.memory_space<vmem>>, vector<1x256x32xf32>
    %103 = vector.shape_cast %102 : vector<1x256x32xf32> to vector<256x32xf32>
    %104 = vector.shape_cast %101 : vector<256x32xf32> to vector<1x256x32xf32>
    tpu.vector_store %arg4[%c0_116, %c0_117, %c0_118], %104 {strides = array<i32>} : memref<1x256x32xf32, #tpu.memory_space<vmem>>, vector<1x256x32xf32>,
    return
  }
  func.func @transform_0(%arg0: i32) -> (i32, i32, i32, i32) {
    %c0_i32 = arith.constant 0 : i32
    %c0_i32_0 = arith.constant 0 : i32
    %c0_i32_1 = arith.constant 0 : i32
    %c0_i32_2 = arith.constant 0 : i32
    return %arg0, %c0_i32, %c0_i32_0, %c0_i32_1 : i32, i32, i32, i32
  }
  func.func @transform_1(%arg0: i32) -> (i32, i32) {
    %c0_i32 = arith.constant 0 : i32
    %c0_i32_0 = arith.constant 0 : i32
    %c0_i32_1 = arith.constant 0 : i32
    return %c0_i32, %c0_i32_0 : i32, i32
  }
  func.func @transform_2(%arg0: i32) -> (i32, i32) {
    %c0_i32 = arith.constant 0 : i32
    %c0_i32_0 = arith.constant 0 : i32
    %c0_i32_1 = arith.constant 0 : i32
    return %c0_i32, %c0_i32_0 : i32, i32
  }
  func.func @transform_3(%arg0: i32) -> (i32, i32, i32) {
    %c0_i32 = arith.constant 0 : i32
    %c0_i32_0 = arith.constant 0 : i32
    %c0_i32_1 = arith.constant 0 : i32
    return %arg0, %c0_i32, %c0_i32_0 : i32, i32, i32
  }
}

</mosaic_0001>

<llo_original>
// kernel: tpu_custom_call.1
$region0: #{tpu_custom_call.1}
  #allocation0 [shape = 'u32[]', space=smem, size = 0x4, offset = 0x4, fixed_abs, tag = 'smem constant byte address 0x4 - core index']
  #allocation1 [shape = 'u32[144,128]{1,0:T(1,128)}', space=vmem, size = 0x12000, scoped, tag = 'internal scratch']
  #allocation2 [shape = 'bf16[18,18,128]{2,1,0:T(8,128)(2,1)}', space=vmem, size = 0x1b000, scoped, tag = 'scratch operand']
  #allocation3 [shape = 'bf16[18,18,128]{2,1,0:T(8,128)(2,1)}', space=vmem, size = 0x1b000, scoped, tag = 'scratch operand']
  %s0 = inlined_call_operand.hbm [shape: bf16[2,16,16,128], index: 0, kind: input, shape index: {}]
  %s1 = inlined_call_operand.vmem [shape: bf16[1152,128], index: 1, kind: input, shape index: {}]
  %s2 = inlined_call_operand.vmem [shape: bf16[1152,32], index: 2, kind: input, shape index: {}]
  %s3 = inlined_call_operand.vmem [shape: f32[2,256,32], index: 3, kind: output, shape index: {}]
  %s4 = sld [smem:[#allocation0]]
  $region49: #{tpu_custom_call.1} parent=0
    _
  %s6 = ssub.s32 1, %s4
  %s7 = scalar_select 0, %s6, %s4
  $region1: #{tpu_custom_call.1} parent=0
    #allocation4 [shape = 'u8[131072]{0}', space=vmem, size = 0x20000, scoped, tag = 'input window, operand 0']
    #allocation5 [shape = 's32[2]{0}', space=sflag, size = 0x8, scoped, tag = 'scoped memory for tpu_custom_call.1']
    %8 = vsyncpa [#allocation5], 0
    %s9 = scalar_lea.sflag [#allocation5], 1
    %10 = vsyncpa %s9, 0
    loop: start=0, step=1, limit=4
    $region2: #{tpu_custom_call.1} parent=1 // loop_pre_header
      _
    $region3: #{tpu_custom_call.1} parent=1 // loop_header
      %s12 = sphi 0, %s16
      %p13 = scmp.ge.s32.totalorder %s12, 4
      %s22 = sphi 0, %s24
      %s25 = sphi 0, %s22
      %s26 = sphi 0, %s25
      %s42 = sphi 0, %s26
      %s46 = sphi 0, %s46
      %s48 = sphi 0, %s46
      %s49 = sphi 0, %s48
      %s63 = sphi 0, %s49
      %s67 = sphi 0, %s67
      %s69 = sphi 0, %s67
      %s70 = sphi 0, %s69
      %s84 = sphi 0, %s70
      %s90 = sphi 0, %s92
      %s93 = sphi 0, %s90
      %s94 = sphi 0, %s93
      %s110 = sphi 0, %s94
    $region4: #{tpu_custom_call.1} parent=1 // loop_header_branch
      %15 = sbr.rel (%p13) target = $region8
    $region5: #{tpu_custom_call.1} parent=1 // loop_body
      %s17 = ssub.s32 %s12, 1
      %s18 = ssub.s32 %s12, 2
      %s19 = sadd.s32 %s12, 1
      %s20 = ssub.s32 %s12, %s19
      %p21 = scmp.eq.s32.totalorder %s20, 0
      %s23 = sadd.s32 %s22, 1
      %s24 = scalar_select %p21, %s22, %s23
      %p27 = pneg %p21
      %p28 = scmp.eq.s32.totalorder %s12, 1
      %p29 = por %p27, %p28
      %p30 = scmp.ne.s32.totalorder %s22, %s25
      %p31 = scmp.eq.s32.totalorder %s12, 0
      %p32 = por %p30, %p31
      %p33 = scmp.ne.s32.totalorder %s22, %s25
      %p34 = scmp.eq.s32.totalorder %s17, 1
      %p35 = por %p33, %p34
      %p36 = scmp.ne.s32.totalorder %s25, %s26
      %p37 = scmp.eq.s32.totalorder %s17, 0
      %p38 = por %p36, %p37
      %p39 = scmp.ne.s32.totalorder %s25, %s26
      %p40 = scmp.eq.s32.totalorder %s18, 1
      %p41 = por %p39, %p40
      %p43 = scmp.ne.s32.totalorder %s26, %s42
      %p44 = scmp.eq.s32.totalorder %s18, 0
      %p45 = por %p43, %p44
      %s47 = sadd.s32 %s46, 1
      %p50 = scmp.eq.s32.totalorder %s12, 1
      %p51 = scmp.ne.s32.totalorder %s46, %s48
      %p52 = scmp.eq.s32.totalorder %s12, 0
      %p53 = por %p51, %p52
      %p54 = scmp.ne.s32.totalorder %s46, %s48
      %p55 = scmp.eq.s32.totalorder %s17, 1
      %p56 = por %p54, %p55
      %p57 = scmp.ne.s32.totalorder %s48, %s49
      %p58 = scmp.eq.s32.totalorder %s17, 0
      %p59 = por %p57, %p58
      %p60 = scmp.ne.s32.totalorder %s48, %s49
      %p61 = scmp.eq.s32.totalorder %s18, 1
      %p62 = por %p60, %p61
      %p64 = scmp.ne.s32.totalorder %s49, %s63
      %p65 = scmp.eq.s32.totalorder %s18, 0
      %p66 = por %p64, %p65
      %s68 = sadd.s32 %s67, 1
      %p71 = scmp.eq.s32.totalorder %s12, 1
      %p72 = scmp.ne.s32.totalorder %s67, %s69
      %p73 = scmp.eq.s32.totalorder %s12, 0
      %p74 = por %p72, %p73
      %p75 = scmp.ne.s32.totalorder %s67, %s69
      %p76 = scmp.eq.s32.totalorder %s17, 1
      %p77 = por %p75, %p76
      %p78 = scmp.ne.s32.totalorder %s69, %s70
      %p79 = scmp.eq.s32.totalorder %s17, 0
      %p80 = por %p78, %p79
      %p81 = scmp.ne.s32.totalorder %s69, %s70
      %p82 = scmp.eq.s32.totalorder %s18, 1
      %p83 = por %p81, %p82
      %p85 = scmp.ne.s32.totalorder %s70, %s84
      %p86 = scmp.eq.s32.totalorder %s18, 0
      %p87 = por %p85, %p86
      %s88 = ssub.s32 %s12, %s19
      %p89 = scmp.eq.s32.totalorder %s88, 0
      %s91 = sadd.s32 %s90, 1
      %s92 = scalar_select %p89, %s90, %s91
      %p95 = pneg %p89
      %p96 = scmp.eq.s32.totalorder %s12, 1
      %p97 = por %p95, %p96
      %p98 = scmp.ne.s32.totalorder %s90, %s93
      %p99 = scmp.eq.s32.totalorder %s12, 0
      %p100 = por %p98, %p99
      %p101 = scmp.ne.s32.totalorder %s90, %s93
      %p102 = scmp.eq.s32.totalorder %s17, 1
      %p103 = por %p101, %p102
      %p104 = scmp.ne.s32.totalorder %s93, %s94
      %p105 = scmp.eq.s32.totalorder %s17, 0
      %p106 = por %p104, %p105
      %p107 = scmp.ne.s32.totalorder %s93, %s94
      %p108 = scmp.eq.s32.totalorder %s18, 1
      %p109 = por %p107, %p108
      %p111 = scmp.ne.s32.totalorder %s94, %s110
      %p112 = scmp.eq.s32.totalorder %s18, 0
      %p113 = por %p111, %p112
      %p114 = scmp.le.s32.totalorder 1, %s12
      %p115 = scmp.lt.s32.totalorder %s12, 3
      %p116 = pnand %p114, %p115
      %p117 = pneg %p116
      // Predicated region
      $region9: #{tpu_custom_call.1} parent=5 // pred_check
        _
      $region10: #{tpu_custom_call.1} parent=5 // pred_check_branch
        %119 = sbr.rel (%p116) target = $region12
      $region11: #{tpu_custom_call.1} parent=5 // pred_region
        %s120 = ssub.s32 %s12, 1
        // Predicated region
        $region13: #{tpu_custom_call.1} parent=11 // pred_check
          %p121 = pneg %p59
        $region14: #{tpu_custom_call.1} parent=11 // pred_check_branch
          %123 = sbr.rel (%p121) target = $region16
        $region15: #{tpu_custom_call.1} parent=11 // pred_region
          _
        $region16: #{tpu_custom_call.1} parent=11 // pred_fallthru
          _
        // Predicated region
        $region17: #{tpu_custom_call.1} parent=11 // pred_check
          %p124 = pneg %p80
        $region18: #{tpu_custom_call.1} parent=11 // pred_check_branch
          %126 = sbr.rel (%p124) target = $region20
        $region19: #{tpu_custom_call.1} parent=11 // pred_region
          _
        $region20: #{tpu_custom_call.1} parent=11 // pred_fallthru
          _
      $region12: #{tpu_custom_call.1} parent=5 // pred_fallthru
        _
      %p127 = scmp.lt.s32.totalorder %s12, 2
      // Predicated region
      $region21: #{tpu_custom_call.1} parent=5 // pred_check
        %p128 = pneg %p127
      $region22: #{tpu_custom_call.1} parent=5 // pred_check_branch
        %130 = sbr.rel (%p128) target = $region24
      $region23: #{tpu_custom_call.1} parent=5 // pred_region
        // Predicated region
        $region25: #{tpu_custom_call.1} parent=23 // pred_check
          %p131 = pneg %p32
        $region26: #{tpu_custom_call.1} parent=23 // pred_check_branch
          %133 = sbr.rel (%p131) target = $region28
        $region27: #{tpu_custom_call.1} parent=23 // pred_region
          %s134 = sand.u32 %s22, 1
          %s135 = scalar_lea.sflag [#allocation5], %s134
          %s136 = sand.u32 %s22, 1
          %s137 = smul.addr %s136, 128
          %s138 = scalar_lea.vmem [#allocation4], %s137
          %s140 = ssub.s32 2048, 2048
          %141 = vsyncadd %s135, %s140
          %s142 = smul.addr %s12, 32
          %s143 = smul.addr %s142, 64
          %s144 = scalar_lea.hbm %s0, %s143
          %s145 = sshll.u32 %s138, 4
          %s146 = int_to_ptr.vmem [resolvable:$true] %s145
          %151 = dma.hbm_to_vmem [thread:$0]  %s144, 2048, %s146, %s135, 64, 64, 4
        $region28: #{tpu_custom_call.1} parent=23 // pred_fallthru
          _
      $region24: #{tpu_custom_call.1} parent=5 // pred_fallthru
        _
      %p152 = scmp.le.s32.totalorder 1, %s12
      %p153 = scmp.lt.s32.totalorder %s12, 3
      %p154 = pnand %p152, %p153
      %p155 = pneg %p154
      // Predicated region
      $region29: #{tpu_custom_call.1} parent=5 // pred_check
        _
      $region30: #{tpu_custom_call.1} parent=5 // pred_check_branch
        %157 = sbr.rel (%p154) target = $region32
      $region31: #{tpu_custom_call.1} parent=5 // pred_region
        %s158 = ssub.s32 %s12, 1
        %s159 = sand.u32 %s25, 1
        %s160 = scalar_lea.sflag [#allocation5], %s159
        %s161 = sand.u32 %s25, 1
        %s162 = smul.addr %s161, 128
        %s163 = scalar_lea.vmem [#allocation4], %s162
        // Predicated region
        $region33: #{tpu_custom_call.1} parent=31 // pred_check
          %p164 = pneg %p38
        $region34: #{tpu_custom_call.1} parent=31 // pred_check_branch
          %166 = sbr.rel (%p164) target = $region36
        $region35: #{tpu_custom_call.1} parent=31 // pred_region
          %167 = dma.done %s160, 2048
        $region36: #{tpu_custom_call.1} parent=31 // pred_fallthru
          _
        %s168 = sand.u32 %s25, 1
        %s169 = scalar_lea.sflag [#allocation5], %s168
        %s170 = sand.u32 %s25, 1
        %s171 = smul.addr %s170, 128
        %s172 = scalar_lea.vmem [#allocation4], %s171
        %p173 = pneg %p38
        %p174 = pneg %p35
        %p175 = pneg %p59
        %p176 = pneg %p56
        %p177 = pneg %p80
        %p178 = pneg %p77
        %p179 = pneg %p106
        %p180 = pneg %p103
        %p181 = scmp.lt.s32.totalorder %s17, 1
        %s182 = scalar_select %p181, %s17, 1
        %s183 = smul.addr %s182, 32
        %s184 = smul.addr %s183, 8
        %s185 = scalar_lea.vmem %s3, %s184
        %p186 = scmp.lt.s32.totalorder %s17, 1
        %s187 = scalar_select %p186, %s17, 1
        %s188 = smul.addr %s187, 32
        %s189 = smul.addr %s188, 8
        %s190 = scalar_lea.vmem %s3, %s189
        %192 = vst [vmem:[#allocation2] sm:$0xf] 0
        %193 = vst [vmem:[#allocation2 + $0x4] sm:$0xf] 0
        %194 = vst [vmem:[#allocation2 + $0x8] sm:$0x1] 0
        %195 = vst [vmem:[#allocation2 + $0xc] sm:$0xf] 0
        %196 = vst [vmem:[#allocation2 + $0x10] sm:$0xf] 0
        %197 = vst [vmem:[#allocation2 + $0x14] sm:$0x1] 0
        %198 = vst [vmem:[#allocation2 + $0x18] sm:$0xf] 0
        %199 = vst [vmem:[#allocation2 + $0x1c] sm:$0xf] 0
        %200 = vst [vmem:[#allocation2 + $0x20] sm:$0x1] 0
        %201 = vst [vmem:[#allocation2 + $0x24] sm:$0xf] 0
        %202 = vst [vmem:[#allocation2 + $0x28] sm:$0xf] 0
        %203 = vst [vmem:[#allocation2 + $0x2c] sm:$0x1] 0
        %204 = vst [vmem:[#allocation2 + $0x30] sm:$0xf] 0
        %205 = vst [vmem:[#allocation2 + $0x34] sm:$0xf] 0
        %206 = vst [vmem:[#allocation2 + $0x38] sm:$0x1] 0
        %207 = vst [vmem:[#allocation2 + $0x3c] sm:$0xf] 0
        %208 = vst [vmem:[#allocation2 + $0x40] sm:$0xf] 0
        %209 = vst [vmem:[#allocation2 + $0x44] sm:$0x1] 0
        %210 = vst [vmem:[#allocation2 + $0x48] sm:$0xf] 0
        %211 = vst [vmem:[#allocation2 + $0x4c] sm:$0xf] 0
        %212 = vst [vmem:[#allocation2 + $0x50] sm:$0x1] 0
        %213 = vst [vmem:[#allocation2 + $0x54] sm:$0xf] 0
        %214 = vst [vmem:[#allocation2 + $0x58] sm:$0xf] 0
        %215 = vst [vmem:[#allocation2 + $0x5c] sm:$0x1] 0
        %216 = vst [vmem:[#allocation2 + $0x60] sm:$0xf] 0
        %217 = vst [vmem:[#allocation2 + $0x64] sm:$0xf] 0
        %218 = vst [vmem:[#allocation2 + $0x68] sm:$0x1] 0
        %219 = vst [vmem:[#allocation2 + $0x6c] sm:$0xf] 0
        %220 = vst [vmem:[#allocation2 + $0x70] sm:$0xf] 0
        %221 = vst [vmem:[#allocation2 + $0x74] sm:$0x1] 0
        %222 = vst [vmem:[#allocation2 + $0x78] sm:$0xf] 0
        %223 = vst [vmem:[#allocation2 + $0x7c] sm:$0xf] 0
        %224 = vst [vmem:[#allocation2 + $0x80] sm:$0x1] 0
        %225 = vst [vmem:[#allocation2 + $0x84] sm:$0xf] 0
        %226 = vst [vmem:[#allocation2 + $0x88] sm:$0xf] 0
        %227 = vst [vmem:[#allocation2 + $0x8c] sm:$0x1] 0
        %228 = vst [vmem:[#allocation2 + $0x90] sm:$0xf] 0
        %229 = vst [vmem:[#allocation2 + $0x94] sm:$0xf] 0
        %230 = vst [vmem:[#allocation2 + $0x98] sm:$0x1] 0
        %231 = vst [vmem:[#allocation2 + $0x9c] sm:$0xf] 0
        %232 = vst [vmem:[#allocation2 + $0xa0] sm:$0xf] 0
        %233 = vst [vmem:[#allocation2 + $0xa4] sm:$0x1] 0
        %234 = vst [vmem:[#allocation2 + $0xa8] sm:$0xf] 0
        %235 = vst [vmem:[#allocation2 + $0xac] sm:$0xf] 0
        %236 = vst [vmem:[#allocation2 + $0xb0] sm:$0x1] 0
        %237 = vst [vmem:[#allocation2 + $0xb4] sm:$0xf] 0
        %238 = vst [vmem:[#allocation2 + $0xb8] sm:$0xf] 0
        %239 = vst [vmem:[#allocation2 + $0xbc] sm:$0x1] 0
        %240 = vst [vmem:[#allocation2 + $0xc0] sm:$0xf] 0
        %241 = vst [vmem:[#allocation2 + $0xc4] sm:$0xf] 0
        %242 = vst [vmem:[#allocation2 + $0xc8] sm:$0x1] 0
        %243 = vst [vmem:[#allocation2 + $0xcc] sm:$0xf] 0
        %244 = vst [vmem:[#allocation2 + $0xd0] sm:$0xf] 0
        %245 = vst [vmem:[#allocation2 + $0xd4] sm:$0x1] 0
        %v246 = vld [vmem:[%s163] sm:$0xf]
        %v247 = vld [vmem:[%s163 + $0x4] sm:$0xf]
        %v248 = vld [vmem:[%s163 + $0x8] sm:$0xf]
        %v249 = vld [vmem:[%s163 + $0xc] sm:$0xf]
        %v250 = vld [vmem:[%s163 + $0x10] sm:$0xf]
        %v251 = vld [vmem:[%s163 + $0x14] sm:$0xf]
        %v252 = vld [vmem:[%s163 + $0x18] sm:$0xf]
        %v253 = vld [vmem:[%s163 + $0x1c] sm:$0xf]
        %v254 = vld [vmem:[%s163 + $0x20] sm:$0xf]
        %v255 = vld [vmem:[%s163 + $0x24] sm:$0xf]
        %v256 = vld [vmem:[%s163 + $0x28] sm:$0xf]
        %v257 = vld [vmem:[%s163 + $0x2c] sm:$0xf]
        %v258 = vld [vmem:[%s163 + $0x30] sm:$0xf]
        %v259 = vld [vmem:[%s163 + $0x34] sm:$0xf]
        %v260 = vld [vmem:[%s163 + $0x38] sm:$0xf]
        %v261 = vld [vmem:[%s163 + $0x3c] sm:$0xf]
        %v262 = vld [vmem:[%s163 + $0x40] sm:$0xf]
        %v263 = vld [vmem:[%s163 + $0x44] sm:$0xf]
        %v264 = vld [vmem:[%s163 + $0x48] sm:$0xf]
        %v265 = vld [vmem:[%s163 + $0x4c] sm:$0xf]
        %v266 = vld [vmem:[%s163 + $0x50] sm:$0xf]
        %v267 = vld [vmem:[%s163 + $0x54] sm:$0xf]
        %v268 = vld [vmem:[%s163 + $0x58] sm:$0xf]
        %v269 = vld [vmem:[%s163 + $0x5c] sm:$0xf]
        %v270 = vld [vmem:[%s163 + $0x60] sm:$0xf]
        %v271 = vld [vmem:[%s163 + $0x64] sm:$0xf]
        %v272 = vld [vmem:[%s163 + $0x68] sm:$0xf]
        %v273 = vld [vmem:[%s163 + $0x6c] sm:$0xf]
        %v274 = vld [vmem:[%s163 + $0x70] sm:$0xf]
        %v275 = vld [vmem:[%s163 + $0x74] sm:$0xf]
        %v276 = vld [vmem:[%s163 + $0x78] sm:$0xf]
        %v277 = vld [vmem:[%s163 + $0x7c] sm:$0xf]
        %vm278 = vsmask.f32 256
        %vm279 = vsmask.f32 4368
        %vm280 = vmor %vm278, %vm279
        %v282 = vshrl.u32 %v246, 16
        %v284 = vrot.slane %v282, 7
        %v285 = vshll.u32 %v246, 16
        %v287 = vor.u32 %v284, %v285
        %v288 = vrot.slane %v284, 4
        %v290 = vshrl.u32 %v247, 16
        %v292 = vrot.slane %v290, 7
        %v293 = vshll.u32 %v247, 16
        %v295 = vor.u32 %v292, %v293
        %v296 = vsel %vm280, %v288, %v295
        %v297 = vrot.slane %v292, 4
        %v299 = vshrl.u32 %v248, 16
        %v301 = vrot.slane %v299, 7
        %v302 = vshll.u32 %v248, 16
        %v304 = vor.u32 %v301, %v302
        %v305 = vrot.slane %v301, 4
        %v307 = vshrl.u32 %v249, 16
        %v309 = vrot.slane %v307, 7
        %v310 = vshll.u32 %v249, 16
        %v312 = vor.u32 %v309, %v310
        %v313 = vsel %vm280, %v305, %v312
        %v314 = vrot.slane %v309, 4
        %v316 = vshrl.u32 %v250, 16
        %v318 = vrot.slane %v316, 7
        %v319 = vshll.u32 %v250, 16
        %v321 = vor.u32 %v318, %v319
        %v322 = vrot.slane %v318, 4
        %v324 = vshrl.u32 %v251, 16
        %v326 = vrot.slane %v324, 7
        %v327 = vshll.u32 %v251, 16
        %v329 = vor.u32 %v326, %v327
        %v330 = vsel %vm280, %v322, %v329
        %v331 = vrot.slane %v326, 4
        %v333 = vshrl.u32 %v252, 16
        %v335 = vrot.slane %v333, 7
        %v336 = vshll.u32 %v252, 16
        %v338 = vor.u32 %v335, %v336
        %v339 = vrot.slane %v335, 4
        %v341 = vshrl.u32 %v253, 16
        %v343 = vrot.slane %v341, 7
        %v344 = vshll.u32 %v253, 16
        %v346 = vor.u32 %v343, %v344
        %v347 = vsel %vm280, %v339, %v346
        %v348 = vrot.slane %v343, 4
        %v350 = vshrl.u32 %v254, 16
        %v352 = vrot.slane %v350, 7
        %v353 = vshll.u32 %v254, 16
        %v355 = vor.u32 %v352, %v353
        %v356 = vrot.slane %v352, 4
        %v358 = vshrl.u32 %v255, 16
        %v360 = vrot.slane %v358, 7
        %v361 = vshll.u32 %v255, 16
        %v363 = vor.u32 %v360, %v361
        %v364 = vsel %vm280, %v356, %v363
        %v365 = vrot.slane %v360, 4
        %v367 = vshrl.u32 %v256, 16
        %v369 = vrot.slane %v367, 7
        %v370 = vshll.u32 %v256, 16
        %v372 = vor.u32 %v369, %v370
        %v373 = vrot.slane %v369, 4
        %v375 = vshrl.u32 %v257, 16
        %v377 = vrot.slane %v375, 7
        %v378 = vshll.u32 %v257, 16
        %v380 = vor.u32 %v377, %v378
        %v381 = vsel %vm280, %v373, %v380
        %v382 = vrot.slane %v377, 4
        %v384 = vshrl.u32 %v258, 16
        %v386 = vrot.slane %v384, 7
        %v387 = vshll.u32 %v258, 16
        %v389 = vor.u32 %v386, %v387
        %v390 = vrot.slane %v386, 4
        %v392 = vshrl.u32 %v259, 16
        %v394 = vrot.slane %v392, 7
        %v395 = vshll.u32 %v259, 16
        %v397 = vor.u32 %v394, %v395
        %v398 = vsel %vm280, %v390, %v397
        %v399 = vrot.slane %v394, 4
        %v401 = vshrl.u32 %v260, 16
        %v403 = vrot.slane %v401, 7
        %v404 = vshll.u32 %v260, 16
        %v406 = vor.u32 %v403, %v404
        %v407 = vrot.slane %v403, 4
        %v409 = vshrl.u32 %v261, 16
        %v411 = vrot.slane %v409, 7
        %v412 = vshll.u32 %v261, 16
        %v414 = vor.u32 %v411, %v412
        %v415 = vsel %vm280, %v407, %v414
        %v416 = vrot.slane %v411, 4
        %v418 = vshrl.u32 %v262, 16
        %v420 = vrot.slane %v418, 7
        %v421 = vshll.u32 %v262, 16
        %v423 = vor.u32 %v420, %v421
        %v424 = vrot.slane %v420, 4
        %v426 = vshrl.u32 %v263, 16
        %v428 = vrot.slane %v426, 7
        %v429 = vshll.u32 %v263, 16
        %v431 = vor.u32 %v428, %v429
        %v432 = vsel %vm280, %v424, %v431
        %v433 = vrot.slane %v428, 4
        %v435 = vshrl.u32 %v264, 16
        %v437 = vrot.slane %v435, 7
        %v438 = vshll.u32 %v264, 16
        %v440 = vor.u32 %v437, %v438
        %v441 = vrot.slane %v437, 4
        %v443 = vshrl.u32 %v265, 16
        %v445 = vrot.slane %v443, 7
        %v446 = vshll.u32 %v265, 16
        %v448 = vor.u32 %v445, %v446
        %v449 = vsel %vm280, %v441, %v448
        %v450 = vrot.slane %v445, 4
        %v452 = vshrl.u32 %v266, 16
        %v454 = vrot.slane %v452, 7
        %v455 = vshll.u32 %v266, 16
        %v457 = vor.u32 %v454, %v455
        %v458 = vrot.slane %v454, 4
        %v460 = vshrl.u32 %v267, 16
        %v462 = vrot.slane %v460, 7
        %v463 = vshll.u32 %v267, 16
        %v465 = vor.u32 %v462, %v463
        %v466 = vsel %vm280, %v458, %v465
        %v467 = vrot.slane %v462, 4
        %v469 = vshrl.u32 %v268, 16
        %v471 = vrot.slane %v469, 7
        %v472 = vshll.u32 %v268, 16
        %v474 = vor.u32 %v471, %v472
        %v475 = vrot.slane %v471, 4
        %v477 = vshrl.u32 %v269, 16
        %v479 = vrot.slane %v477, 7
        %v480 = vshll.u32 %v269, 16
        %v482 = vor.u32 %v479, %v480
        %v483 = vsel %vm280, %v475, %v482
        %v484 = vrot.slane %v479, 4
        %v486 = vshrl.u32 %v270, 16
        %v488 = vrot.slane %v486, 7
        %v489 = vshll.u32 %v270, 16
        %v491 = vor.u32 %v488, %v489
        %v492 = vrot.slane %v488, 4
        %v494 = vshrl.u32 %v271, 16
        %v496 = vrot.slane %v494, 7
        %v497 = vshll.u32 %v271, 16
        %v499 = vor.u32 %v496, %v497
        %v500 = vsel %vm280, %v492, %v499
        %v501 = vrot.slane %v496, 4
        %v503 = vshrl.u32 %v272, 16
        %v505 = vrot.slane %v503, 7
        %v506 = vshll.u32 %v272, 16
        %v508 = vor.u32 %v505, %v506
        %v509 = vrot.slane %v505, 4
        %v511 = vshrl.u32 %v273, 16
        %v513 = vrot.slane %v511, 7
        %v514 = vshll.u32 %v273, 16
        %v516 = vor.u32 %v513, %v514
        %v517 = vsel %vm280, %v509, %v516
        %v518 = vrot.slane %v513, 4
        %v520 = vshrl.u32 %v274, 16
        %v522 = vrot.slane %v520, 7
        %v523 = vshll.u32 %v274, 16
        %v525 = vor.u32 %v522, %v523
        %v526 = vrot.slane %v522, 4
        %v528 = vshrl.u32 %v275, 16
        %v530 = vrot.slane %v528, 7
        %v531 = vshll.u32 %v275, 16
        %v533 = vor.u32 %v530, %v531
        %v534 = vsel %vm280, %v526, %v533
        %v535 = vrot.slane %v530, 4
        %v537 = vshrl.u32 %v276, 16
        %v539 = vrot.slane %v537, 7
        %v540 = vshll.u32 %v276, 16
        %v542 = vor.u32 %v539, %v540
        %v543 = vrot.slane %v539, 4
        %v545 = vshrl.u32 %v277, 16
        %v547 = vrot.slane %v545, 7
        %v548 = vshll.u32 %v277, 16
        %v550 = vor.u32 %v547, %v548
        %v551 = vsel %vm280, %v543, %v550
        %v552 = vrot.slane %v547, 4
        %s601 = scalar_lea.vmem [#allocation2], 12
        %vm602 = vcmask 1043456
        %vm603 = vsmask.f32 7938
        %vm604 = vmand %vm602, %vm603
        %v605 = vld [vmem:[%s601] sm:$0xf]
        %v606 = vsel %vm604, %v287, %v605
        %607 = vst [vmem:[%s601] sm:$0xf] %v606
        %608 = vst [vmem:[%s601 + $0x4] sm:$0xf] %v296
        %vm609 = vcmask 1040384
        %vm610 = vmand %vm609, %vm278
        %v611 = vld [vmem:[%s601 + $0x8] sm:$0x1]
        %v612 = vsel %vm610, %v297, %v611
        %613 = vst [vmem:[%s601 + $0x8] sm:$0x1] %v612
        %v614 = vld [vmem:[%s601 + $0xc] sm:$0xf]
        %v615 = vsel %vm604, %v304, %v614
        %616 = vst [vmem:[%s601 + $0xc] sm:$0xf] %v615
        %617 = vst [vmem:[%s601 + $0x10] sm:$0xf] %v313
        %v618 = vld [vmem:[%s601 + $0x14] sm:$0x1]
        %v619 = vsel %vm610, %v314, %v618
        %620 = vst [vmem:[%s601 + $0x14] sm:$0x1] %v619
        %v621 = vld [vmem:[%s601 + $0x18] sm:$0xf]
        %v622 = vsel %vm604, %v321, %v621
        %623 = vst [vmem:[%s601 + $0x18] sm:$0xf] %v622
        %624 = vst [vmem:[%s601 + $0x1c] sm:$0xf] %v330
        %v625 = vld [vmem:[%s601 + $0x20] sm:$0x1]
        %v626 = vsel %vm610, %v331, %v625
        %627 = vst [vmem:[%s601 + $0x20] sm:$0x1] %v626
        %v628 = vld [vmem:[%s601 + $0x24] sm:$0xf]
        %v629 = vsel %vm604, %v338, %v628
        %630 = vst [vmem:[%s601 + $0x24] sm:$0xf] %v629
        %631 = vst [vmem:[%s601 + $0x28] sm:$0xf] %v347
        %v632 = vld [vmem:[%s601 + $0x2c] sm:$0x1]
        %v633 = vsel %vm610, %v348, %v632
        %634 = vst [vmem:[%s601 + $0x2c] sm:$0x1] %v633
        %v635 = vld [vmem:[%s601 + $0x30] sm:$0xf]
        %v636 = vsel %vm604, %v355, %v635
        %637 = vst [vmem:[%s601 + $0x30] sm:$0xf] %v636
        %638 = vst [vmem:[%s601 + $0x34] sm:$0xf] %v364
        %v639 = vld [vmem:[%s601 + $0x38] sm:$0x1]
        %v640 = vsel %vm610, %v365, %v639
        %641 = vst [vmem:[%s601 + $0x38] sm:$0x1] %v640
        %v642 = vld [vmem:[%s601 + $0x3c] sm:$0xf]
        %v643 = vsel %vm604, %v372, %v642
        %644 = vst [vmem:[%s601 + $0x3c] sm:$0xf] %v643
        %645 = vst [vmem:[%s601 + $0x40] sm:$0xf] %v381
        %v646 = vld [vmem:[%s601 + $0x44] sm:$0x1]
        %v647 = vsel %vm610, %v382, %v646
        %648 = vst [vmem:[%s601 + $0x44] sm:$0x1] %v647
        %v649 = vld [vmem:[%s601 + $0x48] sm:$0xf]
        %v650 = vsel %vm604, %v389, %v649
        %651 = vst [vmem:[%s601 + $0x48] sm:$0xf] %v650
        %652 = vst [vmem:[%s601 + $0x4c] sm:$0xf] %v398
        %v653 = vld [vmem:[%s601 + $0x50] sm:$0x1]
        %v654 = vsel %vm610, %v399, %v653
        %655 = vst [vmem:[%s601 + $0x50] sm:$0x1] %v654
        %v656 = vld [vmem:[%s601 + $0x54] sm:$0xf]
        %v657 = vsel %vm604, %v406, %v656
        %658 = vst [vmem:[%s601 + $0x54] sm:$0xf] %v657
        %659 = vst [vmem:[%s601 + $0x58] sm:$0xf] %v415
        %v660 = vld [vmem:[%s601 + $0x5c] sm:$0x1]
        %v661 = vsel %vm610, %v416, %v660
        %662 = vst [vmem:[%s601 + $0x5c] sm:$0x1] %v661
        %v663 = vld [vmem:[%s601 + $0x60] sm:$0xf]
        %v664 = vsel %vm604, %v423, %v663
        %665 = vst [vmem:[%s601 + $0x60] sm:$0xf] %v664
        %666 = vst [vmem:[%s601 + $0x64] sm:$0xf] %v432
        %v667 = vld [vmem:[%s601 + $0x68] sm:$0x1]
        %v668 = vsel %vm610, %v433, %v667
        %669 = vst [vmem:[%s601 + $0x68] sm:$0x1] %v668
        %v670 = vld [vmem:[%s601 + $0x6c] sm:$0xf]
        %v671 = vsel %vm604, %v440, %v670
        %672 = vst [vmem:[%s601 + $0x6c] sm:$0xf] %v671
        %673 = vst [vmem:[%s601 + $0x70] sm:$0xf] %v449
        %v674 = vld [vmem:[%s601 + $0x74] sm:$0x1]
        %v675 = vsel %vm610, %v450, %v674
        %676 = vst [vmem:[%s601 + $0x74] sm:$0x1] %v675
        %v677 = vld [vmem:[%s601 + $0x78] sm:$0xf]
        %v678 = vsel %vm604, %v457, %v677
        %679 = vst [vmem:[%s601 + $0x78] sm:$0xf] %v678
        %680 = vst [vmem:[%s601 + $0x7c] sm:$0xf] %v466
        %v681 = vld [vmem:[%s601 + $0x80] sm:$0x1]
        %v682 = vsel %vm610, %v467, %v681
        %683 = vst [vmem:[%s601 + $0x80] sm:$0x1] %v682
        %v684 = vld [vmem:[%s601 + $0x84] sm:$0xf]
        %v685 = vsel %vm604, %v474, %v684
        %686 = vst [vmem:[%s601 + $0x84] sm:$0xf] %v685
        %687 = vst [vmem:[%s601 + $0x88] sm:$0xf] %v483
        %v688 = vld [vmem:[%s601 + $0x8c] sm:$0x1]
        %v689 = vsel %vm610, %v484, %v688
        %690 = vst [vmem:[%s601 + $0x8c] sm:$0x1] %v689
        %v691 = vld [vmem:[%s601 + $0x90] sm:$0xf]
        %v692 = vsel %vm604, %v491, %v691
        %693 = vst [vmem:[%s601 + $0x90] sm:$0xf] %v692
        %694 = vst [vmem:[%s601 + $0x94] sm:$0xf] %v500
        %v695 = vld [vmem:[%s601 + $0x98] sm:$0x1]
        %v696 = vsel %vm610, %v501, %v695
        %697 = vst [vmem:[%s601 + $0x98] sm:$0x1] %v696
        %v698 = vld [vmem:[%s601 + $0x9c] sm:$0xf]
        %v699 = vsel %vm604, %v508, %v698
        %700 = vst [vmem:[%s601 + $0x9c] sm:$0xf] %v699
        %701 = vst [vmem:[%s601 + $0xa0] sm:$0xf] %v517
        %v702 = vld [vmem:[%s601 + $0xa4] sm:$0x1]
        %v703 = vsel %vm610, %v518, %v702
        %704 = vst [vmem:[%s601 + $0xa4] sm:$0x1] %v703
        %v705 = vld [vmem:[%s601 + $0xa8] sm:$0xf]
        %v706 = vsel %vm604, %v525, %v705
        %707 = vst [vmem:[%s601 + $0xa8] sm:$0xf] %v706
        %708 = vst [vmem:[%s601 + $0xac] sm:$0xf] %v534
        %v709 = vld [vmem:[%s601 + $0xb0] sm:$0x1]
        %v710 = vsel %vm610, %v535, %v709
        %711 = vst [vmem:[%s601 + $0xb0] sm:$0x1] %v710
        %v712 = vld [vmem:[%s601 + $0xb4] sm:$0xf]
        %v713 = vsel %vm604, %v542, %v712
        %714 = vst [vmem:[%s601 + $0xb4] sm:$0xf] %v713
        %715 = vst [vmem:[%s601 + $0xb8] sm:$0xf] %v551
        %v716 = vld [vmem:[%s601 + $0xbc] sm:$0x1]
        %v717 = vsel %vm610, %v552, %v716
        %718 = vst [vmem:[%s601 + $0xbc] sm:$0x1] %v717
        %v719 = vld [vmem:[#allocation2] sm:$0xf]
        %v720 = vld [vmem:[#allocation2 + $0x4] sm:$0xf]
        %v721 = vld [vmem:[#allocation2 + $0xc] sm:$0xf]
        %v722 = vld [vmem:[#allocation2 + $0x10] sm:$0xf]
        %v723 = vld [vmem:[#allocation2 + $0x18] sm:$0xf]
        %v724 = vld [vmem:[#allocation2 + $0x1c] sm:$0xf]
        %v725 = vld [vmem:[#allocation2 + $0x24] sm:$0xf]
        %v726 = vld [vmem:[#allocation2 + $0x28] sm:$0xf]
        %v727 = vld [vmem:[#allocation2 + $0x30] sm:$0xf]
        %v728 = vld [vmem:[#allocation2 + $0x34] sm:$0xf]
        %v729 = vld [vmem:[#allocation2 + $0x3c] sm:$0xf]
        %v730 = vld [vmem:[#allocation2 + $0x40] sm:$0xf]
        %v731 = vld [vmem:[#allocation2 + $0x48] sm:$0xf]
        %v732 = vld [vmem:[#allocation2 + $0x4c] sm:$0xf]
        %v733 = vld [vmem:[#allocation2 + $0x54] sm:$0xf]
        %v734 = vld [vmem:[#allocation2 + $0x58] sm:$0xf]
        %v735 = vld [vmem:[#allocation2 + $0x60] sm:$0xf]
        %v736 = vld [vmem:[#allocation2 + $0x64] sm:$0xf]
        %v737 = vld [vmem:[#allocation2 + $0x6c] sm:$0xf]
        %v738 = vld [vmem:[#allocation2 + $0x70] sm:$0xf]
        %v739 = vld [vmem:[#allocation2 + $0x78] sm:$0xf]
        %v740 = vld [vmem:[#allocation2 + $0x7c] sm:$0xf]
        %v741 = vld [vmem:[#allocation2 + $0x84] sm:$0xf]
        %v742 = vld [vmem:[#allocation2 + $0x88] sm:$0xf]
        %v743 = vld [vmem:[#allocation2 + $0x90] sm:$0xf]
        %v744 = vld [vmem:[#allocation2 + $0x94] sm:$0xf]
        %v745 = vld [vmem:[#allocation2 + $0x9c] sm:$0xf]
        %v746 = vld [vmem:[#allocation2 + $0xa0] sm:$0xf]
        %v747 = vld [vmem:[#allocation2 + $0xa8] sm:$0xf]
        %v748 = vld [vmem:[#allocation2 + $0xac] sm:$0xf]
        %v749 = vld [vmem:[#allocation2 + $0xb4] sm:$0xf]
        %v750 = vld [vmem:[#allocation2 + $0xb8] sm:$0xf]
        %v751 = vld [vmem:[%s1] sm:$0xf]
        %v752 = vld [vmem:[%s1 + $0x4] sm:$0xf]
        %v753 = vld [vmem:[%s1 + $0x8] sm:$0xf]
        %v754 = vld [vmem:[%s1 + $0xc] sm:$0xf]
        %v755 = vld [vmem:[%s1 + $0x10] sm:$0xf]
        %v756 = vld [vmem:[%s1 + $0x14] sm:$0xf]
        %v757 = vld [vmem:[%s1 + $0x18] sm:$0xf]
        %v758 = vld [vmem:[%s1 + $0x1c] sm:$0xf]
        %v759 = vld [vmem:[%s1 + $0x20] sm:$0xf]
        %v760 = vld [vmem:[%s1 + $0x24] sm:$0xf]
        %v761 = vld [vmem:[%s1 + $0x28] sm:$0xf]
        %v762 = vld [vmem:[%s1 + $0x2c] sm:$0xf]
        %v763 = vld [vmem:[%s1 + $0x30] sm:$0xf]
        %v764 = vld [vmem:[%s1 + $0x34] sm:$0xf]
        %v765 = vld [vmem:[%s1 + $0x38] sm:$0xf]
        %v766 = vld [vmem:[%s1 + $0x3c] sm:$0xf]
        %v767 = vld [vmem:[#allocation2 + $0x8] sm:$0x1]
        %v768 = vld [vmem:[#allocation2 + $0x14] sm:$0x1]
        %v769 = vld [vmem:[#allocation2 + $0x20] sm:$0x1]
        %v770 = vld [vmem:[#allocation2 + $0x2c] sm:$0x1]
        %v771 = vld [vmem:[#allocation2 + $0x38] sm:$0x1]
        %v772 = vld [vmem:[#allocation2 + $0x44] sm:$0x1]
        %v773 = vld [vmem:[#allocation2 + $0x50] sm:$0x1]
        %v774 = vld [vmem:[#allocation2 + $0x5c] sm:$0x1]
        %v775 = vld [vmem:[#allocation2 + $0x68] sm:$0x1]
        %v776 = vld [vmem:[#allocation2 + $0x74] sm:$0x1]
        %v777 = vld [vmem:[#allocation2 + $0x80] sm:$0x1]
        %v778 = vld [vmem:[#allocation2 + $0x8c] sm:$0x1]
        %v779 = vld [vmem:[#allocation2 + $0x98] sm:$0x1]
        %v780 = vld [vmem:[#allocation2 + $0xa4] sm:$0x1]
        %v781 = vld [vmem:[#allocation2 + $0xb0] sm:$0x1]
        %v782 = vld [vmem:[#allocation2 + $0xbc] sm:$0x1]
        %vm783 = vsmask.f32 3328
        %vm784 = vsmask.f32 7440
        %vm785 = vmor %vm783, %vm784
        %v787 = vshrl.u32 %v719, 16
        %v789 = vrot.slane %v787, 4
        %v790 = vshll.u32 %v719, 16
        %v792 = vrot.slane %v790, 5
        %v793 = vor.u32 %v789, %v792
        %v794 = vrot.slane %v793, 4
        %v796 = vshll.u32 %v720, 16
        %v798 = vrot.slane %v796, 5
        %v799 = vsel %vm785, %v794, %v798
        %v800 = vshrl.u32 %v720, 16
        %v802 = vrot.slane %v800, 4
        %v803 = vor.u32 %v802, %v798
        %v804 = vrot.slane %v803, 4
        %v806 = vshll.u32 %v767, 16
        %v808 = vrot.slane %v806, 5
        %v809 = vsel %vm785, %v804, %v808
        %v811 = vshrl.u32 %v721, 16
        %v813 = vrot.slane %v811, 4
        %v814 = vshll.u32 %v721, 16
        %v816 = vrot.slane %v814, 5
        %v817 = vor.u32 %v813, %v816
        %v818 = vrot.slane %v817, 4
        %v820 = vshll.u32 %v722, 16
        %v822 = vrot.slane %v820, 5
        %v823 = vsel %vm785, %v818, %v822
        %v824 = vshrl.u32 %v722, 16
        %v826 = vrot.slane %v824, 4
        %v827 = vor.u32 %v826, %v822
        %v828 = vrot.slane %v827, 4
        %v830 = vshll.u32 %v768, 16
        %v832 = vrot.slane %v830, 5
        %v833 = vsel %vm785, %v828, %v832
        %v835 = vshrl.u32 %v723, 16
        %v837 = vrot.slane %v835, 4
        %v838 = vshll.u32 %v723, 16
        %v840 = vrot.slane %v838, 5
        %v841 = vor.u32 %v837, %v840
        %v842 = vrot.slane %v841, 4
        %v844 = vshll.u32 %v724, 16
        %v846 = vrot.slane %v844, 5
        %v847 = vsel %vm785, %v842, %v846
        %v848 = vshrl.u32 %v724, 16
        %v850 = vrot.slane %v848, 4
        %v851 = vor.u32 %v850, %v846
        %v852 = vrot.slane %v851, 4
        %v854 = vshll.u32 %v769, 16
        %v856 = vrot.slane %v854, 5
        %v857 = vsel %vm785, %v852, %v856
        %v859 = vshrl.u32 %v725, 16
        %v861 = vrot.slane %v859, 4
        %v862 = vshll.u32 %v725, 16
        %v864 = vrot.slane %v862, 5
        %v865 = vor.u32 %v861, %v864
        %v866 = vrot.slane %v865, 4
        %v868 = vshll.u32 %v726, 16
        %v870 = vrot.slane %v868, 5
        %v871 = vsel %vm785, %v866, %v870
        %v872 = vshrl.u32 %v726, 16
        %v874 = vrot.slane %v872, 4
        %v875 = vor.u32 %v874, %v870
        %v876 = vrot.slane %v875, 4
        %v878 = vshll.u32 %v770, 16
        %v880 = vrot.slane %v878, 5
        %v881 = vsel %vm785, %v876, %v880
        %v883 = vshrl.u32 %v727, 16
        %v885 = vrot.slane %v883, 4
        %v886 = vshll.u32 %v727, 16
        %v888 = vrot.slane %v886, 5
        %v889 = vor.u32 %v885, %v888
        %v890 = vrot.slane %v889, 4
        %v892 = vshll.u32 %v728, 16
        %v894 = vrot.slane %v892, 5
        %v895 = vsel %vm785, %v890, %v894
        %v896 = vshrl.u32 %v728, 16
        %v898 = vrot.slane %v896, 4
        %v899 = vor.u32 %v898, %v894
        %v900 = vrot.slane %v899, 4
        %v902 = vshll.u32 %v771, 16
        %v904 = vrot.slane %v902, 5
        %v905 = vsel %vm785, %v900, %v904
        %v907 = vshrl.u32 %v729, 16
        %v909 = vrot.slane %v907, 4
        %v910 = vshll.u32 %v729, 16
        %v912 = vrot.slane %v910, 5
        %v913 = vor.u32 %v909, %v912
        %v914 = vrot.slane %v913, 4
        %v916 = vshll.u32 %v730, 16
        %v918 = vrot.slane %v916, 5
        %v919 = vsel %vm785, %v914, %v918
        %v920 = vshrl.u32 %v730, 16
        %v922 = vrot.slane %v920, 4
        %v923 = vor.u32 %v922, %v918
        %v924 = vrot.slane %v923, 4
        %v926 = vshll.u32 %v772, 16
        %v928 = vrot.slane %v926, 5
        %v929 = vsel %vm785, %v924, %v928
        %v931 = vshrl.u32 %v731, 16
        %v933 = vrot.slane %v931, 4
        %v934 = vshll.u32 %v731, 16
        %v936 = vrot.slane %v934, 5
        %v937 = vor.u32 %v933, %v936
        %v938 = vrot.slane %v937, 4
        %v940 = vshll.u32 %v732, 16
        %v942 = vrot.slane %v940, 5
        %v943 = vsel %vm785, %v938, %v942
        %v944 = vshrl.u32 %v732, 16
        %v946 = vrot.slane %v944, 4
        %v947 = vor.u32 %v946, %v942
        %v948 = vrot.slane %v947, 4
        %v950 = vshll.u32 %v773, 16
        %v952 = vrot.slane %v950, 5
        %v953 = vsel %vm785, %v948, %v952
        %v955 = vshrl.u32 %v733, 16
        %v957 = vrot.slane %v955, 4
        %v958 = vshll.u32 %v733, 16
        %v960 = vrot.slane %v958, 5
        %v961 = vor.u32 %v957, %v960
        %v962 = vrot.slane %v961, 4
        %v964 = vshll.u32 %v734, 16
        %v966 = vrot.slane %v964, 5
        %v967 = vsel %vm785, %v962, %v966
        %v968 = vshrl.u32 %v734, 16
        %v970 = vrot.slane %v968, 4
        %v971 = vor.u32 %v970, %v966
        %v972 = vrot.slane %v971, 4
        %v974 = vshll.u32 %v774, 16
        %v976 = vrot.slane %v974, 5
        %v977 = vsel %vm785, %v972, %v976
        %v979 = vshrl.u32 %v735, 16
        %v981 = vrot.slane %v979, 4
        %v982 = vshll.u32 %v735, 16
        %v984 = vrot.slane %v982, 5
        %v985 = vor.u32 %v981, %v984
        %v986 = vrot.slane %v985, 4
        %v988 = vshll.u32 %v736, 16
        %v990 = vrot.slane %v988, 5
        %v991 = vsel %vm785, %v986, %v990
        %v992 = vshrl.u32 %v736, 16
        %v994 = vrot.slane %v992, 4
        %v995 = vor.u32 %v994, %v990
        %v996 = vrot.slane %v995, 4
        %v998 = vshll.u32 %v775, 16
        %v1000 = vrot.slane %v998, 5
        %v1001 = vsel %vm785, %v996, %v1000
        %v1003 = vshrl.u32 %v737, 16
        %v1005 = vrot.slane %v1003, 4
        %v1006 = vshll.u32 %v737, 16
        %v1008 = vrot.slane %v1006, 5
        %v1009 = vor.u32 %v1005, %v1008
        %v1010 = vrot.slane %v1009, 4
        %v1012 = vshll.u32 %v738, 16
        %v1014 = vrot.slane %v1012, 5
        %v1015 = vsel %vm785, %v1010, %v1014
        %v1016 = vshrl.u32 %v738, 16
        %v1018 = vrot.slane %v1016, 4
        %v1019 = vor.u32 %v1018, %v1014
        %v1020 = vrot.slane %v1019, 4
        %v1022 = vshll.u32 %v776, 16
        %v1024 = vrot.slane %v1022, 5
        %v1025 = vsel %vm785, %v1020, %v1024
        %v1027 = vshrl.u32 %v739, 16
        %v1029 = vrot.slane %v1027, 4
        %v1030 = vshll.u32 %v739, 16
        %v1032 = vrot.slane %v1030, 5
        %v1033 = vor.u32 %v1029, %v1032
        %v1034 = vrot.slane %v1033, 4
        %v1036 = vshll.u32 %v740, 16
        %v1038 = vrot.slane %v1036, 5
        %v1039 = vsel %vm785, %v1034, %v1038
        %v1040 = vshrl.u32 %v740, 16
        %v1042 = vrot.slane %v1040, 4
        %v1043 = vor.u32 %v1042, %v1038
        %v1044 = vrot.slane %v1043, 4
        %v1046 = vshll.u32 %v777, 16
        %v1048 = vrot.slane %v1046, 5
        %v1049 = vsel %vm785, %v1044, %v1048
        %v1051 = vshrl.u32 %v741, 16
        %v1053 = vrot.slane %v1051, 4
        %v1054 = vshll.u32 %v741, 16
        %v1056 = vrot.slane %v1054, 5
        %v1057 = vor.u32 %v1053, %v1056
        %v1058 = vrot.slane %v1057, 4
        %v1060 = vshll.u32 %v742, 16
        %v1062 = vrot.slane %v1060, 5
        %v1063 = vsel %vm785, %v1058, %v1062
        %v1064 = vshrl.u32 %v742, 16
        %v1066 = vrot.slane %v1064, 4
        %v1067 = vor.u32 %v1066, %v1062
        %v1068 = vrot.slane %v1067, 4
        %v1070 = vshll.u32 %v778, 16
        %v1072 = vrot.slane %v1070, 5
        %v1073 = vsel %vm785, %v1068, %v1072
        %v1075 = vshrl.u32 %v743, 16
        %v1077 = vrot.slane %v1075, 4
        %v1078 = vshll.u32 %v743, 16
        %v1080 = vrot.slane %v1078, 5
        %v1081 = vor.u32 %v1077, %v1080
        %v1082 = vrot.slane %v1081, 4
        %v1084 = vshll.u32 %v744, 16
        %v1086 = vrot.slane %v1084, 5
        %v1087 = vsel %vm785, %v1082, %v1086
        %v1088 = vshrl.u32 %v744, 16
        %v1090 = vrot.slane %v1088, 4
        %v1091 = vor.u32 %v1090, %v1086
        %v1092 = vrot.slane %v1091, 4
        %v1094 = vshll.u32 %v779, 16
        %v1096 = vrot.slane %v1094, 5
        %v1097 = vsel %vm785, %v1092, %v1096
        %v1099 = vshrl.u32 %v745, 16
        %v1101 = vrot.slane %v1099, 4
        %v1102 = vshll.u32 %v745, 16
        %v1104 = vrot.slane %v1102, 5
        %v1105 = vor.u32 %v1101, %v1104
        %v1106 = vrot.slane %v1105, 4
        %v1108 = vshll.u32 %v746, 16
        %v1110 = vrot.slane %v1108, 5
        %v1111 = vsel %vm785, %v1106, %v1110
        %v1112 = vshrl.u32 %v746, 16
        %v1114 = vrot.slane %v1112, 4
        %v1115 = vor.u32 %v1114, %v1110
        %v1116 = vrot.slane %v1115, 4
        %v1118 = vshll.u32 %v780, 16
        %v1120 = vrot.slane %v1118, 5
        %v1121 = vsel %vm785, %v1116, %v1120
        %v1123 = vshrl.u32 %v747, 16
        %v1125 = vrot.slane %v1123, 4
        %v1126 = vshll.u32 %v747, 16
        %v1128 = vrot.slane %v1126, 5
        %v1129 = vor.u32 %v1125, %v1128
        %v1130 = vrot.slane %v1129, 4
        %v1132 = vshll.u32 %v748, 16
        %v1134 = vrot.slane %v1132, 5
        %v1135 = vsel %vm785, %v1130, %v1134
        %v1136 = vshrl.u32 %v748, 16
        %v1138 = vrot.slane %v1136, 4
        %v1139 = vor.u32 %v1138, %v1134
        %v1140 = vrot.slane %v1139, 4
        %v1142 = vshll.u32 %v781, 16
        %v1144 = vrot.slane %v1142, 5
        %v1145 = vsel %vm785, %v1140, %v1144
        %v1147 = vshrl.u32 %v749, 16
        %v1149 = vrot.slane %v1147, 4
        %v1150 = vshll.u32 %v749, 16
        %v1152 = vrot.slane %v1150, 5
        %v1153 = vor.u32 %v1149, %v1152
        %v1154 = vrot.slane %v1153, 4
        %v1156 = vshll.u32 %v750, 16
        %v1158 = vrot.slane %v1156, 5
        %v1159 = vsel %vm785, %v1154, %v1158
        %v1160 = vshrl.u32 %v750, 16
        %v1162 = vrot.slane %v1160, 4
        %v1163 = vor.u32 %v1162, %v1158
        %v1164 = vrot.slane %v1163, 4
        %v1166 = vshll.u32 %v782, 16
        %v1168 = vrot.slane %v1166, 5
        %v1169 = vsel %vm785, %v1164, %v1168
        %v1170 = vld [vmem:[%s1 + $0x40] sm:$0xf]
        %v1171 = vld [vmem:[%s1 + $0x44] sm:$0xf]
        %v1172 = vld [vmem:[%s1 + $0x48] sm:$0xf]
        %v1173 = vld [vmem:[%s1 + $0x4c] sm:$0xf]
        %v1174 = vld [vmem:[%s1 + $0x50] sm:$0xf]
        %v1175 = vld [vmem:[%s1 + $0x54] sm:$0xf]
        %v1176 = vld [vmem:[%s1 + $0x58] sm:$0xf]
        %v1177 = vld [vmem:[%s1 + $0x5c] sm:$0xf]
        %v1178 = vld [vmem:[%s1 + $0x60] sm:$0xf]
        %v1179 = vld [vmem:[%s1 + $0x64] sm:$0xf]
        %v1180 = vld [vmem:[%s1 + $0x68] sm:$0xf]
        %v1181 = vld [vmem:[%s1 + $0x6c] sm:$0xf]
        %v1182 = vld [vmem:[%s1 + $0x70] sm:$0xf]
        %v1183 = vld [vmem:[%s1 + $0x74] sm:$0xf]
        %v1184 = vld [vmem:[%s1 + $0x78] sm:$0xf]
        %v1185 = vld [vmem:[%s1 + $0x7c] sm:$0xf]
        %v1186 = vunpack.c.l.b16 %v799
        %v1187 = vunpack.c.l.b16 %v809
        %v1188 = vunpack.c.l.b16 %v823
        %v1189 = vunpack.c.l.b16 %v833
        %v1190 = vunpack.c.l.b16 %v847
        %v1191 = vunpack.c.l.b16 %v857
        %v1192 = vunpack.c.l.b16 %v871
        %v1193 = vunpack.c.l.b16 %v881
        %v1194 = vunpack.c.l.b16 %v895
        %v1195 = vunpack.c.l.b16 %v905
        %v1196 = vunpack.c.l.b16 %v919
        %v1197 = vunpack.c.l.b16 %v929
        %v1198 = vunpack.c.l.b16 %v943
        %v1199 = vunpack.c.l.b16 %v953
        %v1200 = vunpack.c.l.b16 %v967
        %v1201 = vunpack.c.l.b16 %v977
        %v1202 = vunpack.c.l.b16 %v991
        %v1203 = vunpack.c.l.b16 %v1001
        %v1204 = vunpack.c.l.b16 %v1015
        %v1205 = vunpack.c.l.b16 %v1025
        %v1206 = vunpack.c.l.b16 %v1039
        %v1207 = vunpack.c.l.b16 %v1049
        %v1208 = vunpack.c.l.b16 %v1063
        %v1209 = vunpack.c.l.b16 %v1073
        %v1210 = vunpack.c.l.b16 %v1087
        %v1211 = vunpack.c.l.b16 %v1097
        %v1212 = vunpack.c.l.b16 %v1111
        %v1213 = vunpack.c.l.b16 %v1121
        %v1214 = vunpack.c.l.b16 %v1135
        %v1215 = vunpack.c.l.b16 %v1145
        %v1216 = vunpack.c.l.b16 %v1159
        %v1217 = vunpack.c.l.b16 %v1169
        %v1218 = vpack.c.b16 %v1187, %v1186
        %v1219 = vpack.c.b16 %v1189, %v1188
        %v1220 = vpack.c.b16 %v1191, %v1190
        %v1221 = vpack.c.b16 %v1193, %v1192
        %v1222 = vpack.c.b16 %v1195, %v1194
        %v1223 = vpack.c.b16 %v1197, %v1196
        %v1224 = vpack.c.b16 %v1199, %v1198
        %v1225 = vpack.c.b16 %v1201, %v1200
        %v1226 = vpack.c.b16 %v1203, %v1202
        %v1227 = vpack.c.b16 %v1205, %v1204
        %v1228 = vpack.c.b16 %v1207, %v1206
        %v1229 = vpack.c.b16 %v1209, %v1208
        %v1230 = vpack.c.b16 %v1211, %v1210
        %v1231 = vpack.c.b16 %v1213, %v1212
        %v1232 = vpack.c.b16 %v1215, %v1214
        %v1233 = vpack.c.b16 %v1217, %v1216
        %v1266 = vunpack.c.l.b16 %v1170
        %v1267 = vunpack.c.l.b16 %v1171
        %v1268 = vunpack.c.l.b16 %v1172
        %v1269 = vunpack.c.l.b16 %v1173
        %v1270 = vunpack.c.l.b16 %v1174
        %v1271 = vunpack.c.l.b16 %v1175
        %v1272 = vunpack.c.l.b16 %v1176
        %v1273 = vunpack.c.l.b16 %v1177
        %v1274 = vunpack.c.l.b16 %v1178
        %v1275 = vunpack.c.l.b16 %v1179
        %v1276 = vunpack.c.l.b16 %v1180
        %v1277 = vunpack.c.l.b16 %v1181
        %v1278 = vunpack.c.l.b16 %v1182
        %v1279 = vunpack.c.l.b16 %v1183
        %v1280 = vunpack.c.l.b16 %v1184
        %v1281 = vunpack.c.l.b16 %v1185
        %v1282 = vpack.c.b16 %v1267, %v1266
        %v1283 = vpack.c.b16 %v1269, %v1268
        %v1284 = vpack.c.b16 %v1271, %v1270
        %v1285 = vpack.c.b16 %v1273, %v1272
        %v1286 = vpack.c.b16 %v1275, %v1274
        %v1287 = vpack.c.b16 %v1277, %v1276
        %v1288 = vpack.c.b16 %v1279, %v1278
        %v1289 = vpack.c.b16 %v1281, %v1280
        %1298 = vmatprep.subr.bf16.mxu0 0
        %1299 = vmatpush1.bf16.msra.mxu0 %v1289
        %1300 = vmatprep.subr.bf16.mxu0 0
        %1301 = vmatpush1.bf16.msra.mxu0 %v1288
        %1302 = vmatprep.subr.bf16.mxu0 0
        %1303 = vmatpush1.bf16.msra.mxu0 %v1287
        %1304 = vmatprep.subr.bf16.mxu0 0
        %1305 = vmatpush1.bf16.msra.mxu0 %v1286
        %1306 = vmatprep.subr.bf16.mxu0 0
        %1307 = vmatpush1.bf16.msra.mxu0 %v1285
        %1308 = vmatprep.subr.bf16.mxu0 0
        %1309 = vmatpush1.bf16.msra.mxu0 %v1284
        %1310 = vmatprep.subr.bf16.mxu0 0
        %1311 = vmatpush1.bf16.msra.mxu0 %v1283
        %1312 = vmatprep.subr.bf16.mxu0 0
        %1313 = vmatpush1.bf16.msra.mxu0 %v1282
        %1314 = vmatprep.subr.bf16.mxu0 0
        %1315 = vmatpush2.bf16.msra.mxu0 0
        %1316 = vmatprep.subr.bf16.mxu0 0
        %1317 = vmatpush2.bf16.msra.mxu0 0
        %1318 = vmatprep.subr.bf16.mxu0 0
        %1319 = vmatpush2.bf16.msra.mxu0 0
        %1320 = vmatprep.subr.bf16.mxu0 0
        %1321 = vmatpush2.bf16.msra.mxu0 0
        %1322 = vmatprep.subr.bf16.mxu0 0
        %1323 = vmatpush2.bf16.msra.mxu0 0
        %1324 = vmatprep.subr.bf16.mxu0 0
        %1325 = vmatpush2.bf16.msra.mxu0 0
        %1326 = vmatprep.subr.bf16.mxu0 0
        %1327 = vmatpush2.bf16.msra.mxu0 0
        %1328 = vmatprep.subr.bf16.mxu0 0
        %1329 = vmatpush2.bf16.msra.mxu0 0
        %1330 = vmatprep.mubr.bf16.mxu0 0
        %1331 = vmatmul.mubr.bf16.gmra.mxu0 %v1218
        %v1332 = vpop.f32.mrf.mxu0
        %v1333 = vadd.f32 0.0, %v1332
        %v1334 = vpop.f32.mrf.mxu0
        %v1335 = vpop.f32.mrf.mxu0
        %v1336 = vadd.f32 0.0, %v1335
        %v1337 = vpop.f32.mrf.mxu0
        %1338 = vmatprep.mubr.bf16.mxu0 0
        %1339 = vmatmul.mubr.bf16.gmra.mxu0 %v1219
        %v1340 = vpop.f32.mrf.mxu0
        %v1341 = vadd.f32 0.0, %v1340
        %v1342 = vpop.f32.mrf.mxu0
        %v1343 = vpop.f32.mrf.mxu0
        %v1344 = vadd.f32 0.0, %v1343
        %v1345 = vpop.f32.mrf.mxu0
        %1346 = vmatprep.mubr.bf16.mxu0 0
        %1347 = vmatmul.mubr.bf16.gmra.mxu0 %v1220
        %v1348 = vpop.f32.mrf.mxu0
        %v1349 = vadd.f32 0.0, %v1348
        %v1350 = vpop.f32.mrf.mxu0
        %v1351 = vpop.f32.mrf.mxu0
        %v1352 = vadd.f32 0.0, %v1351
        %v1353 = vpop.f32.mrf.mxu0
        %1354 = vmatprep.mubr.bf16.mxu0 0
        %1355 = vmatmul.mubr.bf16.gmra.mxu0 %v1221
        %v1356 = vpop.f32.mrf.mxu0
        %v1357 = vadd.f32 0.0, %v1356
        %v1358 = vpop.f32.mrf.mxu0
        %v1359 = vpop.f32.mrf.mxu0
        %v1360 = vadd.f32 0.0, %v1359
        %v1361 = vpop.f32.mrf.mxu0
        %1362 = vmatprep.mubr.bf16.mxu0 0
        %1363 = vmatmul.mubr.bf16.gmra.mxu0 %v1222
        %v1364 = vpop.f32.mrf.mxu0
        %v1365 = vadd.f32 0.0, %v1364
        %v1366 = vpop.f32.mrf.mxu0
        %v1367 = vpop.f32.mrf.mxu0
        %v1368 = vadd.f32 0.0, %v1367
        %v1369 = vpop.f32.mrf.mxu0
        %1370 = vmatprep.mubr.bf16.mxu0 0
        %1371 = vmatmul.mubr.bf16.gmra.mxu0 %v1223
        %v1372 = vpop.f32.mrf.mxu0
        %v1373 = vadd.f32 0.0, %v1372
        %v1374 = vpop.f32.mrf.mxu0
        %v1375 = vpop.f32.mrf.mxu0
        %v1376 = vadd.f32 0.0, %v1375
        %v1377 = vpop.f32.mrf.mxu0
        %1378 = vmatprep.mubr.bf16.mxu0 0
        %1379 = vmatmul.mubr.bf16.gmra.mxu0 %v1224
        %v1380 = vpop.f32.mrf.mxu0
        %v1381 = vadd.f32 0.0, %v1380
        %v1382 = vpop.f32.mrf.mxu0
        %v1383 = vpop.f32.mrf.mxu0
        %v1384 = vadd.f32 0.0, %v1383
        %v1385 = vpop.f32.mrf.mxu0
        %1386 = vmatprep.mubr.bf16.mxu0 0
        %1387 = vmatmul.mubr.bf16.gmra.mxu0 %v1225
        %v1388 = vpop.f32.mrf.mxu0
        %v1389 = vadd.f32 0.0, %v1388
        %v1390 = vpop.f32.mrf.mxu0
        %v1391 = vpop.f32.mrf.mxu0
        %v1392 = vadd.f32 0.0, %v1391
        %v1393 = vpop.f32.mrf.mxu0
        %1394 = vmatprep.mubr.bf16.mxu0 0
        %1395 = vmatmul.mubr.bf16.gmra.mxu0 %v1226
        %v1396 = vpop.f32.mrf.mxu0
        %v1397 = vadd.f32 0.0, %v1396
        %v1398 = vpop.f32.mrf.mxu0
        %v1399 = vpop.f32.mrf.mxu0
        %v1400 = vadd.f32 0.0, %v1399
        %v1401 = vpop.f32.mrf.mxu0
        %1402 = vmatprep.mubr.bf16.mxu0 0
        %1403 = vmatmul.mubr.bf16.gmra.mxu0 %v1227
        %v1404 = vpop.f32.mrf.mxu0
        %v1405 = vadd.f32 0.0, %v1404
        %v1406 = vpop.f32.mrf.mxu0
        %v1407 = vpop.f32.mrf.mxu0
        %v1408 = vadd.f32 0.0, %v1407
        %v1409 = vpop.f32.mrf.mxu0
        %1410 = vmatprep.mubr.bf16.mxu0 0
        %1411 = vmatmul.mubr.bf16.gmra.mxu0 %v1228
        %v1412 = vpop.f32.mrf.mxu0
        %v1413 = vadd.f32 0.0, %v1412
        %v1414 = vpop.f32.mrf.mxu0
        %v1415 = vpop.f32.mrf.mxu0
        %v1416 = vadd.f32 0.0, %v1415
        %v1417 = vpop.f32.mrf.mxu0
        %1418 = vmatprep.mubr.bf16.mxu0 0
        %1419 = vmatmul.mubr.bf16.gmra.mxu0 %v1229
        %v1420 = vpop.f32.mrf.mxu0
        %v1421 = vadd.f32 0.0, %v1420
        %v1422 = vpop.f32.mrf.mxu0
        %v1423 = vpop.f32.mrf.mxu0
        %v1424 = vadd.f32 0.0, %v1423
        %v1425 = vpop.f32.mrf.mxu0
        %1426 = vmatprep.mubr.bf16.mxu0 0
        %1427 = vmatmul.mubr.bf16.gmra.mxu0 %v1230
        %v1428 = vpop.f32.mrf.mxu0
        %v1429 = vadd.f32 0.0, %v1428
        %v1430 = vpop.f32.mrf.mxu0
        %v1431 = vpop.f32.mrf.mxu0
        %v1432 = vadd.f32 0.0, %v1431
        %v1433 = vpop.f32.mrf.mxu0
        %1434 = vmatprep.mubr.bf16.mxu0 0
        %1435 = vmatmul.mubr.bf16.gmra.mxu0 %v1231
        %v1436 = vpop.f32.mrf.mxu0
        %v1437 = vadd.f32 0.0, %v1436
        %v1438 = vpop.f32.mrf.mxu0
        %v1439 = vpop.f32.mrf.mxu0
        %v1440 = vadd.f32 0.0, %v1439
        %v1441 = vpop.f32.mrf.mxu0
        %1442 = vmatprep.mubr.bf16.mxu0 0
        %1443 = vmatmul.mubr.bf16.gmra.mxu0 %v1232
        %v1444 = vpop.f32.mrf.mxu0
        %v1445 = vadd.f32 0.0, %v1444
        %v1446 = vpop.f32.mrf.mxu0
        %v1447 = vpop.f32.mrf.mxu0
        %v1448 = vadd.f32 0.0, %v1447
        %v1449 = vpop.f32.mrf.mxu0
        %1450 = vmatprep.mubr.bf16.mxu0 0
        %1451 = vmatmul.mubr.bf16.gmra.mxu0 %v1233
        %v1452 = vpop.f32.mrf.mxu0
        %v1453 = vadd.f32 0.0, %v1452
        %v1454 = vpop.f32.mrf.mxu0
        %v1455 = vpop.f32.mrf.mxu0
        %v1456 = vadd.f32 0.0, %v1455
        %v1457 = vpop.f32.mrf.mxu0
        %1458 = vdwg.mxu0
        %v1491 = vunpack.c.l.b16 %v719
        %v1492 = vunpack.c.l.b16 %v720
        %v1493 = vunpack.c.l.b16 %v721
        %v1494 = vunpack.c.l.b16 %v722
        %v1495 = vunpack.c.l.b16 %v723
        %v1496 = vunpack.c.l.b16 %v724
        %v1497 = vunpack.c.l.b16 %v725
        %v1498 = vunpack.c.l.b16 %v726
        %v1499 = vunpack.c.l.b16 %v727
        %v1500 = vunpack.c.l.b16 %v728
        %v1501 = vunpack.c.l.b16 %v729
        %v1502 = vunpack.c.l.b16 %v730
        %v1503 = vunpack.c.l.b16 %v731
        %v1504 = vunpack.c.l.b16 %v732
        %v1505 = vunpack.c.l.b16 %v733
        %v1506 = vunpack.c.l.b16 %v734
        %v1507 = vunpack.c.l.b16 %v735
        %v1508 = vunpack.c.l.b16 %v736
        %v1509 = vunpack.c.l.b16 %v737
        %v1510 = vunpack.c.l.b16 %v738
        %v1511 = vunpack.c.l.b16 %v739
        %v1512 = vunpack.c.l.b16 %v740
        %v1513 = vunpack.c.l.b16 %v741
        %v1514 = vunpack.c.l.b16 %v742
        %v1515 = vunpack.c.l.b16 %v743
        %v1516 = vunpack.c.l.b16 %v744
        %v1517 = vunpack.c.l.b16 %v745
        %v1518 = vunpack.c.l.b16 %v746
        %v1519 = vunpack.c.l.b16 %v747
        %v1520 = vunpack.c.l.b16 %v748
        %v1521 = vunpack.c.l.b16 %v749
        %v1522 = vunpack.c.l.b16 %v750
        %v1523 = vpack.c.b16 %v1492, %v1491
        %v1524 = vpack.c.b16 %v1494, %v1493
        %v1525 = vpack.c.b16 %v1496, %v1495
        %v1526 = vpack.c.b16 %v1498, %v1497
        %v1527 = vpack.c.b16 %v1500, %v1499
        %v1528 = vpack.c.b16 %v1502, %v1501
        %v1529 = vpack.c.b16 %v1504, %v1503
        %v1530 = vpack.c.b16 %v1506, %v1505
        %v1531 = vpack.c.b16 %v1508, %v1507
        %v1532 = vpack.c.b16 %v1510, %v1509
        %v1533 = vpack.c.b16 %v1512, %v1511
        %v1534 = vpack.c.b16 %v1514, %v1513
        %v1535 = vpack.c.b16 %v1516, %v1515
        %v1536 = vpack.c.b16 %v1518, %v1517
        %v1537 = vpack.c.b16 %v1520, %v1519
        %v1538 = vpack.c.b16 %v1522, %v1521
        %v1571 = vunpack.c.l.b16 %v751
        %v1572 = vunpack.c.l.b16 %v752
        %v1573 = vunpack.c.l.b16 %v753
        %v1574 = vunpack.c.l.b16 %v754
        %v1575 = vunpack.c.l.b16 %v755
        %v1576 = vunpack.c.l.b16 %v756
        %v1577 = vunpack.c.l.b16 %v757
        %v1578 = vunpack.c.l.b16 %v758
        %v1579 = vunpack.c.l.b16 %v759
        %v1580 = vunpack.c.l.b16 %v760
        %v1581 = vunpack.c.l.b16 %v761
        %v1582 = vunpack.c.l.b16 %v762
        %v1583 = vunpack.c.l.b16 %v763
        %v1584 = vunpack.c.l.b16 %v764
        %v1585 = vunpack.c.l.b16 %v765
        %v1586 = vunpack.c.l.b16 %v766
        %v1587 = vpack.c.b16 %v1572, %v1571
        %v1588 = vpack.c.b16 %v1574, %v1573
        %v1589 = vpack.c.b16 %v1576, %v1575
        %v1590 = vpack.c.b16 %v1578, %v1577
        %v1591 = vpack.c.b16 %v1580, %v1579
        %v1592 = vpack.c.b16 %v1582, %v1581
        %v1593 = vpack.c.b16 %v1584, %v1583
        %v1594 = vpack.c.b16 %v1586, %v1585
        %1603 = vmatprep.subr.bf16.mxu0 0
        %1604 = vmatpush1.bf16.msra.mxu0 %v1594
        %1605 = vmatprep.subr.bf16.mxu0 0
        %1606 = vmatpush1.bf16.msra.mxu0 %v1593
        %1607 = vmatprep.subr.bf16.mxu0 0
        %1608 = vmatpush1.bf16.msra.mxu0 %v1592
        %1609 = vmatprep.subr.bf16.mxu0 0
        %1610 = vmatpush1.bf16.msra.mxu0 %v1591
        %1611 = vmatprep.subr.bf16.mxu0 0
        %1612 = vmatpush1.bf16.msra.mxu0 %v1590
        %1613 = vmatprep.subr.bf16.mxu0 0
        %1614 = vmatpush1.bf16.msra.mxu0 %v1589
        %1615 = vmatprep.subr.bf16.mxu0 0
        %1616 = vmatpush1.bf16.msra.mxu0 %v1588
        %1617 = vmatprep.subr.bf16.mxu0 0
        %1618 = vmatpush1.bf16.msra.mxu0 %v1587
        %1619 = vmatprep.subr.bf16.mxu0 0
        %1620 = vmatpush2.bf16.msra.mxu0 0
        %1621 = vmatprep.subr.bf16.mxu0 0
        %1622 = vmatpush2.bf16.msra.mxu0 0
        %1623 = vmatprep.subr.bf16.mxu0 0
        %1624 = vmatpush2.bf16.msra.mxu0 0
        %1625 = vmatprep.subr.bf16.mxu0 0
        %1626 = vmatpush2.bf16.msra.mxu0 0
        %1627 = vmatprep.subr.bf16.mxu0 0
        %1628 = vmatpush2.bf16.msra.mxu0 0
        %1629 = vmatprep.subr.bf16.mxu0 0
        %1630 = vmatpush2.bf16.msra.mxu0 0
        %1631 = vmatprep.subr.bf16.mxu0 0
        %1632 = vmatpush2.bf16.msra.mxu0 0
        %1633 = vmatprep.subr.bf16.mxu0 0
        %1634 = vmatpush2.bf16.msra.mxu0 0
        %1635 = vmatprep.mubr.bf16.mxu0 0
        %1636 = vmatmul.mubr.bf16.gmra.mxu0 %v1523
        %v1637 = vpop.f32.mrf.mxu0
        %v1638 = vadd.f32 %v1333, %v1637
        %v1639 = vpop.f32.mrf.mxu0
        %v1640 = vpop.f32.mrf.mxu0
        %v1641 = vadd.f32 %v1336, %v1640
        %v1642 = vpop.f32.mrf.mxu0
        %1643 = vmatprep.mubr.bf16.mxu0 0
        %1644 = vmatmul.mubr.bf16.gmra.mxu0 %v1524
        %v1645 = vpop.f32.mrf.mxu0
        %v1646 = vadd.f32 %v1341, %v1645
        %v1647 = vpop.f32.mrf.mxu0
        %v1648 = vpop.f32.mrf.mxu0
        %v1649 = vadd.f32 %v1344, %v1648
        %v1650 = vpop.f32.mrf.mxu0
        %1651 = vmatprep.mubr.bf16.mxu0 0
        %1652 = vmatmul.mubr.bf16.gmra.mxu0 %v1525
        %v1653 = vpop.f32.mrf.mxu0
        %v1654 = vadd.f32 %v1349, %v1653
        %v1655 = vpop.f32.mrf.mxu0
        %v1656 = vpop.f32.mrf.mxu0
        %v1657 = vadd.f32 %v1352, %v1656
        %v1658 = vpop.f32.mrf.mxu0
        %1659 = vmatprep.mubr.bf16.mxu0 0
        %1660 = vmatmul.mubr.bf16.gmra.mxu0 %v1526
        %v1661 = vpop.f32.mrf.mxu0
        %v1662 = vadd.f32 %v1357, %v1661
        %v1663 = vpop.f32.mrf.mxu0
        %v1664 = vpop.f32.mrf.mxu0
        %v1665 = vadd.f32 %v1360, %v1664
        %v1666 = vpop.f32.mrf.mxu0
        %1667 = vmatprep.mubr.bf16.mxu0 0
        %1668 = vmatmul.mubr.bf16.gmra.mxu0 %v1527
        %v1669 = vpop.f32.mrf.mxu0
        %v1670 = vadd.f32 %v1365, %v1669
        %v1671 = vpop.f32.mrf.mxu0
        %v1672 = vpop.f32.mrf.mxu0
        %v1673 = vadd.f32 %v1368, %v1672
        %v1674 = vpop.f32.mrf.mxu0
        %1675 = vmatprep.mubr.bf16.mxu0 0
        %1676 = vmatmul.mubr.bf16.gmra.mxu0 %v1528
        %v1677 = vpop.f32.mrf.mxu0
        %v1678 = vadd.f32 %v1373, %v1677
        %v1679 = vpop.f32.mrf.mxu0
        %v1680 = vpop.f32.mrf.mxu0
        %v1681 = vadd.f32 %v1376, %v1680
        %v1682 = vpop.f32.mrf.mxu0
        %1683 = vmatprep.mubr.bf16.mxu0 0
        %1684 = vmatmul.mubr.bf16.gmra.mxu0 %v1529
        %v1685 = vpop.f32.mrf.mxu0
        %v1686 = vadd.f32 %v1381, %v1685
        %v1687 = vpop.f32.mrf.mxu0
        %v1688 = vpop.f32.mrf.mxu0
        %v1689 = vadd.f32 %v1384, %v1688
        %v1690 = vpop.f32.mrf.mxu0
        %1691 = vmatprep.mubr.bf16.mxu0 0
        %1692 = vmatmul.mubr.bf16.gmra.mxu0 %v1530
        %v1693 = vpop.f32.mrf.mxu0
        %v1694 = vadd.f32 %v1389, %v1693
        %v1695 = vpop.f32.mrf.mxu0
        %v1696 = vpop.f32.mrf.mxu0
        %v1697 = vadd.f32 %v1392, %v1696
        %v1698 = vpop.f32.mrf.mxu0
        %1699 = vmatprep.mubr.bf16.mxu0 0
        %1700 = vmatmul.mubr.bf16.gmra.mxu0 %v1531
        %v1701 = vpop.f32.mrf.mxu0
        %v1702 = vadd.f32 %v1397, %v1701
        %v1703 = vpop.f32.mrf.mxu0
        %v1704 = vpop.f32.mrf.mxu0
        %v1705 = vadd.f32 %v1400, %v1704
        %v1706 = vpop.f32.mrf.mxu0
        %1707 = vmatprep.mubr.bf16.mxu0 0
        %1708 = vmatmul.mubr.bf16.gmra.mxu0 %v1532
        %v1709 = vpop.f32.mrf.mxu0
        %v1710 = vadd.f32 %v1405, %v1709
        %v1711 = vpop.f32.mrf.mxu0
        %v1712 = vpop.f32.mrf.mxu0
        %v1713 = vadd.f32 %v1408, %v1712
        %v1714 = vpop.f32.mrf.mxu0
        %1715 = vmatprep.mubr.bf16.mxu0 0
        %1716 = vmatmul.mubr.bf16.gmra.mxu0 %v1533
        %v1717 = vpop.f32.mrf.mxu0
        %v1718 = vadd.f32 %v1413, %v1717
        %v1719 = vpop.f32.mrf.mxu0
        %v1720 = vpop.f32.mrf.mxu0
        %v1721 = vadd.f32 %v1416, %v1720
        %v1722 = vpop.f32.mrf.mxu0
        %1723 = vmatprep.mubr.bf16.mxu0 0
        %1724 = vmatmul.mubr.bf16.gmra.mxu0 %v1534
        %v1725 = vpop.f32.mrf.mxu0
        %v1726 = vadd.f32 %v1421, %v1725
        %v1727 = vpop.f32.mrf.mxu0
        %v1728 = vpop.f32.mrf.mxu0
        %v1729 = vadd.f32 %v1424, %v1728
        %v1730 = vpop.f32.mrf.mxu0
        %1731 = vmatprep.mubr.bf16.mxu0 0
        %1732 = vmatmul.mubr.bf16.gmra.mxu0 %v1535
        %v1733 = vpop.f32.mrf.mxu0
        %v1734 = vadd.f32 %v1429, %v1733
        %v1735 = vpop.f32.mrf.mxu0
        %v1736 = vpop.f32.mrf.mxu0
        %v1737 = vadd.f32 %v1432, %v1736
        %v1738 = vpop.f32.mrf.mxu0
        %1739 = vmatprep.mubr.bf16.mxu0 0
        %1740 = vmatmul.mubr.bf16.gmra.mxu0 %v1536
        %v1741 = vpop.f32.mrf.mxu0
        %v1742 = vadd.f32 %v1437, %v1741
        %v1743 = vpop.f32.mrf.mxu0
        %v1744 = vpop.f32.mrf.mxu0
        %v1745 = vadd.f32 %v1440, %v1744
        %v1746 = vpop.f32.mrf.mxu0
        %1747 = vmatprep.mubr.bf16.mxu0 0
        %1748 = vmatmul.mubr.bf16.gmra.mxu0 %v1537
        %v1749 = vpop.f32.mrf.mxu0
        %v1750 = vadd.f32 %v1445, %v1749
        %v1751 = vpop.f32.mrf.mxu0
        %v1752 = vpop.f32.mrf.mxu0
        %v1753 = vadd.f32 %v1448, %v1752
        %v1754 = vpop.f32.mrf.mxu0
        %1755 = vmatprep.mubr.bf16.mxu0 0
        %1756 = vmatmul.mubr.bf16.gmra.mxu0 %v1538
        %v1757 = vpop.f32.mrf.mxu0
        %v1758 = vadd.f32 %v1453, %v1757
        %v1759 = vpop.f32.mrf.mxu0
        %v1760 = vpop.f32.mrf.mxu0
        %v1761 = vadd.f32 %v1456, %v1760
        %v1762 = vpop.f32.mrf.mxu0
        %1763 = vdwg.mxu0
        %v1764 = vld [vmem:[#allocation2] sm:$0xe]
        %v1765 = vld [vmem:[#allocation2 + $0xc] sm:$0xe]
        %v1766 = vld [vmem:[#allocation2 + $0x18] sm:$0xe]
        %v1767 = vld [vmem:[#allocation2 + $0x24] sm:$0xe]
        %v1768 = vld [vmem:[#allocation2 + $0x30] sm:$0xe]
        %v1769 = vld [vmem:[#allocation2 + $0x3c] sm:$0xe]
        %v1770 = vld [vmem:[#allocation2 + $0x48] sm:$0xe]
        %v1771 = vld [vmem:[#allocation2 + $0x54] sm:$0xe]
        %v1772 = vld [vmem:[#allocation2 + $0x60] sm:$0xe]
        %v1773 = vld [vmem:[#allocation2 + $0x6c] sm:$0xe]
        %v1774 = vld [vmem:[#allocation2 + $0x78] sm:$0xe]
        %v1775 = vld [vmem:[#allocation2 + $0x84] sm:$0xe]
        %v1776 = vld [vmem:[#allocation2 + $0x90] sm:$0xe]
        %v1777 = vld [vmem:[#allocation2 + $0x9c] sm:$0xe]
        %v1778 = vld [vmem:[#allocation2 + $0xa8] sm:$0xe]
        %v1779 = vld [vmem:[#allocation2 + $0xb4] sm:$0xe]
        %vm1812 = vcmask 1042432
        %vm1813 = vcmask 1046532
        %vm1814 = vmor %vm1812, %vm1813
        %v1815 = vrot.slane %v1764, 5
        %v1816 = vrot.slane %v1815, 4
        %v1817 = vrot.slane %v720, 5
        %v1818 = vsel %vm1814, %v1816, %v1817
        %v1819 = vrot.slane %v1817, 4
        %v1820 = vrot.slane %v767, 5
        %v1821 = vsel %vm1814, %v1819, %v1820
        %v1822 = vrot.slane %v1765, 5
        %v1823 = vrot.slane %v1822, 4
        %v1824 = vrot.slane %v722, 5
        %v1825 = vsel %vm1814, %v1823, %v1824
        %v1826 = vrot.slane %v1824, 4
        %v1827 = vrot.slane %v768, 5
        %v1828 = vsel %vm1814, %v1826, %v1827
        %v1829 = vrot.slane %v1766, 5
        %v1830 = vrot.slane %v1829, 4
        %v1831 = vrot.slane %v724, 5
        %v1832 = vsel %vm1814, %v1830, %v1831
        %v1833 = vrot.slane %v1831, 4
        %v1834 = vrot.slane %v769, 5
        %v1835 = vsel %vm1814, %v1833, %v1834
        %v1836 = vrot.slane %v1767, 5
        %v1837 = vrot.slane %v1836, 4
        %v1838 = vrot.slane %v726, 5
        %v1839 = vsel %vm1814, %v1837, %v1838
        %v1840 = vrot.slane %v1838, 4
        %v1841 = vrot.slane %v770, 5
        %v1842 = vsel %vm1814, %v1840, %v1841
        %v1843 = vrot.slane %v1768, 5
        %v1844 = vrot.slane %v1843, 4
        %v1845 = vrot.slane %v728, 5
        %v1846 = vsel %vm1814, %v1844, %v1845
        %v1847 = vrot.slane %v1845, 4
        %v1848 = vrot.slane %v771, 5
        %v1849 = vsel %vm1814, %v1847, %v1848
        %v1850 = vrot.slane %v1769, 5
        %v1851 = vrot.slane %v1850, 4
        %v1852 = vrot.slane %v730, 5
        %v1853 = vsel %vm1814, %v1851, %v1852
        %v1854 = vrot.slane %v1852, 4
        %v1855 = vrot.slane %v772, 5
        %v1856 = vsel %vm1814, %v1854, %v1855
        %v1857 = vrot.slane %v1770, 5
        %v1858 = vrot.slane %v1857, 4
        %v1859 = vrot.slane %v732, 5
        %v1860 = vsel %vm1814, %v1858, %v1859
        %v1861 = vrot.slane %v1859, 4
        %v1862 = vrot.slane %v773, 5
        %v1863 = vsel %vm1814, %v1861, %v1862
        %v1864 = vrot.slane %v1771, 5
        %v1865 = vrot.slane %v1864, 4
        %v1866 = vrot.slane %v734, 5
        %v1867 = vsel %vm1814, %v1865, %v1866
        %v1868 = vrot.slane %v1866, 4
        %v1869 = vrot.slane %v774, 5
        %v1870 = vsel %vm1814, %v1868, %v1869
        %v1871 = vrot.slane %v1772, 5
        %v1872 = vrot.slane %v1871, 4
        %v1873 = vrot.slane %v736, 5
        %v1874 = vsel %vm1814, %v1872, %v1873
        %v1875 = vrot.slane %v1873, 4
        %v1876 = vrot.slane %v775, 5
        %v1877 = vsel %vm1814, %v1875, %v1876
        %v1878 = vrot.slane %v1773, 5
        %v1879 = vrot.slane %v1878, 4
        %v1880 = vrot.slane %v738, 5
        %v1881 = vsel %vm1814, %v1879, %v1880
        %v1882 = vrot.slane %v1880, 4
        %v1883 = vrot.slane %v776, 5
        %v1884 = vsel %vm1814, %v1882, %v1883
        %v1885 = vrot.slane %v1774, 5
        %v1886 = vrot.slane %v1885, 4
        %v1887 = vrot.slane %v740, 5
        %v1888 = vsel %vm1814, %v1886, %v1887
        %v1889 = vrot.slane %v1887, 4
        %v1890 = vrot.slane %v777, 5
        %v1891 = vsel %vm1814, %v1889, %v1890
        %v1892 = vrot.slane %v1775, 5
        %v1893 = vrot.slane %v1892, 4
        %v1894 = vrot.slane %v742, 5
        %v1895 = vsel %vm1814, %v1893, %v1894
        %v1896 = vrot.slane %v1894, 4
        %v1897 = vrot.slane %v778, 5
        %v1898 = vsel %vm1814, %v1896, %v1897
        %v1899 = vrot.slane %v1776, 5
        %v1900 = vrot.slane %v1899, 4
        %v1901 = vrot.slane %v744, 5
        %v1902 = vsel %vm1814, %v1900, %v1901
        %v1903 = vrot.slane %v1901, 4
        %v1904 = vrot.slane %v779, 5
        %v1905 = vsel %vm1814, %v1903, %v1904
        %v1906 = vrot.slane %v1777, 5
        %v1907 = vrot.slane %v1906, 4
        %v1908 = vrot.slane %v746, 5
        %v1909 = vsel %vm1814, %v1907, %v1908
        %v1910 = vrot.slane %v1908, 4
        %v1911 = vrot.slane %v780, 5
        %v1912 = vsel %vm1814, %v1910, %v1911
        %v1913 = vrot.slane %v1778, 5
        %v1914 = vrot.slane %v1913, 4
        %v1915 = vrot.slane %v748, 5
        %v1916 = vsel %vm1814, %v1914, %v1915
        %v1917 = vrot.slane %v1915, 4
        %v1918 = vrot.slane %v781, 5
        %v1919 = vsel %vm1814, %v1917, %v1918
        %v1920 = vrot.slane %v1779, 5
        %v1921 = vrot.slane %v1920, 4
        %v1922 = vrot.slane %v750, 5
        %v1923 = vsel %vm1814, %v1921, %v1922
        %v1924 = vrot.slane %v1922, 4
        %v1925 = vrot.slane %v782, 5
        %v1926 = vsel %vm1814, %v1924, %v1925
        %v1927 = vld [vmem:[%s1 + $0x80] sm:$0xf]
        %v1928 = vld [vmem:[%s1 + $0x84] sm:$0xf]
        %v1929 = vld [vmem:[%s1 + $0x88] sm:$0xf]
        %v1930 = vld [vmem:[%s1 + $0x8c] sm:$0xf]
        %v1931 = vld [vmem:[%s1 + $0x90] sm:$0xf]
        %v1932 = vld [vmem:[%s1 + $0x94] sm:$0xf]
        %v1933 = vld [vmem:[%s1 + $0x98] sm:$0xf]
        %v1934 = vld [vmem:[%s1 + $0x9c] sm:$0xf]
        %v1935 = vld [vmem:[%s1 + $0xa0] sm:$0xf]
        %v1936 = vld [vmem:[%s1 + $0xa4] sm:$0xf]
        %v1937 = vld [vmem:[%s1 + $0xa8] sm:$0xf]
        %v1938 = vld [vmem:[%s1 + $0xac] sm:$0xf]
        %v1939 = vld [vmem:[%s1 + $0xb0] sm:$0xf]
        %v1940 = vld [vmem:[%s1 + $0xb4] sm:$0xf]
        %v1941 = vld [vmem:[%s1 + $0xb8] sm:$0xf]
        %v1942 = vld [vmem:[%s1 + $0xbc] sm:$0xf]
        %v1943 = vunpack.c.l.b16 %v1818
        %v1944 = vunpack.c.l.b16 %v1821
        %v1945 = vunpack.c.l.b16 %v1825
        %v1946 = vunpack.c.l.b16 %v1828
        %v1947 = vunpack.c.l.b16 %v1832
        %v1948 = vunpack.c.l.b16 %v1835
        %v1949 = vunpack.c.l.b16 %v1839
        %v1950 = vunpack.c.l.b16 %v1842
        %v1951 = vunpack.c.l.b16 %v1846
        %v1952 = vunpack.c.l.b16 %v1849
        %v1953 = vunpack.c.l.b16 %v1853
        %v1954 = vunpack.c.l.b16 %v1856
        %v1955 = vunpack.c.l.b16 %v1860
        %v1956 = vunpack.c.l.b16 %v1863
        %v1957 = vunpack.c.l.b16 %v1867
        %v1958 = vunpack.c.l.b16 %v1870
        %v1959 = vunpack.c.l.b16 %v1874
        %v1960 = vunpack.c.l.b16 %v1877
        %v1961 = vunpack.c.l.b16 %v1881
        %v1962 = vunpack.c.l.b16 %v1884
        %v1963 = vunpack.c.l.b16 %v1888
        %v1964 = vunpack.c.l.b16 %v1891
        %v1965 = vunpack.c.l.b16 %v1895
        %v1966 = vunpack.c.l.b16 %v1898
        %v1967 = vunpack.c.l.b16 %v1902
        %v1968 = vunpack.c.l.b16 %v1905
        %v1969 = vunpack.c.l.b16 %v1909
        %v1970 = vunpack.c.l.b16 %v1912
        %v1971 = vunpack.c.l.b16 %v1916
        %v1972 = vunpack.c.l.b16 %v1919
        %v1973 = vunpack.c.l.b16 %v1923
        %v1974 = vunpack.c.l.b16 %v1926
        %v1975 = vpack.c.b16 %v1944, %v1943
        %v1976 = vpack.c.b16 %v1946, %v1945
        %v1977 = vpack.c.b16 %v1948, %v1947
        %v1978 = vpack.c.b16 %v1950, %v1949
        %v1979 = vpack.c.b16 %v1952, %v1951
        %v1980 = vpack.c.b16 %v1954, %v1953
        %v1981 = vpack.c.b16 %v1956, %v1955
        %v1982 = vpack.c.b16 %v1958, %v1957
        %v1983 = vpack.c.b16 %v1960, %v1959
        %v1984 = vpack.c.b16 %v1962, %v1961
        %v1985 = vpack.c.b16 %v1964, %v1963
        %v1986 = vpack.c.b16 %v1966, %v1965
        %v1987 = vpack.c.b16 %v1968, %v1967
        %v1988 = vpack.c.b16 %v1970, %v1969
        %v1989 = vpack.c.b16 %v1972, %v1971
        %v1990 = vpack.c.b16 %v1974, %v1973
        %v2023 = vunpack.c.l.b16 %v1927
        %v2024 = vunpack.c.l.b16 %v1928
        %v2025 = vunpack.c.l.b16 %v1929
        %v2026 = vunpack.c.l.b16 %v1930
        %v2027 = vunpack.c.l.b16 %v1931
        %v2028 = vunpack.c.l.b16 %v1932
        %v2029 = vunpack.c.l.b16 %v1933
        %v2030 = vunpack.c.l.b16 %v1934
        %v2031 = vunpack.c.l.b16 %v1935
        %v2032 = vunpack.c.l.b16 %v1936
        %v2033 = vunpack.c.l.b16 %v1937
        %v2034 = vunpack.c.l.b16 %v1938
        %v2035 = vunpack.c.l.b16 %v1939
        %v2036 = vunpack.c.l.b16 %v1940
        %v2037 = vunpack.c.l.b16 %v1941
        %v2038 = vunpack.c.l.b16 %v1942
        %v2039 = vpack.c.b16 %v2024, %v2023
        %v2040 = vpack.c.b16 %v2026, %v2025
        %v2041 = vpack.c.b16 %v2028, %v2027
        %v2042 = vpack.c.b16 %v2030, %v2029
        %v2043 = vpack.c.b16 %v2032, %v2031
        %v2044 = vpack.c.b16 %v2034, %v2033
        %v2045 = vpack.c.b16 %v2036, %v2035
        %v2046 = vpack.c.b16 %v2038, %v2037
        %2055 = vmatprep.subr.bf16.mxu0 0
        %2056 = vmatpush1.bf16.msra.mxu0 %v2046
        %2057 = vmatprep.subr.bf16.mxu0 0
        %2058 = vmatpush1.bf16.msra.mxu0 %v2045
        %2059 = vmatprep.subr.bf16.mxu0 0
        %2060 = vmatpush1.bf16.msra.mxu0 %v2044
        %2061 = vmatprep.subr.bf16.mxu0 0
        %2062 = vmatpush1.bf16.msra.mxu0 %v2043
        %2063 = vmatprep.subr.bf16.mxu0 0
        %2064 = vmatpush1.bf16.msra.mxu0 %v2042
        %2065 = vmatprep.subr.bf16.mxu0 0
        %2066 = vmatpush1.bf16.msra.mxu0 %v2041
        %2067 = vmatprep.subr.bf16.mxu0 0
        %2068 = vmatpush1.bf16.msra.mxu0 %v2040
        %2069 = vmatprep.subr.bf16.mxu0 0
        %2070 = vmatpush1.bf16.msra.mxu0 %v2039
        %2071 = vmatprep.subr.bf16.mxu0 0
        %2072 = vmatpush2.bf16.msra.mxu0 0
        %2073 = vmatprep.subr.bf16.mxu0 0
        %2074 = vmatpush2.bf16.msra.mxu0 0
        %2075 = vmatprep.subr.bf16.mxu0 0
        %2076 = vmatpush2.bf16.msra.mxu0 0
        %2077 = vmatprep.subr.bf16.mxu0 0
        %2078 = vmatpush2.bf16.msra.mxu0 0
        %2079 = vmatprep.subr.bf16.mxu0 0
        %2080 = vmatpush2.bf16.msra.mxu0 0
        %2081 = vmatprep.subr.bf16.mxu0 0
        %2082 = vmatpush2.bf16.msra.mxu0 0
        %2083 = vmatprep.subr.bf16.mxu0 0
        %2084 = vmatpush2.bf16.msra.mxu0 0
        %2085 = vmatprep.subr.bf16.mxu0 0
        %2086 = vmatpush2.bf16.msra.mxu0 0
        %2087 = vmatprep.mubr.bf16.mxu0 0
        %2088 = vmatmul.mubr.bf16.gmra.mxu0 %v1975
        %v2089 = vpop.f32.mrf.mxu0
        %v2090 = vadd.f32 0.0, %v2089
        %v2091 = vpop.f32.mrf.mxu0
        %v2092 = vpop.f32.mrf.mxu0
        %v2093 = vadd.f32 0.0, %v2092
        %v2094 = vpop.f32.mrf.mxu0
        %2095 = vmatprep.mubr.bf16.mxu0 0
        %2096 = vmatmul.mubr.bf16.gmra.mxu0 %v1976
        %v2097 = vpop.f32.mrf.mxu0
        %v2098 = vadd.f32 0.0, %v2097
        %v2099 = vpop.f32.mrf.mxu0
        %v2100 = vpop.f32.mrf.mxu0
        %v2101 = vadd.f32 0.0, %v2100
        %v2102 = vpop.f32.mrf.mxu0
        %2103 = vmatprep.mubr.bf16.mxu0 0
        %2104 = vmatmul.mubr.bf16.gmra.mxu0 %v1977
        %v2105 = vpop.f32.mrf.mxu0
        %v2106 = vadd.f32 0.0, %v2105
        %v2107 = vpop.f32.mrf.mxu0
        %v2108 = vpop.f32.mrf.mxu0
        %v2109 = vadd.f32 0.0, %v2108
        %v2110 = vpop.f32.mrf.mxu0
        %2111 = vmatprep.mubr.bf16.mxu0 0
        %2112 = vmatmul.mubr.bf16.gmra.mxu0 %v1978
        %v2113 = vpop.f32.mrf.mxu0
        %v2114 = vadd.f32 0.0, %v2113
        %v2115 = vpop.f32.mrf.mxu0
        %v2116 = vpop.f32.mrf.mxu0
        %v2117 = vadd.f32 0.0, %v2116
        %v2118 = vpop.f32.mrf.mxu0
        %2119 = vmatprep.mubr.bf16.mxu0 0
        %2120 = vmatmul.mubr.bf16.gmra.mxu0 %v1979
        %v2121 = vpop.f32.mrf.mxu0
        %v2122 = vadd.f32 0.0, %v2121
        %v2123 = vpop.f32.mrf.mxu0
        %v2124 = vpop.f32.mrf.mxu0
        %v2125 = vadd.f32 0.0, %v2124
        %v2126 = vpop.f32.mrf.mxu0
        %2127 = vmatprep.mubr.bf16.mxu0 0
        %2128 = vmatmul.mubr.bf16.gmra.mxu0 %v1980
        %v2129 = vpop.f32.mrf.mxu0
        %v2130 = vadd.f32 0.0, %v2129
        %v2131 = vpop.f32.mrf.mxu0
        %v2132 = vpop.f32.mrf.mxu0
        %v2133 = vadd.f32 0.0, %v2132
        %v2134 = vpop.f32.mrf.mxu0
        %2135 = vmatprep.mubr.bf16.mxu0 0
        %2136 = vmatmul.mubr.bf16.gmra.mxu0 %v1981
        %v2137 = vpop.f32.mrf.mxu0
        %v2138 = vadd.f32 0.0, %v2137
        %v2139 = vpop.f32.mrf.mxu0
        %v2140 = vpop.f32.mrf.mxu0
        %v2141 = vadd.f32 0.0, %v2140
        %v2142 = vpop.f32.mrf.mxu0
        %2143 = vmatprep.mubr.bf16.mxu0 0
        %2144 = vmatmul.mubr.bf16.gmra.mxu0 %v1982
        %v2145 = vpop.f32.mrf.mxu0
        %v2146 = vadd.f32 0.0, %v2145
        %v2147 = vpop.f32.mrf.mxu0
        %v2148 = vpop.f32.mrf.mxu0
        %v2149 = vadd.f32 0.0, %v2148
        %v2150 = vpop.f32.mrf.mxu0
        %2151 = vmatprep.mubr.bf16.mxu0 0
        %2152 = vmatmul.mubr.bf16.gmra.mxu0 %v1983
        %v2153 = vpop.f32.mrf.mxu0
        %v2154 = vadd.f32 0.0, %v2153
        %v2155 = vpop.f32.mrf.mxu0
        %v2156 = vpop.f32.mrf.mxu0
        %v2157 = vadd.f32 0.0, %v2156
        %v2158 = vpop.f32.mrf.mxu0
        %2159 = vmatprep.mubr.bf16.mxu0 0
        %2160 = vmatmul.mubr.bf16.gmra.mxu0 %v1984
        %v2161 = vpop.f32.mrf.mxu0
        %v2162 = vadd.f32 0.0, %v2161
        %v2163 = vpop.f32.mrf.mxu0
        %v2164 = vpop.f32.mrf.mxu0
        %v2165 = vadd.f32 0.0, %v2164
        %v2166 = vpop.f32.mrf.mxu0
        %2167 = vmatprep.mubr.bf16.mxu0 0
        %2168 = vmatmul.mubr.bf16.gmra.mxu0 %v1985
        %v2169 = vpop.f32.mrf.mxu0
        %v2170 = vadd.f32 0.0, %v2169
        %v2171 = vpop.f32.mrf.mxu0
        %v2172 = vpop.f32.mrf.mxu0
        %v2173 = vadd.f32 0.0, %v2172
        %v2174 = vpop.f32.mrf.mxu0
        %2175 = vmatprep.mubr.bf16.mxu0 0
        %2176 = vmatmul.mubr.bf16.gmra.mxu0 %v1986
        %v2177 = vpop.f32.mrf.mxu0
        %v2178 = vadd.f32 0.0, %v2177
        %v2179 = vpop.f32.mrf.mxu0
        %v2180 = vpop.f32.mrf.mxu0
        %v2181 = vadd.f32 0.0, %v2180
        %v2182 = vpop.f32.mrf.mxu0
        %2183 = vmatprep.mubr.bf16.mxu0 0
        %2184 = vmatmul.mubr.bf16.gmra.mxu0 %v1987
        %v2185 = vpop.f32.mrf.mxu0
        %v2186 = vadd.f32 0.0, %v2185
        %v2187 = vpop.f32.mrf.mxu0
        %v2188 = vpop.f32.mrf.mxu0
        %v2189 = vadd.f32 0.0, %v2188
        %v2190 = vpop.f32.mrf.mxu0
        %2191 = vmatprep.mubr.bf16.mxu0 0
        %2192 = vmatmul.mubr.bf16.gmra.mxu0 %v1988
        %v2193 = vpop.f32.mrf.mxu0
        %v2194 = vadd.f32 0.0, %v2193
        %v2195 = vpop.f32.mrf.mxu0
        %v2196 = vpop.f32.mrf.mxu0
        %v2197 = vadd.f32 0.0, %v2196
        %v2198 = vpop.f32.mrf.mxu0
        %2199 = vmatprep.mubr.bf16.mxu0 0
        %2200 = vmatmul.mubr.bf16.gmra.mxu0 %v1989
        %v2201 = vpop.f32.mrf.mxu0
        %v2202 = vadd.f32 0.0, %v2201
        %v2203 = vpop.f32.mrf.mxu0
        %v2204 = vpop.f32.mrf.mxu0
        %v2205 = vadd.f32 0.0, %v2204
        %v2206 = vpop.f32.mrf.mxu0
        %2207 = vmatprep.mubr.bf16.mxu0 0
        %2208 = vmatmul.mubr.bf16.gmra.mxu0 %v1990
        %v2209 = vpop.f32.mrf.mxu0
        %v2210 = vadd.f32 0.0, %v2209
        %v2211 = vpop.f32.mrf.mxu0
        %v2212 = vpop.f32.mrf.mxu0
        %v2213 = vadd.f32 0.0, %v2212
        %v2214 = vpop.f32.mrf.mxu0
        %2215 = vdwg.mxu0
        %v2216 = vadd.f32 %v1638, %v2090
        %v2217 = vadd.f32 %v1641, %v2093
        %v2218 = vadd.f32 %v1646, %v2098
        %v2219 = vadd.f32 %v1649, %v2101
        %v2220 = vadd.f32 %v1654, %v2106
        %v2221 = vadd.f32 %v1657, %v2109
        %v2222 = vadd.f32 %v1662, %v2114
        %v2223 = vadd.f32 %v1665, %v2117
        %v2224 = vadd.f32 %v1670, %v2122
        %v2225 = vadd.f32 %v1673, %v2125
        %v2226 = vadd.f32 %v1678, %v2130
        %v2227 = vadd.f32 %v1681, %v2133
        %v2228 = vadd.f32 %v1686, %v2138
        %v2229 = vadd.f32 %v1689, %v2141
        %v2230 = vadd.f32 %v1694, %v2146
        %v2231 = vadd.f32 %v1697, %v2149
        %v2232 = vadd.f32 %v1702, %v2154
        %v2233 = vadd.f32 %v1705, %v2157
        %v2234 = vadd.f32 %v1710, %v2162
        %v2235 = vadd.f32 %v1713, %v2165
        %v2236 = vadd.f32 %v1718, %v2170
        %v2237 = vadd.f32 %v1721, %v2173
        %v2238 = vadd.f32 %v1726, %v2178
        %v2239 = vadd.f32 %v1729, %v2181
        %v2240 = vadd.f32 %v1734, %v2186
        %v2241 = vadd.f32 %v1737, %v2189
        %v2242 = vadd.f32 %v1742, %v2194
        %v2243 = vadd.f32 %v1745, %v2197
        %v2244 = vadd.f32 %v1750, %v2202
        %v2245 = vadd.f32 %v1753, %v2205
        %v2246 = vadd.f32 %v1758, %v2210
        %v2247 = vadd.f32 %v1761, %v2213
        %v2248 = vld [vmem:[%s601] sm:$0xf]
        %v2249 = vld [vmem:[%s601 + $0x4] sm:$0xf]
        %v2250 = vld [vmem:[%s601 + $0xc] sm:$0xf]
        %v2251 = vld [vmem:[%s601 + $0x10] sm:$0xf]
        %v2252 = vld [vmem:[%s601 + $0x18] sm:$0xf]
        %v2253 = vld [vmem:[%s601 + $0x1c] sm:$0xf]
        %v2254 = vld [vmem:[%s601 + $0x24] sm:$0xf]
        %v2255 = vld [vmem:[%s601 + $0x28] sm:$0xf]
        %v2256 = vld [vmem:[%s601 + $0x30] sm:$0xf]
        %v2257 = vld [vmem:[%s601 + $0x34] sm:$0xf]
        %v2258 = vld [vmem:[%s601 + $0x3c] sm:$0xf]
        %v2259 = vld [vmem:[%s601 + $0x40] sm:$0xf]
        %v2260 = vld [vmem:[%s601 + $0x48] sm:$0xf]
        %v2261 = vld [vmem:[%s601 + $0x4c] sm:$0xf]
        %v2262 = vld [vmem:[%s601 + $0x54] sm:$0xf]
        %v2263 = vld [vmem:[%s601 + $0x58] sm:$0xf]
        %v2264 = vld [vmem:[%s601 + $0x60] sm:$0xf]
        %v2265 = vld [vmem:[%s601 + $0x64] sm:$0xf]
        %v2266 = vld [vmem:[%s601 + $0x6c] sm:$0xf]
        %v2267 = vld [vmem:[%s601 + $0x70] sm:$0xf]
        %v2268 = vld [vmem:[%s601 + $0x78] sm:$0xf]
        %v2269 = vld [vmem:[%s601 + $0x7c] sm:$0xf]
        %v2270 = vld [vmem:[%s601 + $0x84] sm:$0xf]
        %v2271 = vld [vmem:[%s601 + $0x88] sm:$0xf]
        %v2272 = vld [vmem:[%s601 + $0x90] sm:$0xf]
        %v2273 = vld [vmem:[%s601 + $0x94] sm:$0xf]
        %v2274 = vld [vmem:[%s601 + $0x9c] sm:$0xf]
        %v2275 = vld [vmem:[%s601 + $0xa0] sm:$0xf]
        %v2276 = vld [vmem:[%s601 + $0xa8] sm:$0xf]
        %v2277 = vld [vmem:[%s601 + $0xac] sm:$0xf]
        %v2278 = vld [vmem:[%s601 + $0xb4] sm:$0xf]
        %v2279 = vld [vmem:[%s601 + $0xb8] sm:$0xf]
        %v2280 = vld [vmem:[%s1 + $0xc0] sm:$0xf]
        %v2281 = vld [vmem:[%s1 + $0xc4] sm:$0xf]
        %v2282 = vld [vmem:[%s1 + $0xc8] sm:$0xf]
        %v2283 = vld [vmem:[%s1 + $0xcc] sm:$0xf]
        %v2284 = vld [vmem:[%s1 + $0xd0] sm:$0xf]
        %v2285 = vld [vmem:[%s1 + $0xd4] sm:$0xf]
        %v2286 = vld [vmem:[%s1 + $0xd8] sm:$0xf]
        %v2287 = vld [vmem:[%s1 + $0xdc] sm:$0xf]
        %v2288 = vld [vmem:[%s1 + $0xe0] sm:$0xf]
        %v2289 = vld [vmem:[%s1 + $0xe4] sm:$0xf]
        %v2290 = vld [vmem:[%s1 + $0xe8] sm:$0xf]
        %v2291 = vld [vmem:[%s1 + $0xec] sm:$0xf]
        %v2292 = vld [vmem:[%s1 + $0xf0] sm:$0xf]
        %v2293 = vld [vmem:[%s1 + $0xf4] sm:$0xf]
        %v2294 = vld [vmem:[%s1 + $0xf8] sm:$0xf]
        %v2295 = vld [vmem:[%s1 + $0xfc] sm:$0xf]
        %v2328 = vunpack.c.l.b16 %v2248
        %v2329 = vunpack.c.l.b16 %v2249
        %v2330 = vunpack.c.l.b16 %v2250
        %v2331 = vunpack.c.l.b16 %v2251
        %v2332 = vunpack.c.l.b16 %v2252
        %v2333 = vunpack.c.l.b16 %v2253
        %v2334 = vunpack.c.l.b16 %v2254
        %v2335 = vunpack.c.l.b16 %v2255
        %v2336 = vunpack.c.l.b16 %v2256
        %v2337 = vunpack.c.l.b16 %v2257
        %v2338 = vunpack.c.l.b16 %v2258
        %v2339 = vunpack.c.l.b16 %v2259
        %v2340 = vunpack.c.l.b16 %v2260
        %v2341 = vunpack.c.l.b16 %v2261
        %v2342 = vunpack.c.l.b16 %v2262
        %v2343 = vunpack.c.l.b16 %v2263
        %v2344 = vunpack.c.l.b16 %v2264
        %v2345 = vunpack.c.l.b16 %v2265
        %v2346 = vunpack.c.l.b16 %v2266
        %v2347 = vunpack.c.l.b16 %v2267
        %v2348 = vunpack.c.l.b16 %v2268
        %v2349 = vunpack.c.l.b16 %v2269
        %v2350 = vunpack.c.l.b16 %v2270
        %v2351 = vunpack.c.l.b16 %v2271
        %v2352 = vunpack.c.l.b16 %v2272
        %v2353 = vunpack.c.l.b16 %v2273
        %v2354 = vunpack.c.l.b16 %v2274
        %v2355 = vunpack.c.l.b16 %v2275
        %v2356 = vunpack.c.l.b16 %v2276
        %v2357 = vunpack.c.l.b16 %v2277
        %v2358 = vunpack.c.l.b16 %v2278
        %v2359 = vunpack.c.l.b16 %v2279
        %v2360 = vpack.c.b16 %v2329, %v2328
        %v2361 = vpack.c.b16 %v2331, %v2330
        %v2362 = vpack.c.b16 %v2333, %v2332
        %v2363 = vpack.c.b16 %v2335, %v2334
        %v2364 = vpack.c.b16 %v2337, %v2336
        %v2365 = vpack.c.b16 %v2339, %v2338
        %v2366 = vpack.c.b16 %v2341, %v2340
        %v2367 = vpack.c.b16 %v2343, %v2342
        %v2368 = vpack.c.b16 %v2345, %v2344
        %v2369 = vpack.c.b16 %v2347, %v2346
        %v2370 = vpack.c.b16 %v2349, %v2348
        %v2371 = vpack.c.b16 %v2351, %v2350
        %v2372 = vpack.c.b16 %v2353, %v2352
        %v2373 = vpack.c.b16 %v2355, %v2354
        %v2374 = vpack.c.b16 %v2357, %v2356
        %v2375 = vpack.c.b16 %v2359, %v2358
        %v2408 = vunpack.c.l.b16 %v2280
        %v2409 = vunpack.c.l.b16 %v2281
        %v2410 = vunpack.c.l.b16 %v2282
        %v2411 = vunpack.c.l.b16 %v2283
        %v2412 = vunpack.c.l.b16 %v2284
        %v2413 = vunpack.c.l.b16 %v2285
        %v2414 = vunpack.c.l.b16 %v2286
        %v2415 = vunpack.c.l.b16 %v2287
        %v2416 = vunpack.c.l.b16 %v2288
        %v2417 = vunpack.c.l.b16 %v2289
        %v2418 = vunpack.c.l.b16 %v2290
        %v2419 = vunpack.c.l.b16 %v2291
        %v2420 = vunpack.c.l.b16 %v2292
        %v2421 = vunpack.c.l.b16 %v2293
        %v2422 = vunpack.c.l.b16 %v2294
        %v2423 = vunpack.c.l.b16 %v2295
        %v2424 = vpack.c.b16 %v2409, %v2408
        %v2425 = vpack.c.b16 %v2411, %v2410
        %v2426 = vpack.c.b16 %v2413, %v2412
        %v2427 = vpack.c.b16 %v2415, %v2414
        %v2428 = vpack.c.b16 %v2417, %v2416
        %v2429 = vpack.c.b16 %v2419, %v2418
        %v2430 = vpack.c.b16 %v2421, %v2420
        %v2431 = vpack.c.b16 %v2423, %v2422
        %2440 = vmatprep.subr.bf16.mxu0 0
        %2441 = vmatpush1.bf16.msra.mxu0 %v2431
        %2442 = vmatprep.subr.bf16.mxu0 0
        %2443 = vmatpush1.bf16.msra.mxu0 %v2430
        %2444 = vmatprep.subr.bf16.mxu0 0
        %2445 = vmatpush1.bf16.msra.mxu0 %v2429
        %2446 = vmatprep.subr.bf16.mxu0 0
        %2447 = vmatpush1.bf16.msra.mxu0 %v2428
        %2448 = vmatprep.subr.bf16.mxu0 0
        %2449 = vmatpush1.bf16.msra.mxu0 %v2427
        %2450 = vmatprep.subr.bf16.mxu0 0
        %2451 = vmatpush1.bf16.msra.mxu0 %v2426
        %2452 = vmatprep.subr.bf16.mxu0 0
        %2453 = vmatpush1.bf16.msra.mxu0 %v2425
        %2454 = vmatprep.subr.bf16.mxu0 0
        %2455 = vmatpush1.bf16.msra.mxu0 %v2424
        %2456 = vmatprep.subr.bf16.mxu0 0
        %2457 = vmatpush2.bf16.msra.mxu0 0
        %2458 = vmatprep.subr.bf16.mxu0 0
        %2459 = vmatpush2.bf16.msra.mxu0 0
        %2460 = vmatprep.subr.bf16.mxu0 0
        %2461 = vmatpush2.bf16.msra.mxu0 0
        %2462 = vmatprep.subr.bf16.mxu0 0
        %2463 = vmatpush2.bf16.msra.mxu0 0
        %2464 = vmatprep.subr.bf16.mxu0 0
        %2465 = vmatpush2.bf16.msra.mxu0 0
        %2466 = vmatprep.subr.bf16.mxu0 0
        %2467 = vmatpush2.bf16.msra.mxu0 0
        %2468 = vmatprep.subr.bf16.mxu0 0
        %2469 = vmatpush2.bf16.msra.mxu0 0
        %2470 = vmatprep.subr.bf16.mxu0 0
        %2471 = vmatpush2.bf16.msra.mxu0 0
        %2472 = vmatprep.mubr.bf16.mxu0 0
        %2473 = vmatmul.mubr.bf16.gmra.mxu0 %v2360
        %v2474 = vpop.f32.mrf.mxu0
        %v2475 = vadd.f32 0.0, %v2474
        %v2476 = vpop.f32.mrf.mxu0
        %v2477 = vpop.f32.mrf.mxu0
        %v2478 = vadd.f32 0.0, %v2477
        %v2479 = vpop.f32.mrf.mxu0
        %2480 = vmatprep.mubr.bf16.mxu0 0
        %2481 = vmatmul.mubr.bf16.gmra.mxu0 %v2361
        %v2482 = vpop.f32.mrf.mxu0
        %v2483 = vadd.f32 0.0, %v2482
        %v2484 = vpop.f32.mrf.mxu0
        %v2485 = vpop.f32.mrf.mxu0
        %v2486 = vadd.f32 0.0, %v2485
        %v2487 = vpop.f32.mrf.mxu0
        %2488 = vmatprep.mubr.bf16.mxu0 0
        %2489 = vmatmul.mubr.bf16.gmra.mxu0 %v2362
        %v2490 = vpop.f32.mrf.mxu0
        %v2491 = vadd.f32 0.0, %v2490
        %v2492 = vpop.f32.mrf.mxu0
        %v2493 = vpop.f32.mrf.mxu0
        %v2494 = vadd.f32 0.0, %v2493
        %v2495 = vpop.f32.mrf.mxu0
        %2496 = vmatprep.mubr.bf16.mxu0 0
        %2497 = vmatmul.mubr.bf16.gmra.mxu0 %v2363
        %v2498 = vpop.f32.mrf.mxu0
        %v2499 = vadd.f32 0.0, %v2498
        %v2500 = vpop.f32.mrf.mxu0
        %v2501 = vpop.f32.mrf.mxu0
        %v2502 = vadd.f32 0.0, %v2501
        %v2503 = vpop.f32.mrf.mxu0
        %2504 = vmatprep.mubr.bf16.mxu0 0
        %2505 = vmatmul.mubr.bf16.gmra.mxu0 %v2364
        %v2506 = vpop.f32.mrf.mxu0
        %v2507 = vadd.f32 0.0, %v2506
        %v2508 = vpop.f32.mrf.mxu0
        %v2509 = vpop.f32.mrf.mxu0
        %v2510 = vadd.f32 0.0, %v2509
        %v2511 = vpop.f32.mrf.mxu0
        %2512 = vmatprep.mubr.bf16.mxu0 0
        %2513 = vmatmul.mubr.bf16.gmra.mxu0 %v2365
        %v2514 = vpop.f32.mrf.mxu0
        %v2515 = vadd.f32 0.0, %v2514
        %v2516 = vpop.f32.mrf.mxu0
        %v2517 = vpop.f32.mrf.mxu0
        %v2518 = vadd.f32 0.0, %v2517
        %v2519 = vpop.f32.mrf.mxu0
        %2520 = vmatprep.mubr.bf16.mxu0 0
        %2521 = vmatmul.mubr.bf16.gmra.mxu0 %v2366
        %v2522 = vpop.f32.mrf.mxu0
        %v2523 = vadd.f32 0.0, %v2522
        %v2524 = vpop.f32.mrf.mxu0
        %v2525 = vpop.f32.mrf.mxu0
        %v2526 = vadd.f32 0.0, %v2525
        %v2527 = vpop.f32.mrf.mxu0
        %2528 = vmatprep.mubr.bf16.mxu0 0
        %2529 = vmatmul.mubr.bf16.gmra.mxu0 %v2367
        %v2530 = vpop.f32.mrf.mxu0
        %v2531 = vadd.f32 0.0, %v2530
        %v2532 = vpop.f32.mrf.mxu0
        %v2533 = vpop.f32.mrf.mxu0
        %v2534 = vadd.f32 0.0, %v2533
        %v2535 = vpop.f32.mrf.mxu0
        %2536 = vmatprep.mubr.bf16.mxu0 0
        %2537 = vmatmul.mubr.bf16.gmra.mxu0 %v2368
        %v2538 = vpop.f32.mrf.mxu0
        %v2539 = vadd.f32 0.0, %v2538
        %v2540 = vpop.f32.mrf.mxu0
        %v2541 = vpop.f32.mrf.mxu0
        %v2542 = vadd.f32 0.0, %v2541
        %v2543 = vpop.f32.mrf.mxu0
        %2544 = vmatprep.mubr.bf16.mxu0 0
        %2545 = vmatmul.mubr.bf16.gmra.mxu0 %v2369
        %v2546 = vpop.f32.mrf.mxu0
        %v2547 = vadd.f32 0.0, %v2546
        %v2548 = vpop.f32.mrf.mxu0
        %v2549 = vpop.f32.mrf.mxu0
        %v2550 = vadd.f32 0.0, %v2549
        %v2551 = vpop.f32.mrf.mxu0
        %2552 = vmatprep.mubr.bf16.mxu0 0
        %2553 = vmatmul.mubr.bf16.gmra.mxu0 %v2370
        %v2554 = vpop.f32.mrf.mxu0
        %v2555 = vadd.f32 0.0, %v2554
        %v2556 = vpop.f32.mrf.mxu0
        %v2557 = vpop.f32.mrf.mxu0
        %v2558 = vadd.f32 0.0, %v2557
        %v2559 = vpop.f32.mrf.mxu0
        %2560 = vmatprep.mubr.bf16.mxu0 0
        %2561 = vmatmul.mubr.bf16.gmra.mxu0 %v2371
        %v2562 = vpop.f32.mrf.mxu0
        %v2563 = vadd.f32 0.0, %v2562
        %v2564 = vpop.f32.mrf.mxu0
        %v2565 = vpop.f32.mrf.mxu0
        %v2566 = vadd.f32 0.0, %v2565
        %v2567 = vpop.f32.mrf.mxu0
        %2568 = vmatprep.mubr.bf16.mxu0 0
        %2569 = vmatmul.mubr.bf16.gmra.mxu0 %v2372
        %v2570 = vpop.f32.mrf.mxu0
        %v2571 = vadd.f32 0.0, %v2570
        %v2572 = vpop.f32.mrf.mxu0
        %v2573 = vpop.f32.mrf.mxu0
        %v2574 = vadd.f32 0.0, %v2573
        %v2575 = vpop.f32.mrf.mxu0
        %2576 = vmatprep.mubr.bf16.mxu0 0
        %2577 = vmatmul.mubr.bf16.gmra.mxu0 %v2373
        %v2578 = vpop.f32.mrf.mxu0
        %v2579 = vadd.f32 0.0, %v2578
        %v2580 = vpop.f32.mrf.mxu0
        %v2581 = vpop.f32.mrf.mxu0
        %v2582 = vadd.f32 0.0, %v2581
        %v2583 = vpop.f32.mrf.mxu0
        %2584 = vmatprep.mubr.bf16.mxu0 0
        %2585 = vmatmul.mubr.bf16.gmra.mxu0 %v2374
        %v2586 = vpop.f32.mrf.mxu0
        %v2587 = vadd.f32 0.0, %v2586
        %v2588 = vpop.f32.mrf.mxu0
        %v2589 = vpop.f32.mrf.mxu0
        %v2590 = vadd.f32 0.0, %v2589
        %v2591 = vpop.f32.mrf.mxu0
        %2592 = vmatprep.mubr.bf16.mxu0 0
        %2593 = vmatmul.mubr.bf16.gmra.mxu0 %v2375
        %v2594 = vpop.f32.mrf.mxu0
        %v2595 = vadd.f32 0.0, %v2594
        %v2596 = vpop.f32.mrf.mxu0
        %v2597 = vpop.f32.mrf.mxu0
        %v2598 = vadd.f32 0.0, %v2597
        %v2599 = vpop.f32.mrf.mxu0
        %2600 = vdwg.mxu0
        %v2601 = vadd.f32 %v2216, %v2475
        %v2602 = vadd.f32 %v2217, %v2478
        %v2603 = vadd.f32 %v2218, %v2483
        %v2604 = vadd.f32 %v2219, %v2486
        %v2605 = vadd.f32 %v2220, %v2491
        %v2606 = vadd.f32 %v2221, %v2494
        %v2607 = vadd.f32 %v2222, %v2499
        %v2608 = vadd.f32 %v2223, %v2502
        %v2609 = vadd.f32 %v2224, %v2507
        %v2610 = vadd.f32 %v2225, %v2510
        %v2611 = vadd.f32 %v2226, %v2515
        %v2612 = vadd.f32 %v2227, %v2518
        %v2613 = vadd.f32 %v2228, %v2523
        %v2614 = vadd.f32 %v2229, %v2526
        %v2615 = vadd.f32 %v2230, %v2531
        %v2616 = vadd.f32 %v2231, %v2534
        %v2617 = vadd.f32 %v2232, %v2539
        %v2618 = vadd.f32 %v2233, %v2542
        %v2619 = vadd.f32 %v2234, %v2547
        %v2620 = vadd.f32 %v2235, %v2550
        %v2621 = vadd.f32 %v2236, %v2555
        %v2622 = vadd.f32 %v2237, %v2558
        %v2623 = vadd.f32 %v2238, %v2563
        %v2624 = vadd.f32 %v2239, %v2566
        %v2625 = vadd.f32 %v2240, %v2571
        %v2626 = vadd.f32 %v2241, %v2574
        %v2627 = vadd.f32 %v2242, %v2579
        %v2628 = vadd.f32 %v2243, %v2582
        %v2629 = vadd.f32 %v2244, %v2587
        %v2630 = vadd.f32 %v2245, %v2590
        %v2631 = vadd.f32 %v2246, %v2595
        %v2632 = vadd.f32 %v2247, %v2598
        %v2633 = vld [vmem:[%s601] sm:$0xf]
        %v2634 = vld [vmem:[%s601 + $0x4] sm:$0xf]
        %v2635 = vld [vmem:[%s601 + $0x8] sm:$0x1]
        %v2636 = vld [vmem:[%s601 + $0xc] sm:$0xf]
        %v2637 = vld [vmem:[%s601 + $0x10] sm:$0xf]
        %v2638 = vld [vmem:[%s601 + $0x14] sm:$0x1]
        %v2639 = vld [vmem:[%s601 + $0x18] sm:$0xf]
        %v2640 = vld [vmem:[%s601 + $0x1c] sm:$0xf]
        %v2641 = vld [vmem:[%s601 + $0x20] sm:$0x1]
        %v2642 = vld [vmem:[%s601 + $0x24] sm:$0xf]
        %v2643 = vld [vmem:[%s601 + $0x28] sm:$0xf]
        %v2644 = vld [vmem:[%s601 + $0x2c] sm:$0x1]
        %v2645 = vld [vmem:[%s601 + $0x30] sm:$0xf]
        %v2646 = vld [vmem:[%s601 + $0x34] sm:$0xf]
        %v2647 = vld [vmem:[%s601 + $0x38] sm:$0x1]
        %v2648 = vld [vmem:[%s601 + $0x3c] sm:$0xf]
        %v2649 = vld [vmem:[%s601 + $0x40] sm:$0xf]
        %v2650 = vld [vmem:[%s601 + $0x44] sm:$0x1]
        %v2651 = vld [vmem:[%s601 + $0x48] sm:$0xf]
        %v2652 = vld [vmem:[%s601 + $0x4c] sm:$0xf]
        %v2653 = vld [vmem:[%s601 + $0x50] sm:$0x1]
        %v2654 = vld [vmem:[%s601 + $0x54] sm:$0xf]
        %v2655 = vld [vmem:[%s601 + $0x58] sm:$0xf]
        %v2656 = vld [vmem:[%s601 + $0x5c] sm:$0x1]
        %v2657 = vld [vmem:[%s601 + $0x60] sm:$0xf]
        %v2658 = vld [vmem:[%s601 + $0x64] sm:$0xf]
        %v2659 = vld [vmem:[%s601 + $0x68] sm:$0x1]
        %v2660 = vld [vmem:[%s601 + $0x6c] sm:$0xf]
        %v2661 = vld [vmem:[%s601 + $0x70] sm:$0xf]
        %v2662 = vld [vmem:[%s601 + $0x74] sm:$0x1]
        %v2663 = vld [vmem:[%s601 + $0x78] sm:$0xf]
        %v2664 = vld [vmem:[%s601 + $0x7c] sm:$0xf]
        %v2665 = vld [vmem:[%s601 + $0x80] sm:$0x1]
        %v2666 = vld [vmem:[%s601 + $0x84] sm:$0xf]
        %v2667 = vld [vmem:[%s601 + $0x88] sm:$0xf]
        %v2668 = vld [vmem:[%s601 + $0x8c] sm:$0x1]
        %v2669 = vld [vmem:[%s601 + $0x90] sm:$0xf]
        %v2670 = vld [vmem:[%s601 + $0x94] sm:$0xf]
        %v2671 = vld [vmem:[%s601 + $0x98] sm:$0x1]
        %v2672 = vld [vmem:[%s601 + $0x9c] sm:$0xf]
        %v2673 = vld [vmem:[%s601 + $0xa0] sm:$0xf]
        %v2674 = vld [vmem:[%s601 + $0xa4] sm:$0x1]
        %v2675 = vld [vmem:[%s601 + $0xa8] sm:$0xf]
        %v2676 = vld [vmem:[%s601 + $0xac] sm:$0xf]
        %v2677 = vld [vmem:[%s601 + $0xb0] sm:$0x1]
        %v2678 = vld [vmem:[%s601 + $0xb4] sm:$0xf]
        %v2679 = vld [vmem:[%s601 + $0xb8] sm:$0xf]
        %v2680 = vld [vmem:[%s601 + $0xbc] sm:$0x1]
        %v2682 = vshrl.u32 %v2633, 16
        %v2684 = vrot.slane %v2682, 4
        %v2685 = vshll.u32 %v2633, 16
        %v2687 = vrot.slane %v2685, 5
        %v2688 = vor.u32 %v2684, %v2687
        %v2689 = vrot.slane %v2688, 4
        %v2691 = vshll.u32 %v2634, 16
        %v2693 = vrot.slane %v2691, 5
        %v2694 = vsel %vm785, %v2689, %v2693
        %v2695 = vshrl.u32 %v2634, 16
        %v2697 = vrot.slane %v2695, 4
        %v2698 = vor.u32 %v2697, %v2693
        %v2699 = vrot.slane %v2698, 4
        %v2701 = vshll.u32 %v2635, 16
        %v2703 = vrot.slane %v2701, 5
        %v2704 = vsel %vm785, %v2699, %v2703
        %v2706 = vshrl.u32 %v2636, 16
        %v2708 = vrot.slane %v2706, 4
        %v2709 = vshll.u32 %v2636, 16
        %v2711 = vrot.slane %v2709, 5
        %v2712 = vor.u32 %v2708, %v2711
        %v2713 = vrot.slane %v2712, 4
        %v2715 = vshll.u32 %v2637, 16
        %v2717 = vrot.slane %v2715, 5
        %v2718 = vsel %vm785, %v2713, %v2717
        %v2719 = vshrl.u32 %v2637, 16
        %v2721 = vrot.slane %v2719, 4
        %v2722 = vor.u32 %v2721, %v2717
        %v2723 = vrot.slane %v2722, 4
        %v2725 = vshll.u32 %v2638, 16
        %v2727 = vrot.slane %v2725, 5
        %v2728 = vsel %vm785, %v2723, %v2727
        %v2730 = vshrl.u32 %v2639, 16
        %v2732 = vrot.slane %v2730, 4
        %v2733 = vshll.u32 %v2639, 16
        %v2735 = vrot.slane %v2733, 5
        %v2736 = vor.u32 %v2732, %v2735
        %v2737 = vrot.slane %v2736, 4
        %v2739 = vshll.u32 %v2640, 16
        %v2741 = vrot.slane %v2739, 5
        %v2742 = vsel %vm785, %v2737, %v2741
        %v2743 = vshrl.u32 %v2640, 16
        %v2745 = vrot.slane %v2743, 4
        %v2746 = vor.u32 %v2745, %v2741
        %v2747 = vrot.slane %v2746, 4
        %v2749 = vshll.u32 %v2641, 16
        %v2751 = vrot.slane %v2749, 5
        %v2752 = vsel %vm785, %v2747, %v2751
        %v2754 = vshrl.u32 %v2642, 16
        %v2756 = vrot.slane %v2754, 4
        %v2757 = vshll.u32 %v2642, 16
        %v2759 = vrot.slane %v2757, 5
        %v2760 = vor.u32 %v2756, %v2759
        %v2761 = vrot.slane %v2760, 4
        %v2763 = vshll.u32 %v2643, 16
        %v2765 = vrot.slane %v2763, 5
        %v2766 = vsel %vm785, %v2761, %v2765
        %v2767 = vshrl.u32 %v2643, 16
        %v2769 = vrot.slane %v2767, 4
        %v2770 = vor.u32 %v2769, %v2765
        %v2771 = vrot.slane %v2770, 4
        %v2773 = vshll.u32 %v2644, 16
        %v2775 = vrot.slane %v2773, 5
        %v2776 = vsel %vm785, %v2771, %v2775
        %v2778 = vshrl.u32 %v2645, 16
        %v2780 = vrot.slane %v2778, 4
        %v2781 = vshll.u32 %v2645, 16
        %v2783 = vrot.slane %v2781, 5
        %v2784 = vor.u32 %v2780, %v2783
        %v2785 = vrot.slane %v2784, 4
        %v2787 = vshll.u32 %v2646, 16
        %v2789 = vrot.slane %v2787, 5
        %v2790 = vsel %vm785, %v2785, %v2789
        %v2791 = vshrl.u32 %v2646, 16
        %v2793 = vrot.slane %v2791, 4
        %v2794 = vor.u32 %v2793, %v2789
        %v2795 = vrot.slane %v2794, 4
        %v2797 = vshll.u32 %v2647, 16
        %v2799 = vrot.slane %v2797, 5
        %v2800 = vsel %vm785, %v2795, %v2799
        %v2802 = vshrl.u32 %v2648, 16
        %v2804 = vrot.slane %v2802, 4
        %v2805 = vshll.u32 %v2648, 16
        %v2807 = vrot.slane %v2805, 5
        %v2808 = vor.u32 %v2804, %v2807
        %v2809 = vrot.slane %v2808, 4
        %v2811 = vshll.u32 %v2649, 16
        %v2813 = vrot.slane %v2811, 5
        %v2814 = vsel %vm785, %v2809, %v2813
        %v2815 = vshrl.u32 %v2649, 16
        %v2817 = vrot.slane %v2815, 4
        %v2818 = vor.u32 %v2817, %v2813
        %v2819 = vrot.slane %v2818, 4
        %v2821 = vshll.u32 %v2650, 16
        %v2823 = vrot.slane %v2821, 5
        %v2824 = vsel %vm785, %v2819, %v2823
        %v2826 = vshrl.u32 %v2651, 16
        %v2828 = vrot.slane %v2826, 4
        %v2829 = vshll.u32 %v2651, 16
        %v2831 = vrot.slane %v2829, 5
        %v2832 = vor.u32 %v2828, %v2831
        %v2833 = vrot.slane %v2832, 4
        %v2835 = vshll.u32 %v2652, 16
        %v2837 = vrot.slane %v2835, 5
        %v2838 = vsel %vm785, %v2833, %v2837
        %v2839 = vshrl.u32 %v2652, 16
        %v2841 = vrot.slane %v2839, 4
        %v2842 = vor.u32 %v2841, %v2837
        %v2843 = vrot.slane %v2842, 4
        %v2845 = vshll.u32 %v2653, 16
        %v2847 = vrot.slane %v2845, 5
        %v2848 = vsel %vm785, %v2843, %v2847
        %v2850 = vshrl.u32 %v2654, 16
        %v2852 = vrot.slane %v2850, 4
        %v2853 = vshll.u32 %v2654, 16
        %v2855 = vrot.slane %v2853, 5
        %v2856 = vor.u32 %v2852, %v2855
        %v2857 = vrot.slane %v2856, 4
        %v2859 = vshll.u32 %v2655, 16
        %v2861 = vrot.slane %v2859, 5
        %v2862 = vsel %vm785, %v2857, %v2861
        %v2863 = vshrl.u32 %v2655, 16
        %v2865 = vrot.slane %v2863, 4
        %v2866 = vor.u32 %v2865, %v2861
        %v2867 = vrot.slane %v2866, 4
        %v2869 = vshll.u32 %v2656, 16
        %v2871 = vrot.slane %v2869, 5
        %v2872 = vsel %vm785, %v2867, %v2871
        %v2874 = vshrl.u32 %v2657, 16
        %v2876 = vrot.slane %v2874, 4
        %v2877 = vshll.u32 %v2657, 16
        %v2879 = vrot.slane %v2877, 5
        %v2880 = vor.u32 %v2876, %v2879
        %v2881 = vrot.slane %v2880, 4
        %v2883 = vshll.u32 %v2658, 16
        %v2885 = vrot.slane %v2883, 5
        %v2886 = vsel %vm785, %v2881, %v2885
        %v2887 = vshrl.u32 %v2658, 16
        %v2889 = vrot.slane %v2887, 4
        %v2890 = vor.u32 %v2889, %v2885
        %v2891 = vrot.slane %v2890, 4
        %v2893 = vshll.u32 %v2659, 16
        %v2895 = vrot.slane %v2893, 5
        %v2896 = vsel %vm785, %v2891, %v2895
        %v2898 = vshrl.u32 %v2660, 16
        %v2900 = vrot.slane %v2898, 4
        %v2901 = vshll.u32 %v2660, 16
        %v2903 = vrot.slane %v2901, 5
        %v2904 = vor.u32 %v2900, %v2903
        %v2905 = vrot.slane %v2904, 4
        %v2907 = vshll.u32 %v2661, 16
        %v2909 = vrot.slane %v2907, 5
        %v2910 = vsel %vm785, %v2905, %v2909
        %v2911 = vshrl.u32 %v2661, 16
        %v2913 = vrot.slane %v2911, 4
        %v2914 = vor.u32 %v2913, %v2909
        %v2915 = vrot.slane %v2914, 4
        %v2917 = vshll.u32 %v2662, 16
        %v2919 = vrot.slane %v2917, 5
        %v2920 = vsel %vm785, %v2915, %v2919
        %v2922 = vshrl.u32 %v2663, 16
        %v2924 = vrot.slane %v2922, 4
        %v2925 = vshll.u32 %v2663, 16
        %v2927 = vrot.slane %v2925, 5
        %v2928 = vor.u32 %v2924, %v2927
        %v2929 = vrot.slane %v2928, 4
        %v2931 = vshll.u32 %v2664, 16
        %v2933 = vrot.slane %v2931, 5
        %v2934 = vsel %vm785, %v2929, %v2933
        %v2935 = vshrl.u32 %v2664, 16
        %v2937 = vrot.slane %v2935, 4
        %v2938 = vor.u32 %v2937, %v2933
        %v2939 = vrot.slane %v2938, 4
        %v2941 = vshll.u32 %v2665, 16
        %v2943 = vrot.slane %v2941, 5
        %v2944 = vsel %vm785, %v2939, %v2943
        %v2946 = vshrl.u32 %v2666, 16
        %v2948 = vrot.slane %v2946, 4
        %v2949 = vshll.u32 %v2666, 16
        %v2951 = vrot.slane %v2949, 5
        %v2952 = vor.u32 %v2948, %v2951
        %v2953 = vrot.slane %v2952, 4
        %v2955 = vshll.u32 %v2667, 16
        %v2957 = vrot.slane %v2955, 5
        %v2958 = vsel %vm785, %v2953, %v2957
        %v2959 = vshrl.u32 %v2667, 16
        %v2961 = vrot.slane %v2959, 4
        %v2962 = vor.u32 %v2961, %v2957
        %v2963 = vrot.slane %v2962, 4
        %v2965 = vshll.u32 %v2668, 16
        %v2967 = vrot.slane %v2965, 5
        %v2968 = vsel %vm785, %v2963, %v2967
        %v2970 = vshrl.u32 %v2669, 16
        %v2972 = vrot.slane %v2970, 4
        %v2973 = vshll.u32 %v2669, 16
        %v2975 = vrot.slane %v2973, 5
        %v2976 = vor.u32 %v2972, %v2975
        %v2977 = vrot.slane %v2976, 4
        %v2979 = vshll.u32 %v2670, 16
        %v2981 = vrot.slane %v2979, 5
        %v2982 = vsel %vm785, %v2977, %v2981
        %v2983 = vshrl.u32 %v2670, 16
        %v2985 = vrot.slane %v2983, 4
        %v2986 = vor.u32 %v2985, %v2981
        %v2987 = vrot.slane %v2986, 4
        %v2989 = vshll.u32 %v2671, 16
        %v2991 = vrot.slane %v2989, 5
        %v2992 = vsel %vm785, %v2987, %v2991
        %v2994 = vshrl.u32 %v2672, 16
        %v2996 = vrot.slane %v2994, 4
        %v2997 = vshll.u32 %v2672, 16
        %v2999 = vrot.slane %v2997, 5
        %v3000 = vor.u32 %v2996, %v2999
        %v3001 = vrot.slane %v3000, 4
        %v3003 = vshll.u32 %v2673, 16
        %v3005 = vrot.slane %v3003, 5
        %v3006 = vsel %vm785, %v3001, %v3005
        %v3007 = vshrl.u32 %v2673, 16
        %v3009 = vrot.slane %v3007, 4
        %v3010 = vor.u32 %v3009, %v3005
        %v3011 = vrot.slane %v3010, 4
        %v3013 = vshll.u32 %v2674, 16
        %v3015 = vrot.slane %v3013, 5
        %v3016 = vsel %vm785, %v3011, %v3015
        %v3018 = vshrl.u32 %v2675, 16
        %v3020 = vrot.slane %v3018, 4
        %v3021 = vshll.u32 %v2675, 16
        %v3023 = vrot.slane %v3021, 5
        %v3024 = vor.u32 %v3020, %v3023
        %v3025 = vrot.slane %v3024, 4
        %v3027 = vshll.u32 %v2676, 16
        %v3029 = vrot.slane %v3027, 5
        %v3030 = vsel %vm785, %v3025, %v3029
        %v3031 = vshrl.u32 %v2676, 16
        %v3033 = vrot.slane %v3031, 4
        %v3034 = vor.u32 %v3033, %v3029
        %v3035 = vrot.slane %v3034, 4
        %v3037 = vshll.u32 %v2677, 16
        %v3039 = vrot.slane %v3037, 5
        %v3040 = vsel %vm785, %v3035, %v3039
        %v3042 = vshrl.u32 %v2678, 16
        %v3044 = vrot.slane %v3042, 4
        %v3045 = vshll.u32 %v2678, 16
        %v3047 = vrot.slane %v3045, 5
        %v3048 = vor.u32 %v3044, %v3047
        %v3049 = vrot.slane %v3048, 4
        %v3051 = vshll.u32 %v2679, 16
        %v3053 = vrot.slane %v3051, 5
        %v3054 = vsel %vm785, %v3049, %v3053
        %v3055 = vshrl.u32 %v2679, 16
        %v3057 = vrot.slane %v3055, 4
        %v3058 = vor.u32 %v3057, %v3053
        %v3059 = vrot.slane %v3058, 4
        %v3061 = vshll.u32 %v2680, 16
        %v3063 = vrot.slane %v3061, 5
        %v3064 = vsel %vm785, %v3059, %v3063
        %v3065 = vld [vmem:[%s1 + $0x100] sm:$0xf]
        %v3066 = vld [vmem:[%s1 + $0x104] sm:$0xf]
        %v3067 = vld [vmem:[%s1 + $0x108] sm:$0xf]
        %v3068 = vld [vmem:[%s1 + $0x10c] sm:$0xf]
        %v3069 = vld [vmem:[%s1 + $0x110] sm:$0xf]
        %v3070 = vld [vmem:[%s1 + $0x114] sm:$0xf]
        %v3071 = vld [vmem:[%s1 + $0x118] sm:$0xf]
        %v3072 = vld [vmem:[%s1 + $0x11c] sm:$0xf]
        %v3073 = vld [vmem:[%s1 + $0x120] sm:$0xf]
        %v3074 = vld [vmem:[%s1 + $0x124] sm:$0xf]
        %v3075 = vld [vmem:[%s1 + $0x128] sm:$0xf]
        %v3076 = vld [vmem:[%s1 + $0x12c] sm:$0xf]
        %v3077 = vld [vmem:[%s1 + $0x130] sm:$0xf]
        %v3078 = vld [vmem:[%s1 + $0x134] sm:$0xf]
        %v3079 = vld [vmem:[%s1 + $0x138] sm:$0xf]
        %v3080 = vld [vmem:[%s1 + $0x13c] sm:$0xf]
        %v3081 = vunpack.c.l.b16 %v2694
        %v3082 = vunpack.c.l.b16 %v2704
        %v3083 = vunpack.c.l.b16 %v2718
        %v3084 = vunpack.c.l.b16 %v2728
        %v3085 = vunpack.c.l.b16 %v2742
        %v3086 = vunpack.c.l.b16 %v2752
        %v3087 = vunpack.c.l.b16 %v2766
        %v3088 = vunpack.c.l.b16 %v2776
        %v3089 = vunpack.c.l.b16 %v2790
        %v3090 = vunpack.c.l.b16 %v2800
        %v3091 = vunpack.c.l.b16 %v2814
        %v3092 = vunpack.c.l.b16 %v2824
        %v3093 = vunpack.c.l.b16 %v2838
        %v3094 = vunpack.c.l.b16 %v2848
        %v3095 = vunpack.c.l.b16 %v2862
        %v3096 = vunpack.c.l.b16 %v2872
        %v3097 = vunpack.c.l.b16 %v2886
        %v3098 = vunpack.c.l.b16 %v2896
        %v3099 = vunpack.c.l.b16 %v2910
        %v3100 = vunpack.c.l.b16 %v2920
        %v3101 = vunpack.c.l.b16 %v2934
        %v3102 = vunpack.c.l.b16 %v2944
        %v3103 = vunpack.c.l.b16 %v2958
        %v3104 = vunpack.c.l.b16 %v2968
        %v3105 = vunpack.c.l.b16 %v2982
        %v3106 = vunpack.c.l.b16 %v2992
        %v3107 = vunpack.c.l.b16 %v3006
        %v3108 = vunpack.c.l.b16 %v3016
        %v3109 = vunpack.c.l.b16 %v3030
        %v3110 = vunpack.c.l.b16 %v3040
        %v3111 = vunpack.c.l.b16 %v3054
        %v3112 = vunpack.c.l.b16 %v3064
        %v3113 = vpack.c.b16 %v3082, %v3081
        %v3114 = vpack.c.b16 %v3084, %v3083
        %v3115 = vpack.c.b16 %v3086, %v3085
        %v3116 = vpack.c.b16 %v3088, %v3087
        %v3117 = vpack.c.b16 %v3090, %v3089
        %v3118 = vpack.c.b16 %v3092, %v3091
        %v3119 = vpack.c.b16 %v3094, %v3093
        %v3120 = vpack.c.b16 %v3096, %v3095
        %v3121 = vpack.c.b16 %v3098, %v3097
        %v3122 = vpack.c.b16 %v3100, %v3099
        %v3123 = vpack.c.b16 %v3102, %v3101
        %v3124 = vpack.c.b16 %v3104, %v3103
        %v3125 = vpack.c.b16 %v3106, %v3105
        %v3126 = vpack.c.b16 %v3108, %v3107
        %v3127 = vpack.c.b16 %v3110, %v3109
        %v3128 = vpack.c.b16 %v3112, %v3111
        %v3161 = vunpack.c.l.b16 %v3065
        %v3162 = vunpack.c.l.b16 %v3066
        %v3163 = vunpack.c.l.b16 %v3067
        %v3164 = vunpack.c.l.b16 %v3068
        %v3165 = vunpack.c.l.b16 %v3069
        %v3166 = vunpack.c.l.b16 %v3070
        %v3167 = vunpack.c.l.b16 %v3071
        %v3168 = vunpack.c.l.b16 %v3072
        %v3169 = vunpack.c.l.b16 %v3073
        %v3170 = vunpack.c.l.b16 %v3074
        %v3171 = vunpack.c.l.b16 %v3075
        %v3172 = vunpack.c.l.b16 %v3076
        %v3173 = vunpack.c.l.b16 %v3077
        %v3174 = vunpack.c.l.b16 %v3078
        %v3175 = vunpack.c.l.b16 %v3079
        %v3176 = vunpack.c.l.b16 %v3080
        %v3177 = vpack.c.b16 %v3162, %v3161
        %v3178 = vpack.c.b16 %v3164, %v3163
        %v3179 = vpack.c.b16 %v3166, %v3165
        %v3180 = vpack.c.b16 %v3168, %v3167
        %v3181 = vpack.c.b16 %v3170, %v3169
        %v3182 = vpack.c.b16 %v3172, %v3171
        %v3183 = vpack.c.b16 %v3174, %v3173
        %v3184 = vpack.c.b16 %v3176, %v3175
        %3193 = vmatprep.subr.bf16.mxu0 0
        %3194 = vmatpush1.bf16.msra.mxu0 %v3184
        %3195 = vmatprep.subr.bf16.mxu0 0
        %3196 = vmatpush1.bf16.msra.mxu0 %v3183
        %3197 = vmatprep.subr.bf16.mxu0 0
        %3198 = vmatpush1.bf16.msra.mxu0 %v3182
        %3199 = vmatprep.subr.bf16.mxu0 0
        %3200 = vmatpush1.bf16.msra.mxu0 %v3181
        %3201 = vmatprep.subr.bf16.mxu0 0
        %3202 = vmatpush1.bf16.msra.mxu0 %v3180
        %3203 = vmatprep.subr.bf16.mxu0 0
        %3204 = vmatpush1.bf16.msra.mxu0 %v3179
        %3205 = vmatprep.subr.bf16.mxu0 0
        %3206 = vmatpush1.bf16.msra.mxu0 %v3178
        %3207 = vmatprep.subr.bf16.mxu0 0
        %3208 = vmatpush1.bf16.msra.mxu0 %v3177
        %3209 = vmatprep.subr.bf16.mxu0 0
        %3210 = vmatpush2.bf16.msra.mxu0 0
        %3211 = vmatprep.subr.bf16.mxu0 0
        %3212 = vmatpush2.bf16.msra.mxu0 0
        %3213 = vmatprep.subr.bf16.mxu0 0
        %3214 = vmatpush2.bf16.msra.mxu0 0
        %3215 = vmatprep.subr.bf16.mxu0 0
        %3216 = vmatpush2.bf16.msra.mxu0 0
        %3217 = vmatprep.subr.bf16.mxu0 0
        %3218 = vmatpush2.bf16.msra.mxu0 0
        %3219 = vmatprep.subr.bf16.mxu0 0
        %3220 = vmatpush2.bf16.msra.mxu0 0
        %3221 = vmatprep.subr.bf16.mxu0 0
        %3222 = vmatpush2.bf16.msra.mxu0 0
        %3223 = vmatprep.subr.bf16.mxu0 0
        %3224 = vmatpush2.bf16.msra.mxu0 0
        %3225 = vmatprep.mubr.bf16.mxu0 0
        %3226 = vmatmul.mubr.bf16.gmra.mxu0 %v3113
        %v3227 = vpop.f32.mrf.mxu0
        %v3228 = vadd.f32 0.0, %v3227
        %v3229 = vpop.f32.mrf.mxu0
        %v3230 = vpop.f32.mrf.mxu0
        %v3231 = vadd.f32 0.0, %v3230
        %v3232 = vpop.f32.mrf.mxu0
        %3233 = vmatprep.mubr.bf16.mxu0 0
        %3234 = vmatmul.mubr.bf16.gmra.mxu0 %v3114
        %v3235 = vpop.f32.mrf.mxu0
        %v3236 = vadd.f32 0.0, %v3235
        %v3237 = vpop.f32.mrf.mxu0
        %v3238 = vpop.f32.mrf.mxu0
        %v3239 = vadd.f32 0.0, %v3238
        %v3240 = vpop.f32.mrf.mxu0
        %3241 = vmatprep.mubr.bf16.mxu0 0
        %3242 = vmatmul.mubr.bf16.gmra.mxu0 %v3115
        %v3243 = vpop.f32.mrf.mxu0
        %v3244 = vadd.f32 0.0, %v3243
        %v3245 = vpop.f32.mrf.mxu0
        %v3246 = vpop.f32.mrf.mxu0
        %v3247 = vadd.f32 0.0, %v3246
        %v3248 = vpop.f32.mrf.mxu0
        %3249 = vmatprep.mubr.bf16.mxu0 0
        %3250 = vmatmul.mubr.bf16.gmra.mxu0 %v3116
        %v3251 = vpop.f32.mrf.mxu0
        %v3252 = vadd.f32 0.0, %v3251
        %v3253 = vpop.f32.mrf.mxu0
        %v3254 = vpop.f32.mrf.mxu0
        %v3255 = vadd.f32 0.0, %v3254
        %v3256 = vpop.f32.mrf.mxu0
        %3257 = vmatprep.mubr.bf16.mxu0 0
        %3258 = vmatmul.mubr.bf16.gmra.mxu0 %v3117
        %v3259 = vpop.f32.mrf.mxu0
        %v3260 = vadd.f32 0.0, %v3259
        %v3261 = vpop.f32.mrf.mxu0
        %v3262 = vpop.f32.mrf.mxu0
        %v3263 = vadd.f32 0.0, %v3262
        %v3264 = vpop.f32.mrf.mxu0
        %3265 = vmatprep.mubr.bf16.mxu0 0
        %3266 = vmatmul.mubr.bf16.gmra.mxu0 %v3118
        %v3267 = vpop.f32.mrf.mxu0
        %v3268 = vadd.f32 0.0, %v3267
        %v3269 = vpop.f32.mrf.mxu0
        %v3270 = vpop.f32.mrf.mxu0
        %v3271 = vadd.f32 0.0, %v3270
        %v3272 = vpop.f32.mrf.mxu0
        %3273 = vmatprep.mubr.bf16.mxu0 0
        %3274 = vmatmul.mubr.bf16.gmra.mxu0 %v3119
        %v3275 = vpop.f32.mrf.mxu0
        %v3276 = vadd.f32 0.0, %v3275
        %v3277 = vpop.f32.mrf.mxu0
        %v3278 = vpop.f32.mrf.mxu0
        %v3279 = vadd.f32 0.0, %v3278
        %v3280 = vpop.f32.mrf.mxu0
        %3281 = vmatprep.mubr.bf16.mxu0 0
        %3282 = vmatmul.mubr.bf16.gmra.mxu0 %v3120
        %v3283 = vpop.f32.mrf.mxu0
        %v3284 = vadd.f32 0.0, %v3283
        %v3285 = vpop.f32.mrf.mxu0
        %v3286 = vpop.f32.mrf.mxu0
        %v3287 = vadd.f32 0.0, %v3286
        %v3288 = vpop.f32.mrf.mxu0
        %3289 = vmatprep.mubr.bf16.mxu0 0
        %3290 = vmatmul.mubr.bf16.gmra.mxu0 %v3121
        %v3291 = vpop.f32.mrf.mxu0
        %v3292 = vadd.f32 0.0, %v3291
        %v3293 = vpop.f32.mrf.mxu0
        %v3294 = vpop.f32.mrf.mxu0
        %v3295 = vadd.f32 0.0, %v3294
        %v3296 = vpop.f32.mrf.mxu0
        %3297 = vmatprep.mubr.bf16.mxu0 0
        %3298 = vmatmul.mubr.bf16.gmra.mxu0 %v3122
        %v3299 = vpop.f32.mrf.mxu0
        %v3300 = vadd.f32 0.0, %v3299
        %v3301 = vpop.f32.mrf.mxu0
        %v3302 = vpop.f32.mrf.mxu0
        %v3303 = vadd.f32 0.0, %v3302
        %v3304 = vpop.f32.mrf.mxu0
        %3305 = vmatprep.mubr.bf16.mxu0 0
        %3306 = vmatmul.mubr.bf16.gmra.mxu0 %v3123
        %v3307 = vpop.f32.mrf.mxu0
        %v3308 = vadd.f32 0.0, %v3307
        %v3309 = vpop.f32.mrf.mxu0
        %v3310 = vpop.f32.mrf.mxu0
        %v3311 = vadd.f32 0.0, %v3310
        %v3312 = vpop.f32.mrf.mxu0
        %3313 = vmatprep.mubr.bf16.mxu0 0
        %3314 = vmatmul.mubr.bf16.gmra.mxu0 %v3124
        %v3315 = vpop.f32.mrf.mxu0
        %v3316 = vadd.f32 0.0, %v3315
        %v3317 = vpop.f32.mrf.mxu0
        %v3318 = vpop.f32.mrf.mxu0
        %v3319 = vadd.f32 0.0, %v3318
        %v3320 = vpop.f32.mrf.mxu0
        %3321 = vmatprep.mubr.bf16.mxu0 0
        %3322 = vmatmul.mubr.bf16.gmra.mxu0 %v3125
        %v3323 = vpop.f32.mrf.mxu0
        %v3324 = vadd.f32 0.0, %v3323
        %v3325 = vpop.f32.mrf.mxu0
        %v3326 = vpop.f32.mrf.mxu0
        %v3327 = vadd.f32 0.0, %v3326
        %v3328 = vpop.f32.mrf.mxu0
        %3329 = vmatprep.mubr.bf16.mxu0 0
        %3330 = vmatmul.mubr.bf16.gmra.mxu0 %v3126
        %v3331 = vpop.f32.mrf.mxu0
        %v3332 = vadd.f32 0.0, %v3331
        %v3333 = vpop.f32.mrf.mxu0
        %v3334 = vpop.f32.mrf.mxu0
        %v3335 = vadd.f32 0.0, %v3334
        %v3336 = vpop.f32.mrf.mxu0
        %3337 = vmatprep.mubr.bf16.mxu0 0
        %3338 = vmatmul.mubr.bf16.gmra.mxu0 %v3127
        %v3339 = vpop.f32.mrf.mxu0
        %v3340 = vadd.f32 0.0, %v3339
        %v3341 = vpop.f32.mrf.mxu0
        %v3342 = vpop.f32.mrf.mxu0
        %v3343 = vadd.f32 0.0, %v3342
        %v3344 = vpop.f32.mrf.mxu0
        %3345 = vmatprep.mubr.bf16.mxu0 0
        %3346 = vmatmul.mubr.bf16.gmra.mxu0 %v3128
        %v3347 = vpop.f32.mrf.mxu0
        %v3348 = vadd.f32 0.0, %v3347
        %v3349 = vpop.f32.mrf.mxu0
        %v3350 = vpop.f32.mrf.mxu0
        %v3351 = vadd.f32 0.0, %v3350
        %v3352 = vpop.f32.mrf.mxu0
        %3353 = vdwg.mxu0
        %v3354 = vadd.f32 %v2601, %v3228
        %v3355 = vadd.f32 %v2602, %v3231
        %v3356 = vadd.f32 %v2603, %v3236
        %v3357 = vadd.f32 %v2604, %v3239
        %v3358 = vadd.f32 %v2605, %v3244
        %v3359 = vadd.f32 %v2606, %v3247
        %v3360 = vadd.f32 %v2607, %v3252
        %v3361 = vadd.f32 %v2608, %v3255
        %v3362 = vadd.f32 %v2609, %v3260
        %v3363 = vadd.f32 %v2610, %v3263
        %v3364 = vadd.f32 %v2611, %v3268
        %v3365 = vadd.f32 %v2612, %v3271
        %v3366 = vadd.f32 %v2613, %v3276
        %v3367 = vadd.f32 %v2614, %v3279
        %v3368 = vadd.f32 %v2615, %v3284
        %v3369 = vadd.f32 %v2616, %v3287
        %v3370 = vadd.f32 %v2617, %v3292
        %v3371 = vadd.f32 %v2618, %v3295
        %v3372 = vadd.f32 %v2619, %v3300
        %v3373 = vadd.f32 %v2620, %v3303
        %v3374 = vadd.f32 %v2621, %v3308
        %v3375 = vadd.f32 %v2622, %v3311
        %v3376 = vadd.f32 %v2623, %v3316
        %v3377 = vadd.f32 %v2624, %v3319
        %v3378 = vadd.f32 %v2625, %v3324
        %v3379 = vadd.f32 %v2626, %v3327
        %v3380 = vadd.f32 %v2627, %v3332
        %v3381 = vadd.f32 %v2628, %v3335
        %v3382 = vadd.f32 %v2629, %v3340
        %v3383 = vadd.f32 %v2630, %v3343
        %v3384 = vadd.f32 %v2631, %v3348
        %v3385 = vadd.f32 %v2632, %v3351
        %v3386 = vld [vmem:[%s601] sm:$0xe]
        %v3387 = vld [vmem:[%s601 + $0xc] sm:$0xe]
        %v3388 = vld [vmem:[%s601 + $0x18] sm:$0xe]
        %v3389 = vld [vmem:[%s601 + $0x24] sm:$0xe]
        %v3390 = vld [vmem:[%s601 + $0x30] sm:$0xe]
        %v3391 = vld [vmem:[%s601 + $0x3c] sm:$0xe]
        %v3392 = vld [vmem:[%s601 + $0x48] sm:$0xe]
        %v3393 = vld [vmem:[%s601 + $0x54] sm:$0xe]
        %v3394 = vld [vmem:[%s601 + $0x60] sm:$0xe]
        %v3395 = vld [vmem:[%s601 + $0x6c] sm:$0xe]
        %v3396 = vld [vmem:[%s601 + $0x78] sm:$0xe]
        %v3397 = vld [vmem:[%s601 + $0x84] sm:$0xe]
        %v3398 = vld [vmem:[%s601 + $0x90] sm:$0xe]
        %v3399 = vld [vmem:[%s601 + $0x9c] sm:$0xe]
        %v3400 = vld [vmem:[%s601 + $0xa8] sm:$0xe]
        %v3401 = vld [vmem:[%s601 + $0xb4] sm:$0xe]
        %v3450 = vrot.slane %v3386, 5
        %v3451 = vrot.slane %v3450, 4
        %v3452 = vrot.slane %v2634, 5
        %v3453 = vsel %vm1814, %v3451, %v3452
        %v3454 = vrot.slane %v3452, 4
        %v3455 = vrot.slane %v2635, 5
        %v3456 = vsel %vm1814, %v3454, %v3455
        %v3457 = vrot.slane %v3387, 5
        %v3458 = vrot.slane %v3457, 4
        %v3459 = vrot.slane %v2637, 5
        %v3460 = vsel %vm1814, %v3458, %v3459
        %v3461 = vrot.slane %v3459, 4
        %v3462 = vrot.slane %v2638, 5
        %v3463 = vsel %vm1814, %v3461, %v3462
        %v3464 = vrot.slane %v3388, 5
        %v3465 = vrot.slane %v3464, 4
        %v3466 = vrot.slane %v2640, 5
        %v3467 = vsel %vm1814, %v3465, %v3466
        %v3468 = vrot.slane %v3466, 4
        %v3469 = vrot.slane %v2641, 5
        %v3470 = vsel %vm1814, %v3468, %v3469
        %v3471 = vrot.slane %v3389, 5
        %v3472 = vrot.slane %v3471, 4
        %v3473 = vrot.slane %v2643, 5
        %v3474 = vsel %vm1814, %v3472, %v3473
        %v3475 = vrot.slane %v3473, 4
        %v3476 = vrot.slane %v2644, 5
        %v3477 = vsel %vm1814, %v3475, %v3476
        %v3478 = vrot.slane %v3390, 5
        %v3479 = vrot.slane %v3478, 4
        %v3480 = vrot.slane %v2646, 5
        %v3481 = vsel %vm1814, %v3479, %v3480
        %v3482 = vrot.slane %v3480, 4
        %v3483 = vrot.slane %v2647, 5
        %v3484 = vsel %vm1814, %v3482, %v3483
        %v3485 = vrot.slane %v3391, 5
        %v3486 = vrot.slane %v3485, 4
        %v3487 = vrot.slane %v2649, 5
        %v3488 = vsel %vm1814, %v3486, %v3487
        %v3489 = vrot.slane %v3487, 4
        %v3490 = vrot.slane %v2650, 5
        %v3491 = vsel %vm1814, %v3489, %v3490
        %v3492 = vrot.slane %v3392, 5
        %v3493 = vrot.slane %v3492, 4
        %v3494 = vrot.slane %v2652, 5
        %v3495 = vsel %vm1814, %v3493, %v3494
        %v3496 = vrot.slane %v3494, 4
        %v3497 = vrot.slane %v2653, 5
        %v3498 = vsel %vm1814, %v3496, %v3497
        %v3499 = vrot.slane %v3393, 5
        %v3500 = vrot.slane %v3499, 4
        %v3501 = vrot.slane %v2655, 5
        %v3502 = vsel %vm1814, %v3500, %v3501
        %v3503 = vrot.slane %v3501, 4
        %v3504 = vrot.slane %v2656, 5
        %v3505 = vsel %vm1814, %v3503, %v3504
        %v3506 = vrot.slane %v3394, 5
        %v3507 = vrot.slane %v3506, 4
        %v3508 = vrot.slane %v2658, 5
        %v3509 = vsel %vm1814, %v3507, %v3508
        %v3510 = vrot.slane %v3508, 4
        %v3511 = vrot.slane %v2659, 5
        %v3512 = vsel %vm1814, %v3510, %v3511
        %v3513 = vrot.slane %v3395, 5
        %v3514 = vrot.slane %v3513, 4
        %v3515 = vrot.slane %v2661, 5
        %v3516 = vsel %vm1814, %v3514, %v3515
        %v3517 = vrot.slane %v3515, 4
        %v3518 = vrot.slane %v2662, 5
        %v3519 = vsel %vm1814, %v3517, %v3518
        %v3520 = vrot.slane %v3396, 5
        %v3521 = vrot.slane %v3520, 4
        %v3522 = vrot.slane %v2664, 5
        %v3523 = vsel %vm1814, %v3521, %v3522
        %v3524 = vrot.slane %v3522, 4
        %v3525 = vrot.slane %v2665, 5
        %v3526 = vsel %vm1814, %v3524, %v3525
        %v3527 = vrot.slane %v3397, 5
        %v3528 = vrot.slane %v3527, 4
        %v3529 = vrot.slane %v2667, 5
        %v3530 = vsel %vm1814, %v3528, %v3529
        %v3531 = vrot.slane %v3529, 4
        %v3532 = vrot.slane %v2668, 5
        %v3533 = vsel %vm1814, %v3531, %v3532
        %v3534 = vrot.slane %v3398, 5
        %v3535 = vrot.slane %v3534, 4
        %v3536 = vrot.slane %v2670, 5
        %v3537 = vsel %vm1814, %v3535, %v3536
        %v3538 = vrot.slane %v3536, 4
        %v3539 = vrot.slane %v2671, 5
        %v3540 = vsel %vm1814, %v3538, %v3539
        %v3541 = vrot.slane %v3399, 5
        %v3542 = vrot.slane %v3541, 4
        %v3543 = vrot.slane %v2673, 5
        %v3544 = vsel %vm1814, %v3542, %v3543
        %v3545 = vrot.slane %v3543, 4
        %v3546 = vrot.slane %v2674, 5
        %v3547 = vsel %vm1814, %v3545, %v3546
        %v3548 = vrot.slane %v3400, 5
        %v3549 = vrot.slane %v3548, 4
        %v3550 = vrot.slane %v2676, 5
        %v3551 = vsel %vm1814, %v3549, %v3550
        %v3552 = vrot.slane %v3550, 4
        %v3553 = vrot.slane %v2677, 5
        %v3554 = vsel %vm1814, %v3552, %v3553
        %v3555 = vrot.slane %v3401, 5
        %v3556 = vrot.slane %v3555, 4
        %v3557 = vrot.slane %v2679, 5
        %v3558 = vsel %vm1814, %v3556, %v3557
        %v3559 = vrot.slane %v3557, 4
        %v3560 = vrot.slane %v2680, 5
        %v3561 = vsel %vm1814, %v3559, %v3560
        %v3562 = vld [vmem:[%s1 + $0x140] sm:$0xf]
        %v3563 = vld [vmem:[%s1 + $0x144] sm:$0xf]
        %v3564 = vld [vmem:[%s1 + $0x148] sm:$0xf]
        %v3565 = vld [vmem:[%s1 + $0x14c] sm:$0xf]
        %v3566 = vld [vmem:[%s1 + $0x150] sm:$0xf]
        %v3567 = vld [vmem:[%s1 + $0x154] sm:$0xf]
        %v3568 = vld [vmem:[%s1 + $0x158] sm:$0xf]
        %v3569 = vld [vmem:[%s1 + $0x15c] sm:$0xf]
        %v3570 = vld [vmem:[%s1 + $0x160] sm:$0xf]
        %v3571 = vld [vmem:[%s1 + $0x164] sm:$0xf]
        %v3572 = vld [vmem:[%s1 + $0x168] sm:$0xf]
        %v3573 = vld [vmem:[%s1 + $0x16c] sm:$0xf]
        %v3574 = vld [vmem:[%s1 + $0x170] sm:$0xf]
        %v3575 = vld [vmem:[%s1 + $0x174] sm:$0xf]
        %v3576 = vld [vmem:[%s1 + $0x178] sm:$0xf]
        %v3577 = vld [vmem:[%s1 + $0x17c] sm:$0xf]
        %v3578 = vunpack.c.l.b16 %v3453
        %v3579 = vunpack.c.l.b16 %v3456
        %v3580 = vunpack.c.l.b16 %v3460
        %v3581 = vunpack.c.l.b16 %v3463
        %v3582 = vunpack.c.l.b16 %v3467
        %v3583 = vunpack.c.l.b16 %v3470
        %v3584 = vunpack.c.l.b16 %v3474
        %v3585 = vunpack.c.l.b16 %v3477
        %v3586 = vunpack.c.l.b16 %v3481
        %v3587 = vunpack.c.l.b16 %v3484
        %v3588 = vunpack.c.l.b16 %v3488
        %v3589 = vunpack.c.l.b16 %v3491
        %v3590 = vunpack.c.l.b16 %v3495
        %v3591 = vunpack.c.l.b16 %v3498
        %v3592 = vunpack.c.l.b16 %v3502
        %v3593 = vunpack.c.l.b16 %v3505
        %v3594 = vunpack.c.l.b16 %v3509
        %v3595 = vunpack.c.l.b16 %v3512
        %v3596 = vunpack.c.l.b16 %v3516
        %v3597 = vunpack.c.l.b16 %v3519
        %v3598 = vunpack.c.l.b16 %v3523
        %v3599 = vunpack.c.l.b16 %v3526
        %v3600 = vunpack.c.l.b16 %v3530
        %v3601 = vunpack.c.l.b16 %v3533
        %v3602 = vunpack.c.l.b16 %v3537
        %v3603 = vunpack.c.l.b16 %v3540
        %v3604 = vunpack.c.l.b16 %v3544
        %v3605 = vunpack.c.l.b16 %v3547
        %v3606 = vunpack.c.l.b16 %v3551
        %v3607 = vunpack.c.l.b16 %v3554
        %v3608 = vunpack.c.l.b16 %v3558
        %v3609 = vunpack.c.l.b16 %v3561
        %v3610 = vpack.c.b16 %v3579, %v3578
        %v3611 = vpack.c.b16 %v3581, %v3580
        %v3612 = vpack.c.b16 %v3583, %v3582
        %v3613 = vpack.c.b16 %v3585, %v3584
        %v3614 = vpack.c.b16 %v3587, %v3586
        %v3615 = vpack.c.b16 %v3589, %v3588
        %v3616 = vpack.c.b16 %v3591, %v3590
        %v3617 = vpack.c.b16 %v3593, %v3592
        %v3618 = vpack.c.b16 %v3595, %v3594
        %v3619 = vpack.c.b16 %v3597, %v3596
        %v3620 = vpack.c.b16 %v3599, %v3598
        %v3621 = vpack.c.b16 %v3601, %v3600
        %v3622 = vpack.c.b16 %v3603, %v3602
        %v3623 = vpack.c.b16 %v3605, %v3604
        %v3624 = vpack.c.b16 %v3607, %v3606
        %v3625 = vpack.c.b16 %v3609, %v3608
        %v3658 = vunpack.c.l.b16 %v3562
        %v3659 = vunpack.c.l.b16 %v3563
        %v3660 = vunpack.c.l.b16 %v3564
        %v3661 = vunpack.c.l.b16 %v3565
        %v3662 = vunpack.c.l.b16 %v3566
        %v3663 = vunpack.c.l.b16 %v3567
        %v3664 = vunpack.c.l.b16 %v3568
        %v3665 = vunpack.c.l.b16 %v3569
        %v3666 = vunpack.c.l.b16 %v3570
        %v3667 = vunpack.c.l.b16 %v3571
        %v3668 = vunpack.c.l.b16 %v3572
        %v3669 = vunpack.c.l.b16 %v3573
        %v3670 = vunpack.c.l.b16 %v3574
        %v3671 = vunpack.c.l.b16 %v3575
        %v3672 = vunpack.c.l.b16 %v3576
        %v3673 = vunpack.c.l.b16 %v3577
        %v3674 = vpack.c.b16 %v3659, %v3658
        %v3675 = vpack.c.b16 %v3661, %v3660
        %v3676 = vpack.c.b16 %v3663, %v3662
        %v3677 = vpack.c.b16 %v3665, %v3664
        %v3678 = vpack.c.b16 %v3667, %v3666
        %v3679 = vpack.c.b16 %v3669, %v3668
        %v3680 = vpack.c.b16 %v3671, %v3670
        %v3681 = vpack.c.b16 %v3673, %v3672
        %3690 = vmatprep.subr.bf16.mxu0 0
        %3691 = vmatpush1.bf16.msra.mxu0 %v3681
        %3692 = vmatprep.subr.bf16.mxu0 0
        %3693 = vmatpush1.bf16.msra.mxu0 %v3680
        %3694 = vmatprep.subr.bf16.mxu0 0
        %3695 = vmatpush1.bf16.msra.mxu0 %v3679
        %3696 = vmatprep.subr.bf16.mxu0 0
        %3697 = vmatpush1.bf16.msra.mxu0 %v3678
        %3698 = vmatprep.subr.bf16.mxu0 0
        %3699 = vmatpush1.bf16.msra.mxu0 %v3677
        %3700 = vmatprep.subr.bf16.mxu0 0
        %3701 = vmatpush1.bf16.msra.mxu0 %v3676
        %3702 = vmatprep.subr.bf16.mxu0 0
        %3703 = vmatpush1.bf16.msra.mxu0 %v3675
        %3704 = vmatprep.subr.bf16.mxu0 0
        %3705 = vmatpush1.bf16.msra.mxu0 %v3674
        %3706 = vmatprep.subr.bf16.mxu0 0
        %3707 = vmatpush2.bf16.msra.mxu0 0
        %3708 = vmatprep.subr.bf16.mxu0 0
        %3709 = vmatpush2.bf16.msra.mxu0 0
        %3710 = vmatprep.subr.bf16.mxu0 0
        %3711 = vmatpush2.bf16.msra.mxu0 0
        %3712 = vmatprep.subr.bf16.mxu0 0
        %3713 = vmatpush2.bf16.msra.mxu0 0
        %3714 = vmatprep.subr.bf16.mxu0 0
        %3715 = vmatpush2.bf16.msra.mxu0 0
        %3716 = vmatprep.subr.bf16.mxu0 0
        %3717 = vmatpush2.bf16.msra.mxu0 0
        %3718 = vmatprep.subr.bf16.mxu0 0
        %3719 = vmatpush2.bf16.msra.mxu0 0
        %3720 = vmatprep.subr.bf16.mxu0 0
        %3721 = vmatpush2.bf16.msra.mxu0 0
        %3722 = vmatprep.mubr.bf16.mxu0 0
        %3723 = vmatmul.mubr.bf16.gmra.mxu0 %v3610
        %v3724 = vpop.f32.mrf.mxu0
        %v3725 = vadd.f32 0.0, %v3724
        %v3726 = vpop.f32.mrf.mxu0
        %v3727 = vpop.f32.mrf.mxu0
        %v3728 = vadd.f32 0.0, %v3727
        %v3729 = vpop.f32.mrf.mxu0
        %3730 = vmatprep.mubr.bf16.mxu0 0
        %3731 = vmatmul.mubr.bf16.gmra.mxu0 %v3611
        %v3732 = vpop.f32.mrf.mxu0
        %v3733 = vadd.f32 0.0, %v3732
        %v3734 = vpop.f32.mrf.mxu0
        %v3735 = vpop.f32.mrf.mxu0
        %v3736 = vadd.f32 0.0, %v3735
        %v3737 = vpop.f32.mrf.mxu0
        %3738 = vmatprep.mubr.bf16.mxu0 0
        %3739 = vmatmul.mubr.bf16.gmra.mxu0 %v3612
        %v3740 = vpop.f32.mrf.mxu0
        %v3741 = vadd.f32 0.0, %v3740
        %v3742 = vpop.f32.mrf.mxu0
        %v3743 = vpop.f32.mrf.mxu0
        %v3744 = vadd.f32 0.0, %v3743
        %v3745 = vpop.f32.mrf.mxu0
        %3746 = vmatprep.mubr.bf16.mxu0 0
        %3747 = vmatmul.mubr.bf16.gmra.mxu0 %v3613
        %v3748 = vpop.f32.mrf.mxu0
        %v3749 = vadd.f32 0.0, %v3748
        %v3750 = vpop.f32.mrf.mxu0
        %v3751 = vpop.f32.mrf.mxu0
        %v3752 = vadd.f32 0.0, %v3751
        %v3753 = vpop.f32.mrf.mxu0
        %3754 = vmatprep.mubr.bf16.mxu0 0
        %3755 = vmatmul.mubr.bf16.gmra.mxu0 %v3614
        %v3756 = vpop.f32.mrf.mxu0
        %v3757 = vadd.f32 0.0, %v3756
        %v3758 = vpop.f32.mrf.mxu0
        %v3759 = vpop.f32.mrf.mxu0
        %v3760 = vadd.f32 0.0, %v3759
        %v3761 = vpop.f32.mrf.mxu0
        %3762 = vmatprep.mubr.bf16.mxu0 0
        %3763 = vmatmul.mubr.bf16.gmra.mxu0 %v3615
        %v3764 = vpop.f32.mrf.mxu0
        %v3765 = vadd.f32 0.0, %v3764
        %v3766 = vpop.f32.mrf.mxu0
        %v3767 = vpop.f32.mrf.mxu0
        %v3768 = vadd.f32 0.0, %v3767
        %v3769 = vpop.f32.mrf.mxu0
        %3770 = vmatprep.mubr.bf16.mxu0 0
        %3771 = vmatmul.mubr.bf16.gmra.mxu0 %v3616
        %v3772 = vpop.f32.mrf.mxu0
        %v3773 = vadd.f32 0.0, %v3772
        %v3774 = vpop.f32.mrf.mxu0
        %v3775 = vpop.f32.mrf.mxu0
        %v3776 = vadd.f32 0.0, %v3775
        %v3777 = vpop.f32.mrf.mxu0
        %3778 = vmatprep.mubr.bf16.mxu0 0
        %3779 = vmatmul.mubr.bf16.gmra.mxu0 %v3617
        %v3780 = vpop.f32.mrf.mxu0
        %v3781 = vadd.f32 0.0, %v3780
        %v3782 = vpop.f32.mrf.mxu0
        %v3783 = vpop.f32.mrf.mxu0
        %v3784 = vadd.f32 0.0, %v3783
        %v3785 = vpop.f32.mrf.mxu0
        %3786 = vmatprep.mubr.bf16.mxu0 0
        %3787 = vmatmul.mubr.bf16.gmra.mxu0 %v3618
        %v3788 = vpop.f32.mrf.mxu0
        %v3789 = vadd.f32 0.0, %v3788
        %v3790 = vpop.f32.mrf.mxu0
        %v3791 = vpop.f32.mrf.mxu0
        %v3792 = vadd.f32 0.0, %v3791
        %v3793 = vpop.f32.mrf.mxu0
        %3794 = vmatprep.mubr.bf16.mxu0 0
        %3795 = vmatmul.mubr.bf16.gmra.mxu0 %v3619
        %v3796 = vpop.f32.mrf.mxu0
        %v3797 = vadd.f32 0.0, %v3796
        %v3798 = vpop.f32.mrf.mxu0
        %v3799 = vpop.f32.mrf.mxu0
        %v3800 = vadd.f32 0.0, %v3799
        %v3801 = vpop.f32.mrf.mxu0
        %3802 = vmatprep.mubr.bf16.mxu0 0
        %3803 = vmatmul.mubr.bf16.gmra.mxu0 %v3620
        %v3804 = vpop.f32.mrf.mxu0
        %v3805 = vadd.f32 0.0, %v3804
        %v3806 = vpop.f32.mrf.mxu0
        %v3807 = vpop.f32.mrf.mxu0
        %v3808 = vadd.f32 0.0, %v3807
        %v3809 = vpop.f32.mrf.mxu0
        %3810 = vmatprep.mubr.bf16.mxu0 0
        %3811 = vmatmul.mubr.bf16.gmra.mxu0 %v3621
        %v3812 = vpop.f32.mrf.mxu0
        %v3813 = vadd.f32 0.0, %v3812
        %v3814 = vpop.f32.mrf.mxu0
        %v3815 = vpop.f32.mrf.mxu0
        %v3816 = vadd.f32 0.0, %v3815
        %v3817 = vpop.f32.mrf.mxu0
        %3818 = vmatprep.mubr.bf16.mxu0 0
        %3819 = vmatmul.mubr.bf16.gmra.mxu0 %v3622
        %v3820 = vpop.f32.mrf.mxu0
        %v3821 = vadd.f32 0.0, %v3820
        %v3822 = vpop.f32.mrf.mxu0
        %v3823 = vpop.f32.mrf.mxu0
        %v3824 = vadd.f32 0.0, %v3823
        %v3825 = vpop.f32.mrf.mxu0
        %3826 = vmatprep.mubr.bf16.mxu0 0
        %3827 = vmatmul.mubr.bf16.gmra.mxu0 %v3623
        %v3828 = vpop.f32.mrf.mxu0
        %v3829 = vadd.f32 0.0, %v3828
        %v3830 = vpop.f32.mrf.mxu0
        %v3831 = vpop.f32.mrf.mxu0
        %v3832 = vadd.f32 0.0, %v3831
        %v3833 = vpop.f32.mrf.mxu0
        %3834 = vmatprep.mubr.bf16.mxu0 0
        %3835 = vmatmul.mubr.bf16.gmra.mxu0 %v3624
        %v3836 = vpop.f32.mrf.mxu0
        %v3837 = vadd.f32 0.0, %v3836
        %v3838 = vpop.f32.mrf.mxu0
        %v3839 = vpop.f32.mrf.mxu0
        %v3840 = vadd.f32 0.0, %v3839
        %v3841 = vpop.f32.mrf.mxu0
        %3842 = vmatprep.mubr.bf16.mxu0 0
        %3843 = vmatmul.mubr.bf16.gmra.mxu0 %v3625
        %v3844 = vpop.f32.mrf.mxu0
        %v3845 = vadd.f32 0.0, %v3844
        %v3846 = vpop.f32.mrf.mxu0
        %v3847 = vpop.f32.mrf.mxu0
        %v3848 = vadd.f32 0.0, %v3847
        %v3849 = vpop.f32.mrf.mxu0
        %3850 = vdwg.mxu0
        %v3851 = vadd.f32 %v3354, %v3725
        %v3852 = vadd.f32 %v3355, %v3728
        %v3853 = vadd.f32 %v3356, %v3733
        %v3854 = vadd.f32 %v3357, %v3736
        %v3855 = vadd.f32 %v3358, %v3741
        %v3856 = vadd.f32 %v3359, %v3744
        %v3857 = vadd.f32 %v3360, %v3749
        %v3858 = vadd.f32 %v3361, %v3752
        %v3859 = vadd.f32 %v3362, %v3757
        %v3860 = vadd.f32 %v3363, %v3760
        %v3861 = vadd.f32 %v3364, %v3765
        %v3862 = vadd.f32 %v3365, %v3768
        %v3863 = vadd.f32 %v3366, %v3773
        %v3864 = vadd.f32 %v3367, %v3776
        %v3865 = vadd.f32 %v3368, %v3781
        %v3866 = vadd.f32 %v3369, %v3784
        %v3867 = vadd.f32 %v3370, %v3789
        %v3868 = vadd.f32 %v3371, %v3792
        %v3869 = vadd.f32 %v3372, %v3797
        %v3870 = vadd.f32 %v3373, %v3800
        %v3871 = vadd.f32 %v3374, %v3805
        %v3872 = vadd.f32 %v3375, %v3808
        %v3873 = vadd.f32 %v3376, %v3813
        %v3874 = vadd.f32 %v3377, %v3816
        %v3875 = vadd.f32 %v3378, %v3821
        %v3876 = vadd.f32 %v3379, %v3824
        %v3877 = vadd.f32 %v3380, %v3829
        %v3878 = vadd.f32 %v3381, %v3832
        %v3879 = vadd.f32 %v3382, %v3837
        %v3880 = vadd.f32 %v3383, %v3840
        %v3881 = vadd.f32 %v3384, %v3845
        %v3882 = vadd.f32 %v3385, %v3848
        %s3883 = scalar_lea.vmem [#allocation2], 24
        %v3884 = vld [vmem:[%s3883] sm:$0xf]
        %v3885 = vld [vmem:[%s3883 + $0x4] sm:$0xf]
        %v3886 = vld [vmem:[%s3883 + $0xc] sm:$0xf]
        %v3887 = vld [vmem:[%s3883 + $0x10] sm:$0xf]
        %v3888 = vld [vmem:[%s3883 + $0x18] sm:$0xf]
        %v3889 = vld [vmem:[%s3883 + $0x1c] sm:$0xf]
        %v3890 = vld [vmem:[%s3883 + $0x24] sm:$0xf]
        %v3891 = vld [vmem:[%s3883 + $0x28] sm:$0xf]
        %v3892 = vld [vmem:[%s3883 + $0x30] sm:$0xf]
        %v3893 = vld [vmem:[%s3883 + $0x34] sm:$0xf]
        %v3894 = vld [vmem:[%s3883 + $0x3c] sm:$0xf]
        %v3895 = vld [vmem:[%s3883 + $0x40] sm:$0xf]
        %v3896 = vld [vmem:[%s3883 + $0x48] sm:$0xf]
        %v3897 = vld [vmem:[%s3883 + $0x4c] sm:$0xf]
        %v3898 = vld [vmem:[%s3883 + $0x54] sm:$0xf]
        %v3899 = vld [vmem:[%s3883 + $0x58] sm:$0xf]
        %v3900 = vld [vmem:[%s3883 + $0x60] sm:$0xf]
        %v3901 = vld [vmem:[%s3883 + $0x64] sm:$0xf]
        %v3902 = vld [vmem:[%s3883 + $0x6c] sm:$0xf]
        %v3903 = vld [vmem:[%s3883 + $0x70] sm:$0xf]
        %v3904 = vld [vmem:[%s3883 + $0x78] sm:$0xf]
        %v3905 = vld [vmem:[%s3883 + $0x7c] sm:$0xf]
        %v3906 = vld [vmem:[%s3883 + $0x84] sm:$0xf]
        %v3907 = vld [vmem:[%s3883 + $0x88] sm:$0xf]
        %v3908 = vld [vmem:[%s3883 + $0x90] sm:$0xf]
        %v3909 = vld [vmem:[%s3883 + $0x94] sm:$0xf]
        %v3910 = vld [vmem:[%s3883 + $0x9c] sm:$0xf]
        %v3911 = vld [vmem:[%s3883 + $0xa0] sm:$0xf]
        %v3912 = vld [vmem:[%s3883 + $0xa8] sm:$0xf]
        %v3913 = vld [vmem:[%s3883 + $0xac] sm:$0xf]
        %v3914 = vld [vmem:[%s3883 + $0xb4] sm:$0xf]
        %v3915 = vld [vmem:[%s3883 + $0xb8] sm:$0xf]
        %v3916 = vld [vmem:[%s1 + $0x180] sm:$0xf]
        %v3917 = vld [vmem:[%s1 + $0x184] sm:$0xf]
        %v3918 = vld [vmem:[%s1 + $0x188] sm:$0xf]
        %v3919 = vld [vmem:[%s1 + $0x18c] sm:$0xf]
        %v3920 = vld [vmem:[%s1 + $0x190] sm:$0xf]
        %v3921 = vld [vmem:[%s1 + $0x194] sm:$0xf]
        %v3922 = vld [vmem:[%s1 + $0x198] sm:$0xf]
        %v3923 = vld [vmem:[%s1 + $0x19c] sm:$0xf]
        %v3924 = vld [vmem:[%s1 + $0x1a0] sm:$0xf]
        %v3925 = vld [vmem:[%s1 + $0x1a4] sm:$0xf]
        %v3926 = vld [vmem:[%s1 + $0x1a8] sm:$0xf]
        %v3927 = vld [vmem:[%s1 + $0x1ac] sm:$0xf]
        %v3928 = vld [vmem:[%s1 + $0x1b0] sm:$0xf]
        %v3929 = vld [vmem:[%s1 + $0x1b4] sm:$0xf]
        %v3930 = vld [vmem:[%s1 + $0x1b8] sm:$0xf]
        %v3931 = vld [vmem:[%s1 + $0x1bc] sm:$0xf]
        %v3964 = vunpack.c.l.b16 %v3884
        %v3965 = vunpack.c.l.b16 %v3885
        %v3966 = vunpack.c.l.b16 %v3886
        %v3967 = vunpack.c.l.b16 %v3887
        %v3968 = vunpack.c.l.b16 %v3888
        %v3969 = vunpack.c.l.b16 %v3889
        %v3970 = vunpack.c.l.b16 %v3890
        %v3971 = vunpack.c.l.b16 %v3891
        %v3972 = vunpack.c.l.b16 %v3892
        %v3973 = vunpack.c.l.b16 %v3893
        %v3974 = vunpack.c.l.b16 %v3894
        %v3975 = vunpack.c.l.b16 %v3895
        %v3976 = vunpack.c.l.b16 %v3896
        %v3977 = vunpack.c.l.b16 %v3897
        %v3978 = vunpack.c.l.b16 %v3898
        %v3979 = vunpack.c.l.b16 %v3899
        %v3980 = vunpack.c.l.b16 %v3900
        %v3981 = vunpack.c.l.b16 %v3901
        %v3982 = vunpack.c.l.b16 %v3902
        %v3983 = vunpack.c.l.b16 %v3903
        %v3984 = vunpack.c.l.b16 %v3904
        %v3985 = vunpack.c.l.b16 %v3905
        %v3986 = vunpack.c.l.b16 %v3906
        %v3987 = vunpack.c.l.b16 %v3907
        %v3988 = vunpack.c.l.b16 %v3908
        %v3989 = vunpack.c.l.b16 %v3909
        %v3990 = vunpack.c.l.b16 %v3910
        %v3991 = vunpack.c.l.b16 %v3911
        %v3992 = vunpack.c.l.b16 %v3912
        %v3993 = vunpack.c.l.b16 %v3913
        %v3994 = vunpack.c.l.b16 %v3914
        %v3995 = vunpack.c.l.b16 %v3915
        %v3996 = vpack.c.b16 %v3965, %v3964
        %v3997 = vpack.c.b16 %v3967, %v3966
        %v3998 = vpack.c.b16 %v3969, %v3968
        %v3999 = vpack.c.b16 %v3971, %v3970
        %v4000 = vpack.c.b16 %v3973, %v3972
        %v4001 = vpack.c.b16 %v3975, %v3974
        %v4002 = vpack.c.b16 %v3977, %v3976
        %v4003 = vpack.c.b16 %v3979, %v3978
        %v4004 = vpack.c.b16 %v3981, %v3980
        %v4005 = vpack.c.b16 %v3983, %v3982
        %v4006 = vpack.c.b16 %v3985, %v3984
        %v4007 = vpack.c.b16 %v3987, %v3986
        %v4008 = vpack.c.b16 %v3989, %v3988
        %v4009 = vpack.c.b16 %v3991, %v3990
        %v4010 = vpack.c.b16 %v3993, %v3992
        %v4011 = vpack.c.b16 %v3995, %v3994
        %v4044 = vunpack.c.l.b16 %v3916
        %v4045 = vunpack.c.l.b16 %v3917
        %v4046 = vunpack.c.l.b16 %v3918
        %v4047 = vunpack.c.l.b16 %v3919
        %v4048 = vunpack.c.l.b16 %v3920
        %v4049 = vunpack.c.l.b16 %v3921
        %v4050 = vunpack.c.l.b16 %v3922
        %v4051 = vunpack.c.l.b16 %v3923
        %v4052 = vunpack.c.l.b16 %v3924
        %v4053 = vunpack.c.l.b16 %v3925
        %v4054 = vunpack.c.l.b16 %v3926
        %v4055 = vunpack.c.l.b16 %v3927
        %v4056 = vunpack.c.l.b16 %v3928
        %v4057 = vunpack.c.l.b16 %v3929
        %v4058 = vunpack.c.l.b16 %v3930
        %v4059 = vunpack.c.l.b16 %v3931
        %v4060 = vpack.c.b16 %v4045, %v4044
        %v4061 = vpack.c.b16 %v4047, %v4046
        %v4062 = vpack.c.b16 %v4049, %v4048
        %v4063 = vpack.c.b16 %v4051, %v4050
        %v4064 = vpack.c.b16 %v4053, %v4052
        %v4065 = vpack.c.b16 %v4055, %v4054
        %v4066 = vpack.c.b16 %v4057, %v4056
        %v4067 = vpack.c.b16 %v4059, %v4058
        %4076 = vmatprep.subr.bf16.mxu0 0
        %4077 = vmatpush1.bf16.msra.mxu0 %v4067
        %4078 = vmatprep.subr.bf16.mxu0 0
        %4079 = vmatpush1.bf16.msra.mxu0 %v4066
        %4080 = vmatprep.subr.bf16.mxu0 0
        %4081 = vmatpush1.bf16.msra.mxu0 %v4065
        %4082 = vmatprep.subr.bf16.mxu0 0
        %4083 = vmatpush1.bf16.msra.mxu0 %v4064
        %4084 = vmatprep.subr.bf16.mxu0 0
        %4085 = vmatpush1.bf16.msra.mxu0 %v4063
        %4086 = vmatprep.subr.bf16.mxu0 0
        %4087 = vmatpush1.bf16.msra.mxu0 %v4062
        %4088 = vmatprep.subr.bf16.mxu0 0
        %4089 = vmatpush1.bf16.msra.mxu0 %v4061
        %4090 = vmatprep.subr.bf16.mxu0 0
        %4091 = vmatpush1.bf16.msra.mxu0 %v4060
        %4092 = vmatprep.subr.bf16.mxu0 0
        %4093 = vmatpush2.bf16.msra.mxu0 0
        %4094 = vmatprep.subr.bf16.mxu0 0
        %4095 = vmatpush2.bf16.msra.mxu0 0
        %4096 = vmatprep.subr.bf16.mxu0 0
        %4097 = vmatpush2.bf16.msra.mxu0 0
        %4098 = vmatprep.subr.bf16.mxu0 0
        %4099 = vmatpush2.bf16.msra.mxu0 0
        %4100 = vmatprep.subr.bf16.mxu0 0
        %4101 = vmatpush2.bf16.msra.mxu0 0
        %4102 = vmatprep.subr.bf16.mxu0 0
        %4103 = vmatpush2.bf16.msra.mxu0 0
        %4104 = vmatprep.subr.bf16.mxu0 0
        %4105 = vmatpush2.bf16.msra.mxu0 0
        %4106 = vmatprep.subr.bf16.mxu0 0
        %4107 = vmatpush2.bf16.msra.mxu0 0
        %4108 = vmatprep.mubr.bf16.mxu0 0
        %4109 = vmatmul.mubr.bf16.gmra.mxu0 %v3996
        %v4110 = vpop.f32.mrf.mxu0
        %v4111 = vadd.f32 0.0, %v4110
        %v4112 = vpop.f32.mrf.mxu0
        %v4113 = vpop.f32.mrf.mxu0
        %v4114 = vadd.f32 0.0, %v4113
        %v4115 = vpop.f32.mrf.mxu0
        %4116 = vmatprep.mubr.bf16.mxu0 0
        %4117 = vmatmul.mubr.bf16.gmra.mxu0 %v3997
        %v4118 = vpop.f32.mrf.mxu0
        %v4119 = vadd.f32 0.0, %v4118
        %v4120 = vpop.f32.mrf.mxu0
        %v4121 = vpop.f32.mrf.mxu0
        %v4122 = vadd.f32 0.0, %v4121
        %v4123 = vpop.f32.mrf.mxu0
        %4124 = vmatprep.mubr.bf16.mxu0 0
        %4125 = vmatmul.mubr.bf16.gmra.mxu0 %v3998
        %v4126 = vpop.f32.mrf.mxu0
        %v4127 = vadd.f32 0.0, %v4126
        %v4128 = vpop.f32.mrf.mxu0
        %v4129 = vpop.f32.mrf.mxu0
        %v4130 = vadd.f32 0.0, %v4129
        %v4131 = vpop.f32.mrf.mxu0
        %4132 = vmatprep.mubr.bf16.mxu0 0
        %4133 = vmatmul.mubr.bf16.gmra.mxu0 %v3999
        %v4134 = vpop.f32.mrf.mxu0
        %v4135 = vadd.f32 0.0, %v4134
        %v4136 = vpop.f32.mrf.mxu0
        %v4137 = vpop.f32.mrf.mxu0
        %v4138 = vadd.f32 0.0, %v4137
        %v4139 = vpop.f32.mrf.mxu0
        %4140 = vmatprep.mubr.bf16.mxu0 0
        %4141 = vmatmul.mubr.bf16.gmra.mxu0 %v4000
        %v4142 = vpop.f32.mrf.mxu0
        %v4143 = vadd.f32 0.0, %v4142
        %v4144 = vpop.f32.mrf.mxu0
        %v4145 = vpop.f32.mrf.mxu0
        %v4146 = vadd.f32 0.0, %v4145
        %v4147 = vpop.f32.mrf.mxu0
        %4148 = vmatprep.mubr.bf16.mxu0 0
        %4149 = vmatmul.mubr.bf16.gmra.mxu0 %v4001
        %v4150 = vpop.f32.mrf.mxu0
        %v4151 = vadd.f32 0.0, %v4150
        %v4152 = vpop.f32.mrf.mxu0
        %v4153 = vpop.f32.mrf.mxu0
        %v4154 = vadd.f32 0.0, %v4153
        %v4155 = vpop.f32.mrf.mxu0
        %4156 = vmatprep.mubr.bf16.mxu0 0
        %4157 = vmatmul.mubr.bf16.gmra.mxu0 %v4002
        %v4158 = vpop.f32.mrf.mxu0
        %v4159 = vadd.f32 0.0, %v4158
        %v4160 = vpop.f32.mrf.mxu0
        %v4161 = vpop.f32.mrf.mxu0
        %v4162 = vadd.f32 0.0, %v4161
        %v4163 = vpop.f32.mrf.mxu0
        %4164 = vmatprep.mubr.bf16.mxu0 0
        %4165 = vmatmul.mubr.bf16.gmra.mxu0 %v4003
        %v4166 = vpop.f32.mrf.mxu0
        %v4167 = vadd.f32 0.0, %v4166
        %v4168 = vpop.f32.mrf.mxu0
        %v4169 = vpop.f32.mrf.mxu0
        %v4170 = vadd.f32 0.0, %v4169
        %v4171 = vpop.f32.mrf.mxu0
        %4172 = vmatprep.mubr.bf16.mxu0 0
        %4173 = vmatmul.mubr.bf16.gmra.mxu0 %v4004
        %v4174 = vpop.f32.mrf.mxu0
        %v4175 = vadd.f32 0.0, %v4174
        %v4176 = vpop.f32.mrf.mxu0
        %v4177 = vpop.f32.mrf.mxu0
        %v4178 = vadd.f32 0.0, %v4177
        %v4179 = vpop.f32.mrf.mxu0
        %4180 = vmatprep.mubr.bf16.mxu0 0
        %4181 = vmatmul.mubr.bf16.gmra.mxu0 %v4005
        %v4182 = vpop.f32.mrf.mxu0
        %v4183 = vadd.f32 0.0, %v4182
        %v4184 = vpop.f32.mrf.mxu0
        %v4185 = vpop.f32.mrf.mxu0
        %v4186 = vadd.f32 0.0, %v4185
        %v4187 = vpop.f32.mrf.mxu0
        %4188 = vmatprep.mubr.bf16.mxu0 0
        %4189 = vmatmul.mubr.bf16.gmra.mxu0 %v4006
        %v4190 = vpop.f32.mrf.mxu0
        %v4191 = vadd.f32 0.0, %v4190
        %v4192 = vpop.f32.mrf.mxu0
        %v4193 = vpop.f32.mrf.mxu0
        %v4194 = vadd.f32 0.0, %v4193
        %v4195 = vpop.f32.mrf.mxu0
        %4196 = vmatprep.mubr.bf16.mxu0 0
        %4197 = vmatmul.mubr.bf16.gmra.mxu0 %v4007
        %v4198 = vpop.f32.mrf.mxu0
        %v4199 = vadd.f32 0.0, %v4198
        %v4200 = vpop.f32.mrf.mxu0
        %v4201 = vpop.f32.mrf.mxu0
        %v4202 = vadd.f32 0.0, %v4201
        %v4203 = vpop.f32.mrf.mxu0
        %4204 = vmatprep.mubr.bf16.mxu0 0
        %4205 = vmatmul.mubr.bf16.gmra.mxu0 %v4008
        %v4206 = vpop.f32.mrf.mxu0
        %v4207 = vadd.f32 0.0, %v4206
        %v4208 = vpop.f32.mrf.mxu0
        %v4209 = vpop.f32.mrf.mxu0
        %v4210 = vadd.f32 0.0, %v4209
        %v4211 = vpop.f32.mrf.mxu0
        %4212 = vmatprep.mubr.bf16.mxu0 0
        %4213 = vmatmul.mubr.bf16.gmra.mxu0 %v4009
        %v4214 = vpop.f32.mrf.mxu0
        %v4215 = vadd.f32 0.0, %v4214
        %v4216 = vpop.f32.mrf.mxu0
        %v4217 = vpop.f32.mrf.mxu0
        %v4218 = vadd.f32 0.0, %v4217
        %v4219 = vpop.f32.mrf.mxu0
        %4220 = vmatprep.mubr.bf16.mxu0 0
        %4221 = vmatmul.mubr.bf16.gmra.mxu0 %v4010
        %v4222 = vpop.f32.mrf.mxu0
        %v4223 = vadd.f32 0.0, %v4222
        %v4224 = vpop.f32.mrf.mxu0
        %v4225 = vpop.f32.mrf.mxu0
        %v4226 = vadd.f32 0.0, %v4225
        %v4227 = vpop.f32.mrf.mxu0
        %4228 = vmatprep.mubr.bf16.mxu0 0
        %4229 = vmatmul.mubr.bf16.gmra.mxu0 %v4011
        %v4230 = vpop.f32.mrf.mxu0
        %v4231 = vadd.f32 0.0, %v4230
        %v4232 = vpop.f32.mrf.mxu0
        %v4233 = vpop.f32.mrf.mxu0
        %v4234 = vadd.f32 0.0, %v4233
        %v4235 = vpop.f32.mrf.mxu0
        %4236 = vdwg.mxu0
        %v4237 = vadd.f32 %v3851, %v4111
        %v4238 = vadd.f32 %v3852, %v4114
        %v4239 = vadd.f32 %v3853, %v4119
        %v4240 = vadd.f32 %v3854, %v4122
        %v4241 = vadd.f32 %v3855, %v4127
        %v4242 = vadd.f32 %v3856, %v4130
        %v4243 = vadd.f32 %v3857, %v4135
        %v4244 = vadd.f32 %v3858, %v4138
        %v4245 = vadd.f32 %v3859, %v4143
        %v4246 = vadd.f32 %v3860, %v4146
        %v4247 = vadd.f32 %v3861, %v4151
        %v4248 = vadd.f32 %v3862, %v4154
        %v4249 = vadd.f32 %v3863, %v4159
        %v4250 = vadd.f32 %v3864, %v4162
        %v4251 = vadd.f32 %v3865, %v4167
        %v4252 = vadd.f32 %v3866, %v4170
        %v4253 = vadd.f32 %v3867, %v4175
        %v4254 = vadd.f32 %v3868, %v4178
        %v4255 = vadd.f32 %v3869, %v4183
        %v4256 = vadd.f32 %v3870, %v4186
        %v4257 = vadd.f32 %v3871, %v4191
        %v4258 = vadd.f32 %v3872, %v4194
        %v4259 = vadd.f32 %v3873, %v4199
        %v4260 = vadd.f32 %v3874, %v4202
        %v4261 = vadd.f32 %v3875, %v4207
        %v4262 = vadd.f32 %v3876, %v4210
        %v4263 = vadd.f32 %v3877, %v4215
        %v4264 = vadd.f32 %v3878, %v4218
        %v4265 = vadd.f32 %v3879, %v4223
        %v4266 = vadd.f32 %v3880, %v4226
        %v4267 = vadd.f32 %v3881, %v4231
        %v4268 = vadd.f32 %v3882, %v4234
        %v4269 = vld [vmem:[%s3883] sm:$0xf]
        %v4270 = vld [vmem:[%s3883 + $0x4] sm:$0xf]
        %v4271 = vld [vmem:[%s3883 + $0x8] sm:$0x1]
        %v4272 = vld [vmem:[%s3883 + $0xc] sm:$0xf]
        %v4273 = vld [vmem:[%s3883 + $0x10] sm:$0xf]
        %v4274 = vld [vmem:[%s3883 + $0x14] sm:$0x1]
        %v4275 = vld [vmem:[%s3883 + $0x18] sm:$0xf]
        %v4276 = vld [vmem:[%s3883 + $0x1c] sm:$0xf]
        %v4277 = vld [vmem:[%s3883 + $0x20] sm:$0x1]
        %v4278 = vld [vmem:[%s3883 + $0x24] sm:$0xf]
        %v4279 = vld [vmem:[%s3883 + $0x28] sm:$0xf]
        %v4280 = vld [vmem:[%s3883 + $0x2c] sm:$0x1]
        %v4281 = vld [vmem:[%s3883 + $0x30] sm:$0xf]
        %v4282 = vld [vmem:[%s3883 + $0x34] sm:$0xf]
        %v4283 = vld [vmem:[%s3883 + $0x38] sm:$0x1]
        %v4284 = vld [vmem:[%s3883 + $0x3c] sm:$0xf]
        %v4285 = vld [vmem:[%s3883 + $0x40] sm:$0xf]
        %v4286 = vld [vmem:[%s3883 + $0x44] sm:$0x1]
        %v4287 = vld [vmem:[%s3883 + $0x48] sm:$0xf]
        %v4288 = vld [vmem:[%s3883 + $0x4c] sm:$0xf]
        %v4289 = vld [vmem:[%s3883 + $0x50] sm:$0x1]
        %v4290 = vld [vmem:[%s3883 + $0x54] sm:$0xf]
        %v4291 = vld [vmem:[%s3883 + $0x58] sm:$0xf]
        %v4292 = vld [vmem:[%s3883 + $0x5c] sm:$0x1]
        %v4293 = vld [vmem:[%s3883 + $0x60] sm:$0xf]
        %v4294 = vld [vmem:[%s3883 + $0x64] sm:$0xf]
        %v4295 = vld [vmem:[%s3883 + $0x68] sm:$0x1]
        %v4296 = vld [vmem:[%s3883 + $0x6c] sm:$0xf]
        %v4297 = vld [vmem:[%s3883 + $0x70] sm:$0xf]
        %v4298 = vld [vmem:[%s3883 + $0x74] sm:$0x1]
        %v4299 = vld [vmem:[%s3883 + $0x78] sm:$0xf]
        %v4300 = vld [vmem:[%s3883 + $0x7c] sm:$0xf]
        %v4301 = vld [vmem:[%s3883 + $0x80] sm:$0x1]
        %v4302 = vld [vmem:[%s3883 + $0x84] sm:$0xf]
        %v4303 = vld [vmem:[%s3883 + $0x88] sm:$0xf]
        %v4304 = vld [vmem:[%s3883 + $0x8c] sm:$0x1]
        %v4305 = vld [vmem:[%s3883 + $0x90] sm:$0xf]
        %v4306 = vld [vmem:[%s3883 + $0x94] sm:$0xf]
        %v4307 = vld [vmem:[%s3883 + $0x98] sm:$0x1]
        %v4308 = vld [vmem:[%s3883 + $0x9c] sm:$0xf]
        %v4309 = vld [vmem:[%s3883 + $0xa0] sm:$0xf]
        %v4310 = vld [vmem:[%s3883 + $0xa4] sm:$0x1]
        %v4311 = vld [vmem:[%s3883 + $0xa8] sm:$0xf]
        %v4312 = vld [vmem:[%s3883 + $0xac] sm:$0xf]
        %v4313 = vld [vmem:[%s3883 + $0xb0] sm:$0x1]
        %v4314 = vld [vmem:[%s3883 + $0xb4] sm:$0xf]
        %v4315 = vld [vmem:[%s3883 + $0xb8] sm:$0xf]
        %v4316 = vld [vmem:[%s3883 + $0xbc] sm:$0x1]
        %v4318 = vshrl.u32 %v4269, 16
        %v4320 = vrot.slane %v4318, 4
        %v4321 = vshll.u32 %v4269, 16
        %v4323 = vrot.slane %v4321, 5
        %v4324 = vor.u32 %v4320, %v4323
        %v4325 = vrot.slane %v4324, 4
        %v4327 = vshll.u32 %v4270, 16
        %v4329 = vrot.slane %v4327, 5
        %v4330 = vsel %vm785, %v4325, %v4329
        %v4331 = vshrl.u32 %v4270, 16
        %v4333 = vrot.slane %v4331, 4
        %v4334 = vor.u32 %v4333, %v4329
        %v4335 = vrot.slane %v4334, 4
        %v4337 = vshll.u32 %v4271, 16
        %v4339 = vrot.slane %v4337, 5
        %v4340 = vsel %vm785, %v4335, %v4339
        %v4342 = vshrl.u32 %v4272, 16
        %v4344 = vrot.slane %v4342, 4
        %v4345 = vshll.u32 %v4272, 16
        %v4347 = vrot.slane %v4345, 5
        %v4348 = vor.u32 %v4344, %v4347
        %v4349 = vrot.slane %v4348, 4
        %v4351 = vshll.u32 %v4273, 16
        %v4353 = vrot.slane %v4351, 5
        %v4354 = vsel %vm785, %v4349, %v4353
        %v4355 = vshrl.u32 %v4273, 16
        %v4357 = vrot.slane %v4355, 4
        %v4358 = vor.u32 %v4357, %v4353
        %v4359 = vrot.slane %v4358, 4
        %v4361 = vshll.u32 %v4274, 16
        %v4363 = vrot.slane %v4361, 5
        %v4364 = vsel %vm785, %v4359, %v4363
        %v4366 = vshrl.u32 %v4275, 16
        %v4368 = vrot.slane %v4366, 4
        %v4369 = vshll.u32 %v4275, 16
        %v4371 = vrot.slane %v4369, 5
        %v4372 = vor.u32 %v4368, %v4371
        %v4373 = vrot.slane %v4372, 4
        %v4375 = vshll.u32 %v4276, 16
        %v4377 = vrot.slane %v4375, 5
        %v4378 = vsel %vm785, %v4373, %v4377
        %v4379 = vshrl.u32 %v4276, 16
        %v4381 = vrot.slane %v4379, 4
        %v4382 = vor.u32 %v4381, %v4377
        %v4383 = vrot.slane %v4382, 4
        %v4385 = vshll.u32 %v4277, 16
        %v4387 = vrot.slane %v4385, 5
        %v4388 = vsel %vm785, %v4383, %v4387
        %v4390 = vshrl.u32 %v4278, 16
        %v4392 = vrot.slane %v4390, 4
        %v4393 = vshll.u32 %v4278, 16
        %v4395 = vrot.slane %v4393, 5
        %v4396 = vor.u32 %v4392, %v4395
        %v4397 = vrot.slane %v4396, 4
        %v4399 = vshll.u32 %v4279, 16
        %v4401 = vrot.slane %v4399, 5
        %v4402 = vsel %vm785, %v4397, %v4401
        %v4403 = vshrl.u32 %v4279, 16
        %v4405 = vrot.slane %v4403, 4
        %v4406 = vor.u32 %v4405, %v4401
        %v4407 = vrot.slane %v4406, 4
        %v4409 = vshll.u32 %v4280, 16
        %v4411 = vrot.slane %v4409, 5
        %v4412 = vsel %vm785, %v4407, %v4411
        %v4414 = vshrl.u32 %v4281, 16
        %v4416 = vrot.slane %v4414, 4
        %v4417 = vshll.u32 %v4281, 16
        %v4419 = vrot.slane %v4417, 5
        %v4420 = vor.u32 %v4416, %v4419
        %v4421 = vrot.slane %v4420, 4
        %v4423 = vshll.u32 %v4282, 16
        %v4425 = vrot.slane %v4423, 5
        %v4426 = vsel %vm785, %v4421, %v4425
        %v4427 = vshrl.u32 %v4282, 16
        %v4429 = vrot.slane %v4427, 4
        %v4430 = vor.u32 %v4429, %v4425
        %v4431 = vrot.slane %v4430, 4
        %v4433 = vshll.u32 %v4283, 16
        %v4435 = vrot.slane %v4433, 5
        %v4436 = vsel %vm785, %v4431, %v4435
        %v4438 = vshrl.u32 %v4284, 16
        %v4440 = vrot.slane %v4438, 4
        %v4441 = vshll.u32 %v4284, 16
        %v4443 = vrot.slane %v4441, 5
        %v4444 = vor.u32 %v4440, %v4443
        %v4445 = vrot.slane %v4444, 4
        %v4447 = vshll.u32 %v4285, 16
        %v4449 = vrot.slane %v4447, 5
        %v4450 = vsel %vm785, %v4445, %v4449
        %v4451 = vshrl.u32 %v4285, 16
        %v4453 = vrot.slane %v4451, 4
        %v4454 = vor.u32 %v4453, %v4449
        %v4455 = vrot.slane %v4454, 4
        %v4457 = vshll.u32 %v4286, 16
        %v4459 = vrot.slane %v4457, 5
        %v4460 = vsel %vm785, %v4455, %v4459
        %v4462 = vshrl.u32 %v4287, 16
        %v4464 = vrot.slane %v4462, 4
        %v4465 = vshll.u32 %v4287, 16
        %v4467 = vrot.slane %v4465, 5
        %v4468 = vor.u32 %v4464, %v4467
        %v4469 = vrot.slane %v4468, 4
        %v4471 = vshll.u32 %v4288, 16
        %v4473 = vrot.slane %v4471, 5
        %v4474 = vsel %vm785, %v4469, %v4473
        %v4475 = vshrl.u32 %v4288, 16
        %v4477 = vrot.slane %v4475, 4
        %v4478 = vor.u32 %v4477, %v4473
        %v4479 = vrot.slane %v4478, 4
        %v4481 = vshll.u32 %v4289, 16
        %v4483 = vrot.slane %v4481, 5
        %v4484 = vsel %vm785, %v4479, %v4483
        %v4486 = vshrl.u32 %v4290, 16
        %v4488 = vrot.slane %v4486, 4
        %v4489 = vshll.u32 %v4290, 16
        %v4491 = vrot.slane %v4489, 5
        %v4492 = vor.u32 %v4488, %v4491
        %v4493 = vrot.slane %v4492, 4
        %v4495 = vshll.u32 %v4291, 16
        %v4497 = vrot.slane %v4495, 5
        %v4498 = vsel %vm785, %v4493, %v4497
        %v4499 = vshrl.u32 %v4291, 16
        %v4501 = vrot.slane %v4499, 4
        %v4502 = vor.u32 %v4501, %v4497
        %v4503 = vrot.slane %v4502, 4
        %v4505 = vshll.u32 %v4292, 16
        %v4507 = vrot.slane %v4505, 5
        %v4508 = vsel %vm785, %v4503, %v4507
        %v4510 = vshrl.u32 %v4293, 16
        %v4512 = vrot.slane %v4510, 4
        %v4513 = vshll.u32 %v4293, 16
        %v4515 = vrot.slane %v4513, 5
        %v4516 = vor.u32 %v4512, %v4515
        %v4517 = vrot.slane %v4516, 4
        %v4519 = vshll.u32 %v4294, 16
        %v4521 = vrot.slane %v4519, 5
        %v4522 = vsel %vm785, %v4517, %v4521
        %v4523 = vshrl.u32 %v4294, 16
        %v4525 = vrot.slane %v4523, 4
        %v4526 = vor.u32 %v4525, %v4521
        %v4527 = vrot.slane %v4526, 4
        %v4529 = vshll.u32 %v4295, 16
        %v4531 = vrot.slane %v4529, 5
        %v4532 = vsel %vm785, %v4527, %v4531
        %v4534 = vshrl.u32 %v4296, 16
        %v4536 = vrot.slane %v4534, 4
        %v4537 = vshll.u32 %v4296, 16
        %v4539 = vrot.slane %v4537, 5
        %v4540 = vor.u32 %v4536, %v4539
        %v4541 = vrot.slane %v4540, 4
        %v4543 = vshll.u32 %v4297, 16
        %v4545 = vrot.slane %v4543, 5
        %v4546 = vsel %vm785, %v4541, %v4545
        %v4547 = vshrl.u32 %v4297, 16
        %v4549 = vrot.slane %v4547, 4
        %v4550 = vor.u32 %v4549, %v4545
        %v4551 = vrot.slane %v4550, 4
        %v4553 = vshll.u32 %v4298, 16
        %v4555 = vrot.slane %v4553, 5
        %v4556 = vsel %vm785, %v4551, %v4555
        %v4558 = vshrl.u32 %v4299, 16
        %v4560 = vrot.slane %v4558, 4
        %v4561 = vshll.u32 %v4299, 16
        %v4563 = vrot.slane %v4561, 5
        %v4564 = vor.u32 %v4560, %v4563
        %v4565 = vrot.slane %v4564, 4
        %v4567 = vshll.u32 %v4300, 16
        %v4569 = vrot.slane %v4567, 5
        %v4570 = vsel %vm785, %v4565, %v4569
        %v4571 = vshrl.u32 %v4300, 16
        %v4573 = vrot.slane %v4571, 4
        %v4574 = vor.u32 %v4573, %v4569
        %v4575 = vrot.slane %v4574, 4
        %v4577 = vshll.u32 %v4301, 16
        %v4579 = vrot.slane %v4577, 5
        %v4580 = vsel %vm785, %v4575, %v4579
        %v4582 = vshrl.u32 %v4302, 16
        %v4584 = vrot.slane %v4582, 4
        %v4585 = vshll.u32 %v4302, 16
        %v4587 = vrot.slane %v4585, 5
        %v4588 = vor.u32 %v4584, %v4587
        %v4589 = vrot.slane %v4588, 4
        %v4591 = vshll.u32 %v4303, 16
        %v4593 = vrot.slane %v4591, 5
        %v4594 = vsel %vm785, %v4589, %v4593
        %v4595 = vshrl.u32 %v4303, 16
        %v4597 = vrot.slane %v4595, 4
        %v4598 = vor.u32 %v4597, %v4593
        %v4599 = vrot.slane %v4598, 4
        %v4601 = vshll.u32 %v4304, 16
        %v4603 = vrot.slane %v4601, 5
        %v4604 = vsel %vm785, %v4599, %v4603
        %v4606 = vshrl.u32 %v4305, 16
        %v4608 = vrot.slane %v4606, 4
        %v4609 = vshll.u32 %v4305, 16
        %v4611 = vrot.slane %v4609, 5
        %v4612 = vor.u32 %v4608, %v4611
        %v4613 = vrot.slane %v4612, 4
        %v4615 = vshll.u32 %v4306, 16
        %v4617 = vrot.slane %v4615, 5
        %v4618 = vsel %vm785, %v4613, %v4617
        %v4619 = vshrl.u32 %v4306, 16
        %v4621 = vrot.slane %v4619, 4
        %v4622 = vor.u32 %v4621, %v4617
        %v4623 = vrot.slane %v4622, 4
        %v4625 = vshll.u32 %v4307, 16
        %v4627 = vrot.slane %v4625, 5
        %v4628 = vsel %vm785, %v4623, %v4627
        %v4630 = vshrl.u32 %v4308, 16
        %v4632 = vrot.slane %v4630, 4
        %v4633 = vshll.u32 %v4308, 16
        %v4635 = vrot.slane %v4633, 5
        %v4636 = vor.u32 %v4632, %v4635
        %v4637 = vrot.slane %v4636, 4
        %v4639 = vshll.u32 %v4309, 16
        %v4641 = vrot.slane %v4639, 5
        %v4642 = vsel %vm785, %v4637, %v4641
        %v4643 = vshrl.u32 %v4309, 16
        %v4645 = vrot.slane %v4643, 4
        %v4646 = vor.u32 %v4645, %v4641
        %v4647 = vrot.slane %v4646, 4
        %v4649 = vshll.u32 %v4310, 16
        %v4651 = vrot.slane %v4649, 5
        %v4652 = vsel %vm785, %v4647, %v4651
        %v4654 = vshrl.u32 %v4311, 16
        %v4656 = vrot.slane %v4654, 4
        %v4657 = vshll.u32 %v4311, 16
        %v4659 = vrot.slane %v4657, 5
        %v4660 = vor.u32 %v4656, %v4659
        %v4661 = vrot.slane %v4660, 4
        %v4663 = vshll.u32 %v4312, 16
        %v4665 = vrot.slane %v4663, 5
        %v4666 = vsel %vm785, %v4661, %v4665
        %v4667 = vshrl.u32 %v4312, 16
        %v4669 = vrot.slane %v4667, 4
        %v4670 = vor.u32 %v4669, %v4665
        %v4671 = vrot.slane %v4670, 4
        %v4673 = vshll.u32 %v4313, 16
        %v4675 = vrot.slane %v4673, 5
        %v4676 = vsel %vm785, %v4671, %v4675
        %v4678 = vshrl.u32 %v4314, 16
        %v4680 = vrot.slane %v4678, 4
        %v4681 = vshll.u32 %v4314, 16
        %v4683 = vrot.slane %v4681, 5
        %v4684 = vor.u32 %v4680, %v4683
        %v4685 = vrot.slane %v4684, 4
        %v4687 = vshll.u32 %v4315, 16
        %v4689 = vrot.slane %v4687, 5
        %v4690 = vsel %vm785, %v4685, %v4689
        %v4691 = vshrl.u32 %v4315, 16
        %v4693 = vrot.slane %v4691, 4
        %v4694 = vor.u32 %v4693, %v4689
        %v4695 = vrot.slane %v4694, 4
        %v4697 = vshll.u32 %v4316, 16
        %v4699 = vrot.slane %v4697, 5
        %v4700 = vsel %vm785, %v4695, %v4699
        %v4701 = vld [vmem:[%s1 + $0x1c0] sm:$0xf]
        %v4702 = vld [vmem:[%s1 + $0x1c4] sm:$0xf]
        %v4703 = vld [vmem:[%s1 + $0x1c8] sm:$0xf]
        %v4704 = vld [vmem:[%s1 + $0x1cc] sm:$0xf]
        %v4705 = vld [vmem:[%s1 + $0x1d0] sm:$0xf]
        %v4706 = vld [vmem:[%s1 + $0x1d4] sm:$0xf]
        %v4707 = vld [vmem:[%s1 + $0x1d8] sm:$0xf]
        %v4708 = vld [vmem:[%s1 + $0x1dc] sm:$0xf]
        %v4709 = vld [vmem:[%s1 + $0x1e0] sm:$0xf]
        %v4710 = vld [vmem:[%s1 + $0x1e4] sm:$0xf]
        %v4711 = vld [vmem:[%s1 + $0x1e8] sm:$0xf]
        %v4712 = vld [vmem:[%s1 + $0x1ec] sm:$0xf]
        %v4713 = vld [vmem:[%s1 + $0x1f0] sm:$0xf]
        %v4714 = vld [vmem:[%s1 + $0x1f4] sm:$0xf]
        %v4715 = vld [vmem:[%s1 + $0x1f8] sm:$0xf]
        %v4716 = vld [vmem:[%s1 + $0x1fc] sm:$0xf]
        %v4717 = vunpack.c.l.b16 %v4330
        %v4718 = vunpack.c.l.b16 %v4340
        %v4719 = vunpack.c.l.b16 %v4354
        %v4720 = vunpack.c.l.b16 %v4364
        %v4721 = vunpack.c.l.b16 %v4378
        %v4722 = vunpack.c.l.b16 %v4388
        %v4723 = vunpack.c.l.b16 %v4402
        %v4724 = vunpack.c.l.b16 %v4412
        %v4725 = vunpack.c.l.b16 %v4426
        %v4726 = vunpack.c.l.b16 %v4436
        %v4727 = vunpack.c.l.b16 %v4450
        %v4728 = vunpack.c.l.b16 %v4460
        %v4729 = vunpack.c.l.b16 %v4474
        %v4730 = vunpack.c.l.b16 %v4484
        %v4731 = vunpack.c.l.b16 %v4498
        %v4732 = vunpack.c.l.b16 %v4508
        %v4733 = vunpack.c.l.b16 %v4522
        %v4734 = vunpack.c.l.b16 %v4532
        %v4735 = vunpack.c.l.b16 %v4546
        %v4736 = vunpack.c.l.b16 %v4556
        %v4737 = vunpack.c.l.b16 %v4570
        %v4738 = vunpack.c.l.b16 %v4580
        %v4739 = vunpack.c.l.b16 %v4594
        %v4740 = vunpack.c.l.b16 %v4604
        %v4741 = vunpack.c.l.b16 %v4618
        %v4742 = vunpack.c.l.b16 %v4628
        %v4743 = vunpack.c.l.b16 %v4642
        %v4744 = vunpack.c.l.b16 %v4652
        %v4745 = vunpack.c.l.b16 %v4666
        %v4746 = vunpack.c.l.b16 %v4676
        %v4747 = vunpack.c.l.b16 %v4690
        %v4748 = vunpack.c.l.b16 %v4700
        %v4749 = vpack.c.b16 %v4718, %v4717
        %v4750 = vpack.c.b16 %v4720, %v4719
        %v4751 = vpack.c.b16 %v4722, %v4721
        %v4752 = vpack.c.b16 %v4724, %v4723
        %v4753 = vpack.c.b16 %v4726, %v4725
        %v4754 = vpack.c.b16 %v4728, %v4727
        %v4755 = vpack.c.b16 %v4730, %v4729
        %v4756 = vpack.c.b16 %v4732, %v4731
        %v4757 = vpack.c.b16 %v4734, %v4733
        %v4758 = vpack.c.b16 %v4736, %v4735
        %v4759 = vpack.c.b16 %v4738, %v4737
        %v4760 = vpack.c.b16 %v4740, %v4739
        %v4761 = vpack.c.b16 %v4742, %v4741
        %v4762 = vpack.c.b16 %v4744, %v4743
        %v4763 = vpack.c.b16 %v4746, %v4745
        %v4764 = vpack.c.b16 %v4748, %v4747
        %v4797 = vunpack.c.l.b16 %v4701
        %v4798 = vunpack.c.l.b16 %v4702
        %v4799 = vunpack.c.l.b16 %v4703
        %v4800 = vunpack.c.l.b16 %v4704
        %v4801 = vunpack.c.l.b16 %v4705
        %v4802 = vunpack.c.l.b16 %v4706
        %v4803 = vunpack.c.l.b16 %v4707
        %v4804 = vunpack.c.l.b16 %v4708
        %v4805 = vunpack.c.l.b16 %v4709
        %v4806 = vunpack.c.l.b16 %v4710
        %v4807 = vunpack.c.l.b16 %v4711
        %v4808 = vunpack.c.l.b16 %v4712
        %v4809 = vunpack.c.l.b16 %v4713
        %v4810 = vunpack.c.l.b16 %v4714
        %v4811 = vunpack.c.l.b16 %v4715
        %v4812 = vunpack.c.l.b16 %v4716
        %v4813 = vpack.c.b16 %v4798, %v4797
        %v4814 = vpack.c.b16 %v4800, %v4799
        %v4815 = vpack.c.b16 %v4802, %v4801
        %v4816 = vpack.c.b16 %v4804, %v4803
        %v4817 = vpack.c.b16 %v4806, %v4805
        %v4818 = vpack.c.b16 %v4808, %v4807
        %v4819 = vpack.c.b16 %v4810, %v4809
        %v4820 = vpack.c.b16 %v4812, %v4811
        %4829 = vmatprep.subr.bf16.mxu0 0
        %4830 = vmatpush1.bf16.msra.mxu0 %v4820
        %4831 = vmatprep.subr.bf16.mxu0 0
        %4832 = vmatpush1.bf16.msra.mxu0 %v4819
        %4833 = vmatprep.subr.bf16.mxu0 0
        %4834 = vmatpush1.bf16.msra.mxu0 %v4818
        %4835 = vmatprep.subr.bf16.mxu0 0
        %4836 = vmatpush1.bf16.msra.mxu0 %v4817
        %4837 = vmatprep.subr.bf16.mxu0 0
        %4838 = vmatpush1.bf16.msra.mxu0 %v4816
        %4839 = vmatprep.subr.bf16.mxu0 0
        %4840 = vmatpush1.bf16.msra.mxu0 %v4815
        %4841 = vmatprep.subr.bf16.mxu0 0
        %4842 = vmatpush1.bf16.msra.mxu0 %v4814
        %4843 = vmatprep.subr.bf16.mxu0 0
        %4844 = vmatpush1.bf16.msra.mxu0 %v4813
        %4845 = vmatprep.subr.bf16.mxu0 0
        %4846 = vmatpush2.bf16.msra.mxu0 0
        %4847 = vmatprep.subr.bf16.mxu0 0
        %4848 = vmatpush2.bf16.msra.mxu0 0
        %4849 = vmatprep.subr.bf16.mxu0 0
        %4850 = vmatpush2.bf16.msra.mxu0 0
        %4851 = vmatprep.subr.bf16.mxu0 0
        %4852 = vmatpush2.bf16.msra.mxu0 0
        %4853 = vmatprep.subr.bf16.mxu0 0
        %4854 = vmatpush2.bf16.msra.mxu0 0
        %4855 = vmatprep.subr.bf16.mxu0 0
        %4856 = vmatpush2.bf16.msra.mxu0 0
        %4857 = vmatprep.subr.bf16.mxu0 0
        %4858 = vmatpush2.bf16.msra.mxu0 0
        %4859 = vmatprep.subr.bf16.mxu0 0
        %4860 = vmatpush2.bf16.msra.mxu0 0
        %4861 = vmatprep.mubr.bf16.mxu0 0
        %4862 = vmatmul.mubr.bf16.gmra.mxu0 %v4749
        %v4863 = vpop.f32.mrf.mxu0
        %v4864 = vadd.f32 0.0, %v4863
        %v4865 = vpop.f32.mrf.mxu0
        %v4866 = vpop.f32.mrf.mxu0
        %v4867 = vadd.f32 0.0, %v4866
        %v4868 = vpop.f32.mrf.mxu0
        %4869 = vmatprep.mubr.bf16.mxu0 0
        %4870 = vmatmul.mubr.bf16.gmra.mxu0 %v4750
        %v4871 = vpop.f32.mrf.mxu0
        %v4872 = vadd.f32 0.0, %v4871
        %v4873 = vpop.f32.mrf.mxu0
        %v4874 = vpop.f32.mrf.mxu0
        %v4875 = vadd.f32 0.0, %v4874
        %v4876 = vpop.f32.mrf.mxu0
        %4877 = vmatprep.mubr.bf16.mxu0 0
        %4878 = vmatmul.mubr.bf16.gmra.mxu0 %v4751
        %v4879 = vpop.f32.mrf.mxu0
        %v4880 = vadd.f32 0.0, %v4879
        %v4881 = vpop.f32.mrf.mxu0
        %v4882 = vpop.f32.mrf.mxu0
        %v4883 = vadd.f32 0.0, %v4882
        %v4884 = vpop.f32.mrf.mxu0
        %4885 = vmatprep.mubr.bf16.mxu0 0
        %4886 = vmatmul.mubr.bf16.gmra.mxu0 %v4752
        %v4887 = vpop.f32.mrf.mxu0
        %v4888 = vadd.f32 0.0, %v4887
        %v4889 = vpop.f32.mrf.mxu0
        %v4890 = vpop.f32.mrf.mxu0
        %v4891 = vadd.f32 0.0, %v4890
        %v4892 = vpop.f32.mrf.mxu0
        %4893 = vmatprep.mubr.bf16.mxu0 0
        %4894 = vmatmul.mubr.bf16.gmra.mxu0 %v4753
        %v4895 = vpop.f32.mrf.mxu0
        %v4896 = vadd.f32 0.0, %v4895
        %v4897 = vpop.f32.mrf.mxu0
        %v4898 = vpop.f32.mrf.mxu0
        %v4899 = vadd.f32 0.0, %v4898
        %v4900 = vpop.f32.mrf.mxu0
        %4901 = vmatprep.mubr.bf16.mxu0 0
        %4902 = vmatmul.mubr.bf16.gmra.mxu0 %v4754
        %v4903 = vpop.f32.mrf.mxu0
        %v4904 = vadd.f32 0.0, %v4903
        %v4905 = vpop.f32.mrf.mxu0
        %v4906 = vpop.f32.mrf.mxu0
        %v4907 = vadd.f32 0.0, %v4906
        %v4908 = vpop.f32.mrf.mxu0
        %4909 = vmatprep.mubr.bf16.mxu0 0
        %4910 = vmatmul.mubr.bf16.gmra.mxu0 %v4755
        %v4911 = vpop.f32.mrf.mxu0
        %v4912 = vadd.f32 0.0, %v4911
        %v4913 = vpop.f32.mrf.mxu0
        %v4914 = vpop.f32.mrf.mxu0
        %v4915 = vadd.f32 0.0, %v4914
        %v4916 = vpop.f32.mrf.mxu0
        %4917 = vmatprep.mubr.bf16.mxu0 0
        %4918 = vmatmul.mubr.bf16.gmra.mxu0 %v4756
        %v4919 = vpop.f32.mrf.mxu0
        %v4920 = vadd.f32 0.0, %v4919
        %v4921 = vpop.f32.mrf.mxu0
        %v4922 = vpop.f32.mrf.mxu0
        %v4923 = vadd.f32 0.0, %v4922
        %v4924 = vpop.f32.mrf.mxu0
        %4925 = vmatprep.mubr.bf16.mxu0 0
        %4926 = vmatmul.mubr.bf16.gmra.mxu0 %v4757
        %v4927 = vpop.f32.mrf.mxu0
        %v4928 = vadd.f32 0.0, %v4927
        %v4929 = vpop.f32.mrf.mxu0
        %v4930 = vpop.f32.mrf.mxu0
        %v4931 = vadd.f32 0.0, %v4930
        %v4932 = vpop.f32.mrf.mxu0
        %4933 = vmatprep.mubr.bf16.mxu0 0
        %4934 = vmatmul.mubr.bf16.gmra.mxu0 %v4758
        %v4935 = vpop.f32.mrf.mxu0
        %v4936 = vadd.f32 0.0, %v4935
        %v4937 = vpop.f32.mrf.mxu0
        %v4938 = vpop.f32.mrf.mxu0
        %v4939 = vadd.f32 0.0, %v4938
        %v4940 = vpop.f32.mrf.mxu0
        %4941 = vmatprep.mubr.bf16.mxu0 0
        %4942 = vmatmul.mubr.bf16.gmra.mxu0 %v4759
        %v4943 = vpop.f32.mrf.mxu0
        %v4944 = vadd.f32 0.0, %v4943
        %v4945 = vpop.f32.mrf.mxu0
        %v4946 = vpop.f32.mrf.mxu0
        %v4947 = vadd.f32 0.0, %v4946
        %v4948 = vpop.f32.mrf.mxu0
        %4949 = vmatprep.mubr.bf16.mxu0 0
        %4950 = vmatmul.mubr.bf16.gmra.mxu0 %v4760
        %v4951 = vpop.f32.mrf.mxu0
        %v4952 = vadd.f32 0.0, %v4951
        %v4953 = vpop.f32.mrf.mxu0
        %v4954 = vpop.f32.mrf.mxu0
        %v4955 = vadd.f32 0.0, %v4954
        %v4956 = vpop.f32.mrf.mxu0
        %4957 = vmatprep.mubr.bf16.mxu0 0
        %4958 = vmatmul.mubr.bf16.gmra.mxu0 %v4761
        %v4959 = vpop.f32.mrf.mxu0
        %v4960 = vadd.f32 0.0, %v4959
        %v4961 = vpop.f32.mrf.mxu0
        %v4962 = vpop.f32.mrf.mxu0
        %v4963 = vadd.f32 0.0, %v4962
        %v4964 = vpop.f32.mrf.mxu0
        %4965 = vmatprep.mubr.bf16.mxu0 0
        %4966 = vmatmul.mubr.bf16.gmra.mxu0 %v4762
        %v4967 = vpop.f32.mrf.mxu0
        %v4968 = vadd.f32 0.0, %v4967
        %v4969 = vpop.f32.mrf.mxu0
        %v4970 = vpop.f32.mrf.mxu0
        %v4971 = vadd.f32 0.0, %v4970
        %v4972 = vpop.f32.mrf.mxu0
        %4973 = vmatprep.mubr.bf16.mxu0 0
        %4974 = vmatmul.mubr.bf16.gmra.mxu0 %v4763
        %v4975 = vpop.f32.mrf.mxu0
        %v4976 = vadd.f32 0.0, %v4975
        %v4977 = vpop.f32.mrf.mxu0
        %v4978 = vpop.f32.mrf.mxu0
        %v4979 = vadd.f32 0.0, %v4978
        %v4980 = vpop.f32.mrf.mxu0
        %4981 = vmatprep.mubr.bf16.mxu0 0
        %4982 = vmatmul.mubr.bf16.gmra.mxu0 %v4764
        %v4983 = vpop.f32.mrf.mxu0
        %v4984 = vadd.f32 0.0, %v4983
        %v4985 = vpop.f32.mrf.mxu0
        %v4986 = vpop.f32.mrf.mxu0
        %v4987 = vadd.f32 0.0, %v4986
        %v4988 = vpop.f32.mrf.mxu0
        %4989 = vdwg.mxu0
        %v4990 = vadd.f32 %v4237, %v4864
        %v4991 = vadd.f32 %v4238, %v4867
        %v4992 = vadd.f32 %v4239, %v4872
        %v4993 = vadd.f32 %v4240, %v4875
        %v4994 = vadd.f32 %v4241, %v4880
        %v4995 = vadd.f32 %v4242, %v4883
        %v4996 = vadd.f32 %v4243, %v4888
        %v4997 = vadd.f32 %v4244, %v4891
        %v4998 = vadd.f32 %v4245, %v4896
        %v4999 = vadd.f32 %v4246, %v4899
        %v5000 = vadd.f32 %v4247, %v4904
        %v5001 = vadd.f32 %v4248, %v4907
        %v5002 = vadd.f32 %v4249, %v4912
        %v5003 = vadd.f32 %v4250, %v4915
        %v5004 = vadd.f32 %v4251, %v4920
        %v5005 = vadd.f32 %v4252, %v4923
        %v5006 = vadd.f32 %v4253, %v4928
        %v5007 = vadd.f32 %v4254, %v4931
        %v5008 = vadd.f32 %v4255, %v4936
        %v5009 = vadd.f32 %v4256, %v4939
        %v5010 = vadd.f32 %v4257, %v4944
        %v5011 = vadd.f32 %v4258, %v4947
        %v5012 = vadd.f32 %v4259, %v4952
        %v5013 = vadd.f32 %v4260, %v4955
        %v5014 = vadd.f32 %v4261, %v4960
        %v5015 = vadd.f32 %v4262, %v4963
        %v5016 = vadd.f32 %v4263, %v4968
        %v5017 = vadd.f32 %v4264, %v4971
        %v5018 = vadd.f32 %v4265, %v4976
        %v5019 = vadd.f32 %v4266, %v4979
        %v5020 = vadd.f32 %v4267, %v4984
        %v5021 = vadd.f32 %v4268, %v4987
        %v5022 = vld [vmem:[%s3883] sm:$0xe]
        %v5023 = vld [vmem:[%s3883 + $0xc] sm:$0xe]
        %v5024 = vld [vmem:[%s3883 + $0x18] sm:$0xe]
        %v5025 = vld [vmem:[%s3883 + $0x24] sm:$0xe]
        %v5026 = vld [vmem:[%s3883 + $0x30] sm:$0xe]
        %v5027 = vld [vmem:[%s3883 + $0x3c] sm:$0xe]
        %v5028 = vld [vmem:[%s3883 + $0x48] sm:$0xe]
        %v5029 = vld [vmem:[%s3883 + $0x54] sm:$0xe]
        %v5030 = vld [vmem:[%s3883 + $0x60] sm:$0xe]
        %v5031 = vld [vmem:[%s3883 + $0x6c] sm:$0xe]
        %v5032 = vld [vmem:[%s3883 + $0x78] sm:$0xe]
        %v5033 = vld [vmem:[%s3883 + $0x84] sm:$0xe]
        %v5034 = vld [vmem:[%s3883 + $0x90] sm:$0xe]
        %v5035 = vld [vmem:[%s3883 + $0x9c] sm:$0xe]
        %v5036 = vld [vmem:[%s3883 + $0xa8] sm:$0xe]
        %v5037 = vld [vmem:[%s3883 + $0xb4] sm:$0xe]
        %v5086 = vrot.slane %v5022, 5
        %v5087 = vrot.slane %v5086, 4
        %v5088 = vrot.slane %v4270, 5
        %v5089 = vsel %vm1814, %v5087, %v5088
        %v5090 = vrot.slane %v5088, 4
        %v5091 = vrot.slane %v4271, 5
        %v5092 = vsel %vm1814, %v5090, %v5091
        %v5093 = vrot.slane %v5023, 5
        %v5094 = vrot.slane %v5093, 4
        %v5095 = vrot.slane %v4273, 5
        %v5096 = vsel %vm1814, %v5094, %v5095
        %v5097 = vrot.slane %v5095, 4
        %v5098 = vrot.slane %v4274, 5
        %v5099 = vsel %vm1814, %v5097, %v5098
        %v5100 = vrot.slane %v5024, 5
        %v5101 = vrot.slane %v5100, 4
        %v5102 = vrot.slane %v4276, 5
        %v5103 = vsel %vm1814, %v5101, %v5102
        %v5104 = vrot.slane %v5102, 4
        %v5105 = vrot.slane %v4277, 5
        %v5106 = vsel %vm1814, %v5104, %v5105
        %v5107 = vrot.slane %v5025, 5
        %v5108 = vrot.slane %v5107, 4
        %v5109 = vrot.slane %v4279, 5
        %v5110 = vsel %vm1814, %v5108, %v5109
        %v5111 = vrot.slane %v5109, 4
        %v5112 = vrot.slane %v4280, 5
        %v5113 = vsel %vm1814, %v5111, %v5112
        %v5114 = vrot.slane %v5026, 5
        %v5115 = vrot.slane %v5114, 4
        %v5116 = vrot.slane %v4282, 5
        %v5117 = vsel %vm1814, %v5115, %v5116
        %v5118 = vrot.slane %v5116, 4
        %v5119 = vrot.slane %v4283, 5
        %v5120 = vsel %vm1814, %v5118, %v5119
        %v5121 = vrot.slane %v5027, 5
        %v5122 = vrot.slane %v5121, 4
        %v5123 = vrot.slane %v4285, 5
        %v5124 = vsel %vm1814, %v5122, %v5123
        %v5125 = vrot.slane %v5123, 4
        %v5126 = vrot.slane %v4286, 5
        %v5127 = vsel %vm1814, %v5125, %v5126
        %v5128 = vrot.slane %v5028, 5
        %v5129 = vrot.slane %v5128, 4
        %v5130 = vrot.slane %v4288, 5
        %v5131 = vsel %vm1814, %v5129, %v5130
        %v5132 = vrot.slane %v5130, 4
        %v5133 = vrot.slane %v4289, 5
        %v5134 = vsel %vm1814, %v5132, %v5133
        %v5135 = vrot.slane %v5029, 5
        %v5136 = vrot.slane %v5135, 4
        %v5137 = vrot.slane %v4291, 5
        %v5138 = vsel %vm1814, %v5136, %v5137
        %v5139 = vrot.slane %v5137, 4
        %v5140 = vrot.slane %v4292, 5
        %v5141 = vsel %vm1814, %v5139, %v5140
        %v5142 = vrot.slane %v5030, 5
        %v5143 = vrot.slane %v5142, 4
        %v5144 = vrot.slane %v4294, 5
        %v5145 = vsel %vm1814, %v5143, %v5144
        %v5146 = vrot.slane %v5144, 4
        %v5147 = vrot.slane %v4295, 5
        %v5148 = vsel %vm1814, %v5146, %v5147
        %v5149 = vrot.slane %v5031, 5
        %v5150 = vrot.slane %v5149, 4
        %v5151 = vrot.slane %v4297, 5
        %v5152 = vsel %vm1814, %v5150, %v5151
        %v5153 = vrot.slane %v5151, 4
        %v5154 = vrot.slane %v4298, 5
        %v5155 = vsel %vm1814, %v5153, %v5154
        %v5156 = vrot.slane %v5032, 5
        %v5157 = vrot.slane %v5156, 4
        %v5158 = vrot.slane %v4300, 5
        %v5159 = vsel %vm1814, %v5157, %v5158
        %v5160 = vrot.slane %v5158, 4
        %v5161 = vrot.slane %v4301, 5
        %v5162 = vsel %vm1814, %v5160, %v5161
        %v5163 = vrot.slane %v5033, 5
        %v5164 = vrot.slane %v5163, 4
        %v5165 = vrot.slane %v4303, 5
        %v5166 = vsel %vm1814, %v5164, %v5165
        %v5167 = vrot.slane %v5165, 4
        %v5168 = vrot.slane %v4304, 5
        %v5169 = vsel %vm1814, %v5167, %v5168
        %v5170 = vrot.slane %v5034, 5
        %v5171 = vrot.slane %v5170, 4
        %v5172 = vrot.slane %v4306, 5
        %v5173 = vsel %vm1814, %v5171, %v5172
        %v5174 = vrot.slane %v5172, 4
        %v5175 = vrot.slane %v4307, 5
        %v5176 = vsel %vm1814, %v5174, %v5175
        %v5177 = vrot.slane %v5035, 5
        %v5178 = vrot.slane %v5177, 4
        %v5179 = vrot.slane %v4309, 5
        %v5180 = vsel %vm1814, %v5178, %v5179
        %v5181 = vrot.slane %v5179, 4
        %v5182 = vrot.slane %v4310, 5
        %v5183 = vsel %vm1814, %v5181, %v5182
        %v5184 = vrot.slane %v5036, 5
        %v5185 = vrot.slane %v5184, 4
        %v5186 = vrot.slane %v4312, 5
        %v5187 = vsel %vm1814, %v5185, %v5186
        %v5188 = vrot.slane %v5186, 4
        %v5189 = vrot.slane %v4313, 5
        %v5190 = vsel %vm1814, %v5188, %v5189
        %v5191 = vrot.slane %v5037, 5
        %v5192 = vrot.slane %v5191, 4
        %v5193 = vrot.slane %v4315, 5
        %v5194 = vsel %vm1814, %v5192, %v5193
        %v5195 = vrot.slane %v5193, 4
        %v5196 = vrot.slane %v4316, 5
        %v5197 = vsel %vm1814, %v5195, %v5196
        %v5198 = vld [vmem:[%s1 + $0x200] sm:$0xf]
        %v5199 = vld [vmem:[%s1 + $0x204] sm:$0xf]
        %v5200 = vld [vmem:[%s1 + $0x208] sm:$0xf]
        %v5201 = vld [vmem:[%s1 + $0x20c] sm:$0xf]
        %v5202 = vld [vmem:[%s1 + $0x210] sm:$0xf]
        %v5203 = vld [vmem:[%s1 + $0x214] sm:$0xf]
        %v5204 = vld [vmem:[%s1 + $0x218] sm:$0xf]
        %v5205 = vld [vmem:[%s1 + $0x21c] sm:$0xf]
        %v5206 = vld [vmem:[%s1 + $0x220] sm:$0xf]
        %v5207 = vld [vmem:[%s1 + $0x224] sm:$0xf]
        %v5208 = vld [vmem:[%s1 + $0x228] sm:$0xf]
        %v5209 = vld [vmem:[%s1 + $0x22c] sm:$0xf]
        %v5210 = vld [vmem:[%s1 + $0x230] sm:$0xf]
        %v5211 = vld [vmem:[%s1 + $0x234] sm:$0xf]
        %v5212 = vld [vmem:[%s1 + $0x238] sm:$0xf]
        %v5213 = vld [vmem:[%s1 + $0x23c] sm:$0xf]
        %v5214 = vunpack.c.l.b16 %v5089
        %v5215 = vunpack.c.l.b16 %v5092
        %v5216 = vunpack.c.l.b16 %v5096
        %v5217 = vunpack.c.l.b16 %v5099
        %v5218 = vunpack.c.l.b16 %v5103
        %v5219 = vunpack.c.l.b16 %v5106
        %v5220 = vunpack.c.l.b16 %v5110
        %v5221 = vunpack.c.l.b16 %v5113
        %v5222 = vunpack.c.l.b16 %v5117
        %v5223 = vunpack.c.l.b16 %v5120
        %v5224 = vunpack.c.l.b16 %v5124
        %v5225 = vunpack.c.l.b16 %v5127
        %v5226 = vunpack.c.l.b16 %v5131
        %v5227 = vunpack.c.l.b16 %v5134
        %v5228 = vunpack.c.l.b16 %v5138
        %v5229 = vunpack.c.l.b16 %v5141
        %v5230 = vunpack.c.l.b16 %v5145
        %v5231 = vunpack.c.l.b16 %v5148
        %v5232 = vunpack.c.l.b16 %v5152
        %v5233 = vunpack.c.l.b16 %v5155
        %v5234 = vunpack.c.l.b16 %v5159
        %v5235 = vunpack.c.l.b16 %v5162
        %v5236 = vunpack.c.l.b16 %v5166
        %v5237 = vunpack.c.l.b16 %v5169
        %v5238 = vunpack.c.l.b16 %v5173
        %v5239 = vunpack.c.l.b16 %v5176
        %v5240 = vunpack.c.l.b16 %v5180
        %v5241 = vunpack.c.l.b16 %v5183
        %v5242 = vunpack.c.l.b16 %v5187
        %v5243 = vunpack.c.l.b16 %v5190
        %v5244 = vunpack.c.l.b16 %v5194
        %v5245 = vunpack.c.l.b16 %v5197
        %v5246 = vpack.c.b16 %v5215, %v5214
        %v5247 = vpack.c.b16 %v5217, %v5216
        %v5248 = vpack.c.b16 %v5219, %v5218
        %v5249 = vpack.c.b16 %v5221, %v5220
        %v5250 = vpack.c.b16 %v5223, %v5222
        %v5251 = vpack.c.b16 %v5225, %v5224
        %v5252 = vpack.c.b16 %v5227, %v5226
        %v5253 = vpack.c.b16 %v5229, %v5228
        %v5254 = vpack.c.b16 %v5231, %v5230
        %v5255 = vpack.c.b16 %v5233, %v5232
        %v5256 = vpack.c.b16 %v5235, %v5234
        %v5257 = vpack.c.b16 %v5237, %v5236
        %v5258 = vpack.c.b16 %v5239, %v5238
        %v5259 = vpack.c.b16 %v5241, %v5240
        %v5260 = vpack.c.b16 %v5243, %v5242
        %v5261 = vpack.c.b16 %v5245, %v5244
        %v5294 = vunpack.c.l.b16 %v5198
        %v5295 = vunpack.c.l.b16 %v5199
        %v5296 = vunpack.c.l.b16 %v5200
        %v5297 = vunpack.c.l.b16 %v5201
        %v5298 = vunpack.c.l.b16 %v5202
        %v5299 = vunpack.c.l.b16 %v5203
        %v5300 = vunpack.c.l.b16 %v5204
        %v5301 = vunpack.c.l.b16 %v5205
        %v5302 = vunpack.c.l.b16 %v5206
        %v5303 = vunpack.c.l.b16 %v5207
        %v5304 = vunpack.c.l.b16 %v5208
        %v5305 = vunpack.c.l.b16 %v5209
        %v5306 = vunpack.c.l.b16 %v5210
        %v5307 = vunpack.c.l.b16 %v5211
        %v5308 = vunpack.c.l.b16 %v5212
        %v5309 = vunpack.c.l.b16 %v5213
        %v5310 = vpack.c.b16 %v5295, %v5294
        %v5311 = vpack.c.b16 %v5297, %v5296
        %v5312 = vpack.c.b16 %v5299, %v5298
        %v5313 = vpack.c.b16 %v5301, %v5300
        %v5314 = vpack.c.b16 %v5303, %v5302
        %v5315 = vpack.c.b16 %v5305, %v5304
        %v5316 = vpack.c.b16 %v5307, %v5306
        %v5317 = vpack.c.b16 %v5309, %v5308
        %5326 = vmatprep.subr.bf16.mxu0 0
        %5327 = vmatpush1.bf16.msra.mxu0 %v5317
        %5328 = vmatprep.subr.bf16.mxu0 0
        %5329 = vmatpush1.bf16.msra.mxu0 %v5316
        %5330 = vmatprep.subr.bf16.mxu0 0
        %5331 = vmatpush1.bf16.msra.mxu0 %v5315
        %5332 = vmatprep.subr.bf16.mxu0 0
        %5333 = vmatpush1.bf16.msra.mxu0 %v5314
        %5334 = vmatprep.subr.bf16.mxu0 0
        %5335 = vmatpush1.bf16.msra.mxu0 %v5313
        %5336 = vmatprep.subr.bf16.mxu0 0
        %5337 = vmatpush1.bf16.msra.mxu0 %v5312
        %5338 = vmatprep.subr.bf16.mxu0 0
        %5339 = vmatpush1.bf16.msra.mxu0 %v5311
        %5340 = vmatprep.subr.bf16.mxu0 0
        %5341 = vmatpush1.bf16.msra.mxu0 %v5310
        %5342 = vmatprep.subr.bf16.mxu0 0
        %5343 = vmatpush2.bf16.msra.mxu0 0
        %5344 = vmatprep.subr.bf16.mxu0 0
        %5345 = vmatpush2.bf16.msra.mxu0 0
        %5346 = vmatprep.subr.bf16.mxu0 0
        %5347 = vmatpush2.bf16.msra.mxu0 0
        %5348 = vmatprep.subr.bf16.mxu0 0
        %5349 = vmatpush2.bf16.msra.mxu0 0
        %5350 = vmatprep.subr.bf16.mxu0 0
        %5351 = vmatpush2.bf16.msra.mxu0 0
        %5352 = vmatprep.subr.bf16.mxu0 0
        %5353 = vmatpush2.bf16.msra.mxu0 0
        %5354 = vmatprep.subr.bf16.mxu0 0
        %5355 = vmatpush2.bf16.msra.mxu0 0
        %5356 = vmatprep.subr.bf16.mxu0 0
        %5357 = vmatpush2.bf16.msra.mxu0 0
        %5358 = vmatprep.mubr.bf16.mxu0 0
        %5359 = vmatmul.mubr.bf16.gmra.mxu0 %v5246
        %v5360 = vpop.f32.mrf.mxu0
        %v5361 = vadd.f32 0.0, %v5360
        %v5362 = vpop.f32.mrf.mxu0
        %v5363 = vpop.f32.mrf.mxu0
        %v5364 = vadd.f32 0.0, %v5363
        %v5365 = vpop.f32.mrf.mxu0
        %5366 = vmatprep.mubr.bf16.mxu0 0
        %5367 = vmatmul.mubr.bf16.gmra.mxu0 %v5247
        %v5368 = vpop.f32.mrf.mxu0
        %v5369 = vadd.f32 0.0, %v5368
        %v5370 = vpop.f32.mrf.mxu0
        %v5371 = vpop.f32.mrf.mxu0
        %v5372 = vadd.f32 0.0, %v5371
        %v5373 = vpop.f32.mrf.mxu0
        %5374 = vmatprep.mubr.bf16.mxu0 0
        %5375 = vmatmul.mubr.bf16.gmra.mxu0 %v5248
        %v5376 = vpop.f32.mrf.mxu0
        %v5377 = vadd.f32 0.0, %v5376
        %v5378 = vpop.f32.mrf.mxu0
        %v5379 = vpop.f32.mrf.mxu0
        %v5380 = vadd.f32 0.0, %v5379
        %v5381 = vpop.f32.mrf.mxu0
        %5382 = vmatprep.mubr.bf16.mxu0 0
        %5383 = vmatmul.mubr.bf16.gmra.mxu0 %v5249
        %v5384 = vpop.f32.mrf.mxu0
        %v5385 = vadd.f32 0.0, %v5384
        %v5386 = vpop.f32.mrf.mxu0
        %v5387 = vpop.f32.mrf.mxu0
        %v5388 = vadd.f32 0.0, %v5387
        %v5389 = vpop.f32.mrf.mxu0
        %5390 = vmatprep.mubr.bf16.mxu0 0
        %5391 = vmatmul.mubr.bf16.gmra.mxu0 %v5250
        %v5392 = vpop.f32.mrf.mxu0
        %v5393 = vadd.f32 0.0, %v5392
        %v5394 = vpop.f32.mrf.mxu0
        %v5395 = vpop.f32.mrf.mxu0
        %v5396 = vadd.f32 0.0, %v5395
        %v5397 = vpop.f32.mrf.mxu0
        %5398 = vmatprep.mubr.bf16.mxu0 0
        %5399 = vmatmul.mubr.bf16.gmra.mxu0 %v5251
        %v5400 = vpop.f32.mrf.mxu0
        %v5401 = vadd.f32 0.0, %v5400
        %v5402 = vpop.f32.mrf.mxu0
        %v5403 = vpop.f32.mrf.mxu0
        %v5404 = vadd.f32 0.0, %v5403
        %v5405 = vpop.f32.mrf.mxu0
        %5406 = vmatprep.mubr.bf16.mxu0 0
        %5407 = vmatmul.mubr.bf16.gmra.mxu0 %v5252
        %v5408 = vpop.f32.mrf.mxu0
        %v5409 = vadd.f32 0.0, %v5408
        %v5410 = vpop.f32.mrf.mxu0
        %v5411 = vpop.f32.mrf.mxu0
        %v5412 = vadd.f32 0.0, %v5411
        %v5413 = vpop.f32.mrf.mxu0
        %5414 = vmatprep.mubr.bf16.mxu0 0
        %5415 = vmatmul.mubr.bf16.gmra.mxu0 %v5253
        %v5416 = vpop.f32.mrf.mxu0
        %v5417 = vadd.f32 0.0, %v5416
        %v5418 = vpop.f32.mrf.mxu0
        %v5419 = vpop.f32.mrf.mxu0
        %v5420 = vadd.f32 0.0, %v5419
        %v5421 = vpop.f32.mrf.mxu0
        %5422 = vmatprep.mubr.bf16.mxu0 0
        %5423 = vmatmul.mubr.bf16.gmra.mxu0 %v5254
        %v5424 = vpop.f32.mrf.mxu0
        %v5425 = vadd.f32 0.0, %v5424
        %v5426 = vpop.f32.mrf.mxu0
        %v5427 = vpop.f32.mrf.mxu0
        %v5428 = vadd.f32 0.0, %v5427
        %v5429 = vpop.f32.mrf.mxu0
        %5430 = vmatprep.mubr.bf16.mxu0 0
        %5431 = vmatmul.mubr.bf16.gmra.mxu0 %v5255
        %v5432 = vpop.f32.mrf.mxu0
        %v5433 = vadd.f32 0.0, %v5432
        %v5434 = vpop.f32.mrf.mxu0
        %v5435 = vpop.f32.mrf.mxu0
        %v5436 = vadd.f32 0.0, %v5435
        %v5437 = vpop.f32.mrf.mxu0
        %5438 = vmatprep.mubr.bf16.mxu0 0
        %5439 = vmatmul.mubr.bf16.gmra.mxu0 %v5256
        %v5440 = vpop.f32.mrf.mxu0
        %v5441 = vadd.f32 0.0, %v5440
        %v5442 = vpop.f32.mrf.mxu0
        %v5443 = vpop.f32.mrf.mxu0
        %v5444 = vadd.f32 0.0, %v5443
        %v5445 = vpop.f32.mrf.mxu0
        %5446 = vmatprep.mubr.bf16.mxu0 0
        %5447 = vmatmul.mubr.bf16.gmra.mxu0 %v5257
        %v5448 = vpop.f32.mrf.mxu0
        %v5449 = vadd.f32 0.0, %v5448
        %v5450 = vpop.f32.mrf.mxu0
        %v5451 = vpop.f32.mrf.mxu0
        %v5452 = vadd.f32 0.0, %v5451
        %v5453 = vpop.f32.mrf.mxu0
        %5454 = vmatprep.mubr.bf16.mxu0 0
        %5455 = vmatmul.mubr.bf16.gmra.mxu0 %v5258
        %v5456 = vpop.f32.mrf.mxu0
        %v5457 = vadd.f32 0.0, %v5456
        %v5458 = vpop.f32.mrf.mxu0
        %v5459 = vpop.f32.mrf.mxu0
        %v5460 = vadd.f32 0.0, %v5459
        %v5461 = vpop.f32.mrf.mxu0
        %5462 = vmatprep.mubr.bf16.mxu0 0
        %5463 = vmatmul.mubr.bf16.gmra.mxu0 %v5259
        %v5464 = vpop.f32.mrf.mxu0
        %v5465 = vadd.f32 0.0, %v5464
        %v5466 = vpop.f32.mrf.mxu0
        %v5467 = vpop.f32.mrf.mxu0
        %v5468 = vadd.f32 0.0, %v5467
        %v5469 = vpop.f32.mrf.mxu0
        %5470 = vmatprep.mubr.bf16.mxu0 0
        %5471 = vmatmul.mubr.bf16.gmra.mxu0 %v5260
        %v5472 = vpop.f32.mrf.mxu0
        %v5473 = vadd.f32 0.0, %v5472
        %v5474 = vpop.f32.mrf.mxu0
        %v5475 = vpop.f32.mrf.mxu0
        %v5476 = vadd.f32 0.0, %v5475
        %v5477 = vpop.f32.mrf.mxu0
        %5478 = vmatprep.mubr.bf16.mxu0 0
        %5479 = vmatmul.mubr.bf16.gmra.mxu0 %v5261
        %v5480 = vpop.f32.mrf.mxu0
        %v5481 = vadd.f32 0.0, %v5480
        %v5482 = vpop.f32.mrf.mxu0
        %v5483 = vpop.f32.mrf.mxu0
        %v5484 = vadd.f32 0.0, %v5483
        %v5485 = vpop.f32.mrf.mxu0
        %5486 = vdwg.mxu0
        %v5487 = vadd.f32 %v4990, %v5361
        %v5488 = vadd.f32 %v4991, %v5364
        %v5489 = vadd.f32 %v4992, %v5369
        %v5490 = vadd.f32 %v4993, %v5372
        %v5491 = vadd.f32 %v4994, %v5377
        %v5492 = vadd.f32 %v4995, %v5380
        %v5493 = vadd.f32 %v4996, %v5385
        %v5494 = vadd.f32 %v4997, %v5388
        %v5495 = vadd.f32 %v4998, %v5393
        %v5496 = vadd.f32 %v4999, %v5396
        %v5497 = vadd.f32 %v5000, %v5401
        %v5498 = vadd.f32 %v5001, %v5404
        %v5499 = vadd.f32 %v5002, %v5409
        %v5500 = vadd.f32 %v5003, %v5412
        %v5501 = vadd.f32 %v5004, %v5417
        %v5502 = vadd.f32 %v5005, %v5420
        %v5503 = vadd.f32 %v5006, %v5425
        %v5504 = vadd.f32 %v5007, %v5428
        %v5505 = vadd.f32 %v5008, %v5433
        %v5506 = vadd.f32 %v5009, %v5436
        %v5507 = vadd.f32 %v5010, %v5441
        %v5508 = vadd.f32 %v5011, %v5444
        %v5509 = vadd.f32 %v5012, %v5449
        %v5510 = vadd.f32 %v5013, %v5452
        %v5511 = vadd.f32 %v5014, %v5457
        %v5512 = vadd.f32 %v5015, %v5460
        %v5513 = vadd.f32 %v5016, %v5465
        %v5514 = vadd.f32 %v5017, %v5468
        %v5515 = vadd.f32 %v5018, %v5473
        %v5516 = vadd.f32 %v5019, %v5476
        %v5517 = vadd.f32 %v5020, %v5481
        %v5518 = vadd.f32 %v5021, %v5484
        %v5519 = vmax.f32 %v5487, 0.0
        %v5520 = vmax.f32 %v5488, 0.0
        %v5521 = vmax.f32 %v5489, 0.0
        %v5522 = vmax.f32 %v5490, 0.0
        %v5523 = vmax.f32 %v5491, 0.0
        %v5524 = vmax.f32 %v5492, 0.0
        %v5525 = vmax.f32 %v5493, 0.0
        %v5526 = vmax.f32 %v5494, 0.0
        %v5527 = vmax.f32 %v5495, 0.0
        %v5528 = vmax.f32 %v5496, 0.0
        %v5529 = vmax.f32 %v5497, 0.0
        %v5530 = vmax.f32 %v5498, 0.0
        %v5531 = vmax.f32 %v5499, 0.0
        %v5532 = vmax.f32 %v5500, 0.0
        %v5533 = vmax.f32 %v5501, 0.0
        %v5534 = vmax.f32 %v5502, 0.0
        %v5535 = vmax.f32 %v5503, 0.0
        %v5536 = vmax.f32 %v5504, 0.0
        %v5537 = vmax.f32 %v5505, 0.0
        %v5538 = vmax.f32 %v5506, 0.0
        %v5539 = vmax.f32 %v5507, 0.0
        %v5540 = vmax.f32 %v5508, 0.0
        %v5541 = vmax.f32 %v5509, 0.0
        %v5542 = vmax.f32 %v5510, 0.0
        %v5543 = vmax.f32 %v5511, 0.0
        %v5544 = vmax.f32 %v5512, 0.0
        %v5545 = vmax.f32 %v5513, 0.0
        %v5546 = vmax.f32 %v5514, 0.0
        %v5547 = vmax.f32 %v5515, 0.0
        %v5548 = vmax.f32 %v5516, 0.0
        %v5549 = vmax.f32 %v5517, 0.0
        %v5550 = vmax.f32 %v5518, 0.0
        %5551 = vst [vmem:[#allocation3] sm:$0xf] 0
        %5552 = vst [vmem:[#allocation3 + $0x4] sm:$0xf] 0
        %5553 = vst [vmem:[#allocation3 + $0x8] sm:$0x1] 0
        %5554 = vst [vmem:[#allocation3 + $0xc] sm:$0xf] 0
        %5555 = vst [vmem:[#allocation3 + $0x10] sm:$0xf] 0
        %5556 = vst [vmem:[#allocation3 + $0x14] sm:$0x1] 0
        %5557 = vst [vmem:[#allocation3 + $0x18] sm:$0xf] 0
        %5558 = vst [vmem:[#allocation3 + $0x1c] sm:$0xf] 0
        %5559 = vst [vmem:[#allocation3 + $0x20] sm:$0x1] 0
        %5560 = vst [vmem:[#allocation3 + $0x24] sm:$0xf] 0
        %5561 = vst [vmem:[#allocation3 + $0x28] sm:$0xf] 0
        %5562 = vst [vmem:[#allocation3 + $0x2c] sm:$0x1] 0
        %5563 = vst [vmem:[#allocation3 + $0x30] sm:$0xf] 0
        %5564 = vst [vmem:[#allocation3 + $0x34] sm:$0xf] 0
        %5565 = vst [vmem:[#allocation3 + $0x38] sm:$0x1] 0
        %5566 = vst [vmem:[#allocation3 + $0x3c] sm:$0xf] 0
        %5567 = vst [vmem:[#allocation3 + $0x40] sm:$0xf] 0
        %5568 = vst [vmem:[#allocation3 + $0x44] sm:$0x1] 0
        %5569 = vst [vmem:[#allocation3 + $0x48] sm:$0xf] 0
        %5570 = vst [vmem:[#allocation3 + $0x4c] sm:$0xf] 0
        %5571 = vst [vmem:[#allocation3 + $0x50] sm:$0x1] 0
        %5572 = vst [vmem:[#allocation3 + $0x54] sm:$0xf] 0
        %5573 = vst [vmem:[#allocation3 + $0x58] sm:$0xf] 0
        %5574 = vst [vmem:[#allocation3 + $0x5c] sm:$0x1] 0
        %5575 = vst [vmem:[#allocation3 + $0x60] sm:$0xf] 0
        %5576 = vst [vmem:[#allocation3 + $0x64] sm:$0xf] 0
        %5577 = vst [vmem:[#allocation3 + $0x68] sm:$0x1] 0
        %5578 = vst [vmem:[#allocation3 + $0x6c] sm:$0xf] 0
        %5579 = vst [vmem:[#allocation3 + $0x70] sm:$0xf] 0
        %5580 = vst [vmem:[#allocation3 + $0x74] sm:$0x1] 0
        %5581 = vst [vmem:[#allocation3 + $0x78] sm:$0xf] 0
        %5582 = vst [vmem:[#allocation3 + $0x7c] sm:$0xf] 0
        %5583 = vst [vmem:[#allocation3 + $0x80] sm:$0x1] 0
        %5584 = vst [vmem:[#allocation3 + $0x84] sm:$0xf] 0
        %5585 = vst [vmem:[#allocation3 + $0x88] sm:$0xf] 0
        %5586 = vst [vmem:[#allocation3 + $0x8c] sm:$0x1] 0
        %5587 = vst [vmem:[#allocation3 + $0x90] sm:$0xf] 0
        %5588 = vst [vmem:[#allocation3 + $0x94] sm:$0xf] 0
        %5589 = vst [vmem:[#allocation3 + $0x98] sm:$0x1] 0
        %5590 = vst [vmem:[#allocation3 + $0x9c] sm:$0xf] 0
        %5591 = vst [vmem:[#allocation3 + $0xa0] sm:$0xf] 0
        %5592 = vst [vmem:[#allocation3 + $0xa4] sm:$0x1] 0
        %5593 = vst [vmem:[#allocation3 + $0xa8] sm:$0xf] 0
        %5594 = vst [vmem:[#allocation3 + $0xac] sm:$0xf] 0
        %5595 = vst [vmem:[#allocation3 + $0xb0] sm:$0x1] 0
        %5596 = vst [vmem:[#allocation3 + $0xb4] sm:$0xf] 0
        %5597 = vst [vmem:[#allocation3 + $0xb8] sm:$0xf] 0
        %5598 = vst [vmem:[#allocation3 + $0xbc] sm:$0x1] 0
        %5599 = vst [vmem:[#allocation3 + $0xc0] sm:$0xf] 0
        %5600 = vst [vmem:[#allocation3 + $0xc4] sm:$0xf] 0
        %5601 = vst [vmem:[#allocation3 + $0xc8] sm:$0x1] 0
        %5602 = vst [vmem:[#allocation3 + $0xcc] sm:$0xf] 0
        %5603 = vst [vmem:[#allocation3 + $0xd0] sm:$0xf] 0
        %5604 = vst [vmem:[#allocation3 + $0xd4] sm:$0x1] 0
        %v5605 = vpack.c.bf16 %v5520, %v5519
        %v5606 = vpack.c.bf16 %v5522, %v5521
        %v5607 = vpack.c.bf16 %v5524, %v5523
        %v5608 = vpack.c.bf16 %v5526, %v5525
        %v5609 = vpack.c.bf16 %v5528, %v5527
        %v5610 = vpack.c.bf16 %v5530, %v5529
        %v5611 = vpack.c.bf16 %v5532, %v5531
        %v5612 = vpack.c.bf16 %v5534, %v5533
        %v5613 = vpack.c.bf16 %v5536, %v5535
        %v5614 = vpack.c.bf16 %v5538, %v5537
        %v5615 = vpack.c.bf16 %v5540, %v5539
        %v5616 = vpack.c.bf16 %v5542, %v5541
        %v5617 = vpack.c.bf16 %v5544, %v5543
        %v5618 = vpack.c.bf16 %v5546, %v5545
        %v5619 = vpack.c.bf16 %v5548, %v5547
        %v5620 = vpack.c.bf16 %v5550, %v5549
        %v5637 = vunpack.c.l.b16 %v5605
        %v5638 = vunpack.c.h.b16 %v5605
        %v5639 = vunpack.c.l.b16 %v5606
        %v5640 = vunpack.c.h.b16 %v5606
        %v5641 = vunpack.c.l.b16 %v5607
        %v5642 = vunpack.c.h.b16 %v5607
        %v5643 = vunpack.c.l.b16 %v5608
        %v5644 = vunpack.c.h.b16 %v5608
        %v5645 = vunpack.c.l.b16 %v5609
        %v5646 = vunpack.c.h.b16 %v5609
        %v5647 = vunpack.c.l.b16 %v5610
        %v5648 = vunpack.c.h.b16 %v5610
        %v5649 = vunpack.c.l.b16 %v5611
        %v5650 = vunpack.c.h.b16 %v5611
        %v5651 = vunpack.c.l.b16 %v5612
        %v5652 = vunpack.c.h.b16 %v5612
        %v5653 = vunpack.c.l.b16 %v5613
        %v5654 = vunpack.c.h.b16 %v5613
        %v5655 = vunpack.c.l.b16 %v5614
        %v5656 = vunpack.c.h.b16 %v5614
        %v5657 = vunpack.c.l.b16 %v5615
        %v5658 = vunpack.c.h.b16 %v5615
        %v5659 = vunpack.c.l.b16 %v5616
        %v5660 = vunpack.c.h.b16 %v5616
        %v5661 = vunpack.c.l.b16 %v5617
        %v5662 = vunpack.c.h.b16 %v5617
        %v5663 = vunpack.c.l.b16 %v5618
        %v5664 = vunpack.c.h.b16 %v5618
        %v5665 = vunpack.c.l.b16 %v5619
        %v5666 = vunpack.c.h.b16 %v5619
        %v5667 = vunpack.c.l.b16 %v5620
        %v5668 = vunpack.c.h.b16 %v5620
        %v5669 = vpack.c.b16 %v5637, %v5637
        %v5670 = vpack.c.b16 %v5638, %v5638
        %v5671 = vpack.c.b16 %v5639, %v5639
        %v5672 = vpack.c.b16 %v5640, %v5640
        %v5673 = vpack.c.b16 %v5641, %v5641
        %v5674 = vpack.c.b16 %v5642, %v5642
        %v5675 = vpack.c.b16 %v5643, %v5643
        %v5676 = vpack.c.b16 %v5644, %v5644
        %v5677 = vpack.c.b16 %v5645, %v5645
        %v5678 = vpack.c.b16 %v5646, %v5646
        %v5679 = vpack.c.b16 %v5647, %v5647
        %v5680 = vpack.c.b16 %v5648, %v5648
        %v5681 = vpack.c.b16 %v5649, %v5649
        %v5682 = vpack.c.b16 %v5650, %v5650
        %v5683 = vpack.c.b16 %v5651, %v5651
        %v5684 = vpack.c.b16 %v5652, %v5652
        %v5685 = vpack.c.b16 %v5653, %v5653
        %v5686 = vpack.c.b16 %v5654, %v5654
        %v5687 = vpack.c.b16 %v5655, %v5655
        %v5688 = vpack.c.b16 %v5656, %v5656
        %v5689 = vpack.c.b16 %v5657, %v5657
        %v5690 = vpack.c.b16 %v5658, %v5658
        %v5691 = vpack.c.b16 %v5659, %v5659
        %v5692 = vpack.c.b16 %v5660, %v5660
        %v5693 = vpack.c.b16 %v5661, %v5661
        %v5694 = vpack.c.b16 %v5662, %v5662
        %v5695 = vpack.c.b16 %v5663, %v5663
        %v5696 = vpack.c.b16 %v5664, %v5664
        %v5697 = vpack.c.b16 %v5665, %v5665
        %v5698 = vpack.c.b16 %v5666, %v5666
        %v5699 = vpack.c.b16 %v5667, %v5667
        %v5700 = vpack.c.b16 %v5668, %v5668
        %v5702 = vshrl.u32 %v5669, 16
        %v5704 = vrot.slane %v5702, 7
        %v5705 = vshll.u32 %v5669, 16
        %v5707 = vor.u32 %v5704, %v5705
        %v5708 = vrot.slane %v5704, 4
        %v5710 = vshrl.u32 %v5670, 16
        %v5712 = vrot.slane %v5710, 7
        %v5713 = vshll.u32 %v5670, 16
        %v5715 = vor.u32 %v5712, %v5713
        %v5716 = vsel %vm280, %v5708, %v5715
        %v5717 = vrot.slane %v5712, 4
        %v5719 = vshrl.u32 %v5671, 16
        %v5721 = vrot.slane %v5719, 7
        %v5722 = vshll.u32 %v5671, 16
        %v5724 = vor.u32 %v5721, %v5722
        %v5725 = vrot.slane %v5721, 4
        %v5727 = vshrl.u32 %v5672, 16
        %v5729 = vrot.slane %v5727, 7
        %v5730 = vshll.u32 %v5672, 16
        %v5732 = vor.u32 %v5729, %v5730
        %v5733 = vsel %vm280, %v5725, %v5732
        %v5734 = vrot.slane %v5729, 4
        %v5736 = vshrl.u32 %v5673, 16
        %v5738 = vrot.slane %v5736, 7
        %v5739 = vshll.u32 %v5673, 16
        %v5741 = vor.u32 %v5738, %v5739
        %v5742 = vrot.slane %v5738, 4
        %v5744 = vshrl.u32 %v5674, 16
        %v5746 = vrot.slane %v5744, 7
        %v5747 = vshll.u32 %v5674, 16
        %v5749 = vor.u32 %v5746, %v5747
        %v5750 = vsel %vm280, %v5742, %v5749
        %v5751 = vrot.slane %v5746, 4
        %v5753 = vshrl.u32 %v5675, 16
        %v5755 = vrot.slane %v5753, 7
        %v5756 = vshll.u32 %v5675, 16
        %v5758 = vor.u32 %v5755, %v5756
        %v5759 = vrot.slane %v5755, 4
        %v5761 = vshrl.u32 %v5676, 16
        %v5763 = vrot.slane %v5761, 7
        %v5764 = vshll.u32 %v5676, 16
        %v5766 = vor.u32 %v5763, %v5764
        %v5767 = vsel %vm280, %v5759, %v5766
        %v5768 = vrot.slane %v5763, 4
        %v5770 = vshrl.u32 %v5677, 16
        %v5772 = vrot.slane %v5770, 7
        %v5773 = vshll.u32 %v5677, 16
        %v5775 = vor.u32 %v5772, %v5773
        %v5776 = vrot.slane %v5772, 4
        %v5778 = vshrl.u32 %v5678, 16
        %v5780 = vrot.slane %v5778, 7
        %v5781 = vshll.u32 %v5678, 16
        %v5783 = vor.u32 %v5780, %v5781
        %v5784 = vsel %vm280, %v5776, %v5783
        %v5785 = vrot.slane %v5780, 4
        %v5787 = vshrl.u32 %v5679, 16
        %v5789 = vrot.slane %v5787, 7
        %v5790 = vshll.u32 %v5679, 16
        %v5792 = vor.u32 %v5789, %v5790
        %v5793 = vrot.slane %v5789, 4
        %v5795 = vshrl.u32 %v5680, 16
        %v5797 = vrot.slane %v5795, 7
        %v5798 = vshll.u32 %v5680, 16
        %v5800 = vor.u32 %v5797, %v5798
        %v5801 = vsel %vm280, %v5793, %v5800
        %v5802 = vrot.slane %v5797, 4
        %v5804 = vshrl.u32 %v5681, 16
        %v5806 = vrot.slane %v5804, 7
        %v5807 = vshll.u32 %v5681, 16
        %v5809 = vor.u32 %v5806, %v5807
        %v5810 = vrot.slane %v5806, 4
        %v5812 = vshrl.u32 %v5682, 16
        %v5814 = vrot.slane %v5812, 7
        %v5815 = vshll.u32 %v5682, 16
        %v5817 = vor.u32 %v5814, %v5815
        %v5818 = vsel %vm280, %v5810, %v5817
        %v5819 = vrot.slane %v5814, 4
        %v5821 = vshrl.u32 %v5683, 16
        %v5823 = vrot.slane %v5821, 7
        %v5824 = vshll.u32 %v5683, 16
        %v5826 = vor.u32 %v5823, %v5824
        %v5827 = vrot.slane %v5823, 4
        %v5829 = vshrl.u32 %v5684, 16
        %v5831 = vrot.slane %v5829, 7
        %v5832 = vshll.u32 %v5684, 16
        %v5834 = vor.u32 %v5831, %v5832
        %v5835 = vsel %vm280, %v5827, %v5834
        %v5836 = vrot.slane %v5831, 4
        %v5838 = vshrl.u32 %v5685, 16
        %v5840 = vrot.slane %v5838, 7
        %v5841 = vshll.u32 %v5685, 16
        %v5843 = vor.u32 %v5840, %v5841
        %v5844 = vrot.slane %v5840, 4
        %v5846 = vshrl.u32 %v5686, 16
        %v5848 = vrot.slane %v5846, 7
        %v5849 = vshll.u32 %v5686, 16
        %v5851 = vor.u32 %v5848, %v5849
        %v5852 = vsel %vm280, %v5844, %v5851
        %v5853 = vrot.slane %v5848, 4
        %v5855 = vshrl.u32 %v5687, 16
        %v5857 = vrot.slane %v5855, 7
        %v5858 = vshll.u32 %v5687, 16
        %v5860 = vor.u32 %v5857, %v5858
        %v5861 = vrot.slane %v5857, 4
        %v5863 = vshrl.u32 %v5688, 16
        %v5865 = vrot.slane %v5863, 7
        %v5866 = vshll.u32 %v5688, 16
        %v5868 = vor.u32 %v5865, %v5866
        %v5869 = vsel %vm280, %v5861, %v5868
        %v5870 = vrot.slane %v5865, 4
        %v5872 = vshrl.u32 %v5689, 16
        %v5874 = vrot.slane %v5872, 7
        %v5875 = vshll.u32 %v5689, 16
        %v5877 = vor.u32 %v5874, %v5875
        %v5878 = vrot.slane %v5874, 4
        %v5880 = vshrl.u32 %v5690, 16
        %v5882 = vrot.slane %v5880, 7
        %v5883 = vshll.u32 %v5690, 16
        %v5885 = vor.u32 %v5882, %v5883
        %v5886 = vsel %vm280, %v5878, %v5885
        %v5887 = vrot.slane %v5882, 4
        %v5889 = vshrl.u32 %v5691, 16
        %v5891 = vrot.slane %v5889, 7
        %v5892 = vshll.u32 %v5691, 16
        %v5894 = vor.u32 %v5891, %v5892
        %v5895 = vrot.slane %v5891, 4
        %v5897 = vshrl.u32 %v5692, 16
        %v5899 = vrot.slane %v5897, 7
        %v5900 = vshll.u32 %v5692, 16
        %v5902 = vor.u32 %v5899, %v5900
        %v5903 = vsel %vm280, %v5895, %v5902
        %v5904 = vrot.slane %v5899, 4
        %v5906 = vshrl.u32 %v5693, 16
        %v5908 = vrot.slane %v5906, 7
        %v5909 = vshll.u32 %v5693, 16
        %v5911 = vor.u32 %v5908, %v5909
        %v5912 = vrot.slane %v5908, 4
        %v5914 = vshrl.u32 %v5694, 16
        %v5916 = vrot.slane %v5914, 7
        %v5917 = vshll.u32 %v5694, 16
        %v5919 = vor.u32 %v5916, %v5917
        %v5920 = vsel %vm280, %v5912, %v5919
        %v5921 = vrot.slane %v5916, 4
        %v5923 = vshrl.u32 %v5695, 16
        %v5925 = vrot.slane %v5923, 7
        %v5926 = vshll.u32 %v5695, 16
        %v5928 = vor.u32 %v5925, %v5926
        %v5929 = vrot.slane %v5925, 4
        %v5931 = vshrl.u32 %v5696, 16
        %v5933 = vrot.slane %v5931, 7
        %v5934 = vshll.u32 %v5696, 16
        %v5936 = vor.u32 %v5933, %v5934
        %v5937 = vsel %vm280, %v5929, %v5936
        %v5938 = vrot.slane %v5933, 4
        %v5940 = vshrl.u32 %v5697, 16
        %v5942 = vrot.slane %v5940, 7
        %v5943 = vshll.u32 %v5697, 16
        %v5945 = vor.u32 %v5942, %v5943
        %v5946 = vrot.slane %v5942, 4
        %v5948 = vshrl.u32 %v5698, 16
        %v5950 = vrot.slane %v5948, 7
        %v5951 = vshll.u32 %v5698, 16
        %v5953 = vor.u32 %v5950, %v5951
        %v5954 = vsel %vm280, %v5946, %v5953
        %v5955 = vrot.slane %v5950, 4
        %v5957 = vshrl.u32 %v5699, 16
        %v5959 = vrot.slane %v5957, 7
        %v5960 = vshll.u32 %v5699, 16
        %v5962 = vor.u32 %v5959, %v5960
        %v5963 = vrot.slane %v5959, 4
        %v5965 = vshrl.u32 %v5700, 16
        %v5967 = vrot.slane %v5965, 7
        %v5968 = vshll.u32 %v5700, 16
        %v5970 = vor.u32 %v5967, %v5968
        %v5971 = vsel %vm280, %v5963, %v5970
        %v5972 = vrot.slane %v5967, 4
        %s6021 = scalar_lea.vmem [#allocation3], 12
        %v6022 = vld [vmem:[%s6021] sm:$0xf]
        %v6023 = vsel %vm604, %v5707, %v6022
        %6024 = vst [vmem:[%s6021] sm:$0xf] %v6023
        %6025 = vst [vmem:[%s6021 + $0x4] sm:$0xf] %v5716
        %v6026 = vld [vmem:[%s6021 + $0x8] sm:$0x1]
        %v6027 = vsel %vm610, %v5717, %v6026
        %6028 = vst [vmem:[%s6021 + $0x8] sm:$0x1] %v6027
        %v6029 = vld [vmem:[%s6021 + $0xc] sm:$0xf]
        %v6030 = vsel %vm604, %v5724, %v6029
        %6031 = vst [vmem:[%s6021 + $0xc] sm:$0xf] %v6030
        %6032 = vst [vmem:[%s6021 + $0x10] sm:$0xf] %v5733
        %v6033 = vld [vmem:[%s6021 + $0x14] sm:$0x1]
        %v6034 = vsel %vm610, %v5734, %v6033
        %6035 = vst [vmem:[%s6021 + $0x14] sm:$0x1] %v6034
        %v6036 = vld [vmem:[%s6021 + $0x18] sm:$0xf]
        %v6037 = vsel %vm604, %v5741, %v6036
        %6038 = vst [vmem:[%s6021 + $0x18] sm:$0xf] %v6037
        %6039 = vst [vmem:[%s6021 + $0x1c] sm:$0xf] %v5750
        %v6040 = vld [vmem:[%s6021 + $0x20] sm:$0x1]
        %v6041 = vsel %vm610, %v5751, %v6040
        %6042 = vst [vmem:[%s6021 + $0x20] sm:$0x1] %v6041
        %v6043 = vld [vmem:[%s6021 + $0x24] sm:$0xf]
        %v6044 = vsel %vm604, %v5758, %v6043
        %6045 = vst [vmem:[%s6021 + $0x24] sm:$0xf] %v6044
        %6046 = vst [vmem:[%s6021 + $0x28] sm:$0xf] %v5767
        %v6047 = vld [vmem:[%s6021 + $0x2c] sm:$0x1]
        %v6048 = vsel %vm610, %v5768, %v6047
        %6049 = vst [vmem:[%s6021 + $0x2c] sm:$0x1] %v6048
        %v6050 = vld [vmem:[%s6021 + $0x30] sm:$0xf]
        %v6051 = vsel %vm604, %v5775, %v6050
        %6052 = vst [vmem:[%s6021 + $0x30] sm:$0xf] %v6051
        %6053 = vst [vmem:[%s6021 + $0x34] sm:$0xf] %v5784
        %v6054 = vld [vmem:[%s6021 + $0x38] sm:$0x1]
        %v6055 = vsel %vm610, %v5785, %v6054
        %6056 = vst [vmem:[%s6021 + $0x38] sm:$0x1] %v6055
        %v6057 = vld [vmem:[%s6021 + $0x3c] sm:$0xf]
        %v6058 = vsel %vm604, %v5792, %v6057
        %6059 = vst [vmem:[%s6021 + $0x3c] sm:$0xf] %v6058
        %6060 = vst [vmem:[%s6021 + $0x40] sm:$0xf] %v5801
        %v6061 = vld [vmem:[%s6021 + $0x44] sm:$0x1]
        %v6062 = vsel %vm610, %v5802, %v6061
        %6063 = vst [vmem:[%s6021 + $0x44] sm:$0x1] %v6062
        %v6064 = vld [vmem:[%s6021 + $0x48] sm:$0xf]
        %v6065 = vsel %vm604, %v5809, %v6064
        %6066 = vst [vmem:[%s6021 + $0x48] sm:$0xf] %v6065
        %6067 = vst [vmem:[%s6021 + $0x4c] sm:$0xf] %v5818
        %v6068 = vld [vmem:[%s6021 + $0x50] sm:$0x1]
        %v6069 = vsel %vm610, %v5819, %v6068
        %6070 = vst [vmem:[%s6021 + $0x50] sm:$0x1] %v6069
        %v6071 = vld [vmem:[%s6021 + $0x54] sm:$0xf]
        %v6072 = vsel %vm604, %v5826, %v6071
        %6073 = vst [vmem:[%s6021 + $0x54] sm:$0xf] %v6072
        %6074 = vst [vmem:[%s6021 + $0x58] sm:$0xf] %v5835
        %v6075 = vld [vmem:[%s6021 + $0x5c] sm:$0x1]
        %v6076 = vsel %vm610, %v5836, %v6075
        %6077 = vst [vmem:[%s6021 + $0x5c] sm:$0x1] %v6076
        %v6078 = vld [vmem:[%s6021 + $0x60] sm:$0xf]
        %v6079 = vsel %vm604, %v5843, %v6078
        %6080 = vst [vmem:[%s6021 + $0x60] sm:$0xf] %v6079
        %6081 = vst [vmem:[%s6021 + $0x64] sm:$0xf] %v5852
        %v6082 = vld [vmem:[%s6021 + $0x68] sm:$0x1]
        %v6083 = vsel %vm610, %v5853, %v6082
        %6084 = vst [vmem:[%s6021 + $0x68] sm:$0x1] %v6083
        %v6085 = vld [vmem:[%s6021 + $0x6c] sm:$0xf]
        %v6086 = vsel %vm604, %v5860, %v6085
        %6087 = vst [vmem:[%s6021 + $0x6c] sm:$0xf] %v6086
        %6088 = vst [vmem:[%s6021 + $0x70] sm:$0xf] %v5869
        %v6089 = vld [vmem:[%s6021 + $0x74] sm:$0x1]
        %v6090 = vsel %vm610, %v5870, %v6089
        %6091 = vst [vmem:[%s6021 + $0x74] sm:$0x1] %v6090
        %v6092 = vld [vmem:[%s6021 + $0x78] sm:$0xf]
        %v6093 = vsel %vm604, %v5877, %v6092
        %6094 = vst [vmem:[%s6021 + $0x78] sm:$0xf] %v6093
        %6095 = vst [vmem:[%s6021 + $0x7c] sm:$0xf] %v5886
        %v6096 = vld [vmem:[%s6021 + $0x80] sm:$0x1]
        %v6097 = vsel %vm610, %v5887, %v6096
        %6098 = vst [vmem:[%s6021 + $0x80] sm:$0x1] %v6097
        %v6099 = vld [vmem:[%s6021 + $0x84] sm:$0xf]
        %v6100 = vsel %vm604, %v5894, %v6099
        %6101 = vst [vmem:[%s6021 + $0x84] sm:$0xf] %v6100
        %6102 = vst [vmem:[%s6021 + $0x88] sm:$0xf] %v5903
        %v6103 = vld [vmem:[%s6021 + $0x8c] sm:$0x1]
        %v6104 = vsel %vm610, %v5904, %v6103
        %6105 = vst [vmem:[%s6021 + $0x8c] sm:$0x1] %v6104
        %v6106 = vld [vmem:[%s6021 + $0x90] sm:$0xf]
        %v6107 = vsel %vm604, %v5911, %v6106
        %6108 = vst [vmem:[%s6021 + $0x90] sm:$0xf] %v6107
        %6109 = vst [vmem:[%s6021 + $0x94] sm:$0xf] %v5920
        %v6110 = vld [vmem:[%s6021 + $0x98] sm:$0x1]
        %v6111 = vsel %vm610, %v5921, %v6110
        %6112 = vst [vmem:[%s6021 + $0x98] sm:$0x1] %v6111
        %v6113 = vld [vmem:[%s6021 + $0x9c] sm:$0xf]
        %v6114 = vsel %vm604, %v5928, %v6113
        %6115 = vst [vmem:[%s6021 + $0x9c] sm:$0xf] %v6114
        %6116 = vst [vmem:[%s6021 + $0xa0] sm:$0xf] %v5937
        %v6117 = vld [vmem:[%s6021 + $0xa4] sm:$0x1]
        %v6118 = vsel %vm610, %v5938, %v6117
        %6119 = vst [vmem:[%s6021 + $0xa4] sm:$0x1] %v6118
        %v6120 = vld [vmem:[%s6021 + $0xa8] sm:$0xf]
        %v6121 = vsel %vm604, %v5945, %v6120
        %6122 = vst [vmem:[%s6021 + $0xa8] sm:$0xf] %v6121
        %6123 = vst [vmem:[%s6021 + $0xac] sm:$0xf] %v5954
        %v6124 = vld [vmem:[%s6021 + $0xb0] sm:$0x1]
        %v6125 = vsel %vm610, %v5955, %v6124
        %6126 = vst [vmem:[%s6021 + $0xb0] sm:$0x1] %v6125
        %v6127 = vld [vmem:[%s6021 + $0xb4] sm:$0xf]
        %v6128 = vsel %vm604, %v5962, %v6127
        %6129 = vst [vmem:[%s6021 + $0xb4] sm:$0xf] %v6128
        %6130 = vst [vmem:[%s6021 + $0xb8] sm:$0xf] %v5971
        %v6131 = vld [vmem:[%s6021 + $0xbc] sm:$0x1]
        %v6132 = vsel %vm610, %v5972, %v6131
        %6133 = vst [vmem:[%s6021 + $0xbc] sm:$0x1] %v6132
        %v6134 = vld [vmem:[#allocation3] sm:$0xf]
        %v6135 = vld [vmem:[#allocation3 + $0x4] sm:$0xf]
        %v6136 = vld [vmem:[#allocation3 + $0xc] sm:$0xf]
        %v6137 = vld [vmem:[#allocation3 + $0x10] sm:$0xf]
        %v6138 = vld [vmem:[#allocation3 + $0x18] sm:$0xf]
        %v6139 = vld [vmem:[#allocation3 + $0x1c] sm:$0xf]
        %v6140 = vld [vmem:[#allocation3 + $0x24] sm:$0xf]
        %v6141 = vld [vmem:[#allocation3 + $0x28] sm:$0xf]
        %v6142 = vld [vmem:[#allocation3 + $0x30] sm:$0xf]
        %v6143 = vld [vmem:[#allocation3 + $0x34] sm:$0xf]
        %v6144 = vld [vmem:[#allocation3 + $0x3c] sm:$0xf]
        %v6145 = vld [vmem:[#allocation3 + $0x40] sm:$0xf]
        %v6146 = vld [vmem:[#allocation3 + $0x48] sm:$0xf]
        %v6147 = vld [vmem:[#allocation3 + $0x4c] sm:$0xf]
        %v6148 = vld [vmem:[#allocation3 + $0x54] sm:$0xf]
        %v6149 = vld [vmem:[#allocation3 + $0x58] sm:$0xf]
        %v6150 = vld [vmem:[#allocation3 + $0x60] sm:$0xf]
        %v6151 = vld [vmem:[#allocation3 + $0x64] sm:$0xf]
        %v6152 = vld [vmem:[#allocation3 + $0x6c] sm:$0xf]
        %v6153 = vld [vmem:[#allocation3 + $0x70] sm:$0xf]
        %v6154 = vld [vmem:[#allocation3 + $0x78] sm:$0xf]
        %v6155 = vld [vmem:[#allocation3 + $0x7c] sm:$0xf]
        %v6156 = vld [vmem:[#allocation3 + $0x84] sm:$0xf]
        %v6157 = vld [vmem:[#allocation3 + $0x88] sm:$0xf]
        %v6158 = vld [vmem:[#allocation3 + $0x90] sm:$0xf]
        %v6159 = vld [vmem:[#allocation3 + $0x94] sm:$0xf]
        %v6160 = vld [vmem:[#allocation3 + $0x9c] sm:$0xf]
        %v6161 = vld [vmem:[#allocation3 + $0xa0] sm:$0xf]
        %v6162 = vld [vmem:[#allocation3 + $0xa8] sm:$0xf]
        %v6163 = vld [vmem:[#allocation3 + $0xac] sm:$0xf]
        %v6164 = vld [vmem:[#allocation3 + $0xb4] sm:$0xf]
        %v6165 = vld [vmem:[#allocation3 + $0xb8] sm:$0xf]
        %v6166 = vld [vmem:[%s2] sm:$0xf]
        %v6167 = vld [vmem:[%s2 + $0x4] sm:$0xf]
        %v6168 = vld [vmem:[%s2 + $0x8] sm:$0xf]
        %v6169 = vld [vmem:[%s2 + $0xc] sm:$0xf]
        %v6170 = vld [vmem:[%s2 + $0x10] sm:$0xf]
        %v6171 = vld [vmem:[%s2 + $0x14] sm:$0xf]
        %v6172 = vld [vmem:[%s2 + $0x18] sm:$0xf]
        %v6173 = vld [vmem:[%s2 + $0x1c] sm:$0xf]
        %v6174 = vld [vmem:[%s2 + $0x20] sm:$0xf]
        %v6175 = vld [vmem:[%s2 + $0x24] sm:$0xf]
        %v6176 = vld [vmem:[%s2 + $0x28] sm:$0xf]
        %v6177 = vld [vmem:[%s2 + $0x2c] sm:$0xf]
        %v6178 = vld [vmem:[%s2 + $0x30] sm:$0xf]
        %v6179 = vld [vmem:[%s2 + $0x34] sm:$0xf]
        %v6180 = vld [vmem:[%s2 + $0x38] sm:$0xf]
        %v6181 = vld [vmem:[%s2 + $0x3c] sm:$0xf]
        %v6182 = vld [vmem:[#allocation3 + $0x8] sm:$0x1]
        %v6183 = vld [vmem:[#allocation3 + $0x14] sm:$0x1]
        %v6184 = vld [vmem:[#allocation3 + $0x20] sm:$0x1]
        %v6185 = vld [vmem:[#allocation3 + $0x2c] sm:$0x1]
        %v6186 = vld [vmem:[#allocation3 + $0x38] sm:$0x1]
        %v6187 = vld [vmem:[#allocation3 + $0x44] sm:$0x1]
        %v6188 = vld [vmem:[#allocation3 + $0x50] sm:$0x1]
        %v6189 = vld [vmem:[#allocation3 + $0x5c] sm:$0x1]
        %v6190 = vld [vmem:[#allocation3 + $0x68] sm:$0x1]
        %v6191 = vld [vmem:[#allocation3 + $0x74] sm:$0x1]
        %v6192 = vld [vmem:[#allocation3 + $0x80] sm:$0x1]
        %v6193 = vld [vmem:[#allocation3 + $0x8c] sm:$0x1]
        %v6194 = vld [vmem:[#allocation3 + $0x98] sm:$0x1]
        %v6195 = vld [vmem:[#allocation3 + $0xa4] sm:$0x1]
        %v6196 = vld [vmem:[#allocation3 + $0xb0] sm:$0x1]
        %v6197 = vld [vmem:[#allocation3 + $0xbc] sm:$0x1]
        %v6199 = vshrl.u32 %v6134, 16
        %v6201 = vrot.slane %v6199, 4
        %v6202 = vshll.u32 %v6134, 16
        %v6204 = vrot.slane %v6202, 5
        %v6205 = vor.u32 %v6201, %v6204
        %v6206 = vrot.slane %v6205, 4
        %v6208 = vshll.u32 %v6135, 16
        %v6210 = vrot.slane %v6208, 5
        %v6211 = vsel %vm785, %v6206, %v6210
        %v6212 = vshrl.u32 %v6135, 16
        %v6214 = vrot.slane %v6212, 4
        %v6215 = vor.u32 %v6214, %v6210
        %v6216 = vrot.slane %v6215, 4
        %v6218 = vshll.u32 %v6182, 16
        %v6220 = vrot.slane %v6218, 5
        %v6221 = vsel %vm785, %v6216, %v6220
        %v6223 = vshrl.u32 %v6136, 16
        %v6225 = vrot.slane %v6223, 4
        %v6226 = vshll.u32 %v6136, 16
        %v6228 = vrot.slane %v6226, 5
        %v6229 = vor.u32 %v6225, %v6228
        %v6230 = vrot.slane %v6229, 4
        %v6232 = vshll.u32 %v6137, 16
        %v6234 = vrot.slane %v6232, 5
        %v6235 = vsel %vm785, %v6230, %v6234
        %v6236 = vshrl.u32 %v6137, 16
        %v6238 = vrot.slane %v6236, 4
        %v6239 = vor.u32 %v6238, %v6234
        %v6240 = vrot.slane %v6239, 4
        %v6242 = vshll.u32 %v6183, 16
        %v6244 = vrot.slane %v6242, 5
        %v6245 = vsel %vm785, %v6240, %v6244
        %v6247 = vshrl.u32 %v6138, 16
        %v6249 = vrot.slane %v6247, 4
        %v6250 = vshll.u32 %v6138, 16
        %v6252 = vrot.slane %v6250, 5
        %v6253 = vor.u32 %v6249, %v6252
        %v6254 = vrot.slane %v6253, 4
        %v6256 = vshll.u32 %v6139, 16
        %v6258 = vrot.slane %v6256, 5
        %v6259 = vsel %vm785, %v6254, %v6258
        %v6260 = vshrl.u32 %v6139, 16
        %v6262 = vrot.slane %v6260, 4
        %v6263 = vor.u32 %v6262, %v6258
        %v6264 = vrot.slane %v6263, 4
        %v6266 = vshll.u32 %v6184, 16
        %v6268 = vrot.slane %v6266, 5
        %v6269 = vsel %vm785, %v6264, %v6268
        %v6271 = vshrl.u32 %v6140, 16
        %v6273 = vrot.slane %v6271, 4
        %v6274 = vshll.u32 %v6140, 16
        %v6276 = vrot.slane %v6274, 5
        %v6277 = vor.u32 %v6273, %v6276
        %v6278 = vrot.slane %v6277, 4
        %v6280 = vshll.u32 %v6141, 16
        %v6282 = vrot.slane %v6280, 5
        %v6283 = vsel %vm785, %v6278, %v6282
        %v6284 = vshrl.u32 %v6141, 16
        %v6286 = vrot.slane %v6284, 4
        %v6287 = vor.u32 %v6286, %v6282
        %v6288 = vrot.slane %v6287, 4
        %v6290 = vshll.u32 %v6185, 16
        %v6292 = vrot.slane %v6290, 5
        %v6293 = vsel %vm785, %v6288, %v6292
        %v6295 = vshrl.u32 %v6142, 16
        %v6297 = vrot.slane %v6295, 4
        %v6298 = vshll.u32 %v6142, 16
        %v6300 = vrot.slane %v6298, 5
        %v6301 = vor.u32 %v6297, %v6300
        %v6302 = vrot.slane %v6301, 4
        %v6304 = vshll.u32 %v6143, 16
        %v6306 = vrot.slane %v6304, 5
        %v6307 = vsel %vm785, %v6302, %v6306
        %v6308 = vshrl.u32 %v6143, 16
        %v6310 = vrot.slane %v6308, 4
        %v6311 = vor.u32 %v6310, %v6306
        %v6312 = vrot.slane %v6311, 4
        %v6314 = vshll.u32 %v6186, 16
        %v6316 = vrot.slane %v6314, 5
        %v6317 = vsel %vm785, %v6312, %v6316
        %v6319 = vshrl.u32 %v6144, 16
        %v6321 = vrot.slane %v6319, 4
        %v6322 = vshll.u32 %v6144, 16
        %v6324 = vrot.slane %v6322, 5
        %v6325 = vor.u32 %v6321, %v6324
        %v6326 = vrot.slane %v6325, 4
        %v6328 = vshll.u32 %v6145, 16
        %v6330 = vrot.slane %v6328, 5
        %v6331 = vsel %vm785, %v6326, %v6330
        %v6332 = vshrl.u32 %v6145, 16
        %v6334 = vrot.slane %v6332, 4
        %v6335 = vor.u32 %v6334, %v6330
        %v6336 = vrot.slane %v6335, 4
        %v6338 = vshll.u32 %v6187, 16
        %v6340 = vrot.slane %v6338, 5
        %v6341 = vsel %vm785, %v6336, %v6340
        %v6343 = vshrl.u32 %v6146, 16
        %v6345 = vrot.slane %v6343, 4
        %v6346 = vshll.u32 %v6146, 16
        %v6348 = vrot.slane %v6346, 5
        %v6349 = vor.u32 %v6345, %v6348
        %v6350 = vrot.slane %v6349, 4
        %v6352 = vshll.u32 %v6147, 16
        %v6354 = vrot.slane %v6352, 5
        %v6355 = vsel %vm785, %v6350, %v6354
        %v6356 = vshrl.u32 %v6147, 16
        %v6358 = vrot.slane %v6356, 4
        %v6359 = vor.u32 %v6358, %v6354
        %v6360 = vrot.slane %v6359, 4
        %v6362 = vshll.u32 %v6188, 16
        %v6364 = vrot.slane %v6362, 5
        %v6365 = vsel %vm785, %v6360, %v6364
        %v6367 = vshrl.u32 %v6148, 16
        %v6369 = vrot.slane %v6367, 4
        %v6370 = vshll.u32 %v6148, 16
        %v6372 = vrot.slane %v6370, 5
        %v6373 = vor.u32 %v6369, %v6372
        %v6374 = vrot.slane %v6373, 4
        %v6376 = vshll.u32 %v6149, 16
        %v6378 = vrot.slane %v6376, 5
        %v6379 = vsel %vm785, %v6374, %v6378
        %v6380 = vshrl.u32 %v6149, 16
        %v6382 = vrot.slane %v6380, 4
        %v6383 = vor.u32 %v6382, %v6378
        %v6384 = vrot.slane %v6383, 4
        %v6386 = vshll.u32 %v6189, 16
        %v6388 = vrot.slane %v6386, 5
        %v6389 = vsel %vm785, %v6384, %v6388
        %v6391 = vshrl.u32 %v6150, 16
        %v6393 = vrot.slane %v6391, 4
        %v6394 = vshll.u32 %v6150, 16
        %v6396 = vrot.slane %v6394, 5
        %v6397 = vor.u32 %v6393, %v6396
        %v6398 = vrot.slane %v6397, 4
        %v6400 = vshll.u32 %v6151, 16
        %v6402 = vrot.slane %v6400, 5
        %v6403 = vsel %vm785, %v6398, %v6402
        %v6404 = vshrl.u32 %v6151, 16
        %v6406 = vrot.slane %v6404, 4
        %v6407 = vor.u32 %v6406, %v6402
        %v6408 = vrot.slane %v6407, 4
        %v6410 = vshll.u32 %v6190, 16
        %v6412 = vrot.slane %v6410, 5
        %v6413 = vsel %vm785, %v6408, %v6412
        %v6415 = vshrl.u32 %v6152, 16
        %v6417 = vrot.slane %v6415, 4
        %v6418 = vshll.u32 %v6152, 16
        %v6420 = vrot.slane %v6418, 5
        %v6421 = vor.u32 %v6417, %v6420
        %v6422 = vrot.slane %v6421, 4
        %v6424 = vshll.u32 %v6153, 16
        %v6426 = vrot.slane %v6424, 5
        %v6427 = vsel %vm785, %v6422, %v6426
        %v6428 = vshrl.u32 %v6153, 16
        %v6430 = vrot.slane %v6428, 4
        %v6431 = vor.u32 %v6430, %v6426
        %v6432 = vrot.slane %v6431, 4
        %v6434 = vshll.u32 %v6191, 16
        %v6436 = vrot.slane %v6434, 5
        %v6437 = vsel %vm785, %v6432, %v6436
        %v6439 = vshrl.u32 %v6154, 16
        %v6441 = vrot.slane %v6439, 4
        %v6442 = vshll.u32 %v6154, 16
        %v6444 = vrot.slane %v6442, 5
        %v6445 = vor.u32 %v6441, %v6444
        %v6446 = vrot.slane %v6445, 4
        %v6448 = vshll.u32 %v6155, 16
        %v6450 = vrot.slane %v6448, 5
        %v6451 = vsel %vm785, %v6446, %v6450
        %v6452 = vshrl.u32 %v6155, 16
        %v6454 = vrot.slane %v6452, 4
        %v6455 = vor.u32 %v6454, %v6450
        %v6456 = vrot.slane %v6455, 4
        %v6458 = vshll.u32 %v6192, 16
        %v6460 = vrot.slane %v6458, 5
        %v6461 = vsel %vm785, %v6456, %v6460
        %v6463 = vshrl.u32 %v6156, 16
        %v6465 = vrot.slane %v6463, 4
        %v6466 = vshll.u32 %v6156, 16
        %v6468 = vrot.slane %v6466, 5
        %v6469 = vor.u32 %v6465, %v6468
        %v6470 = vrot.slane %v6469, 4
        %v6472 = vshll.u32 %v6157, 16
        %v6474 = vrot.slane %v6472, 5
        %v6475 = vsel %vm785, %v6470, %v6474
        %v6476 = vshrl.u32 %v6157, 16
        %v6478 = vrot.slane %v6476, 4
        %v6479 = vor.u32 %v6478, %v6474
        %v6480 = vrot.slane %v6479, 4
        %v6482 = vshll.u32 %v6193, 16
        %v6484 = vrot.slane %v6482, 5
        %v6485 = vsel %vm785, %v6480, %v6484
        %v6487 = vshrl.u32 %v6158, 16
        %v6489 = vrot.slane %v6487, 4
        %v6490 = vshll.u32 %v6158, 16
        %v6492 = vrot.slane %v6490, 5
        %v6493 = vor.u32 %v6489, %v6492
        %v6494 = vrot.slane %v6493, 4
        %v6496 = vshll.u32 %v6159, 16
        %v6498 = vrot.slane %v6496, 5
        %v6499 = vsel %vm785, %v6494, %v6498
        %v6500 = vshrl.u32 %v6159, 16
        %v6502 = vrot.slane %v6500, 4
        %v6503 = vor.u32 %v6502, %v6498
        %v6504 = vrot.slane %v6503, 4
        %v6506 = vshll.u32 %v6194, 16
        %v6508 = vrot.slane %v6506, 5
        %v6509 = vsel %vm785, %v6504, %v6508
        %v6511 = vshrl.u32 %v6160, 16
        %v6513 = vrot.slane %v6511, 4
        %v6514 = vshll.u32 %v6160, 16
        %v6516 = vrot.slane %v6514, 5
        %v6517 = vor.u32 %v6513, %v6516
        %v6518 = vrot.slane %v6517, 4
        %v6520 = vshll.u32 %v6161, 16
        %v6522 = vrot.slane %v6520, 5
        %v6523 = vsel %vm785, %v6518, %v6522
        %v6524 = vshrl.u32 %v6161, 16
        %v6526 = vrot.slane %v6524, 4
        %v6527 = vor.u32 %v6526, %v6522
        %v6528 = vrot.slane %v6527, 4
        %v6530 = vshll.u32 %v6195, 16
        %v6532 = vrot.slane %v6530, 5
        %v6533 = vsel %vm785, %v6528, %v6532
        %v6535 = vshrl.u32 %v6162, 16
        %v6537 = vrot.slane %v6535, 4
        %v6538 = vshll.u32 %v6162, 16
        %v6540 = vrot.slane %v6538, 5
        %v6541 = vor.u32 %v6537, %v6540
        %v6542 = vrot.slane %v6541, 4
        %v6544 = vshll.u32 %v6163, 16
        %v6546 = vrot.slane %v6544, 5
        %v6547 = vsel %vm785, %v6542, %v6546
        %v6548 = vshrl.u32 %v6163, 16
        %v6550 = vrot.slane %v6548, 4
        %v6551 = vor.u32 %v6550, %v6546
        %v6552 = vrot.slane %v6551, 4
        %v6554 = vshll.u32 %v6196, 16
        %v6556 = vrot.slane %v6554, 5
        %v6557 = vsel %vm785, %v6552, %v6556
        %v6559 = vshrl.u32 %v6164, 16
        %v6561 = vrot.slane %v6559, 4
        %v6562 = vshll.u32 %v6164, 16
        %v6564 = vrot.slane %v6562, 5
        %v6565 = vor.u32 %v6561, %v6564
        %v6566 = vrot.slane %v6565, 4
        %v6568 = vshll.u32 %v6165, 16
        %v6570 = vrot.slane %v6568, 5
        %v6571 = vsel %vm785, %v6566, %v6570
        %v6572 = vshrl.u32 %v6165, 16
        %v6574 = vrot.slane %v6572, 4
        %v6575 = vor.u32 %v6574, %v6570
        %v6576 = vrot.slane %v6575, 4
        %v6578 = vshll.u32 %v6197, 16
        %v6580 = vrot.slane %v6578, 5
        %v6581 = vsel %vm785, %v6576, %v6580
        %v6582 = vld [vmem:[%s2 + $0x40] sm:$0xf]
        %v6583 = vld [vmem:[%s2 + $0x44] sm:$0xf]
        %v6584 = vld [vmem:[%s2 + $0x48] sm:$0xf]
        %v6585 = vld [vmem:[%s2 + $0x4c] sm:$0xf]
        %v6586 = vld [vmem:[%s2 + $0x50] sm:$0xf]
        %v6587 = vld [vmem:[%s2 + $0x54] sm:$0xf]
        %v6588 = vld [vmem:[%s2 + $0x58] sm:$0xf]
        %v6589 = vld [vmem:[%s2 + $0x5c] sm:$0xf]
        %v6590 = vld [vmem:[%s2 + $0x60] sm:$0xf]
        %v6591 = vld [vmem:[%s2 + $0x64] sm:$0xf]
        %v6592 = vld [vmem:[%s2 + $0x68] sm:$0xf]
        %v6593 = vld [vmem:[%s2 + $0x6c] sm:$0xf]
        %v6594 = vld [vmem:[%s2 + $0x70] sm:$0xf]
        %v6595 = vld [vmem:[%s2 + $0x74] sm:$0xf]
        %v6596 = vld [vmem:[%s2 + $0x78] sm:$0xf]
        %v6597 = vld [vmem:[%s2 + $0x7c] sm:$0xf]
        %v6598 = vunpack.c.l.b16 %v6211
        %v6599 = vunpack.c.l.b16 %v6221
        %v6600 = vunpack.c.l.b16 %v6235
        %v6601 = vunpack.c.l.b16 %v6245
        %v6602 = vunpack.c.l.b16 %v6259
        %v6603 = vunpack.c.l.b16 %v6269
        %v6604 = vunpack.c.l.b16 %v6283
        %v6605 = vunpack.c.l.b16 %v6293
        %v6606 = vunpack.c.l.b16 %v6307
        %v6607 = vunpack.c.l.b16 %v6317
        %v6608 = vunpack.c.l.b16 %v6331
        %v6609 = vunpack.c.l.b16 %v6341
        %v6610 = vunpack.c.l.b16 %v6355
        %v6611 = vunpack.c.l.b16 %v6365
        %v6612 = vunpack.c.l.b16 %v6379
        %v6613 = vunpack.c.l.b16 %v6389
        %v6614 = vunpack.c.l.b16 %v6403
        %v6615 = vunpack.c.l.b16 %v6413
        %v6616 = vunpack.c.l.b16 %v6427
        %v6617 = vunpack.c.l.b16 %v6437
        %v6618 = vunpack.c.l.b16 %v6451
        %v6619 = vunpack.c.l.b16 %v6461
        %v6620 = vunpack.c.l.b16 %v6475
        %v6621 = vunpack.c.l.b16 %v6485
        %v6622 = vunpack.c.l.b16 %v6499
        %v6623 = vunpack.c.l.b16 %v6509
        %v6624 = vunpack.c.l.b16 %v6523
        %v6625 = vunpack.c.l.b16 %v6533
        %v6626 = vunpack.c.l.b16 %v6547
        %v6627 = vunpack.c.l.b16 %v6557
        %v6628 = vunpack.c.l.b16 %v6571
        %v6629 = vunpack.c.l.b16 %v6581
        %v6630 = vpack.c.b16 %v6599, %v6598
        %v6631 = vpack.c.b16 %v6601, %v6600
        %v6632 = vpack.c.b16 %v6603, %v6602
        %v6633 = vpack.c.b16 %v6605, %v6604
        %v6634 = vpack.c.b16 %v6607, %v6606
        %v6635 = vpack.c.b16 %v6609, %v6608
        %v6636 = vpack.c.b16 %v6611, %v6610
        %v6637 = vpack.c.b16 %v6613, %v6612
        %v6638 = vpack.c.b16 %v6615, %v6614
        %v6639 = vpack.c.b16 %v6617, %v6616
        %v6640 = vpack.c.b16 %v6619, %v6618
        %v6641 = vpack.c.b16 %v6621, %v6620
        %v6642 = vpack.c.b16 %v6623, %v6622
        %v6643 = vpack.c.b16 %v6625, %v6624
        %v6644 = vpack.c.b16 %v6627, %v6626
        %v6645 = vpack.c.b16 %v6629, %v6628
        %v6678 = vunpack.c.l.b16 %v6582
        %v6679 = vunpack.c.l.b16 %v6583
        %v6680 = vunpack.c.l.b16 %v6584
        %v6681 = vunpack.c.l.b16 %v6585
        %v6682 = vunpack.c.l.b16 %v6586
        %v6683 = vunpack.c.l.b16 %v6587
        %v6684 = vunpack.c.l.b16 %v6588
        %v6685 = vunpack.c.l.b16 %v6589
        %v6686 = vunpack.c.l.b16 %v6590
        %v6687 = vunpack.c.l.b16 %v6591
        %v6688 = vunpack.c.l.b16 %v6592
        %v6689 = vunpack.c.l.b16 %v6593
        %v6690 = vunpack.c.l.b16 %v6594
        %v6691 = vunpack.c.l.b16 %v6595
        %v6692 = vunpack.c.l.b16 %v6596
        %v6693 = vunpack.c.l.b16 %v6597
        %v6694 = vpack.c.b16 %v6679, %v6678
        %v6695 = vpack.c.b16 %v6681, %v6680
        %v6696 = vpack.c.b16 %v6683, %v6682
        %v6697 = vpack.c.b16 %v6685, %v6684
        %v6698 = vpack.c.b16 %v6687, %v6686
        %v6699 = vpack.c.b16 %v6689, %v6688
        %v6700 = vpack.c.b16 %v6691, %v6690
        %v6701 = vpack.c.b16 %v6693, %v6692
        %6710 = vmatprep.subr.bf16.mxu0 0
        %6711 = vmatpush1.bf16.msra.mxu0 %v6701
        %6712 = vmatprep.subr.bf16.mxu0 0
        %6713 = vmatpush1.bf16.msra.mxu0 %v6700
        %6714 = vmatprep.subr.bf16.mxu0 0
        %6715 = vmatpush1.bf16.msra.mxu0 %v6699
        %6716 = vmatprep.subr.bf16.mxu0 0
        %6717 = vmatpush1.bf16.msra.mxu0 %v6698
        %6718 = vmatprep.subr.bf16.mxu0 0
        %6719 = vmatpush1.bf16.msra.mxu0 %v6697
        %6720 = vmatprep.subr.bf16.mxu0 0
        %6721 = vmatpush1.bf16.msra.mxu0 %v6696
        %6722 = vmatprep.subr.bf16.mxu0 0
        %6723 = vmatpush1.bf16.msra.mxu0 %v6695
        %6724 = vmatprep.subr.bf16.mxu0 0
        %6725 = vmatpush1.bf16.msra.mxu0 %v6694
        %6726 = vmatprep.subr.bf16.mxu0 0
        %6727 = vmatpush2.bf16.msra.mxu0 0
        %6728 = vmatprep.subr.bf16.mxu0 0
        %6729 = vmatpush2.bf16.msra.mxu0 0
        %6730 = vmatprep.subr.bf16.mxu0 0
        %6731 = vmatpush2.bf16.msra.mxu0 0
        %6732 = vmatprep.subr.bf16.mxu0 0
        %6733 = vmatpush2.bf16.msra.mxu0 0
        %6734 = vmatprep.subr.bf16.mxu0 0
        %6735 = vmatpush2.bf16.msra.mxu0 0
        %6736 = vmatprep.subr.bf16.mxu0 0
        %6737 = vmatpush2.bf16.msra.mxu0 0
        %6738 = vmatprep.subr.bf16.mxu0 0
        %6739 = vmatpush2.bf16.msra.mxu0 0
        %6740 = vmatprep.subr.bf16.mxu0 0
        %6741 = vmatpush2.bf16.msra.mxu0 0
        %6742 = vmatprep.mubr.bf16.mxu0 0
        %6743 = vmatmul.mubr.bf16.gmra.mxu0 %v6630
        %v6744 = vpop.f32.mrf.mxu0
        %v6745 = vadd.f32 0.0, %v6744
        %v6746 = vpop.f32.mrf.mxu0
        %v6747 = vpop.f32.mrf.mxu0
        %v6748 = vadd.f32 0.0, %v6747
        %v6749 = vpop.f32.mrf.mxu0
        %6750 = vmatprep.mubr.bf16.mxu0 0
        %6751 = vmatmul.mubr.bf16.gmra.mxu0 %v6631
        %v6752 = vpop.f32.mrf.mxu0
        %v6753 = vadd.f32 0.0, %v6752
        %v6754 = vpop.f32.mrf.mxu0
        %v6755 = vpop.f32.mrf.mxu0
        %v6756 = vadd.f32 0.0, %v6755
        %v6757 = vpop.f32.mrf.mxu0
        %6758 = vmatprep.mubr.bf16.mxu0 0
        %6759 = vmatmul.mubr.bf16.gmra.mxu0 %v6632
        %v6760 = vpop.f32.mrf.mxu0
        %v6761 = vadd.f32 0.0, %v6760
        %v6762 = vpop.f32.mrf.mxu0
        %v6763 = vpop.f32.mrf.mxu0
        %v6764 = vadd.f32 0.0, %v6763
        %v6765 = vpop.f32.mrf.mxu0
        %6766 = vmatprep.mubr.bf16.mxu0 0
        %6767 = vmatmul.mubr.bf16.gmra.mxu0 %v6633
        %v6768 = vpop.f32.mrf.mxu0
        %v6769 = vadd.f32 0.0, %v6768
        %v6770 = vpop.f32.mrf.mxu0
        %v6771 = vpop.f32.mrf.mxu0
        %v6772 = vadd.f32 0.0, %v6771
        %v6773 = vpop.f32.mrf.mxu0
        %6774 = vmatprep.mubr.bf16.mxu0 0
        %6775 = vmatmul.mubr.bf16.gmra.mxu0 %v6634
        %v6776 = vpop.f32.mrf.mxu0
        %v6777 = vadd.f32 0.0, %v6776
        %v6778 = vpop.f32.mrf.mxu0
        %v6779 = vpop.f32.mrf.mxu0
        %v6780 = vadd.f32 0.0, %v6779
        %v6781 = vpop.f32.mrf.mxu0
        %6782 = vmatprep.mubr.bf16.mxu0 0
        %6783 = vmatmul.mubr.bf16.gmra.mxu0 %v6635
        %v6784 = vpop.f32.mrf.mxu0
        %v6785 = vadd.f32 0.0, %v6784
        %v6786 = vpop.f32.mrf.mxu0
        %v6787 = vpop.f32.mrf.mxu0
        %v6788 = vadd.f32 0.0, %v6787
        %v6789 = vpop.f32.mrf.mxu0
        %6790 = vmatprep.mubr.bf16.mxu0 0
        %6791 = vmatmul.mubr.bf16.gmra.mxu0 %v6636
        %v6792 = vpop.f32.mrf.mxu0
        %v6793 = vadd.f32 0.0, %v6792
        %v6794 = vpop.f32.mrf.mxu0
        %v6795 = vpop.f32.mrf.mxu0
        %v6796 = vadd.f32 0.0, %v6795
        %v6797 = vpop.f32.mrf.mxu0
        %6798 = vmatprep.mubr.bf16.mxu0 0
        %6799 = vmatmul.mubr.bf16.gmra.mxu0 %v6637
        %v6800 = vpop.f32.mrf.mxu0
        %v6801 = vadd.f32 0.0, %v6800
        %v6802 = vpop.f32.mrf.mxu0
        %v6803 = vpop.f32.mrf.mxu0
        %v6804 = vadd.f32 0.0, %v6803
        %v6805 = vpop.f32.mrf.mxu0
        %6806 = vmatprep.mubr.bf16.mxu0 0
        %6807 = vmatmul.mubr.bf16.gmra.mxu0 %v6638
        %v6808 = vpop.f32.mrf.mxu0
        %v6809 = vadd.f32 0.0, %v6808
        %v6810 = vpop.f32.mrf.mxu0
        %v6811 = vpop.f32.mrf.mxu0
        %v6812 = vadd.f32 0.0, %v6811
        %v6813 = vpop.f32.mrf.mxu0
        %6814 = vmatprep.mubr.bf16.mxu0 0
        %6815 = vmatmul.mubr.bf16.gmra.mxu0 %v6639
        %v6816 = vpop.f32.mrf.mxu0
        %v6817 = vadd.f32 0.0, %v6816
        %v6818 = vpop.f32.mrf.mxu0
        %v6819 = vpop.f32.mrf.mxu0
        %v6820 = vadd.f32 0.0, %v6819
        %v6821 = vpop.f32.mrf.mxu0
        %6822 = vmatprep.mubr.bf16.mxu0 0
        %6823 = vmatmul.mubr.bf16.gmra.mxu0 %v6640
        %v6824 = vpop.f32.mrf.mxu0
        %v6825 = vadd.f32 0.0, %v6824
        %v6826 = vpop.f32.mrf.mxu0
        %v6827 = vpop.f32.mrf.mxu0
        %v6828 = vadd.f32 0.0, %v6827
        %v6829 = vpop.f32.mrf.mxu0
        %6830 = vmatprep.mubr.bf16.mxu0 0
        %6831 = vmatmul.mubr.bf16.gmra.mxu0 %v6641
        %v6832 = vpop.f32.mrf.mxu0
        %v6833 = vadd.f32 0.0, %v6832
        %v6834 = vpop.f32.mrf.mxu0
        %v6835 = vpop.f32.mrf.mxu0
        %v6836 = vadd.f32 0.0, %v6835
        %v6837 = vpop.f32.mrf.mxu0
        %6838 = vmatprep.mubr.bf16.mxu0 0
        %6839 = vmatmul.mubr.bf16.gmra.mxu0 %v6642
        %v6840 = vpop.f32.mrf.mxu0
        %v6841 = vadd.f32 0.0, %v6840
        %v6842 = vpop.f32.mrf.mxu0
        %v6843 = vpop.f32.mrf.mxu0
        %v6844 = vadd.f32 0.0, %v6843
        %v6845 = vpop.f32.mrf.mxu0
        %6846 = vmatprep.mubr.bf16.mxu0 0
        %6847 = vmatmul.mubr.bf16.gmra.mxu0 %v6643
        %v6848 = vpop.f32.mrf.mxu0
        %v6849 = vadd.f32 0.0, %v6848
        %v6850 = vpop.f32.mrf.mxu0
        %v6851 = vpop.f32.mrf.mxu0
        %v6852 = vadd.f32 0.0, %v6851
        %v6853 = vpop.f32.mrf.mxu0
        %6854 = vmatprep.mubr.bf16.mxu0 0
        %6855 = vmatmul.mubr.bf16.gmra.mxu0 %v6644
        %v6856 = vpop.f32.mrf.mxu0
        %v6857 = vadd.f32 0.0, %v6856
        %v6858 = vpop.f32.mrf.mxu0
        %v6859 = vpop.f32.mrf.mxu0
        %v6860 = vadd.f32 0.0, %v6859
        %v6861 = vpop.f32.mrf.mxu0
        %6862 = vmatprep.mubr.bf16.mxu0 0
        %6863 = vmatmul.mubr.bf16.gmra.mxu0 %v6645
        %v6864 = vpop.f32.mrf.mxu0
        %v6865 = vadd.f32 0.0, %v6864
        %v6866 = vpop.f32.mrf.mxu0
        %v6867 = vpop.f32.mrf.mxu0
        %v6868 = vadd.f32 0.0, %v6867
        %v6869 = vpop.f32.mrf.mxu0
        %6870 = vdwg.mxu0
        %v6903 = vunpack.c.l.b16 %v6134
        %v6904 = vunpack.c.l.b16 %v6135
        %v6905 = vunpack.c.l.b16 %v6136
        %v6906 = vunpack.c.l.b16 %v6137
        %v6907 = vunpack.c.l.b16 %v6138
        %v6908 = vunpack.c.l.b16 %v6139
        %v6909 = vunpack.c.l.b16 %v6140
        %v6910 = vunpack.c.l.b16 %v6141
        %v6911 = vunpack.c.l.b16 %v6142
        %v6912 = vunpack.c.l.b16 %v6143
        %v6913 = vunpack.c.l.b16 %v6144
        %v6914 = vunpack.c.l.b16 %v6145
        %v6915 = vunpack.c.l.b16 %v6146
        %v6916 = vunpack.c.l.b16 %v6147
        %v6917 = vunpack.c.l.b16 %v6148
        %v6918 = vunpack.c.l.b16 %v6149
        %v6919 = vunpack.c.l.b16 %v6150
        %v6920 = vunpack.c.l.b16 %v6151
        %v6921 = vunpack.c.l.b16 %v6152
        %v6922 = vunpack.c.l.b16 %v6153
        %v6923 = vunpack.c.l.b16 %v6154
        %v6924 = vunpack.c.l.b16 %v6155
        %v6925 = vunpack.c.l.b16 %v6156
        %v6926 = vunpack.c.l.b16 %v6157
        %v6927 = vunpack.c.l.b16 %v6158
        %v6928 = vunpack.c.l.b16 %v6159
        %v6929 = vunpack.c.l.b16 %v6160
        %v6930 = vunpack.c.l.b16 %v6161
        %v6931 = vunpack.c.l.b16 %v6162
        %v6932 = vunpack.c.l.b16 %v6163
        %v6933 = vunpack.c.l.b16 %v6164
        %v6934 = vunpack.c.l.b16 %v6165
        %v6935 = vpack.c.b16 %v6904, %v6903
        %v6936 = vpack.c.b16 %v6906, %v6905
        %v6937 = vpack.c.b16 %v6908, %v6907
        %v6938 = vpack.c.b16 %v6910, %v6909
        %v6939 = vpack.c.b16 %v6912, %v6911
        %v6940 = vpack.c.b16 %v6914, %v6913
        %v6941 = vpack.c.b16 %v6916, %v6915
        %v6942 = vpack.c.b16 %v6918, %v6917
        %v6943 = vpack.c.b16 %v6920, %v6919
        %v6944 = vpack.c.b16 %v6922, %v6921
        %v6945 = vpack.c.b16 %v6924, %v6923
        %v6946 = vpack.c.b16 %v6926, %v6925
        %v6947 = vpack.c.b16 %v6928, %v6927
        %v6948 = vpack.c.b16 %v6930, %v6929
        %v6949 = vpack.c.b16 %v6932, %v6931
        %v6950 = vpack.c.b16 %v6934, %v6933
        %v6983 = vunpack.c.l.b16 %v6166
        %v6984 = vunpack.c.l.b16 %v6167
        %v6985 = vunpack.c.l.b16 %v6168
        %v6986 = vunpack.c.l.b16 %v6169
        %v6987 = vunpack.c.l.b16 %v6170
        %v6988 = vunpack.c.l.b16 %v6171
        %v6989 = vunpack.c.l.b16 %v6172
        %v6990 = vunpack.c.l.b16 %v6173
        %v6991 = vunpack.c.l.b16 %v6174
        %v6992 = vunpack.c.l.b16 %v6175
        %v6993 = vunpack.c.l.b16 %v6176
        %v6994 = vunpack.c.l.b16 %v6177
        %v6995 = vunpack.c.l.b16 %v6178
        %v6996 = vunpack.c.l.b16 %v6179
        %v6997 = vunpack.c.l.b16 %v6180
        %v6998 = vunpack.c.l.b16 %v6181
        %v6999 = vpack.c.b16 %v6984, %v6983
        %v7000 = vpack.c.b16 %v6986, %v6985
        %v7001 = vpack.c.b16 %v6988, %v6987
        %v7002 = vpack.c.b16 %v6990, %v6989
        %v7003 = vpack.c.b16 %v6992, %v6991
        %v7004 = vpack.c.b16 %v6994, %v6993
        %v7005 = vpack.c.b16 %v6996, %v6995
        %v7006 = vpack.c.b16 %v6998, %v6997
        %7015 = vmatprep.subr.bf16.mxu0 0
        %7016 = vmatpush1.bf16.msra.mxu0 %v7006
        %7017 = vmatprep.subr.bf16.mxu0 0
        %7018 = vmatpush1.bf16.msra.mxu0 %v7005
        %7019 = vmatprep.subr.bf16.mxu0 0
        %7020 = vmatpush1.bf16.msra.mxu0 %v7004
        %7021 = vmatprep.subr.bf16.mxu0 0
        %7022 = vmatpush1.bf16.msra.mxu0 %v7003
        %7023 = vmatprep.subr.bf16.mxu0 0
        %7024 = vmatpush1.bf16.msra.mxu0 %v7002
        %7025 = vmatprep.subr.bf16.mxu0 0
        %7026 = vmatpush1.bf16.msra.mxu0 %v7001
        %7027 = vmatprep.subr.bf16.mxu0 0
        %7028 = vmatpush1.bf16.msra.mxu0 %v7000
        %7029 = vmatprep.subr.bf16.mxu0 0
        %7030 = vmatpush1.bf16.msra.mxu0 %v6999
        %7031 = vmatprep.subr.bf16.mxu0 0
        %7032 = vmatpush2.bf16.msra.mxu0 0
        %7033 = vmatprep.subr.bf16.mxu0 0
        %7034 = vmatpush2.bf16.msra.mxu0 0
        %7035 = vmatprep.subr.bf16.mxu0 0
        %7036 = vmatpush2.bf16.msra.mxu0 0
        %7037 = vmatprep.subr.bf16.mxu0 0
        %7038 = vmatpush2.bf16.msra.mxu0 0
        %7039 = vmatprep.subr.bf16.mxu0 0
        %7040 = vmatpush2.bf16.msra.mxu0 0
        %7041 = vmatprep.subr.bf16.mxu0 0
        %7042 = vmatpush2.bf16.msra.mxu0 0
        %7043 = vmatprep.subr.bf16.mxu0 0
        %7044 = vmatpush2.bf16.msra.mxu0 0
        %7045 = vmatprep.subr.bf16.mxu0 0
        %7046 = vmatpush2.bf16.msra.mxu0 0
        %7047 = vmatprep.mubr.bf16.mxu0 0
        %7048 = vmatmul.mubr.bf16.gmra.mxu0 %v6935
        %v7049 = vpop.f32.mrf.mxu0
        %v7050 = vadd.f32 %v6745, %v7049
        %v7051 = vpop.f32.mrf.mxu0
        %v7052 = vpop.f32.mrf.mxu0
        %v7053 = vadd.f32 %v6748, %v7052
        %v7054 = vpop.f32.mrf.mxu0
        %7055 = vmatprep.mubr.bf16.mxu0 0
        %7056 = vmatmul.mubr.bf16.gmra.mxu0 %v6936
        %v7057 = vpop.f32.mrf.mxu0
        %v7058 = vadd.f32 %v6753, %v7057
        %v7059 = vpop.f32.mrf.mxu0
        %v7060 = vpop.f32.mrf.mxu0
        %v7061 = vadd.f32 %v6756, %v7060
        %v7062 = vpop.f32.mrf.mxu0
        %7063 = vmatprep.mubr.bf16.mxu0 0
        %7064 = vmatmul.mubr.bf16.gmra.mxu0 %v6937
        %v7065 = vpop.f32.mrf.mxu0
        %v7066 = vadd.f32 %v6761, %v7065
        %v7067 = vpop.f32.mrf.mxu0
        %v7068 = vpop.f32.mrf.mxu0
        %v7069 = vadd.f32 %v6764, %v7068
        %v7070 = vpop.f32.mrf.mxu0
        %7071 = vmatprep.mubr.bf16.mxu0 0
        %7072 = vmatmul.mubr.bf16.gmra.mxu0 %v6938
        %v7073 = vpop.f32.mrf.mxu0
        %v7074 = vadd.f32 %v6769, %v7073
        %v7075 = vpop.f32.mrf.mxu0
        %v7076 = vpop.f32.mrf.mxu0
        %v7077 = vadd.f32 %v6772, %v7076
        %v7078 = vpop.f32.mrf.mxu0
        %7079 = vmatprep.mubr.bf16.mxu0 0
        %7080 = vmatmul.mubr.bf16.gmra.mxu0 %v6939
        %v7081 = vpop.f32.mrf.mxu0
        %v7082 = vadd.f32 %v6777, %v7081
        %v7083 = vpop.f32.mrf.mxu0
        %v7084 = vpop.f32.mrf.mxu0
        %v7085 = vadd.f32 %v6780, %v7084
        %v7086 = vpop.f32.mrf.mxu0
        %7087 = vmatprep.mubr.bf16.mxu0 0
        %7088 = vmatmul.mubr.bf16.gmra.mxu0 %v6940
        %v7089 = vpop.f32.mrf.mxu0
        %v7090 = vadd.f32 %v6785, %v7089
        %v7091 = vpop.f32.mrf.mxu0
        %v7092 = vpop.f32.mrf.mxu0
        %v7093 = vadd.f32 %v6788, %v7092
        %v7094 = vpop.f32.mrf.mxu0
        %7095 = vmatprep.mubr.bf16.mxu0 0
        %7096 = vmatmul.mubr.bf16.gmra.mxu0 %v6941
        %v7097 = vpop.f32.mrf.mxu0
        %v7098 = vadd.f32 %v6793, %v7097
        %v7099 = vpop.f32.mrf.mxu0
        %v7100 = vpop.f32.mrf.mxu0
        %v7101 = vadd.f32 %v6796, %v7100
        %v7102 = vpop.f32.mrf.mxu0
        %7103 = vmatprep.mubr.bf16.mxu0 0
        %7104 = vmatmul.mubr.bf16.gmra.mxu0 %v6942
        %v7105 = vpop.f32.mrf.mxu0
        %v7106 = vadd.f32 %v6801, %v7105
        %v7107 = vpop.f32.mrf.mxu0
        %v7108 = vpop.f32.mrf.mxu0
        %v7109 = vadd.f32 %v6804, %v7108
        %v7110 = vpop.f32.mrf.mxu0
        %7111 = vmatprep.mubr.bf16.mxu0 0
        %7112 = vmatmul.mubr.bf16.gmra.mxu0 %v6943
        %v7113 = vpop.f32.mrf.mxu0
        %v7114 = vadd.f32 %v6809, %v7113
        %v7115 = vpop.f32.mrf.mxu0
        %v7116 = vpop.f32.mrf.mxu0
        %v7117 = vadd.f32 %v6812, %v7116
        %v7118 = vpop.f32.mrf.mxu0
        %7119 = vmatprep.mubr.bf16.mxu0 0
        %7120 = vmatmul.mubr.bf16.gmra.mxu0 %v6944
        %v7121 = vpop.f32.mrf.mxu0
        %v7122 = vadd.f32 %v6817, %v7121
        %v7123 = vpop.f32.mrf.mxu0
        %v7124 = vpop.f32.mrf.mxu0
        %v7125 = vadd.f32 %v6820, %v7124
        %v7126 = vpop.f32.mrf.mxu0
        %7127 = vmatprep.mubr.bf16.mxu0 0
        %7128 = vmatmul.mubr.bf16.gmra.mxu0 %v6945
        %v7129 = vpop.f32.mrf.mxu0
        %v7130 = vadd.f32 %v6825, %v7129
        %v7131 = vpop.f32.mrf.mxu0
        %v7132 = vpop.f32.mrf.mxu0
        %v7133 = vadd.f32 %v6828, %v7132
        %v7134 = vpop.f32.mrf.mxu0
        %7135 = vmatprep.mubr.bf16.mxu0 0
        %7136 = vmatmul.mubr.bf16.gmra.mxu0 %v6946
        %v7137 = vpop.f32.mrf.mxu0
        %v7138 = vadd.f32 %v6833, %v7137
        %v7139 = vpop.f32.mrf.mxu0
        %v7140 = vpop.f32.mrf.mxu0
        %v7141 = vadd.f32 %v6836, %v7140
        %v7142 = vpop.f32.mrf.mxu0
        %7143 = vmatprep.mubr.bf16.mxu0 0
        %7144 = vmatmul.mubr.bf16.gmra.mxu0 %v6947
        %v7145 = vpop.f32.mrf.mxu0
        %v7146 = vadd.f32 %v6841, %v7145
        %v7147 = vpop.f32.mrf.mxu0
        %v7148 = vpop.f32.mrf.mxu0
        %v7149 = vadd.f32 %v6844, %v7148
        %v7150 = vpop.f32.mrf.mxu0
        %7151 = vmatprep.mubr.bf16.mxu0 0
        %7152 = vmatmul.mubr.bf16.gmra.mxu0 %v6948
        %v7153 = vpop.f32.mrf.mxu0
        %v7154 = vadd.f32 %v6849, %v7153
        %v7155 = vpop.f32.mrf.mxu0
        %v7156 = vpop.f32.mrf.mxu0
        %v7157 = vadd.f32 %v6852, %v7156
        %v7158 = vpop.f32.mrf.mxu0
        %7159 = vmatprep.mubr.bf16.mxu0 0
        %7160 = vmatmul.mubr.bf16.gmra.mxu0 %v6949
        %v7161 = vpop.f32.mrf.mxu0
        %v7162 = vadd.f32 %v6857, %v7161
        %v7163 = vpop.f32.mrf.mxu0
        %v7164 = vpop.f32.mrf.mxu0
        %v7165 = vadd.f32 %v6860, %v7164
        %v7166 = vpop.f32.mrf.mxu0
        %7167 = vmatprep.mubr.bf16.mxu0 0
        %7168 = vmatmul.mubr.bf16.gmra.mxu0 %v6950
        %v7169 = vpop.f32.mrf.mxu0
        %v7170 = vadd.f32 %v6865, %v7169
        %v7171 = vpop.f32.mrf.mxu0
        %v7172 = vpop.f32.mrf.mxu0
        %v7173 = vadd.f32 %v6868, %v7172
        %v7174 = vpop.f32.mrf.mxu0
        %7175 = vdwg.mxu0
        %v7176 = vld [vmem:[#allocation3] sm:$0xe]
        %v7177 = vld [vmem:[#allocation3 + $0xc] sm:$0xe]
        %v7178 = vld [vmem:[#allocation3 + $0x18] sm:$0xe]
        %v7179 = vld [vmem:[#allocation3 + $0x24] sm:$0xe]
        %v7180 = vld [vmem:[#allocation3 + $0x30] sm:$0xe]
        %v7181 = vld [vmem:[#allocation3 + $0x3c] sm:$0xe]
        %v7182 = vld [vmem:[#allocation3 + $0x48] sm:$0xe]
        %v7183 = vld [vmem:[#allocation3 + $0x54] sm:$0xe]
        %v7184 = vld [vmem:[#allocation3 + $0x60] sm:$0xe]
        %v7185 = vld [vmem:[#allocation3 + $0x6c] sm:$0xe]
        %v7186 = vld [vmem:[#allocation3 + $0x78] sm:$0xe]
        %v7187 = vld [vmem:[#allocation3 + $0x84] sm:$0xe]
        %v7188 = vld [vmem:[#allocation3 + $0x90] sm:$0xe]
        %v7189 = vld [vmem:[#allocation3 + $0x9c] sm:$0xe]
        %v7190 = vld [vmem:[#allocation3 + $0xa8] sm:$0xe]
        %v7191 = vld [vmem:[#allocation3 + $0xb4] sm:$0xe]
        %v7224 = vrot.slane %v7176, 5
        %v7225 = vrot.slane %v7224, 4
        %v7226 = vrot.slane %v6135, 5
        %v7227 = vsel %vm1814, %v7225, %v7226
        %v7228 = vrot.slane %v7226, 4
        %v7229 = vrot.slane %v6182, 5
        %v7230 = vsel %vm1814, %v7228, %v7229
        %v7231 = vrot.slane %v7177, 5
        %v7232 = vrot.slane %v7231, 4
        %v7233 = vrot.slane %v6137, 5
        %v7234 = vsel %vm1814, %v7232, %v7233
        %v7235 = vrot.slane %v7233, 4
        %v7236 = vrot.slane %v6183, 5
        %v7237 = vsel %vm1814, %v7235, %v7236
        %v7238 = vrot.slane %v7178, 5
        %v7239 = vrot.slane %v7238, 4
        %v7240 = vrot.slane %v6139, 5
        %v7241 = vsel %vm1814, %v7239, %v7240
        %v7242 = vrot.slane %v7240, 4
        %v7243 = vrot.slane %v6184, 5
        %v7244 = vsel %vm1814, %v7242, %v7243
        %v7245 = vrot.slane %v7179, 5
        %v7246 = vrot.slane %v7245, 4
        %v7247 = vrot.slane %v6141, 5
        %v7248 = vsel %vm1814, %v7246, %v7247
        %v7249 = vrot.slane %v7247, 4
        %v7250 = vrot.slane %v6185, 5
        %v7251 = vsel %vm1814, %v7249, %v7250
        %v7252 = vrot.slane %v7180, 5
        %v7253 = vrot.slane %v7252, 4
        %v7254 = vrot.slane %v6143, 5
        %v7255 = vsel %vm1814, %v7253, %v7254
        %v7256 = vrot.slane %v7254, 4
        %v7257 = vrot.slane %v6186, 5
        %v7258 = vsel %vm1814, %v7256, %v7257
        %v7259 = vrot.slane %v7181, 5
        %v7260 = vrot.slane %v7259, 4
        %v7261 = vrot.slane %v6145, 5
        %v7262 = vsel %vm1814, %v7260, %v7261
        %v7263 = vrot.slane %v7261, 4
        %v7264 = vrot.slane %v6187, 5
        %v7265 = vsel %vm1814, %v7263, %v7264
        %v7266 = vrot.slane %v7182, 5
        %v7267 = vrot.slane %v7266, 4
        %v7268 = vrot.slane %v6147, 5
        %v7269 = vsel %vm1814, %v7267, %v7268
        %v7270 = vrot.slane %v7268, 4
        %v7271 = vrot.slane %v6188, 5
        %v7272 = vsel %vm1814, %v7270, %v7271
        %v7273 = vrot.slane %v7183, 5
        %v7274 = vrot.slane %v7273, 4
        %v7275 = vrot.slane %v6149, 5
        %v7276 = vsel %vm1814, %v7274, %v7275
        %v7277 = vrot.slane %v7275, 4
        %v7278 = vrot.slane %v6189, 5
        %v7279 = vsel %vm1814, %v7277, %v7278
        %v7280 = vrot.slane %v7184, 5
        %v7281 = vrot.slane %v7280, 4
        %v7282 = vrot.slane %v6151, 5
        %v7283 = vsel %vm1814, %v7281, %v7282
        %v7284 = vrot.slane %v7282, 4
        %v7285 = vrot.slane %v6190, 5
        %v7286 = vsel %vm1814, %v7284, %v7285
        %v7287 = vrot.slane %v7185, 5
        %v7288 = vrot.slane %v7287, 4
        %v7289 = vrot.slane %v6153, 5
        %v7290 = vsel %vm1814, %v7288, %v7289
        %v7291 = vrot.slane %v7289, 4
        %v7292 = vrot.slane %v6191, 5
        %v7293 = vsel %vm1814, %v7291, %v7292
        %v7294 = vrot.slane %v7186, 5
        %v7295 = vrot.slane %v7294, 4
        %v7296 = vrot.slane %v6155, 5
        %v7297 = vsel %vm1814, %v7295, %v7296
        %v7298 = vrot.slane %v7296, 4
        %v7299 = vrot.slane %v6192, 5
        %v7300 = vsel %vm1814, %v7298, %v7299
        %v7301 = vrot.slane %v7187, 5
        %v7302 = vrot.slane %v7301, 4
        %v7303 = vrot.slane %v6157, 5
        %v7304 = vsel %vm1814, %v7302, %v7303
        %v7305 = vrot.slane %v7303, 4
        %v7306 = vrot.slane %v6193, 5
        %v7307 = vsel %vm1814, %v7305, %v7306
        %v7308 = vrot.slane %v7188, 5
        %v7309 = vrot.slane %v7308, 4
        %v7310 = vrot.slane %v6159, 5
        %v7311 = vsel %vm1814, %v7309, %v7310
        %v7312 = vrot.slane %v7310, 4
        %v7313 = vrot.slane %v6194, 5
        %v7314 = vsel %vm1814, %v7312, %v7313
        %v7315 = vrot.slane %v7189, 5
        %v7316 = vrot.slane %v7315, 4
        %v7317 = vrot.slane %v6161, 5
        %v7318 = vsel %vm1814, %v7316, %v7317
        %v7319 = vrot.slane %v7317, 4
        %v7320 = vrot.slane %v6195, 5
        %v7321 = vsel %vm1814, %v7319, %v7320
        %v7322 = vrot.slane %v7190, 5
        %v7323 = vrot.slane %v7322, 4
        %v7324 = vrot.slane %v6163, 5
        %v7325 = vsel %vm1814, %v7323, %v7324
        %v7326 = vrot.slane %v7324, 4
        %v7327 = vrot.slane %v6196, 5
        %v7328 = vsel %vm1814, %v7326, %v7327
        %v7329 = vrot.slane %v7191, 5
        %v7330 = vrot.slane %v7329, 4
        %v7331 = vrot.slane %v6165, 5
        %v7332 = vsel %vm1814, %v7330, %v7331
        %v7333 = vrot.slane %v7331, 4
        %v7334 = vrot.slane %v6197, 5
        %v7335 = vsel %vm1814, %v7333, %v7334
        %v7336 = vld [vmem:[%s2 + $0x80] sm:$0xf]
        %v7337 = vld [vmem:[%s2 + $0x84] sm:$0xf]
        %v7338 = vld [vmem:[%s2 + $0x88] sm:$0xf]
        %v7339 = vld [vmem:[%s2 + $0x8c] sm:$0xf]
        %v7340 = vld [vmem:[%s2 + $0x90] sm:$0xf]
        %v7341 = vld [vmem:[%s2 + $0x94] sm:$0xf]
        %v7342 = vld [vmem:[%s2 + $0x98] sm:$0xf]
        %v7343 = vld [vmem:[%s2 + $0x9c] sm:$0xf]
        %v7344 = vld [vmem:[%s2 + $0xa0] sm:$0xf]
        %v7345 = vld [vmem:[%s2 + $0xa4] sm:$0xf]
        %v7346 = vld [vmem:[%s2 + $0xa8] sm:$0xf]
        %v7347 = vld [vmem:[%s2 + $0xac] sm:$0xf]
        %v7348 = vld [vmem:[%s2 + $0xb0] sm:$0xf]
        %v7349 = vld [vmem:[%s2 + $0xb4] sm:$0xf]
        %v7350 = vld [vmem:[%s2 + $0xb8] sm:$0xf]
        %v7351 = vld [vmem:[%s2 + $0xbc] sm:$0xf]
        %v7352 = vunpack.c.l.b16 %v7227
        %v7353 = vunpack.c.l.b16 %v7230
        %v7354 = vunpack.c.l.b16 %v7234
        %v7355 = vunpack.c.l.b16 %v7237
        %v7356 = vunpack.c.l.b16 %v7241
        %v7357 = vunpack.c.l.b16 %v7244
        %v7358 = vunpack.c.l.b16 %v7248
        %v7359 = vunpack.c.l.b16 %v7251
        %v7360 = vunpack.c.l.b16 %v7255
        %v7361 = vunpack.c.l.b16 %v7258
        %v7362 = vunpack.c.l.b16 %v7262
        %v7363 = vunpack.c.l.b16 %v7265
        %v7364 = vunpack.c.l.b16 %v7269
        %v7365 = vunpack.c.l.b16 %v7272
        %v7366 = vunpack.c.l.b16 %v7276
        %v7367 = vunpack.c.l.b16 %v7279
        %v7368 = vunpack.c.l.b16 %v7283
        %v7369 = vunpack.c.l.b16 %v7286
        %v7370 = vunpack.c.l.b16 %v7290
        %v7371 = vunpack.c.l.b16 %v7293
        %v7372 = vunpack.c.l.b16 %v7297
        %v7373 = vunpack.c.l.b16 %v7300
        %v7374 = vunpack.c.l.b16 %v7304
        %v7375 = vunpack.c.l.b16 %v7307
        %v7376 = vunpack.c.l.b16 %v7311
        %v7377 = vunpack.c.l.b16 %v7314
        %v7378 = vunpack.c.l.b16 %v7318
        %v7379 = vunpack.c.l.b16 %v7321
        %v7380 = vunpack.c.l.b16 %v7325
        %v7381 = vunpack.c.l.b16 %v7328
        %v7382 = vunpack.c.l.b16 %v7332
        %v7383 = vunpack.c.l.b16 %v7335
        %v7384 = vpack.c.b16 %v7353, %v7352
        %v7385 = vpack.c.b16 %v7355, %v7354
        %v7386 = vpack.c.b16 %v7357, %v7356
        %v7387 = vpack.c.b16 %v7359, %v7358
        %v7388 = vpack.c.b16 %v7361, %v7360
        %v7389 = vpack.c.b16 %v7363, %v7362
        %v7390 = vpack.c.b16 %v7365, %v7364
        %v7391 = vpack.c.b16 %v7367, %v7366
        %v7392 = vpack.c.b16 %v7369, %v7368
        %v7393 = vpack.c.b16 %v7371, %v7370
        %v7394 = vpack.c.b16 %v7373, %v7372
        %v7395 = vpack.c.b16 %v7375, %v7374
        %v7396 = vpack.c.b16 %v7377, %v7376
        %v7397 = vpack.c.b16 %v7379, %v7378
        %v7398 = vpack.c.b16 %v7381, %v7380
        %v7399 = vpack.c.b16 %v7383, %v7382
        %v7432 = vunpack.c.l.b16 %v7336
        %v7433 = vunpack.c.l.b16 %v7337
        %v7434 = vunpack.c.l.b16 %v7338
        %v7435 = vunpack.c.l.b16 %v7339
        %v7436 = vunpack.c.l.b16 %v7340
        %v7437 = vunpack.c.l.b16 %v7341
        %v7438 = vunpack.c.l.b16 %v7342
        %v7439 = vunpack.c.l.b16 %v7343
        %v7440 = vunpack.c.l.b16 %v7344
        %v7441 = vunpack.c.l.b16 %v7345
        %v7442 = vunpack.c.l.b16 %v7346
        %v7443 = vunpack.c.l.b16 %v7347
        %v7444 = vunpack.c.l.b16 %v7348
        %v7445 = vunpack.c.l.b16 %v7349
        %v7446 = vunpack.c.l.b16 %v7350
        %v7447 = vunpack.c.l.b16 %v7351
        %v7448 = vpack.c.b16 %v7433, %v7432
        %v7449 = vpack.c.b16 %v7435, %v7434
        %v7450 = vpack.c.b16 %v7437, %v7436
        %v7451 = vpack.c.b16 %v7439, %v7438
        %v7452 = vpack.c.b16 %v7441, %v7440
        %v7453 = vpack.c.b16 %v7443, %v7442
        %v7454 = vpack.c.b16 %v7445, %v7444
        %v7455 = vpack.c.b16 %v7447, %v7446
        %7464 = vmatprep.subr.bf16.mxu0 0
        %7465 = vmatpush1.bf16.msra.mxu0 %v7455
        %7466 = vmatprep.subr.bf16.mxu0 0
        %7467 = vmatpush1.bf16.msra.mxu0 %v7454
        %7468 = vmatprep.subr.bf16.mxu0 0
        %7469 = vmatpush1.bf16.msra.mxu0 %v7453
        %7470 = vmatprep.subr.bf16.mxu0 0
        %7471 = vmatpush1.bf16.msra.mxu0 %v7452
        %7472 = vmatprep.subr.bf16.mxu0 0
        %7473 = vmatpush1.bf16.msra.mxu0 %v7451
        %7474 = vmatprep.subr.bf16.mxu0 0
        %7475 = vmatpush1.bf16.msra.mxu0 %v7450
        %7476 = vmatprep.subr.bf16.mxu0 0
        %7477 = vmatpush1.bf16.msra.mxu0 %v7449
        %7478 = vmatprep.subr.bf16.mxu0 0
        %7479 = vmatpush1.bf16.msra.mxu0 %v7448
        %7480 = vmatprep.subr.bf16.mxu0 0
        %7481 = vmatpush2.bf16.msra.mxu0 0
        %7482 = vmatprep.subr.bf16.mxu0 0
        %7483 = vmatpush2.bf16.msra.mxu0 0
        %7484 = vmatprep.subr.bf16.mxu0 0
        %7485 = vmatpush2.bf16.msra.mxu0 0
        %7486 = vmatprep.subr.bf16.mxu0 0
        %7487 = vmatpush2.bf16.msra.mxu0 0
        %7488 = vmatprep.subr.bf16.mxu0 0
        %7489 = vmatpush2.bf16.msra.mxu0 0
        %7490 = vmatprep.subr.bf16.mxu0 0
        %7491 = vmatpush2.bf16.msra.mxu0 0
        %7492 = vmatprep.subr.bf16.mxu0 0
        %7493 = vmatpush2.bf16.msra.mxu0 0
        %7494 = vmatprep.subr.bf16.mxu0 0
        %7495 = vmatpush2.bf16.msra.mxu0 0
        %7496 = vmatprep.mubr.bf16.mxu0 0
        %7497 = vmatmul.mubr.bf16.gmra.mxu0 %v7384
        %v7498 = vpop.f32.mrf.mxu0
        %v7499 = vadd.f32 0.0, %v7498
        %v7500 = vpop.f32.mrf.mxu0
        %v7501 = vpop.f32.mrf.mxu0
        %v7502 = vadd.f32 0.0, %v7501
        %v7503 = vpop.f32.mrf.mxu0
        %7504 = vmatprep.mubr.bf16.mxu0 0
        %7505 = vmatmul.mubr.bf16.gmra.mxu0 %v7385
        %v7506 = vpop.f32.mrf.mxu0
        %v7507 = vadd.f32 0.0, %v7506
        %v7508 = vpop.f32.mrf.mxu0
        %v7509 = vpop.f32.mrf.mxu0
        %v7510 = vadd.f32 0.0, %v7509
        %v7511 = vpop.f32.mrf.mxu0
        %7512 = vmatprep.mubr.bf16.mxu0 0
        %7513 = vmatmul.mubr.bf16.gmra.mxu0 %v7386
        %v7514 = vpop.f32.mrf.mxu0
        %v7515 = vadd.f32 0.0, %v7514
        %v7516 = vpop.f32.mrf.mxu0
        %v7517 = vpop.f32.mrf.mxu0
        %v7518 = vadd.f32 0.0, %v7517
        %v7519 = vpop.f32.mrf.mxu0
        %7520 = vmatprep.mubr.bf16.mxu0 0
        %7521 = vmatmul.mubr.bf16.gmra.mxu0 %v7387
        %v7522 = vpop.f32.mrf.mxu0
        %v7523 = vadd.f32 0.0, %v7522
        %v7524 = vpop.f32.mrf.mxu0
        %v7525 = vpop.f32.mrf.mxu0
        %v7526 = vadd.f32 0.0, %v7525
        %v7527 = vpop.f32.mrf.mxu0
        %7528 = vmatprep.mubr.bf16.mxu0 0
        %7529 = vmatmul.mubr.bf16.gmra.mxu0 %v7388
        %v7530 = vpop.f32.mrf.mxu0
        %v7531 = vadd.f32 0.0, %v7530
        %v7532 = vpop.f32.mrf.mxu0
        %v7533 = vpop.f32.mrf.mxu0
        %v7534 = vadd.f32 0.0, %v7533
        %v7535 = vpop.f32.mrf.mxu0
        %7536 = vmatprep.mubr.bf16.mxu0 0
        %7537 = vmatmul.mubr.bf16.gmra.mxu0 %v7389
        %v7538 = vpop.f32.mrf.mxu0
        %v7539 = vadd.f32 0.0, %v7538
        %v7540 = vpop.f32.mrf.mxu0
        %v7541 = vpop.f32.mrf.mxu0
        %v7542 = vadd.f32 0.0, %v7541
        %v7543 = vpop.f32.mrf.mxu0
        %7544 = vmatprep.mubr.bf16.mxu0 0
        %7545 = vmatmul.mubr.bf16.gmra.mxu0 %v7390
        %v7546 = vpop.f32.mrf.mxu0
        %v7547 = vadd.f32 0.0, %v7546
        %v7548 = vpop.f32.mrf.mxu0
        %v7549 = vpop.f32.mrf.mxu0
        %v7550 = vadd.f32 0.0, %v7549
        %v7551 = vpop.f32.mrf.mxu0
        %7552 = vmatprep.mubr.bf16.mxu0 0
        %7553 = vmatmul.mubr.bf16.gmra.mxu0 %v7391
        %v7554 = vpop.f32.mrf.mxu0
        %v7555 = vadd.f32 0.0, %v7554
        %v7556 = vpop.f32.mrf.mxu0
        %v7557 = vpop.f32.mrf.mxu0
        %v7558 = vadd.f32 0.0, %v7557
        %v7559 = vpop.f32.mrf.mxu0
        %7560 = vmatprep.mubr.bf16.mxu0 0
        %7561 = vmatmul.mubr.bf16.gmra.mxu0 %v7392
        %v7562 = vpop.f32.mrf.mxu0
        %v7563 = vadd.f32 0.0, %v7562
        %v7564 = vpop.f32.mrf.mxu0
        %v7565 = vpop.f32.mrf.mxu0
        %v7566 = vadd.f32 0.0, %v7565
        %v7567 = vpop.f32.mrf.mxu0
        %7568 = vmatprep.mubr.bf16.mxu0 0
        %7569 = vmatmul.mubr.bf16.gmra.mxu0 %v7393
        %v7570 = vpop.f32.mrf.mxu0
        %v7571 = vadd.f32 0.0, %v7570
        %v7572 = vpop.f32.mrf.mxu0
        %v7573 = vpop.f32.mrf.mxu0
        %v7574 = vadd.f32 0.0, %v7573
        %v7575 = vpop.f32.mrf.mxu0
        %7576 = vmatprep.mubr.bf16.mxu0 0
        %7577 = vmatmul.mubr.bf16.gmra.mxu0 %v7394
        %v7578 = vpop.f32.mrf.mxu0
        %v7579 = vadd.f32 0.0, %v7578
        %v7580 = vpop.f32.mrf.mxu0
        %v7581 = vpop.f32.mrf.mxu0
        %v7582 = vadd.f32 0.0, %v7581
        %v7583 = vpop.f32.mrf.mxu0
        %7584 = vmatprep.mubr.bf16.mxu0 0
        %7585 = vmatmul.mubr.bf16.gmra.mxu0 %v7395
        %v7586 = vpop.f32.mrf.mxu0
        %v7587 = vadd.f32 0.0, %v7586
        %v7588 = vpop.f32.mrf.mxu0
        %v7589 = vpop.f32.mrf.mxu0
        %v7590 = vadd.f32 0.0, %v7589
        %v7591 = vpop.f32.mrf.mxu0
        %7592 = vmatprep.mubr.bf16.mxu0 0
        %7593 = vmatmul.mubr.bf16.gmra.mxu0 %v7396
        %v7594 = vpop.f32.mrf.mxu0
        %v7595 = vadd.f32 0.0, %v7594
        %v7596 = vpop.f32.mrf.mxu0
        %v7597 = vpop.f32.mrf.mxu0
        %v7598 = vadd.f32 0.0, %v7597
        %v7599 = vpop.f32.mrf.mxu0
        %7600 = vmatprep.mubr.bf16.mxu0 0
        %7601 = vmatmul.mubr.bf16.gmra.mxu0 %v7397
        %v7602 = vpop.f32.mrf.mxu0
        %v7603 = vadd.f32 0.0, %v7602
        %v7604 = vpop.f32.mrf.mxu0
        %v7605 = vpop.f32.mrf.mxu0
        %v7606 = vadd.f32 0.0, %v7605
        %v7607 = vpop.f32.mrf.mxu0
        %7608 = vmatprep.mubr.bf16.mxu0 0
        %7609 = vmatmul.mubr.bf16.gmra.mxu0 %v7398
        %v7610 = vpop.f32.mrf.mxu0
        %v7611 = vadd.f32 0.0, %v7610
        %v7612 = vpop.f32.mrf.mxu0
        %v7613 = vpop.f32.mrf.mxu0
        %v7614 = vadd.f32 0.0, %v7613
        %v7615 = vpop.f32.mrf.mxu0
        %7616 = vmatprep.mubr.bf16.mxu0 0
        %7617 = vmatmul.mubr.bf16.gmra.mxu0 %v7399
        %v7618 = vpop.f32.mrf.mxu0
        %v7619 = vadd.f32 0.0, %v7618
        %v7620 = vpop.f32.mrf.mxu0
        %v7621 = vpop.f32.mrf.mxu0
        %v7622 = vadd.f32 0.0, %v7621
        %v7623 = vpop.f32.mrf.mxu0
        %7624 = vdwg.mxu0
        %v7625 = vadd.f32 %v7050, %v7499
        %v7626 = vadd.f32 %v7053, %v7502
        %v7627 = vadd.f32 %v7058, %v7507
        %v7628 = vadd.f32 %v7061, %v7510
        %v7629 = vadd.f32 %v7066, %v7515
        %v7630 = vadd.f32 %v7069, %v7518
        %v7631 = vadd.f32 %v7074, %v7523
        %v7632 = vadd.f32 %v7077, %v7526
        %v7633 = vadd.f32 %v7082, %v7531
        %v7634 = vadd.f32 %v7085, %v7534
        %v7635 = vadd.f32 %v7090, %v7539
        %v7636 = vadd.f32 %v7093, %v7542
        %v7637 = vadd.f32 %v7098, %v7547
        %v7638 = vadd.f32 %v7101, %v7550
        %v7639 = vadd.f32 %v7106, %v7555
        %v7640 = vadd.f32 %v7109, %v7558
        %v7641 = vadd.f32 %v7114, %v7563
        %v7642 = vadd.f32 %v7117, %v7566
        %v7643 = vadd.f32 %v7122, %v7571
        %v7644 = vadd.f32 %v7125, %v7574
        %v7645 = vadd.f32 %v7130, %v7579
        %v7646 = vadd.f32 %v7133, %v7582
        %v7647 = vadd.f32 %v7138, %v7587
        %v7648 = vadd.f32 %v7141, %v7590
        %v7649 = vadd.f32 %v7146, %v7595
        %v7650 = vadd.f32 %v7149, %v7598
        %v7651 = vadd.f32 %v7154, %v7603
        %v7652 = vadd.f32 %v7157, %v7606
        %v7653 = vadd.f32 %v7162, %v7611
        %v7654 = vadd.f32 %v7165, %v7614
        %v7655 = vadd.f32 %v7170, %v7619
        %v7656 = vadd.f32 %v7173, %v7622
        %v7657 = vld [vmem:[%s6021] sm:$0xf]
        %v7658 = vld [vmem:[%s6021 + $0x4] sm:$0xf]
        %v7659 = vld [vmem:[%s6021 + $0xc] sm:$0xf]
        %v7660 = vld [vmem:[%s6021 + $0x10] sm:$0xf]
        %v7661 = vld [vmem:[%s6021 + $0x18] sm:$0xf]
        %v7662 = vld [vmem:[%s6021 + $0x1c] sm:$0xf]
        %v7663 = vld [vmem:[%s6021 + $0x24] sm:$0xf]
        %v7664 = vld [vmem:[%s6021 + $0x28] sm:$0xf]
        %v7665 = vld [vmem:[%s6021 + $0x30] sm:$0xf]
        %v7666 = vld [vmem:[%s6021 + $0x34] sm:$0xf]
        %v7667 = vld [vmem:[%s6021 + $0x3c] sm:$0xf]
        %v7668 = vld [vmem:[%s6021 + $0x40] sm:$0xf]
        %v7669 = vld [vmem:[%s6021 + $0x48] sm:$0xf]
        %v7670 = vld [vmem:[%s6021 + $0x4c] sm:$0xf]
        %v7671 = vld [vmem:[%s6021 + $0x54] sm:$0xf]
        %v7672 = vld [vmem:[%s6021 + $0x58] sm:$0xf]
        %v7673 = vld [vmem:[%s6021 + $0x60] sm:$0xf]
        %v7674 = vld [vmem:[%s6021 + $0x64] sm:$0xf]
        %v7675 = vld [vmem:[%s6021 + $0x6c] sm:$0xf]
        %v7676 = vld [vmem:[%s6021 + $0x70] sm:$0xf]
        %v7677 = vld [vmem:[%s6021 + $0x78] sm:$0xf]
        %v7678 = vld [vmem:[%s6021 + $0x7c] sm:$0xf]
        %v7679 = vld [vmem:[%s6021 + $0x84] sm:$0xf]
        %v7680 = vld [vmem:[%s6021 + $0x88] sm:$0xf]
        %v7681 = vld [vmem:[%s6021 + $0x90] sm:$0xf]
        %v7682 = vld [vmem:[%s6021 + $0x94] sm:$0xf]
        %v7683 = vld [vmem:[%s6021 + $0x9c] sm:$0xf]
        %v7684 = vld [vmem:[%s6021 + $0xa0] sm:$0xf]
        %v7685 = vld [vmem:[%s6021 + $0xa8] sm:$0xf]
        %v7686 = vld [vmem:[%s6021 + $0xac] sm:$0xf]
        %v7687 = vld [vmem:[%s6021 + $0xb4] sm:$0xf]
        %v7688 = vld [vmem:[%s6021 + $0xb8] sm:$0xf]
        %v7689 = vld [vmem:[%s2 + $0xc0] sm:$0xf]
        %v7690 = vld [vmem:[%s2 + $0xc4] sm:$0xf]
        %v7691 = vld [vmem:[%s2 + $0xc8] sm:$0xf]
        %v7692 = vld [vmem:[%s2 + $0xcc] sm:$0xf]
        %v7693 = vld [vmem:[%s2 + $0xd0] sm:$0xf]
        %v7694 = vld [vmem:[%s2 + $0xd4] sm:$0xf]
        %v7695 = vld [vmem:[%s2 + $0xd8] sm:$0xf]
        %v7696 = vld [vmem:[%s2 + $0xdc] sm:$0xf]
        %v7697 = vld [vmem:[%s2 + $0xe0] sm:$0xf]
        %v7698 = vld [vmem:[%s2 + $0xe4] sm:$0xf]
        %v7699 = vld [vmem:[%s2 + $0xe8] sm:$0xf]
        %v7700 = vld [vmem:[%s2 + $0xec] sm:$0xf]
        %v7701 = vld [vmem:[%s2 + $0xf0] sm:$0xf]
        %v7702 = vld [vmem:[%s2 + $0xf4] sm:$0xf]
        %v7703 = vld [vmem:[%s2 + $0xf8] sm:$0xf]
        %v7704 = vld [vmem:[%s2 + $0xfc] sm:$0xf]
        %v7737 = vunpack.c.l.b16 %v7657
        %v7738 = vunpack.c.l.b16 %v7658
        %v7739 = vunpack.c.l.b16 %v7659
        %v7740 = vunpack.c.l.b16 %v7660
        %v7741 = vunpack.c.l.b16 %v7661
        %v7742 = vunpack.c.l.b16 %v7662
        %v7743 = vunpack.c.l.b16 %v7663
        %v7744 = vunpack.c.l.b16 %v7664
        %v7745 = vunpack.c.l.b16 %v7665
        %v7746 = vunpack.c.l.b16 %v7666
        %v7747 = vunpack.c.l.b16 %v7667
        %v7748 = vunpack.c.l.b16 %v7668
        %v7749 = vunpack.c.l.b16 %v7669
        %v7750 = vunpack.c.l.b16 %v7670
        %v7751 = vunpack.c.l.b16 %v7671
        %v7752 = vunpack.c.l.b16 %v7672
        %v7753 = vunpack.c.l.b16 %v7673
        %v7754 = vunpack.c.l.b16 %v7674
        %v7755 = vunpack.c.l.b16 %v7675
        %v7756 = vunpack.c.l.b16 %v7676
        %v7757 = vunpack.c.l.b16 %v7677
        %v7758 = vunpack.c.l.b16 %v7678
        %v7759 = vunpack.c.l.b16 %v7679
        %v7760 = vunpack.c.l.b16 %v7680
        %v7761 = vunpack.c.l.b16 %v7681
        %v7762 = vunpack.c.l.b16 %v7682
        %v7763 = vunpack.c.l.b16 %v7683
        %v7764 = vunpack.c.l.b16 %v7684
        %v7765 = vunpack.c.l.b16 %v7685
        %v7766 = vunpack.c.l.b16 %v7686
        %v7767 = vunpack.c.l.b16 %v7687
        %v7768 = vunpack.c.l.b16 %v7688
        %v7769 = vpack.c.b16 %v7738, %v7737
        %v7770 = vpack.c.b16 %v7740, %v7739
        %v7771 = vpack.c.b16 %v7742, %v7741
        %v7772 = vpack.c.b16 %v7744, %v7743
        %v7773 = vpack.c.b16 %v7746, %v7745
        %v7774 = vpack.c.b16 %v7748, %v7747
        %v7775 = vpack.c.b16 %v7750, %v7749
        %v7776 = vpack.c.b16 %v7752, %v7751
        %v7777 = vpack.c.b16 %v7754, %v7753
        %v7778 = vpack.c.b16 %v7756, %v7755
        %v7779 = vpack.c.b16 %v7758, %v7757
        %v7780 = vpack.c.b16 %v7760, %v7759
        %v7781 = vpack.c.b16 %v7762, %v7761
        %v7782 = vpack.c.b16 %v7764, %v7763
        %v7783 = vpack.c.b16 %v7766, %v7765
        %v7784 = vpack.c.b16 %v7768, %v7767
        %v7817 = vunpack.c.l.b16 %v7689
        %v7818 = vunpack.c.l.b16 %v7690
        %v7819 = vunpack.c.l.b16 %v7691
        %v7820 = vunpack.c.l.b16 %v7692
        %v7821 = vunpack.c.l.b16 %v7693
        %v7822 = vunpack.c.l.b16 %v7694
        %v7823 = vunpack.c.l.b16 %v7695
        %v7824 = vunpack.c.l.b16 %v7696
        %v7825 = vunpack.c.l.b16 %v7697
        %v7826 = vunpack.c.l.b16 %v7698
        %v7827 = vunpack.c.l.b16 %v7699
        %v7828 = vunpack.c.l.b16 %v7700
        %v7829 = vunpack.c.l.b16 %v7701
        %v7830 = vunpack.c.l.b16 %v7702
        %v7831 = vunpack.c.l.b16 %v7703
        %v7832 = vunpack.c.l.b16 %v7704
        %v7833 = vpack.c.b16 %v7818, %v7817
        %v7834 = vpack.c.b16 %v7820, %v7819
        %v7835 = vpack.c.b16 %v7822, %v7821
        %v7836 = vpack.c.b16 %v7824, %v7823
        %v7837 = vpack.c.b16 %v7826, %v7825
        %v7838 = vpack.c.b16 %v7828, %v7827
        %v7839 = vpack.c.b16 %v7830, %v7829
        %v7840 = vpack.c.b16 %v7832, %v7831
        %7849 = vmatprep.subr.bf16.mxu0 0
        %7850 = vmatpush1.bf16.msra.mxu0 %v7840
        %7851 = vmatprep.subr.bf16.mxu0 0
        %7852 = vmatpush1.bf16.msra.mxu0 %v7839
        %7853 = vmatprep.subr.bf16.mxu0 0
        %7854 = vmatpush1.bf16.msra.mxu0 %v7838
        %7855 = vmatprep.subr.bf16.mxu0 0
        %7856 = vmatpush1.bf16.msra.mxu0 %v7837
        %7857 = vmatprep.subr.bf16.mxu0 0
        %7858 = vmatpush1.bf16.msra.mxu0 %v7836
        %7859 = vmatprep.subr.bf16.mxu0 0
        %7860 = vmatpush1.bf16.msra.mxu0 %v7835
        %7861 = vmatprep.subr.bf16.mxu0 0
        %7862 = vmatpush1.bf16.msra.mxu0 %v7834
        %7863 = vmatprep.subr.bf16.mxu0 0
        %7864 = vmatpush1.bf16.msra.mxu0 %v7833
        %7865 = vmatprep.subr.bf16.mxu0 0
        %7866 = vmatpush2.bf16.msra.mxu0 0
        %7867 = vmatprep.subr.bf16.mxu0 0
        %7868 = vmatpush2.bf16.msra.mxu0 0
        %7869 = vmatprep.subr.bf16.mxu0 0
        %7870 = vmatpush2.bf16.msra.mxu0 0
        %7871 = vmatprep.subr.bf16.mxu0 0
        %7872 = vmatpush2.bf16.msra.mxu0 0
        %7873 = vmatprep.subr.bf16.mxu0 0
        %7874 = vmatpush2.bf16.msra.mxu0 0
        %7875 = vmatprep.subr.bf16.mxu0 0
        %7876 = vmatpush2.bf16.msra.mxu0 0
        %7877 = vmatprep.subr.bf16.mxu0 0
        %7878 = vmatpush2.bf16.msra.mxu0 0
        %7879 = vmatprep.subr.bf16.mxu0 0
        %7880 = vmatpush2.bf16.msra.mxu0 0
        %7881 = vmatprep.mubr.bf16.mxu0 0
        %7882 = vmatmul.mubr.bf16.gmra.mxu0 %v7769
        %v7883 = vpop.f32.mrf.mxu0
        %v7884 = vadd.f32 0.0, %v7883
        %v7885 = vpop.f32.mrf.mxu0
        %v7886 = vpop.f32.mrf.mxu0
        %v7887 = vadd.f32 0.0, %v7886
        %v7888 = vpop.f32.mrf.mxu0
        %7889 = vmatprep.mubr.bf16.mxu0 0
        %7890 = vmatmul.mubr.bf16.gmra.mxu0 %v7770
        %v7891 = vpop.f32.mrf.mxu0
        %v7892 = vadd.f32 0.0, %v7891
        %v7893 = vpop.f32.mrf.mxu0
        %v7894 = vpop.f32.mrf.mxu0
        %v7895 = vadd.f32 0.0, %v7894
        %v7896 = vpop.f32.mrf.mxu0
        %7897 = vmatprep.mubr.bf16.mxu0 0
        %7898 = vmatmul.mubr.bf16.gmra.mxu0 %v7771
        %v7899 = vpop.f32.mrf.mxu0
        %v7900 = vadd.f32 0.0, %v7899
        %v7901 = vpop.f32.mrf.mxu0
        %v7902 = vpop.f32.mrf.mxu0
        %v7903 = vadd.f32 0.0, %v7902
        %v7904 = vpop.f32.mrf.mxu0
        %7905 = vmatprep.mubr.bf16.mxu0 0
        %7906 = vmatmul.mubr.bf16.gmra.mxu0 %v7772
        %v7907 = vpop.f32.mrf.mxu0
        %v7908 = vadd.f32 0.0, %v7907
        %v7909 = vpop.f32.mrf.mxu0
        %v7910 = vpop.f32.mrf.mxu0
        %v7911 = vadd.f32 0.0, %v7910
        %v7912 = vpop.f32.mrf.mxu0
        %7913 = vmatprep.mubr.bf16.mxu0 0
        %7914 = vmatmul.mubr.bf16.gmra.mxu0 %v7773
        %v7915 = vpop.f32.mrf.mxu0
        %v7916 = vadd.f32 0.0, %v7915
        %v7917 = vpop.f32.mrf.mxu0
        %v7918 = vpop.f32.mrf.mxu0
        %v7919 = vadd.f32 0.0, %v7918
        %v7920 = vpop.f32.mrf.mxu0
        %7921 = vmatprep.mubr.bf16.mxu0 0
        %7922 = vmatmul.mubr.bf16.gmra.mxu0 %v7774
        %v7923 = vpop.f32.mrf.mxu0
        %v7924 = vadd.f32 0.0, %v7923
        %v7925 = vpop.f32.mrf.mxu0
        %v7926 = vpop.f32.mrf.mxu0
        %v7927 = vadd.f32 0.0, %v7926
        %v7928 = vpop.f32.mrf.mxu0
        %7929 = vmatprep.mubr.bf16.mxu0 0
        %7930 = vmatmul.mubr.bf16.gmra.mxu0 %v7775
        %v7931 = vpop.f32.mrf.mxu0
        %v7932 = vadd.f32 0.0, %v7931
        %v7933 = vpop.f32.mrf.mxu0
        %v7934 = vpop.f32.mrf.mxu0
        %v7935 = vadd.f32 0.0, %v7934
        %v7936 = vpop.f32.mrf.mxu0
        %7937 = vmatprep.mubr.bf16.mxu0 0
        %7938 = vmatmul.mubr.bf16.gmra.mxu0 %v7776
        %v7939 = vpop.f32.mrf.mxu0
        %v7940 = vadd.f32 0.0, %v7939
        %v7941 = vpop.f32.mrf.mxu0
        %v7942 = vpop.f32.mrf.mxu0
        %v7943 = vadd.f32 0.0, %v7942
        %v7944 = vpop.f32.mrf.mxu0
        %7945 = vmatprep.mubr.bf16.mxu0 0
        %7946 = vmatmul.mubr.bf16.gmra.mxu0 %v7777
        %v7947 = vpop.f32.mrf.mxu0
        %v7948 = vadd.f32 0.0, %v7947
        %v7949 = vpop.f32.mrf.mxu0
        %v7950 = vpop.f32.mrf.mxu0
        %v7951 = vadd.f32 0.0, %v7950
        %v7952 = vpop.f32.mrf.mxu0
        %7953 = vmatprep.mubr.bf16.mxu0 0
        %7954 = vmatmul.mubr.bf16.gmra.mxu0 %v7778
        %v7955 = vpop.f32.mrf.mxu0
        %v7956 = vadd.f32 0.0, %v7955
        %v7957 = vpop.f32.mrf.mxu0
        %v7958 = vpop.f32.mrf.mxu0
        %v7959 = vadd.f32 0.0, %v7958
        %v7960 = vpop.f32.mrf.mxu0
        %7961 = vmatprep.mubr.bf16.mxu0 0
        %7962 = vmatmul.mubr.bf16.gmra.mxu0 %v7779
        %v7963 = vpop.f32.mrf.mxu0
        %v7964 = vadd.f32 0.0, %v7963
        %v7965 = vpop.f32.mrf.mxu0
        %v7966 = vpop.f32.mrf.mxu0
        %v7967 = vadd.f32 0.0, %v7966
        %v7968 = vpop.f32.mrf.mxu0
        %7969 = vmatprep.mubr.bf16.mxu0 0
        %7970 = vmatmul.mubr.bf16.gmra.mxu0 %v7780
        %v7971 = vpop.f32.mrf.mxu0
        %v7972 = vadd.f32 0.0, %v7971
        %v7973 = vpop.f32.mrf.mxu0
        %v7974 = vpop.f32.mrf.mxu0
        %v7975 = vadd.f32 0.0, %v7974
        %v7976 = vpop.f32.mrf.mxu0
        %7977 = vmatprep.mubr.bf16.mxu0 0
        %7978 = vmatmul.mubr.bf16.gmra.mxu0 %v7781
        %v7979 = vpop.f32.mrf.mxu0
        %v7980 = vadd.f32 0.0, %v7979
        %v7981 = vpop.f32.mrf.mxu0
        %v7982 = vpop.f32.mrf.mxu0
        %v7983 = vadd.f32 0.0, %v7982
        %v7984 = vpop.f32.mrf.mxu0
        %7985 = vmatprep.mubr.bf16.mxu0 0
        %7986 = vmatmul.mubr.bf16.gmra.mxu0 %v7782
        %v7987 = vpop.f32.mrf.mxu0
        %v7988 = vadd.f32 0.0, %v7987
        %v7989 = vpop.f32.mrf.mxu0
        %v7990 = vpop.f32.mrf.mxu0
        %v7991 = vadd.f32 0.0, %v7990
        %v7992 = vpop.f32.mrf.mxu0
        %7993 = vmatprep.mubr.bf16.mxu0 0
        %7994 = vmatmul.mubr.bf16.gmra.mxu0 %v7783
        %v7995 = vpop.f32.mrf.mxu0
        %v7996 = vadd.f32 0.0, %v7995
        %v7997 = vpop.f32.mrf.mxu0
        %v7998 = vpop.f32.mrf.mxu0
        %v7999 = vadd.f32 0.0, %v7998
        %v8000 = vpop.f32.mrf.mxu0
        %8001 = vmatprep.mubr.bf16.mxu0 0
        %8002 = vmatmul.mubr.bf16.gmra.mxu0 %v7784
        %v8003 = vpop.f32.mrf.mxu0
        %v8004 = vadd.f32 0.0, %v8003
        %v8005 = vpop.f32.mrf.mxu0
        %v8006 = vpop.f32.mrf.mxu0
        %v8007 = vadd.f32 0.0, %v8006
        %v8008 = vpop.f32.mrf.mxu0
        %8009 = vdwg.mxu0
        %v8010 = vadd.f32 %v7625, %v7884
        %v8011 = vadd.f32 %v7626, %v7887
        %v8012 = vadd.f32 %v7627, %v7892
        %v8013 = vadd.f32 %v7628, %v7895
        %v8014 = vadd.f32 %v7629, %v7900
        %v8015 = vadd.f32 %v7630, %v7903
        %v8016 = vadd.f32 %v7631, %v7908
        %v8017 = vadd.f32 %v7632, %v7911
        %v8018 = vadd.f32 %v7633, %v7916
        %v8019 = vadd.f32 %v7634, %v7919
        %v8020 = vadd.f32 %v7635, %v7924
        %v8021 = vadd.f32 %v7636, %v7927
        %v8022 = vadd.f32 %v7637, %v7932
        %v8023 = vadd.f32 %v7638, %v7935
        %v8024 = vadd.f32 %v7639, %v7940
        %v8025 = vadd.f32 %v7640, %v7943
        %v8026 = vadd.f32 %v7641, %v7948
        %v8027 = vadd.f32 %v7642, %v7951
        %v8028 = vadd.f32 %v7643, %v7956
        %v8029 = vadd.f32 %v7644, %v7959
        %v8030 = vadd.f32 %v7645, %v7964
        %v8031 = vadd.f32 %v7646, %v7967
        %v8032 = vadd.f32 %v7647, %v7972
        %v8033 = vadd.f32 %v7648, %v7975
        %v8034 = vadd.f32 %v7649, %v7980
        %v8035 = vadd.f32 %v7650, %v7983
        %v8036 = vadd.f32 %v7651, %v7988
        %v8037 = vadd.f32 %v7652, %v7991
        %v8038 = vadd.f32 %v7653, %v7996
        %v8039 = vadd.f32 %v7654, %v7999
        %v8040 = vadd.f32 %v7655, %v8004
        %v8041 = vadd.f32 %v7656, %v8007
        %v8042 = vld [vmem:[%s6021] sm:$0xf]
        %v8043 = vld [vmem:[%s6021 + $0x4] sm:$0xf]
        %v8044 = vld [vmem:[%s6021 + $0x8] sm:$0x1]
        %v8045 = vld [vmem:[%s6021 + $0xc] sm:$0xf]
        %v8046 = vld [vmem:[%s6021 + $0x10] sm:$0xf]
        %v8047 = vld [vmem:[%s6021 + $0x14] sm:$0x1]
        %v8048 = vld [vmem:[%s6021 + $0x18] sm:$0xf]
        %v8049 = vld [vmem:[%s6021 + $0x1c] sm:$0xf]
        %v8050 = vld [vmem:[%s6021 + $0x20] sm:$0x1]
        %v8051 = vld [vmem:[%s6021 + $0x24] sm:$0xf]
        %v8052 = vld [vmem:[%s6021 + $0x28] sm:$0xf]
        %v8053 = vld [vmem:[%s6021 + $0x2c] sm:$0x1]
        %v8054 = vld [vmem:[%s6021 + $0x30] sm:$0xf]
        %v8055 = vld [vmem:[%s6021 + $0x34] sm:$0xf]
        %v8056 = vld [vmem:[%s6021 + $0x38] sm:$0x1]
        %v8057 = vld [vmem:[%s6021 + $0x3c] sm:$0xf]
        %v8058 = vld [vmem:[%s6021 + $0x40] sm:$0xf]
        %v8059 = vld [vmem:[%s6021 + $0x44] sm:$0x1]
        %v8060 = vld [vmem:[%s6021 + $0x48] sm:$0xf]
        %v8061 = vld [vmem:[%s6021 + $0x4c] sm:$0xf]
        %v8062 = vld [vmem:[%s6021 + $0x50] sm:$0x1]
        %v8063 = vld [vmem:[%s6021 + $0x54] sm:$0xf]
        %v8064 = vld [vmem:[%s6021 + $0x58] sm:$0xf]
        %v8065 = vld [vmem:[%s6021 + $0x5c] sm:$0x1]
        %v8066 = vld [vmem:[%s6021 + $0x60] sm:$0xf]
        %v8067 = vld [vmem:[%s6021 + $0x64] sm:$0xf]
        %v8068 = vld [vmem:[%s6021 + $0x68] sm:$0x1]
        %v8069 = vld [vmem:[%s6021 + $0x6c] sm:$0xf]
        %v8070 = vld [vmem:[%s6021 + $0x70] sm:$0xf]
        %v8071 = vld [vmem:[%s6021 + $0x74] sm:$0x1]
        %v8072 = vld [vmem:[%s6021 + $0x78] sm:$0xf]
        %v8073 = vld [vmem:[%s6021 + $0x7c] sm:$0xf]
        %v8074 = vld [vmem:[%s6021 + $0x80] sm:$0x1]
        %v8075 = vld [vmem:[%s6021 + $0x84] sm:$0xf]
        %v8076 = vld [vmem:[%s6021 + $0x88] sm:$0xf]
        %v8077 = vld [vmem:[%s6021 + $0x8c] sm:$0x1]
        %v8078 = vld [vmem:[%s6021 + $0x90] sm:$0xf]
        %v8079 = vld [vmem:[%s6021 + $0x94] sm:$0xf]
        %v8080 = vld [vmem:[%s6021 + $0x98] sm:$0x1]
        %v8081 = vld [vmem:[%s6021 + $0x9c] sm:$0xf]
        %v8082 = vld [vmem:[%s6021 + $0xa0] sm:$0xf]
        %v8083 = vld [vmem:[%s6021 + $0xa4] sm:$0x1]
        %v8084 = vld [vmem:[%s6021 + $0xa8] sm:$0xf]
        %v8085 = vld [vmem:[%s6021 + $0xac] sm:$0xf]
        %v8086 = vld [vmem:[%s6021 + $0xb0] sm:$0x1]
        %v8087 = vld [vmem:[%s6021 + $0xb4] sm:$0xf]
        %v8088 = vld [vmem:[%s6021 + $0xb8] sm:$0xf]
        %v8089 = vld [vmem:[%s6021 + $0xbc] sm:$0x1]
        %v8091 = vshrl.u32 %v8042, 16
        %v8093 = vrot.slane %v8091, 4
        %v8094 = vshll.u32 %v8042, 16
        %v8096 = vrot.slane %v8094, 5
        %v8097 = vor.u32 %v8093, %v8096
        %v8098 = vrot.slane %v8097, 4
        %v8100 = vshll.u32 %v8043, 16
        %v8102 = vrot.slane %v8100, 5
        %v8103 = vsel %vm785, %v8098, %v8102
        %v8104 = vshrl.u32 %v8043, 16
        %v8106 = vrot.slane %v8104, 4
        %v8107 = vor.u32 %v8106, %v8102
        %v8108 = vrot.slane %v8107, 4
        %v8110 = vshll.u32 %v8044, 16
        %v8112 = vrot.slane %v8110, 5
        %v8113 = vsel %vm785, %v8108, %v8112
        %v8115 = vshrl.u32 %v8045, 16
        %v8117 = vrot.slane %v8115, 4
        %v8118 = vshll.u32 %v8045, 16
        %v8120 = vrot.slane %v8118, 5
        %v8121 = vor.u32 %v8117, %v8120
        %v8122 = vrot.slane %v8121, 4
        %v8124 = vshll.u32 %v8046, 16
        %v8126 = vrot.slane %v8124, 5
        %v8127 = vsel %vm785, %v8122, %v8126
        %v8128 = vshrl.u32 %v8046, 16
        %v8130 = vrot.slane %v8128, 4
        %v8131 = vor.u32 %v8130, %v8126
        %v8132 = vrot.slane %v8131, 4
        %v8134 = vshll.u32 %v8047, 16
        %v8136 = vrot.slane %v8134, 5
        %v8137 = vsel %vm785, %v8132, %v8136
        %v8139 = vshrl.u32 %v8048, 16
        %v8141 = vrot.slane %v8139, 4
        %v8142 = vshll.u32 %v8048, 16
        %v8144 = vrot.slane %v8142, 5
        %v8145 = vor.u32 %v8141, %v8144
        %v8146 = vrot.slane %v8145, 4
        %v8148 = vshll.u32 %v8049, 16
        %v8150 = vrot.slane %v8148, 5
        %v8151 = vsel %vm785, %v8146, %v8150
        %v8152 = vshrl.u32 %v8049, 16
        %v8154 = vrot.slane %v8152, 4
        %v8155 = vor.u32 %v8154, %v8150
        %v8156 = vrot.slane %v8155, 4
        %v8158 = vshll.u32 %v8050, 16
        %v8160 = vrot.slane %v8158, 5
        %v8161 = vsel %vm785, %v8156, %v8160
        %v8163 = vshrl.u32 %v8051, 16
        %v8165 = vrot.slane %v8163, 4
        %v8166 = vshll.u32 %v8051, 16
        %v8168 = vrot.slane %v8166, 5
        %v8169 = vor.u32 %v8165, %v8168
        %v8170 = vrot.slane %v8169, 4
        %v8172 = vshll.u32 %v8052, 16
        %v8174 = vrot.slane %v8172, 5
        %v8175 = vsel %vm785, %v8170, %v8174
        %v8176 = vshrl.u32 %v8052, 16
        %v8178 = vrot.slane %v8176, 4
        %v8179 = vor.u32 %v8178, %v8174
        %v8180 = vrot.slane %v8179, 4
        %v8182 = vshll.u32 %v8053, 16
        %v8184 = vrot.slane %v8182, 5
        %v8185 = vsel %vm785, %v8180, %v8184
        %v8187 = vshrl.u32 %v8054, 16
        %v8189 = vrot.slane %v8187, 4
        %v8190 = vshll.u32 %v8054, 16
        %v8192 = vrot.slane %v8190, 5
        %v8193 = vor.u32 %v8189, %v8192
        %v8194 = vrot.slane %v8193, 4
        %v8196 = vshll.u32 %v8055, 16
        %v8198 = vrot.slane %v8196, 5
        %v8199 = vsel %vm785, %v8194, %v8198
        %v8200 = vshrl.u32 %v8055, 16
        %v8202 = vrot.slane %v8200, 4
        %v8203 = vor.u32 %v8202, %v8198
        %v8204 = vrot.slane %v8203, 4
        %v8206 = vshll.u32 %v8056, 16
        %v8208 = vrot.slane %v8206, 5
        %v8209 = vsel %vm785, %v8204, %v8208
        %v8211 = vshrl.u32 %v8057, 16
        %v8213 = vrot.slane %v8211, 4
        %v8214 = vshll.u32 %v8057, 16
        %v8216 = vrot.slane %v8214, 5
        %v8217 = vor.u32 %v8213, %v8216
        %v8218 = vrot.slane %v8217, 4
        %v8220 = vshll.u32 %v8058, 16
        %v8222 = vrot.slane %v8220, 5
        %v8223 = vsel %vm785, %v8218, %v8222
        %v8224 = vshrl.u32 %v8058, 16
        %v8226 = vrot.slane %v8224, 4
        %v8227 = vor.u32 %v8226, %v8222
        %v8228 = vrot.slane %v8227, 4
        %v8230 = vshll.u32 %v8059, 16
        %v8232 = vrot.slane %v8230, 5
        %v8233 = vsel %vm785, %v8228, %v8232
        %v8235 = vshrl.u32 %v8060, 16
        %v8237 = vrot.slane %v8235, 4
        %v8238 = vshll.u32 %v8060, 16
        %v8240 = vrot.slane %v8238, 5
        %v8241 = vor.u32 %v8237, %v8240
        %v8242 = vrot.slane %v8241, 4
        %v8244 = vshll.u32 %v8061, 16
        %v8246 = vrot.slane %v8244, 5
        %v8247 = vsel %vm785, %v8242, %v8246
        %v8248 = vshrl.u32 %v8061, 16
        %v8250 = vrot.slane %v8248, 4
        %v8251 = vor.u32 %v8250, %v8246
        %v8252 = vrot.slane %v8251, 4
        %v8254 = vshll.u32 %v8062, 16
        %v8256 = vrot.slane %v8254, 5
        %v8257 = vsel %vm785, %v8252, %v8256
        %v8259 = vshrl.u32 %v8063, 16
        %v8261 = vrot.slane %v8259, 4
        %v8262 = vshll.u32 %v8063, 16
        %v8264 = vrot.slane %v8262, 5
        %v8265 = vor.u32 %v8261, %v8264
        %v8266 = vrot.slane %v8265, 4
        %v8268 = vshll.u32 %v8064, 16
        %v8270 = vrot.slane %v8268, 5
        %v8271 = vsel %vm785, %v8266, %v8270
        %v8272 = vshrl.u32 %v8064, 16
        %v8274 = vrot.slane %v8272, 4
        %v8275 = vor.u32 %v8274, %v8270
        %v8276 = vrot.slane %v8275, 4
        %v8278 = vshll.u32 %v8065, 16
        %v8280 = vrot.slane %v8278, 5
        %v8281 = vsel %vm785, %v8276, %v8280
        %v8283 = vshrl.u32 %v8066, 16
        %v8285 = vrot.slane %v8283, 4
        %v8286 = vshll.u32 %v8066, 16
        %v8288 = vrot.slane %v8286, 5
        %v8289 = vor.u32 %v8285, %v8288
        %v8290 = vrot.slane %v8289, 4
        %v8292 = vshll.u32 %v8067, 16
        %v8294 = vrot.slane %v8292, 5
        %v8295 = vsel %vm785, %v8290, %v8294
        %v8296 = vshrl.u32 %v8067, 16
        %v8298 = vrot.slane %v8296, 4
        %v8299 = vor.u32 %v8298, %v8294
        %v8300 = vrot.slane %v8299, 4
        %v8302 = vshll.u32 %v8068, 16
        %v8304 = vrot.slane %v8302, 5
        %v8305 = vsel %vm785, %v8300, %v8304
        %v8307 = vshrl.u32 %v8069, 16
        %v8309 = vrot.slane %v8307, 4
        %v8310 = vshll.u32 %v8069, 16
        %v8312 = vrot.slane %v8310, 5
        %v8313 = vor.u32 %v8309, %v8312
        %v8314 = vrot.slane %v8313, 4
        %v8316 = vshll.u32 %v8070, 16
        %v8318 = vrot.slane %v8316, 5
        %v8319 = vsel %vm785, %v8314, %v8318
        %v8320 = vshrl.u32 %v8070, 16
        %v8322 = vrot.slane %v8320, 4
        %v8323 = vor.u32 %v8322, %v8318
        %v8324 = vrot.slane %v8323, 4
        %v8326 = vshll.u32 %v8071, 16
        %v8328 = vrot.slane %v8326, 5
        %v8329 = vsel %vm785, %v8324, %v8328
        %v8331 = vshrl.u32 %v8072, 16
        %v8333 = vrot.slane %v8331, 4
        %v8334 = vshll.u32 %v8072, 16
        %v8336 = vrot.slane %v8334, 5
        %v8337 = vor.u32 %v8333, %v8336
        %v8338 = vrot.slane %v8337, 4
        %v8340 = vshll.u32 %v8073, 16
        %v8342 = vrot.slane %v8340, 5
        %v8343 = vsel %vm785, %v8338, %v8342
        %v8344 = vshrl.u32 %v8073, 16
        %v8346 = vrot.slane %v8344, 4
        %v8347 = vor.u32 %v8346, %v8342
        %v8348 = vrot.slane %v8347, 4
        %v8350 = vshll.u32 %v8074, 16
        %v8352 = vrot.slane %v8350, 5
        %v8353 = vsel %vm785, %v8348, %v8352
        %v8355 = vshrl.u32 %v8075, 16
        %v8357 = vrot.slane %v8355, 4
        %v8358 = vshll.u32 %v8075, 16
        %v8360 = vrot.slane %v8358, 5
        %v8361 = vor.u32 %v8357, %v8360
        %v8362 = vrot.slane %v8361, 4
        %v8364 = vshll.u32 %v8076, 16
        %v8366 = vrot.slane %v8364, 5
        %v8367 = vsel %vm785, %v8362, %v8366
        %v8368 = vshrl.u32 %v8076, 16
        %v8370 = vrot.slane %v8368, 4
        %v8371 = vor.u32 %v8370, %v8366
        %v8372 = vrot.slane %v8371, 4
        %v8374 = vshll.u32 %v8077, 16
        %v8376 = vrot.slane %v8374, 5
        %v8377 = vsel %vm785, %v8372, %v8376
        %v8379 = vshrl.u32 %v8078, 16
        %v8381 = vrot.slane %v8379, 4
        %v8382 = vshll.u32 %v8078, 16
        %v8384 = vrot.slane %v8382, 5
        %v8385 = vor.u32 %v8381, %v8384
        %v8386 = vrot.slane %v8385, 4
        %v8388 = vshll.u32 %v8079, 16
        %v8390 = vrot.slane %v8388, 5
        %v8391 = vsel %vm785, %v8386, %v8390
        %v8392 = vshrl.u32 %v8079, 16
        %v8394 = vrot.slane %v8392, 4
        %v8395 = vor.u32 %v8394, %v8390
        %v8396 = vrot.slane %v8395, 4
        %v8398 = vshll.u32 %v8080, 16
        %v8400 = vrot.slane %v8398, 5
        %v8401 = vsel %vm785, %v8396, %v8400
        %v8403 = vshrl.u32 %v8081, 16
        %v8405 = vrot.slane %v8403, 4
        %v8406 = vshll.u32 %v8081, 16
        %v8408 = vrot.slane %v8406, 5
        %v8409 = vor.u32 %v8405, %v8408
        %v8410 = vrot.slane %v8409, 4
        %v8412 = vshll.u32 %v8082, 16
        %v8414 = vrot.slane %v8412, 5
        %v8415 = vsel %vm785, %v8410, %v8414
        %v8416 = vshrl.u32 %v8082, 16
        %v8418 = vrot.slane %v8416, 4
        %v8419 = vor.u32 %v8418, %v8414
        %v8420 = vrot.slane %v8419, 4
        %v8422 = vshll.u32 %v8083, 16
        %v8424 = vrot.slane %v8422, 5
        %v8425 = vsel %vm785, %v8420, %v8424
        %v8427 = vshrl.u32 %v8084, 16
        %v8429 = vrot.slane %v8427, 4
        %v8430 = vshll.u32 %v8084, 16
        %v8432 = vrot.slane %v8430, 5
        %v8433 = vor.u32 %v8429, %v8432
        %v8434 = vrot.slane %v8433, 4
        %v8436 = vshll.u32 %v8085, 16
        %v8438 = vrot.slane %v8436, 5
        %v8439 = vsel %vm785, %v8434, %v8438
        %v8440 = vshrl.u32 %v8085, 16
        %v8442 = vrot.slane %v8440, 4
        %v8443 = vor.u32 %v8442, %v8438
        %v8444 = vrot.slane %v8443, 4
        %v8446 = vshll.u32 %v8086, 16
        %v8448 = vrot.slane %v8446, 5
        %v8449 = vsel %vm785, %v8444, %v8448
        %v8451 = vshrl.u32 %v8087, 16
        %v8453 = vrot.slane %v8451, 4
        %v8454 = vshll.u32 %v8087, 16
        %v8456 = vrot.slane %v8454, 5
        %v8457 = vor.u32 %v8453, %v8456
        %v8458 = vrot.slane %v8457, 4
        %v8460 = vshll.u32 %v8088, 16
        %v8462 = vrot.slane %v8460, 5
        %v8463 = vsel %vm785, %v8458, %v8462
        %v8464 = vshrl.u32 %v8088, 16
        %v8466 = vrot.slane %v8464, 4
        %v8467 = vor.u32 %v8466, %v8462
        %v8468 = vrot.slane %v8467, 4
        %v8470 = vshll.u32 %v8089, 16
        %v8472 = vrot.slane %v8470, 5
        %v8473 = vsel %vm785, %v8468, %v8472
        %v8474 = vld [vmem:[%s2 + $0x100] sm:$0xf]
        %v8475 = vld [vmem:[%s2 + $0x104] sm:$0xf]
        %v8476 = vld [vmem:[%s2 + $0x108] sm:$0xf]
        %v8477 = vld [vmem:[%s2 + $0x10c] sm:$0xf]
        %v8478 = vld [vmem:[%s2 + $0x110] sm:$0xf]
        %v8479 = vld [vmem:[%s2 + $0x114] sm:$0xf]
        %v8480 = vld [vmem:[%s2 + $0x118] sm:$0xf]
        %v8481 = vld [vmem:[%s2 + $0x11c] sm:$0xf]
        %v8482 = vld [vmem:[%s2 + $0x120] sm:$0xf]
        %v8483 = vld [vmem:[%s2 + $0x124] sm:$0xf]
        %v8484 = vld [vmem:[%s2 + $0x128] sm:$0xf]
        %v8485 = vld [vmem:[%s2 + $0x12c] sm:$0xf]
        %v8486 = vld [vmem:[%s2 + $0x130] sm:$0xf]
        %v8487 = vld [vmem:[%s2 + $0x134] sm:$0xf]
        %v8488 = vld [vmem:[%s2 + $0x138] sm:$0xf]
        %v8489 = vld [vmem:[%s2 + $0x13c] sm:$0xf]
        %v8490 = vunpack.c.l.b16 %v8103
        %v8491 = vunpack.c.l.b16 %v8113
        %v8492 = vunpack.c.l.b16 %v8127
        %v8493 = vunpack.c.l.b16 %v8137
        %v8494 = vunpack.c.l.b16 %v8151
        %v8495 = vunpack.c.l.b16 %v8161
        %v8496 = vunpack.c.l.b16 %v8175
        %v8497 = vunpack.c.l.b16 %v8185
        %v8498 = vunpack.c.l.b16 %v8199
        %v8499 = vunpack.c.l.b16 %v8209
        %v8500 = vunpack.c.l.b16 %v8223
        %v8501 = vunpack.c.l.b16 %v8233
        %v8502 = vunpack.c.l.b16 %v8247
        %v8503 = vunpack.c.l.b16 %v8257
        %v8504 = vunpack.c.l.b16 %v8271
        %v8505 = vunpack.c.l.b16 %v8281
        %v8506 = vunpack.c.l.b16 %v8295
        %v8507 = vunpack.c.l.b16 %v8305
        %v8508 = vunpack.c.l.b16 %v8319
        %v8509 = vunpack.c.l.b16 %v8329
        %v8510 = vunpack.c.l.b16 %v8343
        %v8511 = vunpack.c.l.b16 %v8353
        %v8512 = vunpack.c.l.b16 %v8367
        %v8513 = vunpack.c.l.b16 %v8377
        %v8514 = vunpack.c.l.b16 %v8391
        %v8515 = vunpack.c.l.b16 %v8401
        %v8516 = vunpack.c.l.b16 %v8415
        %v8517 = vunpack.c.l.b16 %v8425
        %v8518 = vunpack.c.l.b16 %v8439
        %v8519 = vunpack.c.l.b16 %v8449
        %v8520 = vunpack.c.l.b16 %v8463
        %v8521 = vunpack.c.l.b16 %v8473
        %v8522 = vpack.c.b16 %v8491, %v8490
        %v8523 = vpack.c.b16 %v8493, %v8492
        %v8524 = vpack.c.b16 %v8495, %v8494
        %v8525 = vpack.c.b16 %v8497, %v8496
        %v8526 = vpack.c.b16 %v8499, %v8498
        %v8527 = vpack.c.b16 %v8501, %v8500
        %v8528 = vpack.c.b16 %v8503, %v8502
        %v8529 = vpack.c.b16 %v8505, %v8504
        %v8530 = vpack.c.b16 %v8507, %v8506
        %v8531 = vpack.c.b16 %v8509, %v8508
        %v8532 = vpack.c.b16 %v8511, %v8510
        %v8533 = vpack.c.b16 %v8513, %v8512
        %v8534 = vpack.c.b16 %v8515, %v8514
        %v8535 = vpack.c.b16 %v8517, %v8516
        %v8536 = vpack.c.b16 %v8519, %v8518
        %v8537 = vpack.c.b16 %v8521, %v8520
        %v8570 = vunpack.c.l.b16 %v8474
        %v8571 = vunpack.c.l.b16 %v8475
        %v8572 = vunpack.c.l.b16 %v8476
        %v8573 = vunpack.c.l.b16 %v8477
        %v8574 = vunpack.c.l.b16 %v8478
        %v8575 = vunpack.c.l.b16 %v8479
        %v8576 = vunpack.c.l.b16 %v8480
        %v8577 = vunpack.c.l.b16 %v8481
        %v8578 = vunpack.c.l.b16 %v8482
        %v8579 = vunpack.c.l.b16 %v8483
        %v8580 = vunpack.c.l.b16 %v8484
        %v8581 = vunpack.c.l.b16 %v8485
        %v8582 = vunpack.c.l.b16 %v8486
        %v8583 = vunpack.c.l.b16 %v8487
        %v8584 = vunpack.c.l.b16 %v8488
        %v8585 = vunpack.c.l.b16 %v8489
        %v8586 = vpack.c.b16 %v8571, %v8570
        %v8587 = vpack.c.b16 %v8573, %v8572
        %v8588 = vpack.c.b16 %v8575, %v8574
        %v8589 = vpack.c.b16 %v8577, %v8576
        %v8590 = vpack.c.b16 %v8579, %v8578
        %v8591 = vpack.c.b16 %v8581, %v8580
        %v8592 = vpack.c.b16 %v8583, %v8582
        %v8593 = vpack.c.b16 %v8585, %v8584
        %8602 = vmatprep.subr.bf16.mxu0 0
        %8603 = vmatpush1.bf16.msra.mxu0 %v8593
        %8604 = vmatprep.subr.bf16.mxu0 0
        %8605 = vmatpush1.bf16.msra.mxu0 %v8592
        %8606 = vmatprep.subr.bf16.mxu0 0
        %8607 = vmatpush1.bf16.msra.mxu0 %v8591
        %8608 = vmatprep.subr.bf16.mxu0 0
        %8609 = vmatpush1.bf16.msra.mxu0 %v8590
        %8610 = vmatprep.subr.bf16.mxu0 0
        %8611 = vmatpush1.bf16.msra.mxu0 %v8589
        %8612 = vmatprep.subr.bf16.mxu0 0
        %8613 = vmatpush1.bf16.msra.mxu0 %v8588
        %8614 = vmatprep.subr.bf16.mxu0 0
        %8615 = vmatpush1.bf16.msra.mxu0 %v8587
        %8616 = vmatprep.subr.bf16.mxu0 0
        %8617 = vmatpush1.bf16.msra.mxu0 %v8586
        %8618 = vmatprep.subr.bf16.mxu0 0
        %8619 = vmatpush2.bf16.msra.mxu0 0
        %8620 = vmatprep.subr.bf16.mxu0 0
        %8621 = vmatpush2.bf16.msra.mxu0 0
        %8622 = vmatprep.subr.bf16.mxu0 0
        %8623 = vmatpush2.bf16.msra.mxu0 0
        %8624 = vmatprep.subr.bf16.mxu0 0
        %8625 = vmatpush2.bf16.msra.mxu0 0
        %8626 = vmatprep.subr.bf16.mxu0 0
        %8627 = vmatpush2.bf16.msra.mxu0 0
        %8628 = vmatprep.subr.bf16.mxu0 0
        %8629 = vmatpush2.bf16.msra.mxu0 0
        %8630 = vmatprep.subr.bf16.mxu0 0
        %8631 = vmatpush2.bf16.msra.mxu0 0
        %8632 = vmatprep.subr.bf16.mxu0 0
        %8633 = vmatpush2.bf16.msra.mxu0 0
        %8634 = vmatprep.mubr.bf16.mxu0 0
        %8635 = vmatmul.mubr.bf16.gmra.mxu0 %v8522
        %v8636 = vpop.f32.mrf.mxu0
        %v8637 = vadd.f32 0.0, %v8636
        %v8638 = vpop.f32.mrf.mxu0
        %v8639 = vpop.f32.mrf.mxu0
        %v8640 = vadd.f32 0.0, %v8639
        %v8641 = vpop.f32.mrf.mxu0
        %8642 = vmatprep.mubr.bf16.mxu0 0
        %8643 = vmatmul.mubr.bf16.gmra.mxu0 %v8523
        %v8644 = vpop.f32.mrf.mxu0
        %v8645 = vadd.f32 0.0, %v8644
        %v8646 = vpop.f32.mrf.mxu0
        %v8647 = vpop.f32.mrf.mxu0
        %v8648 = vadd.f32 0.0, %v8647
        %v8649 = vpop.f32.mrf.mxu0
        %8650 = vmatprep.mubr.bf16.mxu0 0
        %8651 = vmatmul.mubr.bf16.gmra.mxu0 %v8524
        %v8652 = vpop.f32.mrf.mxu0
        %v8653 = vadd.f32 0.0, %v8652
        %v8654 = vpop.f32.mrf.mxu0
        %v8655 = vpop.f32.mrf.mxu0
        %v8656 = vadd.f32 0.0, %v8655
        %v8657 = vpop.f32.mrf.mxu0
        %8658 = vmatprep.mubr.bf16.mxu0 0
        %8659 = vmatmul.mubr.bf16.gmra.mxu0 %v8525
        %v8660 = vpop.f32.mrf.mxu0
        %v8661 = vadd.f32 0.0, %v8660
        %v8662 = vpop.f32.mrf.mxu0
        %v8663 = vpop.f32.mrf.mxu0
        %v8664 = vadd.f32 0.0, %v8663
        %v8665 = vpop.f32.mrf.mxu0
        %8666 = vmatprep.mubr.bf16.mxu0 0
        %8667 = vmatmul.mubr.bf16.gmra.mxu0 %v8526
        %v8668 = vpop.f32.mrf.mxu0
        %v8669 = vadd.f32 0.0, %v8668
        %v8670 = vpop.f32.mrf.mxu0
        %v8671 = vpop.f32.mrf.mxu0
        %v8672 = vadd.f32 0.0, %v8671
        %v8673 = vpop.f32.mrf.mxu0
        %8674 = vmatprep.mubr.bf16.mxu0 0
        %8675 = vmatmul.mubr.bf16.gmra.mxu0 %v8527
        %v8676 = vpop.f32.mrf.mxu0
        %v8677 = vadd.f32 0.0, %v8676
        %v8678 = vpop.f32.mrf.mxu0
        %v8679 = vpop.f32.mrf.mxu0
        %v8680 = vadd.f32 0.0, %v8679
        %v8681 = vpop.f32.mrf.mxu0
        %8682 = vmatprep.mubr.bf16.mxu0 0
        %8683 = vmatmul.mubr.bf16.gmra.mxu0 %v8528
        %v8684 = vpop.f32.mrf.mxu0
        %v8685 = vadd.f32 0.0, %v8684
        %v8686 = vpop.f32.mrf.mxu0
        %v8687 = vpop.f32.mrf.mxu0
        %v8688 = vadd.f32 0.0, %v8687
        %v8689 = vpop.f32.mrf.mxu0
        %8690 = vmatprep.mubr.bf16.mxu0 0
        %8691 = vmatmul.mubr.bf16.gmra.mxu0 %v8529
        %v8692 = vpop.f32.mrf.mxu0
        %v8693 = vadd.f32 0.0, %v8692
        %v8694 = vpop.f32.mrf.mxu0
        %v8695 = vpop.f32.mrf.mxu0
        %v8696 = vadd.f32 0.0, %v8695
        %v8697 = vpop.f32.mrf.mxu0
        %8698 = vmatprep.mubr.bf16.mxu0 0
        %8699 = vmatmul.mubr.bf16.gmra.mxu0 %v8530
        %v8700 = vpop.f32.mrf.mxu0
        %v8701 = vadd.f32 0.0, %v8700
        %v8702 = vpop.f32.mrf.mxu0
        %v8703 = vpop.f32.mrf.mxu0
        %v8704 = vadd.f32 0.0, %v8703
        %v8705 = vpop.f32.mrf.mxu0
        %8706 = vmatprep.mubr.bf16.mxu0 0
        %8707 = vmatmul.mubr.bf16.gmra.mxu0 %v8531
        %v8708 = vpop.f32.mrf.mxu0
        %v8709 = vadd.f32 0.0, %v8708
        %v8710 = vpop.f32.mrf.mxu0
        %v8711 = vpop.f32.mrf.mxu0
        %v8712 = vadd.f32 0.0, %v8711
        %v8713 = vpop.f32.mrf.mxu0
        %8714 = vmatprep.mubr.bf16.mxu0 0
        %8715 = vmatmul.mubr.bf16.gmra.mxu0 %v8532
        %v8716 = vpop.f32.mrf.mxu0
        %v8717 = vadd.f32 0.0, %v8716
        %v8718 = vpop.f32.mrf.mxu0
        %v8719 = vpop.f32.mrf.mxu0
        %v8720 = vadd.f32 0.0, %v8719
        %v8721 = vpop.f32.mrf.mxu0
        %8722 = vmatprep.mubr.bf16.mxu0 0
        %8723 = vmatmul.mubr.bf16.gmra.mxu0 %v8533
        %v8724 = vpop.f32.mrf.mxu0
        %v8725 = vadd.f32 0.0, %v8724
        %v8726 = vpop.f32.mrf.mxu0
        %v8727 = vpop.f32.mrf.mxu0
        %v8728 = vadd.f32 0.0, %v8727
        %v8729 = vpop.f32.mrf.mxu0
        %8730 = vmatprep.mubr.bf16.mxu0 0
        %8731 = vmatmul.mubr.bf16.gmra.mxu0 %v8534
        %v8732 = vpop.f32.mrf.mxu0
        %v8733 = vadd.f32 0.0, %v8732
        %v8734 = vpop.f32.mrf.mxu0
        %v8735 = vpop.f32.mrf.mxu0
        %v8736 = vadd.f32 0.0, %v8735
        %v8737 = vpop.f32.mrf.mxu0
        %8738 = vmatprep.mubr.bf16.mxu0 0
        %8739 = vmatmul.mubr.bf16.gmra.mxu0 %v8535
        %v8740 = vpop.f32.mrf.mxu0
        %v8741 = vadd.f32 0.0, %v8740
        %v8742 = vpop.f32.mrf.mxu0
        %v8743 = vpop.f32.mrf.mxu0
        %v8744 = vadd.f32 0.0, %v8743
        %v8745 = vpop.f32.mrf.mxu0
        %8746 = vmatprep.mubr.bf16.mxu0 0
        %8747 = vmatmul.mubr.bf16.gmra.mxu0 %v8536
        %v8748 = vpop.f32.mrf.mxu0
        %v8749 = vadd.f32 0.0, %v8748
        %v8750 = vpop.f32.mrf.mxu0
        %v8751 = vpop.f32.mrf.mxu0
        %v8752 = vadd.f32 0.0, %v8751
        %v8753 = vpop.f32.mrf.mxu0
        %8754 = vmatprep.mubr.bf16.mxu0 0
        %8755 = vmatmul.mubr.bf16.gmra.mxu0 %v8537
        %v8756 = vpop.f32.mrf.mxu0
        %v8757 = vadd.f32 0.0, %v8756
        %v8758 = vpop.f32.mrf.mxu0
        %v8759 = vpop.f32.mrf.mxu0
        %v8760 = vadd.f32 0.0, %v8759
        %v8761 = vpop.f32.mrf.mxu0
        %8762 = vdwg.mxu0
        %v8763 = vadd.f32 %v8010, %v8637
        %v8764 = vadd.f32 %v8011, %v8640
        %v8765 = vadd.f32 %v8012, %v8645
        %v8766 = vadd.f32 %v8013, %v8648
        %v8767 = vadd.f32 %v8014, %v8653
        %v8768 = vadd.f32 %v8015, %v8656
        %v8769 = vadd.f32 %v8016, %v8661
        %v8770 = vadd.f32 %v8017, %v8664
        %v8771 = vadd.f32 %v8018, %v8669
        %v8772 = vadd.f32 %v8019, %v8672
        %v8773 = vadd.f32 %v8020, %v8677
        %v8774 = vadd.f32 %v8021, %v8680
        %v8775 = vadd.f32 %v8022, %v8685
        %v8776 = vadd.f32 %v8023, %v8688
        %v8777 = vadd.f32 %v8024, %v8693
        %v8778 = vadd.f32 %v8025, %v8696
        %v8779 = vadd.f32 %v8026, %v8701
        %v8780 = vadd.f32 %v8027, %v8704
        %v8781 = vadd.f32 %v8028, %v8709
        %v8782 = vadd.f32 %v8029, %v8712
        %v8783 = vadd.f32 %v8030, %v8717
        %v8784 = vadd.f32 %v8031, %v8720
        %v8785 = vadd.f32 %v8032, %v8725
        %v8786 = vadd.f32 %v8033, %v8728
        %v8787 = vadd.f32 %v8034, %v8733
        %v8788 = vadd.f32 %v8035, %v8736
        %v8789 = vadd.f32 %v8036, %v8741
        %v8790 = vadd.f32 %v8037, %v8744
        %v8791 = vadd.f32 %v8038, %v8749
        %v8792 = vadd.f32 %v8039, %v8752
        %v8793 = vadd.f32 %v8040, %v8757
        %v8794 = vadd.f32 %v8041, %v8760
        %v8795 = vld [vmem:[%s6021] sm:$0xe]
        %v8796 = vld [vmem:[%s6021 + $0xc] sm:$0xe]
        %v8797 = vld [vmem:[%s6021 + $0x18] sm:$0xe]
        %v8798 = vld [vmem:[%s6021 + $0x24] sm:$0xe]
        %v8799 = vld [vmem:[%s6021 + $0x30] sm:$0xe]
        %v8800 = vld [vmem:[%s6021 + $0x3c] sm:$0xe]
        %v8801 = vld [vmem:[%s6021 + $0x48] sm:$0xe]
        %v8802 = vld [vmem:[%s6021 + $0x54] sm:$0xe]
        %v8803 = vld [vmem:[%s6021 + $0x60] sm:$0xe]
        %v8804 = vld [vmem:[%s6021 + $0x6c] sm:$0xe]
        %v8805 = vld [vmem:[%s6021 + $0x78] sm:$0xe]
        %v8806 = vld [vmem:[%s6021 + $0x84] sm:$0xe]
        %v8807 = vld [vmem:[%s6021 + $0x90] sm:$0xe]
        %v8808 = vld [vmem:[%s6021 + $0x9c] sm:$0xe]
        %v8809 = vld [vmem:[%s6021 + $0xa8] sm:$0xe]
        %v8810 = vld [vmem:[%s6021 + $0xb4] sm:$0xe]
        %v8859 = vrot.slane %v8795, 5
        %v8860 = vrot.slane %v8859, 4
        %v8861 = vrot.slane %v8043, 5
        %v8862 = vsel %vm1814, %v8860, %v8861
        %v8863 = vrot.slane %v8861, 4
        %v8864 = vrot.slane %v8044, 5
        %v8865 = vsel %vm1814, %v8863, %v8864
        %v8866 = vrot.slane %v8796, 5
        %v8867 = vrot.slane %v8866, 4
        %v8868 = vrot.slane %v8046, 5
        %v8869 = vsel %vm1814, %v8867, %v8868
        %v8870 = vrot.slane %v8868, 4
        %v8871 = vrot.slane %v8047, 5
        %v8872 = vsel %vm1814, %v8870, %v8871
        %v8873 = vrot.slane %v8797, 5
        %v8874 = vrot.slane %v8873, 4
        %v8875 = vrot.slane %v8049, 5
        %v8876 = vsel %vm1814, %v8874, %v8875
        %v8877 = vrot.slane %v8875, 4
        %v8878 = vrot.slane %v8050, 5
        %v8879 = vsel %vm1814, %v8877, %v8878
        %v8880 = vrot.slane %v8798, 5
        %v8881 = vrot.slane %v8880, 4
        %v8882 = vrot.slane %v8052, 5
        %v8883 = vsel %vm1814, %v8881, %v8882
        %v8884 = vrot.slane %v8882, 4
        %v8885 = vrot.slane %v8053, 5
        %v8886 = vsel %vm1814, %v8884, %v8885
        %v8887 = vrot.slane %v8799, 5
        %v8888 = vrot.slane %v8887, 4
        %v8889 = vrot.slane %v8055, 5
        %v8890 = vsel %vm1814, %v8888, %v8889
        %v8891 = vrot.slane %v8889, 4
        %v8892 = vrot.slane %v8056, 5
        %v8893 = vsel %vm1814, %v8891, %v8892
        %v8894 = vrot.slane %v8800, 5
        %v8895 = vrot.slane %v8894, 4
        %v8896 = vrot.slane %v8058, 5
        %v8897 = vsel %vm1814, %v8895, %v8896
        %v8898 = vrot.slane %v8896, 4
        %v8899 = vrot.slane %v8059, 5
        %v8900 = vsel %vm1814, %v8898, %v8899
        %v8901 = vrot.slane %v8801, 5
        %v8902 = vrot.slane %v8901, 4
        %v8903 = vrot.slane %v8061, 5
        %v8904 = vsel %vm1814, %v8902, %v8903
        %v8905 = vrot.slane %v8903, 4
        %v8906 = vrot.slane %v8062, 5
        %v8907 = vsel %vm1814, %v8905, %v8906
        %v8908 = vrot.slane %v8802, 5
        %v8909 = vrot.slane %v8908, 4
        %v8910 = vrot.slane %v8064, 5
        %v8911 = vsel %vm1814, %v8909, %v8910
        %v8912 = vrot.slane %v8910, 4
        %v8913 = vrot.slane %v8065, 5
        %v8914 = vsel %vm1814, %v8912, %v8913
        %v8915 = vrot.slane %v8803, 5
        %v8916 = vrot.slane %v8915, 4
        %v8917 = vrot.slane %v8067, 5
        %v8918 = vsel %vm1814, %v8916, %v8917
        %v8919 = vrot.slane %v8917, 4
        %v8920 = vrot.slane %v8068, 5
        %v8921 = vsel %vm1814, %v8919, %v8920
        %v8922 = vrot.slane %v8804, 5
        %v8923 = vrot.slane %v8922, 4
        %v8924 = vrot.slane %v8070, 5
        %v8925 = vsel %vm1814, %v8923, %v8924
        %v8926 = vrot.slane %v8924, 4
        %v8927 = vrot.slane %v8071, 5
        %v8928 = vsel %vm1814, %v8926, %v8927
        %v8929 = vrot.slane %v8805, 5
        %v8930 = vrot.slane %v8929, 4
        %v8931 = vrot.slane %v8073, 5
        %v8932 = vsel %vm1814, %v8930, %v8931
        %v8933 = vrot.slane %v8931, 4
        %v8934 = vrot.slane %v8074, 5
        %v8935 = vsel %vm1814, %v8933, %v8934
        %v8936 = vrot.slane %v8806, 5
        %v8937 = vrot.slane %v8936, 4
        %v8938 = vrot.slane %v8076, 5
        %v8939 = vsel %vm1814, %v8937, %v8938
        %v8940 = vrot.slane %v8938, 4
        %v8941 = vrot.slane %v8077, 5
        %v8942 = vsel %vm1814, %v8940, %v8941
        %v8943 = vrot.slane %v8807, 5
        %v8944 = vrot.slane %v8943, 4
        %v8945 = vrot.slane %v8079, 5
        %v8946 = vsel %vm1814, %v8944, %v8945
        %v8947 = vrot.slane %v8945, 4
        %v8948 = vrot.slane %v8080, 5
        %v8949 = vsel %vm1814, %v8947, %v8948
        %v8950 = vrot.slane %v8808, 5
        %v8951 = vrot.slane %v8950, 4
        %v8952 = vrot.slane %v8082, 5
        %v8953 = vsel %vm1814, %v8951, %v8952
        %v8954 = vrot.slane %v8952, 4
        %v8955 = vrot.slane %v8083, 5
        %v8956 = vsel %vm1814, %v8954, %v8955
        %v8957 = vrot.slane %v8809, 5
        %v8958 = vrot.slane %v8957, 4
        %v8959 = vrot.slane %v8085, 5
        %v8960 = vsel %vm1814, %v8958, %v8959
        %v8961 = vrot.slane %v8959, 4
        %v8962 = vrot.slane %v8086, 5
        %v8963 = vsel %vm1814, %v8961, %v8962
        %v8964 = vrot.slane %v8810, 5
        %v8965 = vrot.slane %v8964, 4
        %v8966 = vrot.slane %v8088, 5
        %v8967 = vsel %vm1814, %v8965, %v8966
        %v8968 = vrot.slane %v8966, 4
        %v8969 = vrot.slane %v8089, 5
        %v8970 = vsel %vm1814, %v8968, %v8969
        %v8971 = vld [vmem:[%s2 + $0x140] sm:$0xf]
        %v8972 = vld [vmem:[%s2 + $0x144] sm:$0xf]
        %v8973 = vld [vmem:[%s2 + $0x148] sm:$0xf]
        %v8974 = vld [vmem:[%s2 + $0x14c] sm:$0xf]
        %v8975 = vld [vmem:[%s2 + $0x150] sm:$0xf]
        %v8976 = vld [vmem:[%s2 + $0x154] sm:$0xf]
        %v8977 = vld [vmem:[%s2 + $0x158] sm:$0xf]
        %v8978 = vld [vmem:[%s2 + $0x15c] sm:$0xf]
        %v8979 = vld [vmem:[%s2 + $0x160] sm:$0xf]
        %v8980 = vld [vmem:[%s2 + $0x164] sm:$0xf]
        %v8981 = vld [vmem:[%s2 + $0x168] sm:$0xf]
        %v8982 = vld [vmem:[%s2 + $0x16c] sm:$0xf]
        %v8983 = vld [vmem:[%s2 + $0x170] sm:$0xf]
        %v8984 = vld [vmem:[%s2 + $0x174] sm:$0xf]
        %v8985 = vld [vmem:[%s2 + $0x178] sm:$0xf]
        %v8986 = vld [vmem:[%s2 + $0x17c] sm:$0xf]
        %v8987 = vunpack.c.l.b16 %v8862
        %v8988 = vunpack.c.l.b16 %v8865
        %v8989 = vunpack.c.l.b16 %v8869
        %v8990 = vunpack.c.l.b16 %v8872
        %v8991 = vunpack.c.l.b16 %v8876
        %v8992 = vunpack.c.l.b16 %v8879
        %v8993 = vunpack.c.l.b16 %v8883
        %v8994 = vunpack.c.l.b16 %v8886
        %v8995 = vunpack.c.l.b16 %v8890
        %v8996 = vunpack.c.l.b16 %v8893
        %v8997 = vunpack.c.l.b16 %v8897
        %v8998 = vunpack.c.l.b16 %v8900
        %v8999 = vunpack.c.l.b16 %v8904
        %v9000 = vunpack.c.l.b16 %v8907
        %v9001 = vunpack.c.l.b16 %v8911
        %v9002 = vunpack.c.l.b16 %v8914
        %v9003 = vunpack.c.l.b16 %v8918
        %v9004 = vunpack.c.l.b16 %v8921
        %v9005 = vunpack.c.l.b16 %v8925
        %v9006 = vunpack.c.l.b16 %v8928
        %v9007 = vunpack.c.l.b16 %v8932
        %v9008 = vunpack.c.l.b16 %v8935
        %v9009 = vunpack.c.l.b16 %v8939
        %v9010 = vunpack.c.l.b16 %v8942
        %v9011 = vunpack.c.l.b16 %v8946
        %v9012 = vunpack.c.l.b16 %v8949
        %v9013 = vunpack.c.l.b16 %v8953
        %v9014 = vunpack.c.l.b16 %v8956
        %v9015 = vunpack.c.l.b16 %v8960
        %v9016 = vunpack.c.l.b16 %v8963
        %v9017 = vunpack.c.l.b16 %v8967
        %v9018 = vunpack.c.l.b16 %v8970
        %v9019 = vpack.c.b16 %v8988, %v8987
        %v9020 = vpack.c.b16 %v8990, %v8989
        %v9021 = vpack.c.b16 %v8992, %v8991
        %v9022 = vpack.c.b16 %v8994, %v8993
        %v9023 = vpack.c.b16 %v8996, %v8995
        %v9024 = vpack.c.b16 %v8998, %v8997
        %v9025 = vpack.c.b16 %v9000, %v8999
        %v9026 = vpack.c.b16 %v9002, %v9001
        %v9027 = vpack.c.b16 %v9004, %v9003
        %v9028 = vpack.c.b16 %v9006, %v9005
        %v9029 = vpack.c.b16 %v9008, %v9007
        %v9030 = vpack.c.b16 %v9010, %v9009
        %v9031 = vpack.c.b16 %v9012, %v9011
        %v9032 = vpack.c.b16 %v9014, %v9013
        %v9033 = vpack.c.b16 %v9016, %v9015
        %v9034 = vpack.c.b16 %v9018, %v9017
        %v9067 = vunpack.c.l.b16 %v8971
        %v9068 = vunpack.c.l.b16 %v8972
        %v9069 = vunpack.c.l.b16 %v8973
        %v9070 = vunpack.c.l.b16 %v8974
        %v9071 = vunpack.c.l.b16 %v8975
        %v9072 = vunpack.c.l.b16 %v8976
        %v9073 = vunpack.c.l.b16 %v8977
        %v9074 = vunpack.c.l.b16 %v8978
        %v9075 = vunpack.c.l.b16 %v8979
        %v9076 = vunpack.c.l.b16 %v8980
        %v9077 = vunpack.c.l.b16 %v8981
        %v9078 = vunpack.c.l.b16 %v8982
        %v9079 = vunpack.c.l.b16 %v8983
        %v9080 = vunpack.c.l.b16 %v8984
        %v9081 = vunpack.c.l.b16 %v8985
        %v9082 = vunpack.c.l.b16 %v8986
        %v9083 = vpack.c.b16 %v9068, %v9067
        %v9084 = vpack.c.b16 %v9070, %v9069
        %v9085 = vpack.c.b16 %v9072, %v9071
        %v9086 = vpack.c.b16 %v9074, %v9073
        %v9087 = vpack.c.b16 %v9076, %v9075
        %v9088 = vpack.c.b16 %v9078, %v9077
        %v9089 = vpack.c.b16 %v9080, %v9079
        %v9090 = vpack.c.b16 %v9082, %v9081
        %9099 = vmatprep.subr.bf16.mxu0 0
        %9100 = vmatpush1.bf16.msra.mxu0 %v9090
        %9101 = vmatprep.subr.bf16.mxu0 0
        %9102 = vmatpush1.bf16.msra.mxu0 %v9089
        %9103 = vmatprep.subr.bf16.mxu0 0
        %9104 = vmatpush1.bf16.msra.mxu0 %v9088
        %9105 = vmatprep.subr.bf16.mxu0 0
        %9106 = vmatpush1.bf16.msra.mxu0 %v9087
        %9107 = vmatprep.subr.bf16.mxu0 0
        %9108 = vmatpush1.bf16.msra.mxu0 %v9086
        %9109 = vmatprep.subr.bf16.mxu0 0
        %9110 = vmatpush1.bf16.msra.mxu0 %v9085
        %9111 = vmatprep.subr.bf16.mxu0 0
        %9112 = vmatpush1.bf16.msra.mxu0 %v9084
        %9113 = vmatprep.subr.bf16.mxu0 0
        %9114 = vmatpush1.bf16.msra.mxu0 %v9083
        %9115 = vmatprep.subr.bf16.mxu0 0
        %9116 = vmatpush2.bf16.msra.mxu0 0
        %9117 = vmatprep.subr.bf16.mxu0 0
        %9118 = vmatpush2.bf16.msra.mxu0 0
        %9119 = vmatprep.subr.bf16.mxu0 0
        %9120 = vmatpush2.bf16.msra.mxu0 0
        %9121 = vmatprep.subr.bf16.mxu0 0
        %9122 = vmatpush2.bf16.msra.mxu0 0
        %9123 = vmatprep.subr.bf16.mxu0 0
        %9124 = vmatpush2.bf16.msra.mxu0 0
        %9125 = vmatprep.subr.bf16.mxu0 0
        %9126 = vmatpush2.bf16.msra.mxu0 0
        %9127 = vmatprep.subr.bf16.mxu0 0
        %9128 = vmatpush2.bf16.msra.mxu0 0
        %9129 = vmatprep.subr.bf16.mxu0 0
        %9130 = vmatpush2.bf16.msra.mxu0 0
        %9131 = vmatprep.mubr.bf16.mxu0 0
        %9132 = vmatmul.mubr.bf16.gmra.mxu0 %v9019
        %v9133 = vpop.f32.mrf.mxu0
        %v9134 = vadd.f32 0.0, %v9133
        %v9135 = vpop.f32.mrf.mxu0
        %v9136 = vpop.f32.mrf.mxu0
        %v9137 = vadd.f32 0.0, %v9136
        %v9138 = vpop.f32.mrf.mxu0
        %9139 = vmatprep.mubr.bf16.mxu0 0
        %9140 = vmatmul.mubr.bf16.gmra.mxu0 %v9020
        %v9141 = vpop.f32.mrf.mxu0
        %v9142 = vadd.f32 0.0, %v9141
        %v9143 = vpop.f32.mrf.mxu0
        %v9144 = vpop.f32.mrf.mxu0
        %v9145 = vadd.f32 0.0, %v9144
        %v9146 = vpop.f32.mrf.mxu0
        %9147 = vmatprep.mubr.bf16.mxu0 0
        %9148 = vmatmul.mubr.bf16.gmra.mxu0 %v9021
        %v9149 = vpop.f32.mrf.mxu0
        %v9150 = vadd.f32 0.0, %v9149
        %v9151 = vpop.f32.mrf.mxu0
        %v9152 = vpop.f32.mrf.mxu0
        %v9153 = vadd.f32 0.0, %v9152
        %v9154 = vpop.f32.mrf.mxu0
        %9155 = vmatprep.mubr.bf16.mxu0 0
        %9156 = vmatmul.mubr.bf16.gmra.mxu0 %v9022
        %v9157 = vpop.f32.mrf.mxu0
        %v9158 = vadd.f32 0.0, %v9157
        %v9159 = vpop.f32.mrf.mxu0
        %v9160 = vpop.f32.mrf.mxu0
        %v9161 = vadd.f32 0.0, %v9160
        %v9162 = vpop.f32.mrf.mxu0
        %9163 = vmatprep.mubr.bf16.mxu0 0
        %9164 = vmatmul.mubr.bf16.gmra.mxu0 %v9023
        %v9165 = vpop.f32.mrf.mxu0
        %v9166 = vadd.f32 0.0, %v9165
        %v9167 = vpop.f32.mrf.mxu0
        %v9168 = vpop.f32.mrf.mxu0
        %v9169 = vadd.f32 0.0, %v9168
        %v9170 = vpop.f32.mrf.mxu0
        %9171 = vmatprep.mubr.bf16.mxu0 0
        %9172 = vmatmul.mubr.bf16.gmra.mxu0 %v9024
        %v9173 = vpop.f32.mrf.mxu0
        %v9174 = vadd.f32 0.0, %v9173
        %v9175 = vpop.f32.mrf.mxu0
        %v9176 = vpop.f32.mrf.mxu0
        %v9177 = vadd.f32 0.0, %v9176
        %v9178 = vpop.f32.mrf.mxu0
        %9179 = vmatprep.mubr.bf16.mxu0 0
        %9180 = vmatmul.mubr.bf16.gmra.mxu0 %v9025
        %v9181 = vpop.f32.mrf.mxu0
        %v9182 = vadd.f32 0.0, %v9181
        %v9183 = vpop.f32.mrf.mxu0
        %v9184 = vpop.f32.mrf.mxu0
        %v9185 = vadd.f32 0.0, %v9184
        %v9186 = vpop.f32.mrf.mxu0
        %9187 = vmatprep.mubr.bf16.mxu0 0
        %9188 = vmatmul.mubr.bf16.gmra.mxu0 %v9026
        %v9189 = vpop.f32.mrf.mxu0
        %v9190 = vadd.f32 0.0, %v9189
        %v9191 = vpop.f32.mrf.mxu0
        %v9192 = vpop.f32.mrf.mxu0
        %v9193 = vadd.f32 0.0, %v9192
        %v9194 = vpop.f32.mrf.mxu0
        %9195 = vmatprep.mubr.bf16.mxu0 0
        %9196 = vmatmul.mubr.bf16.gmra.mxu0 %v9027
        %v9197 = vpop.f32.mrf.mxu0
        %v9198 = vadd.f32 0.0, %v9197
        %v9199 = vpop.f32.mrf.mxu0
        %v9200 = vpop.f32.mrf.mxu0
        %v9201 = vadd.f32 0.0, %v9200
        %v9202 = vpop.f32.mrf.mxu0
        %9203 = vmatprep.mubr.bf16.mxu0 0
        %9204 = vmatmul.mubr.bf16.gmra.mxu0 %v9028
        %v9205 = vpop.f32.mrf.mxu0
        %v9206 = vadd.f32 0.0, %v9205
        %v9207 = vpop.f32.mrf.mxu0
        %v9208 = vpop.f32.mrf.mxu0
        %v9209 = vadd.f32 0.0, %v9208
        %v9210 = vpop.f32.mrf.mxu0
        %9211 = vmatprep.mubr.bf16.mxu0 0
        %9212 = vmatmul.mubr.bf16.gmra.mxu0 %v9029
        %v9213 = vpop.f32.mrf.mxu0
        %v9214 = vadd.f32 0.0, %v9213
        %v9215 = vpop.f32.mrf.mxu0
        %v9216 = vpop.f32.mrf.mxu0
        %v9217 = vadd.f32 0.0, %v9216
        %v9218 = vpop.f32.mrf.mxu0
        %9219 = vmatprep.mubr.bf16.mxu0 0
        %9220 = vmatmul.mubr.bf16.gmra.mxu0 %v9030
        %v9221 = vpop.f32.mrf.mxu0
        %v9222 = vadd.f32 0.0, %v9221
        %v9223 = vpop.f32.mrf.mxu0
        %v9224 = vpop.f32.mrf.mxu0
        %v9225 = vadd.f32 0.0, %v9224
        %v9226 = vpop.f32.mrf.mxu0
        %9227 = vmatprep.mubr.bf16.mxu0 0
        %9228 = vmatmul.mubr.bf16.gmra.mxu0 %v9031
        %v9229 = vpop.f32.mrf.mxu0
        %v9230 = vadd.f32 0.0, %v9229
        %v9231 = vpop.f32.mrf.mxu0
        %v9232 = vpop.f32.mrf.mxu0
        %v9233 = vadd.f32 0.0, %v9232
        %v9234 = vpop.f32.mrf.mxu0
        %9235 = vmatprep.mubr.bf16.mxu0 0
        %9236 = vmatmul.mubr.bf16.gmra.mxu0 %v9032
        %v9237 = vpop.f32.mrf.mxu0
        %v9238 = vadd.f32 0.0, %v9237
        %v9239 = vpop.f32.mrf.mxu0
        %v9240 = vpop.f32.mrf.mxu0
        %v9241 = vadd.f32 0.0, %v9240
        %v9242 = vpop.f32.mrf.mxu0
        %9243 = vmatprep.mubr.bf16.mxu0 0
        %9244 = vmatmul.mubr.bf16.gmra.mxu0 %v9033
        %v9245 = vpop.f32.mrf.mxu0
        %v9246 = vadd.f32 0.0, %v9245
        %v9247 = vpop.f32.mrf.mxu0
        %v9248 = vpop.f32.mrf.mxu0
        %v9249 = vadd.f32 0.0, %v9248
        %v9250 = vpop.f32.mrf.mxu0
        %9251 = vmatprep.mubr.bf16.mxu0 0
        %9252 = vmatmul.mubr.bf16.gmra.mxu0 %v9034
        %v9253 = vpop.f32.mrf.mxu0
        %v9254 = vadd.f32 0.0, %v9253
        %v9255 = vpop.f32.mrf.mxu0
        %v9256 = vpop.f32.mrf.mxu0
        %v9257 = vadd.f32 0.0, %v9256
        %v9258 = vpop.f32.mrf.mxu0
        %9259 = vdwg.mxu0
        %v9260 = vadd.f32 %v8763, %v9134
        %v9261 = vadd.f32 %v8764, %v9137
        %v9262 = vadd.f32 %v8765, %v9142
        %v9263 = vadd.f32 %v8766, %v9145
        %v9264 = vadd.f32 %v8767, %v9150
        %v9265 = vadd.f32 %v8768, %v9153
        %v9266 = vadd.f32 %v8769, %v9158
        %v9267 = vadd.f32 %v8770, %v9161
        %v9268 = vadd.f32 %v8771, %v9166
        %v9269 = vadd.f32 %v8772, %v9169
        %v9270 = vadd.f32 %v8773, %v9174
        %v9271 = vadd.f32 %v8774, %v9177
        %v9272 = vadd.f32 %v8775, %v9182
        %v9273 = vadd.f32 %v8776, %v9185
        %v9274 = vadd.f32 %v8777, %v9190
        %v9275 = vadd.f32 %v8778, %v9193
        %v9276 = vadd.f32 %v8779, %v9198
        %v9277 = vadd.f32 %v8780, %v9201
        %v9278 = vadd.f32 %v8781, %v9206
        %v9279 = vadd.f32 %v8782, %v9209
        %v9280 = vadd.f32 %v8783, %v9214
        %v9281 = vadd.f32 %v8784, %v9217
        %v9282 = vadd.f32 %v8785, %v9222
        %v9283 = vadd.f32 %v8786, %v9225
        %v9284 = vadd.f32 %v8787, %v9230
        %v9285 = vadd.f32 %v8788, %v9233
        %v9286 = vadd.f32 %v8789, %v9238
        %v9287 = vadd.f32 %v8790, %v9241
        %v9288 = vadd.f32 %v8791, %v9246
        %v9289 = vadd.f32 %v8792, %v9249
        %v9290 = vadd.f32 %v8793, %v9254
        %v9291 = vadd.f32 %v8794, %v9257
        %s9292 = scalar_lea.vmem [#allocation3], 24
        %v9293 = vld [vmem:[%s9292] sm:$0xf]
        %v9294 = vld [vmem:[%s9292 + $0x4] sm:$0xf]
        %v9295 = vld [vmem:[%s9292 + $0xc] sm:$0xf]
        %v9296 = vld [vmem:[%s9292 + $0x10] sm:$0xf]
        %v9297 = vld [vmem:[%s9292 + $0x18] sm:$0xf]
        %v9298 = vld [vmem:[%s9292 + $0x1c] sm:$0xf]
        %v9299 = vld [vmem:[%s9292 + $0x24] sm:$0xf]
        %v9300 = vld [vmem:[%s9292 + $0x28] sm:$0xf]
        %v9301 = vld [vmem:[%s9292 + $0x30] sm:$0xf]
        %v9302 = vld [vmem:[%s9292 + $0x34] sm:$0xf]
        %v9303 = vld [vmem:[%s9292 + $0x3c] sm:$0xf]
        %v9304 = vld [vmem:[%s9292 + $0x40] sm:$0xf]
        %v9305 = vld [vmem:[%s9292 + $0x48] sm:$0xf]
        %v9306 = vld [vmem:[%s9292 + $0x4c] sm:$0xf]
        %v9307 = vld [vmem:[%s9292 + $0x54] sm:$0xf]
        %v9308 = vld [vmem:[%s9292 + $0x58] sm:$0xf]
        %v9309 = vld [vmem:[%s9292 + $0x60] sm:$0xf]
        %v9310 = vld [vmem:[%s9292 + $0x64] sm:$0xf]
        %v9311 = vld [vmem:[%s9292 + $0x6c] sm:$0xf]
        %v9312 = vld [vmem:[%s9292 + $0x70] sm:$0xf]
        %v9313 = vld [vmem:[%s9292 + $0x78] sm:$0xf]
        %v9314 = vld [vmem:[%s9292 + $0x7c] sm:$0xf]
        %v9315 = vld [vmem:[%s9292 + $0x84] sm:$0xf]
        %v9316 = vld [vmem:[%s9292 + $0x88] sm:$0xf]
        %v9317 = vld [vmem:[%s9292 + $0x90] sm:$0xf]
        %v9318 = vld [vmem:[%s9292 + $0x94] sm:$0xf]
        %v9319 = vld [vmem:[%s9292 + $0x9c] sm:$0xf]
        %v9320 = vld [vmem:[%s9292 + $0xa0] sm:$0xf]
        %v9321 = vld [vmem:[%s9292 + $0xa8] sm:$0xf]
        %v9322 = vld [vmem:[%s9292 + $0xac] sm:$0xf]
        %v9323 = vld [vmem:[%s9292 + $0xb4] sm:$0xf]
        %v9324 = vld [vmem:[%s9292 + $0xb8] sm:$0xf]
        %v9325 = vld [vmem:[%s2 + $0x180] sm:$0xf]
        %v9326 = vld [vmem:[%s2 + $0x184] sm:$0xf]
        %v9327 = vld [vmem:[%s2 + $0x188] sm:$0xf]
        %v9328 = vld [vmem:[%s2 + $0x18c] sm:$0xf]
        %v9329 = vld [vmem:[%s2 + $0x190] sm:$0xf]
        %v9330 = vld [vmem:[%s2 + $0x194] sm:$0xf]
        %v9331 = vld [vmem:[%s2 + $0x198] sm:$0xf]
        %v9332 = vld [vmem:[%s2 + $0x19c] sm:$0xf]
        %v9333 = vld [vmem:[%s2 + $0x1a0] sm:$0xf]
        %v9334 = vld [vmem:[%s2 + $0x1a4] sm:$0xf]
        %v9335 = vld [vmem:[%s2 + $0x1a8] sm:$0xf]
        %v9336 = vld [vmem:[%s2 + $0x1ac] sm:$0xf]
        %v9337 = vld [vmem:[%s2 + $0x1b0] sm:$0xf]
        %v9338 = vld [vmem:[%s2 + $0x1b4] sm:$0xf]
        %v9339 = vld [vmem:[%s2 + $0x1b8] sm:$0xf]
        %v9340 = vld [vmem:[%s2 + $0x1bc] sm:$0xf]
        %v9373 = vunpack.c.l.b16 %v9293
        %v9374 = vunpack.c.l.b16 %v9294
        %v9375 = vunpack.c.l.b16 %v9295
        %v9376 = vunpack.c.l.b16 %v9296
        %v9377 = vunpack.c.l.b16 %v9297
        %v9378 = vunpack.c.l.b16 %v9298
        %v9379 = vunpack.c.l.b16 %v9299
        %v9380 = vunpack.c.l.b16 %v9300
        %v9381 = vunpack.c.l.b16 %v9301
        %v9382 = vunpack.c.l.b16 %v9302
        %v9383 = vunpack.c.l.b16 %v9303
        %v9384 = vunpack.c.l.b16 %v9304
        %v9385 = vunpack.c.l.b16 %v9305
        %v9386 = vunpack.c.l.b16 %v9306
        %v9387 = vunpack.c.l.b16 %v9307
        %v9388 = vunpack.c.l.b16 %v9308
        %v9389 = vunpack.c.l.b16 %v9309
        %v9390 = vunpack.c.l.b16 %v9310
        %v9391 = vunpack.c.l.b16 %v9311
        %v9392 = vunpack.c.l.b16 %v9312
        %v9393 = vunpack.c.l.b16 %v9313
        %v9394 = vunpack.c.l.b16 %v9314
        %v9395 = vunpack.c.l.b16 %v9315
        %v9396 = vunpack.c.l.b16 %v9316
        %v9397 = vunpack.c.l.b16 %v9317
        %v9398 = vunpack.c.l.b16 %v9318
        %v9399 = vunpack.c.l.b16 %v9319
        %v9400 = vunpack.c.l.b16 %v9320
        %v9401 = vunpack.c.l.b16 %v9321
        %v9402 = vunpack.c.l.b16 %v9322
        %v9403 = vunpack.c.l.b16 %v9323
        %v9404 = vunpack.c.l.b16 %v9324
        %v9405 = vpack.c.b16 %v9374, %v9373
        %v9406 = vpack.c.b16 %v9376, %v9375
        %v9407 = vpack.c.b16 %v9378, %v9377
        %v9408 = vpack.c.b16 %v9380, %v9379
        %v9409 = vpack.c.b16 %v9382, %v9381
        %v9410 = vpack.c.b16 %v9384, %v9383
        %v9411 = vpack.c.b16 %v9386, %v9385
        %v9412 = vpack.c.b16 %v9388, %v9387
        %v9413 = vpack.c.b16 %v9390, %v9389
        %v9414 = vpack.c.b16 %v9392, %v9391
        %v9415 = vpack.c.b16 %v9394, %v9393
        %v9416 = vpack.c.b16 %v9396, %v9395
        %v9417 = vpack.c.b16 %v9398, %v9397
        %v9418 = vpack.c.b16 %v9400, %v9399
        %v9419 = vpack.c.b16 %v9402, %v9401
        %v9420 = vpack.c.b16 %v9404, %v9403
        %v9453 = vunpack.c.l.b16 %v9325
        %v9454 = vunpack.c.l.b16 %v9326
        %v9455 = vunpack.c.l.b16 %v9327
        %v9456 = vunpack.c.l.b16 %v9328
        %v9457 = vunpack.c.l.b16 %v9329
        %v9458 = vunpack.c.l.b16 %v9330
        %v9459 = vunpack.c.l.b16 %v9331
        %v9460 = vunpack.c.l.b16 %v9332
        %v9461 = vunpack.c.l.b16 %v9333
        %v9462 = vunpack.c.l.b16 %v9334
        %v9463 = vunpack.c.l.b16 %v9335
        %v9464 = vunpack.c.l.b16 %v9336
        %v9465 = vunpack.c.l.b16 %v9337
        %v9466 = vunpack.c.l.b16 %v9338
        %v9467 = vunpack.c.l.b16 %v9339
        %v9468 = vunpack.c.l.b16 %v9340
        %v9469 = vpack.c.b16 %v9454, %v9453
        %v9470 = vpack.c.b16 %v9456, %v9455
        %v9471 = vpack.c.b16 %v9458, %v9457
        %v9472 = vpack.c.b16 %v9460, %v9459
        %v9473 = vpack.c.b16 %v9462, %v9461
        %v9474 = vpack.c.b16 %v9464, %v9463
        %v9475 = vpack.c.b16 %v9466, %v9465
        %v9476 = vpack.c.b16 %v9468, %v9467
        %9485 = vmatprep.subr.bf16.mxu0 0
        %9486 = vmatpush1.bf16.msra.mxu0 %v9476
        %9487 = vmatprep.subr.bf16.mxu0 0
        %9488 = vmatpush1.bf16.msra.mxu0 %v9475
        %9489 = vmatprep.subr.bf16.mxu0 0
        %9490 = vmatpush1.bf16.msra.mxu0 %v9474
        %9491 = vmatprep.subr.bf16.mxu0 0
        %9492 = vmatpush1.bf16.msra.mxu0 %v9473
        %9493 = vmatprep.subr.bf16.mxu0 0
        %9494 = vmatpush1.bf16.msra.mxu0 %v9472
        %9495 = vmatprep.subr.bf16.mxu0 0
        %9496 = vmatpush1.bf16.msra.mxu0 %v9471
        %9497 = vmatprep.subr.bf16.mxu0 0
        %9498 = vmatpush1.bf16.msra.mxu0 %v9470
        %9499 = vmatprep.subr.bf16.mxu0 0
        %9500 = vmatpush1.bf16.msra.mxu0 %v9469
        %9501 = vmatprep.subr.bf16.mxu0 0
        %9502 = vmatpush2.bf16.msra.mxu0 0
        %9503 = vmatprep.subr.bf16.mxu0 0
        %9504 = vmatpush2.bf16.msra.mxu0 0
        %9505 = vmatprep.subr.bf16.mxu0 0
        %9506 = vmatpush2.bf16.msra.mxu0 0
        %9507 = vmatprep.subr.bf16.mxu0 0
        %9508 = vmatpush2.bf16.msra.mxu0 0
        %9509 = vmatprep.subr.bf16.mxu0 0
        %9510 = vmatpush2.bf16.msra.mxu0 0
        %9511 = vmatprep.subr.bf16.mxu0 0
        %9512 = vmatpush2.bf16.msra.mxu0 0
        %9513 = vmatprep.subr.bf16.mxu0 0
        %9514 = vmatpush2.bf16.msra.mxu0 0
        %9515 = vmatprep.subr.bf16.mxu0 0
        %9516 = vmatpush2.bf16.msra.mxu0 0
        %9517 = vmatprep.mubr.bf16.mxu0 0
        %9518 = vmatmul.mubr.bf16.gmra.mxu0 %v9405
        %v9519 = vpop.f32.mrf.mxu0
        %v9520 = vadd.f32 0.0, %v9519
        %v9521 = vpop.f32.mrf.mxu0
        %v9522 = vpop.f32.mrf.mxu0
        %v9523 = vadd.f32 0.0, %v9522
        %v9524 = vpop.f32.mrf.mxu0
        %9525 = vmatprep.mubr.bf16.mxu0 0
        %9526 = vmatmul.mubr.bf16.gmra.mxu0 %v9406
        %v9527 = vpop.f32.mrf.mxu0
        %v9528 = vadd.f32 0.0, %v9527
        %v9529 = vpop.f32.mrf.mxu0
        %v9530 = vpop.f32.mrf.mxu0
        %v9531 = vadd.f32 0.0, %v9530
        %v9532 = vpop.f32.mrf.mxu0
        %9533 = vmatprep.mubr.bf16.mxu0 0
        %9534 = vmatmul.mubr.bf16.gmra.mxu0 %v9407
        %v9535 = vpop.f32.mrf.mxu0
        %v9536 = vadd.f32 0.0, %v9535
        %v9537 = vpop.f32.mrf.mxu0
        %v9538 = vpop.f32.mrf.mxu0
        %v9539 = vadd.f32 0.0, %v9538
        %v9540 = vpop.f32.mrf.mxu0
        %9541 = vmatprep.mubr.bf16.mxu0 0
        %9542 = vmatmul.mubr.bf16.gmra.mxu0 %v9408
        %v9543 = vpop.f32.mrf.mxu0
        %v9544 = vadd.f32 0.0, %v9543
        %v9545 = vpop.f32.mrf.mxu0
        %v9546 = vpop.f32.mrf.mxu0
        %v9547 = vadd.f32 0.0, %v9546
        %v9548 = vpop.f32.mrf.mxu0
        %9549 = vmatprep.mubr.bf16.mxu0 0
        %9550 = vmatmul.mubr.bf16.gmra.mxu0 %v9409
        %v9551 = vpop.f32.mrf.mxu0
        %v9552 = vadd.f32 0.0, %v9551
        %v9553 = vpop.f32.mrf.mxu0
        %v9554 = vpop.f32.mrf.mxu0
        %v9555 = vadd.f32 0.0, %v9554
        %v9556 = vpop.f32.mrf.mxu0
        %9557 = vmatprep.mubr.bf16.mxu0 0
        %9558 = vmatmul.mubr.bf16.gmra.mxu0 %v9410
        %v9559 = vpop.f32.mrf.mxu0
        %v9560 = vadd.f32 0.0, %v9559
        %v9561 = vpop.f32.mrf.mxu0
        %v9562 = vpop.f32.mrf.mxu0
        %v9563 = vadd.f32 0.0, %v9562
        %v9564 = vpop.f32.mrf.mxu0
        %9565 = vmatprep.mubr.bf16.mxu0 0
        %9566 = vmatmul.mubr.bf16.gmra.mxu0 %v9411
        %v9567 = vpop.f32.mrf.mxu0
        %v9568 = vadd.f32 0.0, %v9567
        %v9569 = vpop.f32.mrf.mxu0
        %v9570 = vpop.f32.mrf.mxu0
        %v9571 = vadd.f32 0.0, %v9570
        %v9572 = vpop.f32.mrf.mxu0
        %9573 = vmatprep.mubr.bf16.mxu0 0
        %9574 = vmatmul.mubr.bf16.gmra.mxu0 %v9412
        %v9575 = vpop.f32.mrf.mxu0
        %v9576 = vadd.f32 0.0, %v9575
        %v9577 = vpop.f32.mrf.mxu0
        %v9578 = vpop.f32.mrf.mxu0
        %v9579 = vadd.f32 0.0, %v9578
        %v9580 = vpop.f32.mrf.mxu0
        %9581 = vmatprep.mubr.bf16.mxu0 0
        %9582 = vmatmul.mubr.bf16.gmra.mxu0 %v9413
        %v9583 = vpop.f32.mrf.mxu0
        %v9584 = vadd.f32 0.0, %v9583
        %v9585 = vpop.f32.mrf.mxu0
        %v9586 = vpop.f32.mrf.mxu0
        %v9587 = vadd.f32 0.0, %v9586
        %v9588 = vpop.f32.mrf.mxu0
        %9589 = vmatprep.mubr.bf16.mxu0 0
        %9590 = vmatmul.mubr.bf16.gmra.mxu0 %v9414
        %v9591 = vpop.f32.mrf.mxu0
        %v9592 = vadd.f32 0.0, %v9591
        %v9593 = vpop.f32.mrf.mxu0
        %v9594 = vpop.f32.mrf.mxu0
        %v9595 = vadd.f32 0.0, %v9594
        %v9596 = vpop.f32.mrf.mxu0
        %9597 = vmatprep.mubr.bf16.mxu0 0
        %9598 = vmatmul.mubr.bf16.gmra.mxu0 %v9415
        %v9599 = vpop.f32.mrf.mxu0
        %v9600 = vadd.f32 0.0, %v9599
        %v9601 = vpop.f32.mrf.mxu0
        %v9602 = vpop.f32.mrf.mxu0
        %v9603 = vadd.f32 0.0, %v9602
        %v9604 = vpop.f32.mrf.mxu0
        %9605 = vmatprep.mubr.bf16.mxu0 0
        %9606 = vmatmul.mubr.bf16.gmra.mxu0 %v9416
        %v9607 = vpop.f32.mrf.mxu0
        %v9608 = vadd.f32 0.0, %v9607
        %v9609 = vpop.f32.mrf.mxu0
        %v9610 = vpop.f32.mrf.mxu0
        %v9611 = vadd.f32 0.0, %v9610
        %v9612 = vpop.f32.mrf.mxu0
        %9613 = vmatprep.mubr.bf16.mxu0 0
        %9614 = vmatmul.mubr.bf16.gmra.mxu0 %v9417
        %v9615 = vpop.f32.mrf.mxu0
        %v9616 = vadd.f32 0.0, %v9615
        %v9617 = vpop.f32.mrf.mxu0
        %v9618 = vpop.f32.mrf.mxu0
        %v9619 = vadd.f32 0.0, %v9618
        %v9620 = vpop.f32.mrf.mxu0
        %9621 = vmatprep.mubr.bf16.mxu0 0
        %9622 = vmatmul.mubr.bf16.gmra.mxu0 %v9418
        %v9623 = vpop.f32.mrf.mxu0
        %v9624 = vadd.f32 0.0, %v9623
        %v9625 = vpop.f32.mrf.mxu0
        %v9626 = vpop.f32.mrf.mxu0
        %v9627 = vadd.f32 0.0, %v9626
        %v9628 = vpop.f32.mrf.mxu0
        %9629 = vmatprep.mubr.bf16.mxu0 0
        %9630 = vmatmul.mubr.bf16.gmra.mxu0 %v9419
        %v9631 = vpop.f32.mrf.mxu0
        %v9632 = vadd.f32 0.0, %v9631
        %v9633 = vpop.f32.mrf.mxu0
        %v9634 = vpop.f32.mrf.mxu0
        %v9635 = vadd.f32 0.0, %v9634
        %v9636 = vpop.f32.mrf.mxu0
        %9637 = vmatprep.mubr.bf16.mxu0 0
        %9638 = vmatmul.mubr.bf16.gmra.mxu0 %v9420
        %v9639 = vpop.f32.mrf.mxu0
        %v9640 = vadd.f32 0.0, %v9639
        %v9641 = vpop.f32.mrf.mxu0
        %v9642 = vpop.f32.mrf.mxu0
        %v9643 = vadd.f32 0.0, %v9642
        %v9644 = vpop.f32.mrf.mxu0
        %9645 = vdwg.mxu0
        %v9646 = vadd.f32 %v9260, %v9520
        %v9647 = vadd.f32 %v9261, %v9523
        %v9648 = vadd.f32 %v9262, %v9528
        %v9649 = vadd.f32 %v9263, %v9531
        %v9650 = vadd.f32 %v9264, %v9536
        %v9651 = vadd.f32 %v9265, %v9539
        %v9652 = vadd.f32 %v9266, %v9544
        %v9653 = vadd.f32 %v9267, %v9547
        %v9654 = vadd.f32 %v9268, %v9552
        %v9655 = vadd.f32 %v9269, %v9555
        %v9656 = vadd.f32 %v9270, %v9560
        %v9657 = vadd.f32 %v9271, %v9563
        %v9658 = vadd.f32 %v9272, %v9568
        %v9659 = vadd.f32 %v9273, %v9571
        %v9660 = vadd.f32 %v9274, %v9576
        %v9661 = vadd.f32 %v9275, %v9579
        %v9662 = vadd.f32 %v9276, %v9584
        %v9663 = vadd.f32 %v9277, %v9587
        %v9664 = vadd.f32 %v9278, %v9592
        %v9665 = vadd.f32 %v9279, %v9595
        %v9666 = vadd.f32 %v9280, %v9600
        %v9667 = vadd.f32 %v9281, %v9603
        %v9668 = vadd.f32 %v9282, %v9608
        %v9669 = vadd.f32 %v9283, %v9611
        %v9670 = vadd.f32 %v9284, %v9616
        %v9671 = vadd.f32 %v9285, %v9619
        %v9672 = vadd.f32 %v9286, %v9624
        %v9673 = vadd.f32 %v9287, %v9627
        %v9674 = vadd.f32 %v9288, %v9632
        %v9675 = vadd.f32 %v9289, %v9635
        %v9676 = vadd.f32 %v9290, %v9640
        %v9677 = vadd.f32 %v9291, %v9643
        %v9678 = vld [vmem:[%s9292] sm:$0xf]
        %v9679 = vld [vmem:[%s9292 + $0x4] sm:$0xf]
        %v9680 = vld [vmem:[%s9292 + $0x8] sm:$0x1]
        %v9681 = vld [vmem:[%s9292 + $0xc] sm:$0xf]
        %v9682 = vld [vmem:[%s9292 + $0x10] sm:$0xf]
        %v9683 = vld [vmem:[%s9292 + $0x14] sm:$0x1]
        %v9684 = vld [vmem:[%s9292 + $0x18] sm:$0xf]
        %v9685 = vld [vmem:[%s9292 + $0x1c] sm:$0xf]
        %v9686 = vld [vmem:[%s9292 + $0x20] sm:$0x1]
        %v9687 = vld [vmem:[%s9292 + $0x24] sm:$0xf]
        %v9688 = vld [vmem:[%s9292 + $0x28] sm:$0xf]
        %v9689 = vld [vmem:[%s9292 + $0x2c] sm:$0x1]
        %v9690 = vld [vmem:[%s9292 + $0x30] sm:$0xf]
        %v9691 = vld [vmem:[%s9292 + $0x34] sm:$0xf]
        %v9692 = vld [vmem:[%s9292 + $0x38] sm:$0x1]
        %v9693 = vld [vmem:[%s9292 + $0x3c] sm:$0xf]
        %v9694 = vld [vmem:[%s9292 + $0x40] sm:$0xf]
        %v9695 = vld [vmem:[%s9292 + $0x44] sm:$0x1]
        %v9696 = vld [vmem:[%s9292 + $0x48] sm:$0xf]
        %v9697 = vld [vmem:[%s9292 + $0x4c] sm:$0xf]
        %v9698 = vld [vmem:[%s9292 + $0x50] sm:$0x1]
        %v9699 = vld [vmem:[%s9292 + $0x54] sm:$0xf]
        %v9700 = vld [vmem:[%s9292 + $0x58] sm:$0xf]
        %v9701 = vld [vmem:[%s9292 + $0x5c] sm:$0x1]
        %v9702 = vld [vmem:[%s9292 + $0x60] sm:$0xf]
        %v9703 = vld [vmem:[%s9292 + $0x64] sm:$0xf]
        %v9704 = vld [vmem:[%s9292 + $0x68] sm:$0x1]
        %v9705 = vld [vmem:[%s9292 + $0x6c] sm:$0xf]
        %v9706 = vld [vmem:[%s9292 + $0x70] sm:$0xf]
        %v9707 = vld [vmem:[%s9292 + $0x74] sm:$0x1]
        %v9708 = vld [vmem:[%s9292 + $0x78] sm:$0xf]
        %v9709 = vld [vmem:[%s9292 + $0x7c] sm:$0xf]
        %v9710 = vld [vmem:[%s9292 + $0x80] sm:$0x1]
        %v9711 = vld [vmem:[%s9292 + $0x84] sm:$0xf]
        %v9712 = vld [vmem:[%s9292 + $0x88] sm:$0xf]
        %v9713 = vld [vmem:[%s9292 + $0x8c] sm:$0x1]
        %v9714 = vld [vmem:[%s9292 + $0x90] sm:$0xf]
        %v9715 = vld [vmem:[%s9292 + $0x94] sm:$0xf]
        %v9716 = vld [vmem:[%s9292 + $0x98] sm:$0x1]
        %v9717 = vld [vmem:[%s9292 + $0x9c] sm:$0xf]
        %v9718 = vld [vmem:[%s9292 + $0xa0] sm:$0xf]
        %v9719 = vld [vmem:[%s9292 + $0xa4] sm:$0x1]
        %v9720 = vld [vmem:[%s9292 + $0xa8] sm:$0xf]
        %v9721 = vld [vmem:[%s9292 + $0xac] sm:$0xf]
        %v9722 = vld [vmem:[%s9292 + $0xb0] sm:$0x1]
        %v9723 = vld [vmem:[%s9292 + $0xb4] sm:$0xf]
        %v9724 = vld [vmem:[%s9292 + $0xb8] sm:$0xf]
        %v9725 = vld [vmem:[%s9292 + $0xbc] sm:$0x1]
        %v9727 = vshrl.u32 %v9678, 16
        %v9729 = vrot.slane %v9727, 4
        %v9730 = vshll.u32 %v9678, 16
        %v9732 = vrot.slane %v9730, 5
        %v9733 = vor.u32 %v9729, %v9732
        %v9734 = vrot.slane %v9733, 4
        %v9736 = vshll.u32 %v9679, 16
        %v9738 = vrot.slane %v9736, 5
        %v9739 = vsel %vm785, %v9734, %v9738
        %v9740 = vshrl.u32 %v9679, 16
        %v9742 = vrot.slane %v9740, 4
        %v9743 = vor.u32 %v9742, %v9738
        %v9744 = vrot.slane %v9743, 4
        %v9746 = vshll.u32 %v9680, 16
        %v9748 = vrot.slane %v9746, 5
        %v9749 = vsel %vm785, %v9744, %v9748
        %v9751 = vshrl.u32 %v9681, 16
        %v9753 = vrot.slane %v9751, 4
        %v9754 = vshll.u32 %v9681, 16
        %v9756 = vrot.slane %v9754, 5
        %v9757 = vor.u32 %v9753, %v9756
        %v9758 = vrot.slane %v9757, 4
        %v9760 = vshll.u32 %v9682, 16
        %v9762 = vrot.slane %v9760, 5
        %v9763 = vsel %vm785, %v9758, %v9762
        %v9764 = vshrl.u32 %v9682, 16
        %v9766 = vrot.slane %v9764, 4
        %v9767 = vor.u32 %v9766, %v9762
        %v9768 = vrot.slane %v9767, 4
        %v9770 = vshll.u32 %v9683, 16
        %v9772 = vrot.slane %v9770, 5
        %v9773 = vsel %vm785, %v9768, %v9772
        %v9775 = vshrl.u32 %v9684, 16
        %v9777 = vrot.slane %v9775, 4
        %v9778 = vshll.u32 %v9684, 16
        %v9780 = vrot.slane %v9778, 5
        %v9781 = vor.u32 %v9777, %v9780
        %v9782 = vrot.slane %v9781, 4
        %v9784 = vshll.u32 %v9685, 16
        %v9786 = vrot.slane %v9784, 5
        %v9787 = vsel %vm785, %v9782, %v9786
        %v9788 = vshrl.u32 %v9685, 16
        %v9790 = vrot.slane %v9788, 4
        %v9791 = vor.u32 %v9790, %v9786
        %v9792 = vrot.slane %v9791, 4
        %v9794 = vshll.u32 %v9686, 16
        %v9796 = vrot.slane %v9794, 5
        %v9797 = vsel %vm785, %v9792, %v9796
        %v9799 = vshrl.u32 %v9687, 16
        %v9801 = vrot.slane %v9799, 4
        %v9802 = vshll.u32 %v9687, 16
        %v9804 = vrot.slane %v9802, 5
        %v9805 = vor.u32 %v9801, %v9804
        %v9806 = vrot.slane %v9805, 4
        %v9808 = vshll.u32 %v9688, 16
        %v9810 = vrot.slane %v9808, 5
        %v9811 = vsel %vm785, %v9806, %v9810
        %v9812 = vshrl.u32 %v9688, 16
        %v9814 = vrot.slane %v9812, 4
        %v9815 = vor.u32 %v9814, %v9810
        %v9816 = vrot.slane %v9815, 4
        %v9818 = vshll.u32 %v9689, 16
        %v9820 = vrot.slane %v9818, 5
        %v9821 = vsel %vm785, %v9816, %v9820
        %v9823 = vshrl.u32 %v9690, 16
        %v9825 = vrot.slane %v9823, 4
        %v9826 = vshll.u32 %v9690, 16
        %v9828 = vrot.slane %v9826, 5
        %v9829 = vor.u32 %v9825, %v9828
        %v9830 = vrot.slane %v9829, 4
        %v9832 = vshll.u32 %v9691, 16
        %v9834 = vrot.slane %v9832, 5
        %v9835 = vsel %vm785, %v9830, %v9834
        %v9836 = vshrl.u32 %v9691, 16
        %v9838 = vrot.slane %v9836, 4
        %v9839 = vor.u32 %v9838, %v9834
        %v9840 = vrot.slane %v9839, 4
        %v9842 = vshll.u32 %v9692, 16
        %v9844 = vrot.slane %v9842, 5
        %v9845 = vsel %vm785, %v9840, %v9844
        %v9847 = vshrl.u32 %v9693, 16
        %v9849 = vrot.slane %v9847, 4
        %v9850 = vshll.u32 %v9693, 16
        %v9852 = vrot.slane %v9850, 5
        %v9853 = vor.u32 %v9849, %v9852
        %v9854 = vrot.slane %v9853, 4
        %v9856 = vshll.u32 %v9694, 16
        %v9858 = vrot.slane %v9856, 5
        %v9859 = vsel %vm785, %v9854, %v9858
        %v9860 = vshrl.u32 %v9694, 16
        %v9862 = vrot.slane %v9860, 4
        %v9863 = vor.u32 %v9862, %v9858
        %v9864 = vrot.slane %v9863, 4
        %v9866 = vshll.u32 %v9695, 16
        %v9868 = vrot.slane %v9866, 5
        %v9869 = vsel %vm785, %v9864, %v9868
        %v9871 = vshrl.u32 %v9696, 16
        %v9873 = vrot.slane %v9871, 4
        %v9874 = vshll.u32 %v9696, 16
        %v9876 = vrot.slane %v9874, 5
        %v9877 = vor.u32 %v9873, %v9876
        %v9878 = vrot.slane %v9877, 4
        %v9880 = vshll.u32 %v9697, 16
        %v9882 = vrot.slane %v9880, 5
        %v9883 = vsel %vm785, %v9878, %v9882
        %v9884 = vshrl.u32 %v9697, 16
        %v9886 = vrot.slane %v9884, 4
        %v9887 = vor.u32 %v9886, %v9882
        %v9888 = vrot.slane %v9887, 4
        %v9890 = vshll.u32 %v9698, 16
        %v9892 = vrot.slane %v9890, 5
        %v9893 = vsel %vm785, %v9888, %v9892
        %v9895 = vshrl.u32 %v9699, 16
        %v9897 = vrot.slane %v9895, 4
        %v9898 = vshll.u32 %v9699, 16
        %v9900 = vrot.slane %v9898, 5
        %v9901 = vor.u32 %v9897, %v9900
        %v9902 = vrot.slane %v9901, 4
        %v9904 = vshll.u32 %v9700, 16
        %v9906 = vrot.slane %v9904, 5
        %v9907 = vsel %vm785, %v9902, %v9906
        %v9908 = vshrl.u32 %v9700, 16
        %v9910 = vrot.slane %v9908, 4
        %v9911 = vor.u32 %v9910, %v9906
        %v9912 = vrot.slane %v9911, 4
        %v9914 = vshll.u32 %v9701, 16
        %v9916 = vrot.slane %v9914, 5
        %v9917 = vsel %vm785, %v9912, %v9916
        %v9919 = vshrl.u32 %v9702, 16
        %v9921 = vrot.slane %v9919, 4
        %v9922 = vshll.u32 %v9702, 16
        %v9924 = vrot.slane %v9922, 5
        %v9925 = vor.u32 %v9921, %v9924
        %v9926 = vrot.slane %v9925, 4
        %v9928 = vshll.u32 %v9703, 16
        %v9930 = vrot.slane %v9928, 5
        %v9931 = vsel %vm785, %v9926, %v9930
        %v9932 = vshrl.u32 %v9703, 16
        %v9934 = vrot.slane %v9932, 4
        %v9935 = vor.u32 %v9934, %v9930
        %v9936 = vrot.slane %v9935, 4
        %v9938 = vshll.u32 %v9704, 16
        %v9940 = vrot.slane %v9938, 5
        %v9941 = vsel %vm785, %v9936, %v9940
        %v9943 = vshrl.u32 %v9705, 16
        %v9945 = vrot.slane %v9943, 4
        %v9946 = vshll.u32 %v9705, 16
        %v9948 = vrot.slane %v9946, 5
        %v9949 = vor.u32 %v9945, %v9948
        %v9950 = vrot.slane %v9949, 4
        %v9952 = vshll.u32 %v9706, 16
        %v9954 = vrot.slane %v9952, 5
        %v9955 = vsel %vm785, %v9950, %v9954
        %v9956 = vshrl.u32 %v9706, 16
        %v9958 = vrot.slane %v9956, 4
        %v9959 = vor.u32 %v9958, %v9954
        %v9960 = vrot.slane %v9959, 4
        %v9962 = vshll.u32 %v9707, 16
        %v9964 = vrot.slane %v9962, 5
        %v9965 = vsel %vm785, %v9960, %v9964
        %v9967 = vshrl.u32 %v9708, 16
        %v9969 = vrot.slane %v9967, 4
        %v9970 = vshll.u32 %v9708, 16
        %v9972 = vrot.slane %v9970, 5
        %v9973 = vor.u32 %v9969, %v9972
        %v9974 = vrot.slane %v9973, 4
        %v9976 = vshll.u32 %v9709, 16
        %v9978 = vrot.slane %v9976, 5
        %v9979 = vsel %vm785, %v9974, %v9978
        %v9980 = vshrl.u32 %v9709, 16
        %v9982 = vrot.slane %v9980, 4
        %v9983 = vor.u32 %v9982, %v9978
        %v9984 = vrot.slane %v9983, 4
        %v9986 = vshll.u32 %v9710, 16
        %v9988 = vrot.slane %v9986, 5
        %v9989 = vsel %vm785, %v9984, %v9988
        %v9991 = vshrl.u32 %v9711, 16
        %v9993 = vrot.slane %v9991, 4
        %v9994 = vshll.u32 %v9711, 16
        %v9996 = vrot.slane %v9994, 5
        %v9997 = vor.u32 %v9993, %v9996
        %v9998 = vrot.slane %v9997, 4
        %v10000 = vshll.u32 %v9712, 16
        %v10002 = vrot.slane %v10000, 5
        %v10003 = vsel %vm785, %v9998, %v10002
        %v10004 = vshrl.u32 %v9712, 16
        %v10006 = vrot.slane %v10004, 4
        %v10007 = vor.u32 %v10006, %v10002
        %v10008 = vrot.slane %v10007, 4
        %v10010 = vshll.u32 %v9713, 16
        %v10012 = vrot.slane %v10010, 5
        %v10013 = vsel %vm785, %v10008, %v10012
        %v10015 = vshrl.u32 %v9714, 16
        %v10017 = vrot.slane %v10015, 4
        %v10018 = vshll.u32 %v9714, 16
        %v10020 = vrot.slane %v10018, 5
        %v10021 = vor.u32 %v10017, %v10020
        %v10022 = vrot.slane %v10021, 4
        %v10024 = vshll.u32 %v9715, 16
        %v10026 = vrot.slane %v10024, 5
        %v10027 = vsel %vm785, %v10022, %v10026
        %v10028 = vshrl.u32 %v9715, 16
        %v10030 = vrot.slane %v10028, 4
        %v10031 = vor.u32 %v10030, %v10026
        %v10032 = vrot.slane %v10031, 4
        %v10034 = vshll.u32 %v9716, 16
        %v10036 = vrot.slane %v10034, 5
        %v10037 = vsel %vm785, %v10032, %v10036
        %v10039 = vshrl.u32 %v9717, 16
        %v10041 = vrot.slane %v10039, 4
        %v10042 = vshll.u32 %v9717, 16
        %v10044 = vrot.slane %v10042, 5
        %v10045 = vor.u32 %v10041, %v10044
        %v10046 = vrot.slane %v10045, 4
        %v10048 = vshll.u32 %v9718, 16
        %v10050 = vrot.slane %v10048, 5
        %v10051 = vsel %vm785, %v10046, %v10050
        %v10052 = vshrl.u32 %v9718, 16
        %v10054 = vrot.slane %v10052, 4
        %v10055 = vor.u32 %v10054, %v10050
        %v10056 = vrot.slane %v10055, 4
        %v10058 = vshll.u32 %v9719, 16
        %v10060 = vrot.slane %v10058, 5
        %v10061 = vsel %vm785, %v10056, %v10060
        %v10063 = vshrl.u32 %v9720, 16
        %v10065 = vrot.slane %v10063, 4
        %v10066 = vshll.u32 %v9720, 16
        %v10068 = vrot.slane %v10066, 5
        %v10069 = vor.u32 %v10065, %v10068
        %v10070 = vrot.slane %v10069, 4
        %v10072 = vshll.u32 %v9721, 16
        %v10074 = vrot.slane %v10072, 5
        %v10075 = vsel %vm785, %v10070, %v10074
        %v10076 = vshrl.u32 %v9721, 16
        %v10078 = vrot.slane %v10076, 4
        %v10079 = vor.u32 %v10078, %v10074
        %v10080 = vrot.slane %v10079, 4
        %v10082 = vshll.u32 %v9722, 16
        %v10084 = vrot.slane %v10082, 5
        %v10085 = vsel %vm785, %v10080, %v10084
        %v10087 = vshrl.u32 %v9723, 16
        %v10089 = vrot.slane %v10087, 4
        %v10090 = vshll.u32 %v9723, 16
        %v10092 = vrot.slane %v10090, 5
        %v10093 = vor.u32 %v10089, %v10092
        %v10094 = vrot.slane %v10093, 4
        %v10096 = vshll.u32 %v9724, 16
        %v10098 = vrot.slane %v10096, 5
        %v10099 = vsel %vm785, %v10094, %v10098
        %v10100 = vshrl.u32 %v9724, 16
        %v10102 = vrot.slane %v10100, 4
        %v10103 = vor.u32 %v10102, %v10098
        %v10104 = vrot.slane %v10103, 4
        %v10106 = vshll.u32 %v9725, 16
        %v10108 = vrot.slane %v10106, 5
        %v10109 = vsel %vm785, %v10104, %v10108
        %v10110 = vld [vmem:[%s2 + $0x1c0] sm:$0xf]
        %v10111 = vld [vmem:[%s2 + $0x1c4] sm:$0xf]
        %v10112 = vld [vmem:[%s2 + $0x1c8] sm:$0xf]
        %v10113 = vld [vmem:[%s2 + $0x1cc] sm:$0xf]
        %v10114 = vld [vmem:[%s2 + $0x1d0] sm:$0xf]
        %v10115 = vld [vmem:[%s2 + $0x1d4] sm:$0xf]
        %v10116 = vld [vmem:[%s2 + $0x1d8] sm:$0xf]
        %v10117 = vld [vmem:[%s2 + $0x1dc] sm:$0xf]
        %v10118 = vld [vmem:[%s2 + $0x1e0] sm:$0xf]
        %v10119 = vld [vmem:[%s2 + $0x1e4] sm:$0xf]
        %v10120 = vld [vmem:[%s2 + $0x1e8] sm:$0xf]
        %v10121 = vld [vmem:[%s2 + $0x1ec] sm:$0xf]
        %v10122 = vld [vmem:[%s2 + $0x1f0] sm:$0xf]
        %v10123 = vld [vmem:[%s2 + $0x1f4] sm:$0xf]
        %v10124 = vld [vmem:[%s2 + $0x1f8] sm:$0xf]
        %v10125 = vld [vmem:[%s2 + $0x1fc] sm:$0xf]
        %v10126 = vunpack.c.l.b16 %v9739
        %v10127 = vunpack.c.l.b16 %v9749
        %v10128 = vunpack.c.l.b16 %v9763
        %v10129 = vunpack.c.l.b16 %v9773
        %v10130 = vunpack.c.l.b16 %v9787
        %v10131 = vunpack.c.l.b16 %v9797
        %v10132 = vunpack.c.l.b16 %v9811
        %v10133 = vunpack.c.l.b16 %v9821
        %v10134 = vunpack.c.l.b16 %v9835
        %v10135 = vunpack.c.l.b16 %v9845
        %v10136 = vunpack.c.l.b16 %v9859
        %v10137 = vunpack.c.l.b16 %v9869
        %v10138 = vunpack.c.l.b16 %v9883
        %v10139 = vunpack.c.l.b16 %v9893
        %v10140 = vunpack.c.l.b16 %v9907
        %v10141 = vunpack.c.l.b16 %v9917
        %v10142 = vunpack.c.l.b16 %v9931
        %v10143 = vunpack.c.l.b16 %v9941
        %v10144 = vunpack.c.l.b16 %v9955
        %v10145 = vunpack.c.l.b16 %v9965
        %v10146 = vunpack.c.l.b16 %v9979
        %v10147 = vunpack.c.l.b16 %v9989
        %v10148 = vunpack.c.l.b16 %v10003
        %v10149 = vunpack.c.l.b16 %v10013
        %v10150 = vunpack.c.l.b16 %v10027
        %v10151 = vunpack.c.l.b16 %v10037
        %v10152 = vunpack.c.l.b16 %v10051
        %v10153 = vunpack.c.l.b16 %v10061
        %v10154 = vunpack.c.l.b16 %v10075
        %v10155 = vunpack.c.l.b16 %v10085
        %v10156 = vunpack.c.l.b16 %v10099
        %v10157 = vunpack.c.l.b16 %v10109
        %v10158 = vpack.c.b16 %v10127, %v10126
        %v10159 = vpack.c.b16 %v10129, %v10128
        %v10160 = vpack.c.b16 %v10131, %v10130
        %v10161 = vpack.c.b16 %v10133, %v10132
        %v10162 = vpack.c.b16 %v10135, %v10134
        %v10163 = vpack.c.b16 %v10137, %v10136
        %v10164 = vpack.c.b16 %v10139, %v10138
        %v10165 = vpack.c.b16 %v10141, %v10140
        %v10166 = vpack.c.b16 %v10143, %v10142
        %v10167 = vpack.c.b16 %v10145, %v10144
        %v10168 = vpack.c.b16 %v10147, %v10146
        %v10169 = vpack.c.b16 %v10149, %v10148
        %v10170 = vpack.c.b16 %v10151, %v10150
        %v10171 = vpack.c.b16 %v10153, %v10152
        %v10172 = vpack.c.b16 %v10155, %v10154
        %v10173 = vpack.c.b16 %v10157, %v10156
        %v10206 = vunpack.c.l.b16 %v10110
        %v10207 = vunpack.c.l.b16 %v10111
        %v10208 = vunpack.c.l.b16 %v10112
        %v10209 = vunpack.c.l.b16 %v10113
        %v10210 = vunpack.c.l.b16 %v10114
        %v10211 = vunpack.c.l.b16 %v10115
        %v10212 = vunpack.c.l.b16 %v10116
        %v10213 = vunpack.c.l.b16 %v10117
        %v10214 = vunpack.c.l.b16 %v10118
        %v10215 = vunpack.c.l.b16 %v10119
        %v10216 = vunpack.c.l.b16 %v10120
        %v10217 = vunpack.c.l.b16 %v10121
        %v10218 = vunpack.c.l.b16 %v10122
        %v10219 = vunpack.c.l.b16 %v10123
        %v10220 = vunpack.c.l.b16 %v10124
        %v10221 = vunpack.c.l.b16 %v10125
        %v10222 = vpack.c.b16 %v10207, %v10206
        %v10223 = vpack.c.b16 %v10209, %v10208
        %v10224 = vpack.c.b16 %v10211, %v10210
        %v10225 = vpack.c.b16 %v10213, %v10212
        %v10226 = vpack.c.b16 %v10215, %v10214
        %v10227 = vpack.c.b16 %v10217, %v10216
        %v10228 = vpack.c.b16 %v10219, %v10218
        %v10229 = vpack.c.b16 %v10221, %v10220
        %10238 = vmatprep.subr.bf16.mxu0 0
        %10239 = vmatpush1.bf16.msra.mxu0 %v10229
        %10240 = vmatprep.subr.bf16.mxu0 0
        %10241 = vmatpush1.bf16.msra.mxu0 %v10228
        %10242 = vmatprep.subr.bf16.mxu0 0
        %10243 = vmatpush1.bf16.msra.mxu0 %v10227
        %10244 = vmatprep.subr.bf16.mxu0 0
        %10245 = vmatpush1.bf16.msra.mxu0 %v10226
        %10246 = vmatprep.subr.bf16.mxu0 0
        %10247 = vmatpush1.bf16.msra.mxu0 %v10225
        %10248 = vmatprep.subr.bf16.mxu0 0
        %10249 = vmatpush1.bf16.msra.mxu0 %v10224
        %10250 = vmatprep.subr.bf16.mxu0 0
        %10251 = vmatpush1.bf16.msra.mxu0 %v10223
        %10252 = vmatprep.subr.bf16.mxu0 0
        %10253 = vmatpush1.bf16.msra.mxu0 %v10222
        %10254 = vmatprep.subr.bf16.mxu0 0
        %10255 = vmatpush2.bf16.msra.mxu0 0
        %10256 = vmatprep.subr.bf16.mxu0 0
        %10257 = vmatpush2.bf16.msra.mxu0 0
        %10258 = vmatprep.subr.bf16.mxu0 0
        %10259 = vmatpush2.bf16.msra.mxu0 0
        %10260 = vmatprep.subr.bf16.mxu0 0
        %10261 = vmatpush2.bf16.msra.mxu0 0
        %10262 = vmatprep.subr.bf16.mxu0 0
        %10263 = vmatpush2.bf16.msra.mxu0 0
        %10264 = vmatprep.subr.bf16.mxu0 0
        %10265 = vmatpush2.bf16.msra.mxu0 0
        %10266 = vmatprep.subr.bf16.mxu0 0
        %10267 = vmatpush2.bf16.msra.mxu0 0
        %10268 = vmatprep.subr.bf16.mxu0 0
        %10269 = vmatpush2.bf16.msra.mxu0 0
        %10270 = vmatprep.mubr.bf16.mxu0 0
        %10271 = vmatmul.mubr.bf16.gmra.mxu0 %v10158
        %v10272 = vpop.f32.mrf.mxu0
        %v10273 = vadd.f32 0.0, %v10272
        %v10274 = vpop.f32.mrf.mxu0
        %v10275 = vpop.f32.mrf.mxu0
        %v10276 = vadd.f32 0.0, %v10275
        %v10277 = vpop.f32.mrf.mxu0
        %10278 = vmatprep.mubr.bf16.mxu0 0
        %10279 = vmatmul.mubr.bf16.gmra.mxu0 %v10159
        %v10280 = vpop.f32.mrf.mxu0
        %v10281 = vadd.f32 0.0, %v10280
        %v10282 = vpop.f32.mrf.mxu0
        %v10283 = vpop.f32.mrf.mxu0
        %v10284 = vadd.f32 0.0, %v10283
        %v10285 = vpop.f32.mrf.mxu0
        %10286 = vmatprep.mubr.bf16.mxu0 0
        %10287 = vmatmul.mubr.bf16.gmra.mxu0 %v10160
        %v10288 = vpop.f32.mrf.mxu0
        %v10289 = vadd.f32 0.0, %v10288
        %v10290 = vpop.f32.mrf.mxu0
        %v10291 = vpop.f32.mrf.mxu0
        %v10292 = vadd.f32 0.0, %v10291
        %v10293 = vpop.f32.mrf.mxu0
        %10294 = vmatprep.mubr.bf16.mxu0 0
        %10295 = vmatmul.mubr.bf16.gmra.mxu0 %v10161
        %v10296 = vpop.f32.mrf.mxu0
        %v10297 = vadd.f32 0.0, %v10296
        %v10298 = vpop.f32.mrf.mxu0
        %v10299 = vpop.f32.mrf.mxu0
        %v10300 = vadd.f32 0.0, %v10299
        %v10301 = vpop.f32.mrf.mxu0
        %10302 = vmatprep.mubr.bf16.mxu0 0
        %10303 = vmatmul.mubr.bf16.gmra.mxu0 %v10162
        %v10304 = vpop.f32.mrf.mxu0
        %v10305 = vadd.f32 0.0, %v10304
        %v10306 = vpop.f32.mrf.mxu0
        %v10307 = vpop.f32.mrf.mxu0
        %v10308 = vadd.f32 0.0, %v10307
        %v10309 = vpop.f32.mrf.mxu0
        %10310 = vmatprep.mubr.bf16.mxu0 0
        %10311 = vmatmul.mubr.bf16.gmra.mxu0 %v10163
        %v10312 = vpop.f32.mrf.mxu0
        %v10313 = vadd.f32 0.0, %v10312
        %v10314 = vpop.f32.mrf.mxu0
        %v10315 = vpop.f32.mrf.mxu0
        %v10316 = vadd.f32 0.0, %v10315
        %v10317 = vpop.f32.mrf.mxu0
        %10318 = vmatprep.mubr.bf16.mxu0 0
        %10319 = vmatmul.mubr.bf16.gmra.mxu0 %v10164
        %v10320 = vpop.f32.mrf.mxu0
        %v10321 = vadd.f32 0.0, %v10320
        %v10322 = vpop.f32.mrf.mxu0
        %v10323 = vpop.f32.mrf.mxu0
        %v10324 = vadd.f32 0.0, %v10323
        %v10325 = vpop.f32.mrf.mxu0
        %10326 = vmatprep.mubr.bf16.mxu0 0
        %10327 = vmatmul.mubr.bf16.gmra.mxu0 %v10165
        %v10328 = vpop.f32.mrf.mxu0
        %v10329 = vadd.f32 0.0, %v10328
        %v10330 = vpop.f32.mrf.mxu0
        %v10331 = vpop.f32.mrf.mxu0
        %v10332 = vadd.f32 0.0, %v10331
        %v10333 = vpop.f32.mrf.mxu0
        %10334 = vmatprep.mubr.bf16.mxu0 0
        %10335 = vmatmul.mubr.bf16.gmra.mxu0 %v10166
        %v10336 = vpop.f32.mrf.mxu0
        %v10337 = vadd.f32 0.0, %v10336
        %v10338 = vpop.f32.mrf.mxu0
        %v10339 = vpop.f32.mrf.mxu0
        %v10340 = vadd.f32 0.0, %v10339
        %v10341 = vpop.f32.mrf.mxu0
        %10342 = vmatprep.mubr.bf16.mxu0 0
        %10343 = vmatmul.mubr.bf16.gmra.mxu0 %v10167
        %v10344 = vpop.f32.mrf.mxu0
        %v10345 = vadd.f32 0.0, %v10344
        %v10346 = vpop.f32.mrf.mxu0
        %v10347 = vpop.f32.mrf.mxu0
        %v10348 = vadd.f32 0.0, %v10347
        %v10349 = vpop.f32.mrf.mxu0
        %10350 = vmatprep.mubr.bf16.mxu0 0
        %10351 = vmatmul.mubr.bf16.gmra.mxu0 %v10168
        %v10352 = vpop.f32.mrf.mxu0
        %v10353 = vadd.f32 0.0, %v10352
        %v10354 = vpop.f32.mrf.mxu0
        %v10355 = vpop.f32.mrf.mxu0
        %v10356 = vadd.f32 0.0, %v10355
        %v10357 = vpop.f32.mrf.mxu0
        %10358 = vmatprep.mubr.bf16.mxu0 0
        %10359 = vmatmul.mubr.bf16.gmra.mxu0 %v10169
        %v10360 = vpop.f32.mrf.mxu0
        %v10361 = vadd.f32 0.0, %v10360
        %v10362 = vpop.f32.mrf.mxu0
        %v10363 = vpop.f32.mrf.mxu0
        %v10364 = vadd.f32 0.0, %v10363
        %v10365 = vpop.f32.mrf.mxu0
        %10366 = vmatprep.mubr.bf16.mxu0 0
        %10367 = vmatmul.mubr.bf16.gmra.mxu0 %v10170
        %v10368 = vpop.f32.mrf.mxu0
        %v10369 = vadd.f32 0.0, %v10368
        %v10370 = vpop.f32.mrf.mxu0
        %v10371 = vpop.f32.mrf.mxu0
        %v10372 = vadd.f32 0.0, %v10371
        %v10373 = vpop.f32.mrf.mxu0
        %10374 = vmatprep.mubr.bf16.mxu0 0
        %10375 = vmatmul.mubr.bf16.gmra.mxu0 %v10171
        %v10376 = vpop.f32.mrf.mxu0
        %v10377 = vadd.f32 0.0, %v10376
        %v10378 = vpop.f32.mrf.mxu0
        %v10379 = vpop.f32.mrf.mxu0
        %v10380 = vadd.f32 0.0, %v10379
        %v10381 = vpop.f32.mrf.mxu0
        %10382 = vmatprep.mubr.bf16.mxu0 0
        %10383 = vmatmul.mubr.bf16.gmra.mxu0 %v10172
        %v10384 = vpop.f32.mrf.mxu0
        %v10385 = vadd.f32 0.0, %v10384
        %v10386 = vpop.f32.mrf.mxu0
        %v10387 = vpop.f32.mrf.mxu0
        %v10388 = vadd.f32 0.0, %v10387
        %v10389 = vpop.f32.mrf.mxu0
        %10390 = vmatprep.mubr.bf16.mxu0 0
        %10391 = vmatmul.mubr.bf16.gmra.mxu0 %v10173
        %v10392 = vpop.f32.mrf.mxu0
        %v10393 = vadd.f32 0.0, %v10392
        %v10394 = vpop.f32.mrf.mxu0
        %v10395 = vpop.f32.mrf.mxu0
        %v10396 = vadd.f32 0.0, %v10395
        %v10397 = vpop.f32.mrf.mxu0
        %10398 = vdwg.mxu0
        %v10399 = vadd.f32 %v9646, %v10273
        %v10400 = vadd.f32 %v9647, %v10276
        %v10401 = vadd.f32 %v9648, %v10281
        %v10402 = vadd.f32 %v9649, %v10284
        %v10403 = vadd.f32 %v9650, %v10289
        %v10404 = vadd.f32 %v9651, %v10292
        %v10405 = vadd.f32 %v9652, %v10297
        %v10406 = vadd.f32 %v9653, %v10300
        %v10407 = vadd.f32 %v9654, %v10305
        %v10408 = vadd.f32 %v9655, %v10308
        %v10409 = vadd.f32 %v9656, %v10313
        %v10410 = vadd.f32 %v9657, %v10316
        %v10411 = vadd.f32 %v9658, %v10321
        %v10412 = vadd.f32 %v9659, %v10324
        %v10413 = vadd.f32 %v9660, %v10329
        %v10414 = vadd.f32 %v9661, %v10332
        %v10415 = vadd.f32 %v9662, %v10337
        %v10416 = vadd.f32 %v9663, %v10340
        %v10417 = vadd.f32 %v9664, %v10345
        %v10418 = vadd.f32 %v9665, %v10348
        %v10419 = vadd.f32 %v9666, %v10353
        %v10420 = vadd.f32 %v9667, %v10356
        %v10421 = vadd.f32 %v9668, %v10361
        %v10422 = vadd.f32 %v9669, %v10364
        %v10423 = vadd.f32 %v9670, %v10369
        %v10424 = vadd.f32 %v9671, %v10372
        %v10425 = vadd.f32 %v9672, %v10377
        %v10426 = vadd.f32 %v9673, %v10380
        %v10427 = vadd.f32 %v9674, %v10385
        %v10428 = vadd.f32 %v9675, %v10388
        %v10429 = vadd.f32 %v9676, %v10393
        %v10430 = vadd.f32 %v9677, %v10396
        %v10431 = vld [vmem:[%s9292] sm:$0xe]
        %v10432 = vld [vmem:[%s9292 + $0xc] sm:$0xe]
        %v10433 = vld [vmem:[%s9292 + $0x18] sm:$0xe]
        %v10434 = vld [vmem:[%s9292 + $0x24] sm:$0xe]
        %v10435 = vld [vmem:[%s9292 + $0x30] sm:$0xe]
        %v10436 = vld [vmem:[%s9292 + $0x3c] sm:$0xe]
        %v10437 = vld [vmem:[%s9292 + $0x48] sm:$0xe]
        %v10438 = vld [vmem:[%s9292 + $0x54] sm:$0xe]
        %v10439 = vld [vmem:[%s9292 + $0x60] sm:$0xe]
        %v10440 = vld [vmem:[%s9292 + $0x6c] sm:$0xe]
        %v10441 = vld [vmem:[%s9292 + $0x78] sm:$0xe]
        %v10442 = vld [vmem:[%s9292 + $0x84] sm:$0xe]
        %v10443 = vld [vmem:[%s9292 + $0x90] sm:$0xe]
        %v10444 = vld [vmem:[%s9292 + $0x9c] sm:$0xe]
        %v10445 = vld [vmem:[%s9292 + $0xa8] sm:$0xe]
        %v10446 = vld [vmem:[%s9292 + $0xb4] sm:$0xe]
        %v10495 = vrot.slane %v10431, 5
        %v10496 = vrot.slane %v10495, 4
        %v10497 = vrot.slane %v9679, 5
        %v10498 = vsel %vm1814, %v10496, %v10497
        %v10499 = vrot.slane %v10497, 4
        %v10500 = vrot.slane %v9680, 5
        %v10501 = vsel %vm1814, %v10499, %v10500
        %v10502 = vrot.slane %v10432, 5
        %v10503 = vrot.slane %v10502, 4
        %v10504 = vrot.slane %v9682, 5
        %v10505 = vsel %vm1814, %v10503, %v10504
        %v10506 = vrot.slane %v10504, 4
        %v10507 = vrot.slane %v9683, 5
        %v10508 = vsel %vm1814, %v10506, %v10507
        %v10509 = vrot.slane %v10433, 5
        %v10510 = vrot.slane %v10509, 4
        %v10511 = vrot.slane %v9685, 5
        %v10512 = vsel %vm1814, %v10510, %v10511
        %v10513 = vrot.slane %v10511, 4
        %v10514 = vrot.slane %v9686, 5
        %v10515 = vsel %vm1814, %v10513, %v10514
        %v10516 = vrot.slane %v10434, 5
        %v10517 = vrot.slane %v10516, 4
        %v10518 = vrot.slane %v9688, 5
        %v10519 = vsel %vm1814, %v10517, %v10518
        %v10520 = vrot.slane %v10518, 4
        %v10521 = vrot.slane %v9689, 5
        %v10522 = vsel %vm1814, %v10520, %v10521
        %v10523 = vrot.slane %v10435, 5
        %v10524 = vrot.slane %v10523, 4
        %v10525 = vrot.slane %v9691, 5
        %v10526 = vsel %vm1814, %v10524, %v10525
        %v10527 = vrot.slane %v10525, 4
        %v10528 = vrot.slane %v9692, 5
        %v10529 = vsel %vm1814, %v10527, %v10528
        %v10530 = vrot.slane %v10436, 5
        %v10531 = vrot.slane %v10530, 4
        %v10532 = vrot.slane %v9694, 5
        %v10533 = vsel %vm1814, %v10531, %v10532
        %v10534 = vrot.slane %v10532, 4
        %v10535 = vrot.slane %v9695, 5
        %v10536 = vsel %vm1814, %v10534, %v10535
        %v10537 = vrot.slane %v10437, 5
        %v10538 = vrot.slane %v10537, 4
        %v10539 = vrot.slane %v9697, 5
        %v10540 = vsel %vm1814, %v10538, %v10539
        %v10541 = vrot.slane %v10539, 4
        %v10542 = vrot.slane %v9698, 5
        %v10543 = vsel %vm1814, %v10541, %v10542
        %v10544 = vrot.slane %v10438, 5
        %v10545 = vrot.slane %v10544, 4
        %v10546 = vrot.slane %v9700, 5
        %v10547 = vsel %vm1814, %v10545, %v10546
        %v10548 = vrot.slane %v10546, 4
        %v10549 = vrot.slane %v9701, 5
        %v10550 = vsel %vm1814, %v10548, %v10549
        %v10551 = vrot.slane %v10439, 5
        %v10552 = vrot.slane %v10551, 4
        %v10553 = vrot.slane %v9703, 5
        %v10554 = vsel %vm1814, %v10552, %v10553
        %v10555 = vrot.slane %v10553, 4
        %v10556 = vrot.slane %v9704, 5
        %v10557 = vsel %vm1814, %v10555, %v10556
        %v10558 = vrot.slane %v10440, 5
        %v10559 = vrot.slane %v10558, 4
        %v10560 = vrot.slane %v9706, 5
        %v10561 = vsel %vm1814, %v10559, %v10560
        %v10562 = vrot.slane %v10560, 4
        %v10563 = vrot.slane %v9707, 5
        %v10564 = vsel %vm1814, %v10562, %v10563
        %v10565 = vrot.slane %v10441, 5
        %v10566 = vrot.slane %v10565, 4
        %v10567 = vrot.slane %v9709, 5
        %v10568 = vsel %vm1814, %v10566, %v10567
        %v10569 = vrot.slane %v10567, 4
        %v10570 = vrot.slane %v9710, 5
        %v10571 = vsel %vm1814, %v10569, %v10570
        %v10572 = vrot.slane %v10442, 5
        %v10573 = vrot.slane %v10572, 4
        %v10574 = vrot.slane %v9712, 5
        %v10575 = vsel %vm1814, %v10573, %v10574
        %v10576 = vrot.slane %v10574, 4
        %v10577 = vrot.slane %v9713, 5
        %v10578 = vsel %vm1814, %v10576, %v10577
        %v10579 = vrot.slane %v10443, 5
        %v10580 = vrot.slane %v10579, 4
        %v10581 = vrot.slane %v9715, 5
        %v10582 = vsel %vm1814, %v10580, %v10581
        %v10583 = vrot.slane %v10581, 4
        %v10584 = vrot.slane %v9716, 5
        %v10585 = vsel %vm1814, %v10583, %v10584
        %v10586 = vrot.slane %v10444, 5
        %v10587 = vrot.slane %v10586, 4
        %v10588 = vrot.slane %v9718, 5
        %v10589 = vsel %vm1814, %v10587, %v10588
        %v10590 = vrot.slane %v10588, 4
        %v10591 = vrot.slane %v9719, 5
        %v10592 = vsel %vm1814, %v10590, %v10591
        %v10593 = vrot.slane %v10445, 5
        %v10594 = vrot.slane %v10593, 4
        %v10595 = vrot.slane %v9721, 5
        %v10596 = vsel %vm1814, %v10594, %v10595
        %v10597 = vrot.slane %v10595, 4
        %v10598 = vrot.slane %v9722, 5
        %v10599 = vsel %vm1814, %v10597, %v10598
        %v10600 = vrot.slane %v10446, 5
        %v10601 = vrot.slane %v10600, 4
        %v10602 = vrot.slane %v9724, 5
        %v10603 = vsel %vm1814, %v10601, %v10602
        %v10604 = vrot.slane %v10602, 4
        %v10605 = vrot.slane %v9725, 5
        %v10606 = vsel %vm1814, %v10604, %v10605
        %v10607 = vld [vmem:[%s2 + $0x200] sm:$0xf]
        %v10608 = vld [vmem:[%s2 + $0x204] sm:$0xf]
        %v10609 = vld [vmem:[%s2 + $0x208] sm:$0xf]
        %v10610 = vld [vmem:[%s2 + $0x20c] sm:$0xf]
        %v10611 = vld [vmem:[%s2 + $0x210] sm:$0xf]
        %v10612 = vld [vmem:[%s2 + $0x214] sm:$0xf]
        %v10613 = vld [vmem:[%s2 + $0x218] sm:$0xf]
        %v10614 = vld [vmem:[%s2 + $0x21c] sm:$0xf]
        %v10615 = vld [vmem:[%s2 + $0x220] sm:$0xf]
        %v10616 = vld [vmem:[%s2 + $0x224] sm:$0xf]
        %v10617 = vld [vmem:[%s2 + $0x228] sm:$0xf]
        %v10618 = vld [vmem:[%s2 + $0x22c] sm:$0xf]
        %v10619 = vld [vmem:[%s2 + $0x230] sm:$0xf]
        %v10620 = vld [vmem:[%s2 + $0x234] sm:$0xf]
        %v10621 = vld [vmem:[%s2 + $0x238] sm:$0xf]
        %v10622 = vld [vmem:[%s2 + $0x23c] sm:$0xf]
        %v10623 = vunpack.c.l.b16 %v10498
        %v10624 = vunpack.c.l.b16 %v10501
        %v10625 = vunpack.c.l.b16 %v10505
        %v10626 = vunpack.c.l.b16 %v10508
        %v10627 = vunpack.c.l.b16 %v10512
        %v10628 = vunpack.c.l.b16 %v10515
        %v10629 = vunpack.c.l.b16 %v10519
        %v10630 = vunpack.c.l.b16 %v10522
        %v10631 = vunpack.c.l.b16 %v10526
        %v10632 = vunpack.c.l.b16 %v10529
        %v10633 = vunpack.c.l.b16 %v10533
        %v10634 = vunpack.c.l.b16 %v10536
        %v10635 = vunpack.c.l.b16 %v10540
        %v10636 = vunpack.c.l.b16 %v10543
        %v10637 = vunpack.c.l.b16 %v10547
        %v10638 = vunpack.c.l.b16 %v10550
        %v10639 = vunpack.c.l.b16 %v10554
        %v10640 = vunpack.c.l.b16 %v10557
        %v10641 = vunpack.c.l.b16 %v10561
        %v10642 = vunpack.c.l.b16 %v10564
        %v10643 = vunpack.c.l.b16 %v10568
        %v10644 = vunpack.c.l.b16 %v10571
        %v10645 = vunpack.c.l.b16 %v10575
        %v10646 = vunpack.c.l.b16 %v10578
        %v10647 = vunpack.c.l.b16 %v10582
        %v10648 = vunpack.c.l.b16 %v10585
        %v10649 = vunpack.c.l.b16 %v10589
        %v10650 = vunpack.c.l.b16 %v10592
        %v10651 = vunpack.c.l.b16 %v10596
        %v10652 = vunpack.c.l.b16 %v10599
        %v10653 = vunpack.c.l.b16 %v10603
        %v10654 = vunpack.c.l.b16 %v10606
        %v10655 = vpack.c.b16 %v10624, %v10623
        %v10656 = vpack.c.b16 %v10626, %v10625
        %v10657 = vpack.c.b16 %v10628, %v10627
        %v10658 = vpack.c.b16 %v10630, %v10629
        %v10659 = vpack.c.b16 %v10632, %v10631
        %v10660 = vpack.c.b16 %v10634, %v10633
        %v10661 = vpack.c.b16 %v10636, %v10635
        %v10662 = vpack.c.b16 %v10638, %v10637
        %v10663 = vpack.c.b16 %v10640, %v10639
        %v10664 = vpack.c.b16 %v10642, %v10641
        %v10665 = vpack.c.b16 %v10644, %v10643
        %v10666 = vpack.c.b16 %v10646, %v10645
        %v10667 = vpack.c.b16 %v10648, %v10647
        %v10668 = vpack.c.b16 %v10650, %v10649
        %v10669 = vpack.c.b16 %v10652, %v10651
        %v10670 = vpack.c.b16 %v10654, %v10653
        %v10703 = vunpack.c.l.b16 %v10607
        %v10704 = vunpack.c.l.b16 %v10608
        %v10705 = vunpack.c.l.b16 %v10609
        %v10706 = vunpack.c.l.b16 %v10610
        %v10707 = vunpack.c.l.b16 %v10611
        %v10708 = vunpack.c.l.b16 %v10612
        %v10709 = vunpack.c.l.b16 %v10613
        %v10710 = vunpack.c.l.b16 %v10614
        %v10711 = vunpack.c.l.b16 %v10615
        %v10712 = vunpack.c.l.b16 %v10616
        %v10713 = vunpack.c.l.b16 %v10617
        %v10714 = vunpack.c.l.b16 %v10618
        %v10715 = vunpack.c.l.b16 %v10619
        %v10716 = vunpack.c.l.b16 %v10620
        %v10717 = vunpack.c.l.b16 %v10621
        %v10718 = vunpack.c.l.b16 %v10622
        %v10719 = vpack.c.b16 %v10704, %v10703
        %v10720 = vpack.c.b16 %v10706, %v10705
        %v10721 = vpack.c.b16 %v10708, %v10707
        %v10722 = vpack.c.b16 %v10710, %v10709
        %v10723 = vpack.c.b16 %v10712, %v10711
        %v10724 = vpack.c.b16 %v10714, %v10713
        %v10725 = vpack.c.b16 %v10716, %v10715
        %v10726 = vpack.c.b16 %v10718, %v10717
        %10735 = vmatprep.subr.bf16.mxu0 0
        %10736 = vmatpush1.bf16.msra.mxu0 %v10726
        %10737 = vmatprep.subr.bf16.mxu0 0
        %10738 = vmatpush1.bf16.msra.mxu0 %v10725
        %10739 = vmatprep.subr.bf16.mxu0 0
        %10740 = vmatpush1.bf16.msra.mxu0 %v10724
        %10741 = vmatprep.subr.bf16.mxu0 0
        %10742 = vmatpush1.bf16.msra.mxu0 %v10723
        %10743 = vmatprep.subr.bf16.mxu0 0
        %10744 = vmatpush1.bf16.msra.mxu0 %v10722
        %10745 = vmatprep.subr.bf16.mxu0 0
        %10746 = vmatpush1.bf16.msra.mxu0 %v10721
        %10747 = vmatprep.subr.bf16.mxu0 0
        %10748 = vmatpush1.bf16.msra.mxu0 %v10720
        %10749 = vmatprep.subr.bf16.mxu0 0
        %10750 = vmatpush1.bf16.msra.mxu0 %v10719
        %10751 = vmatprep.subr.bf16.mxu0 0
        %10752 = vmatpush2.bf16.msra.mxu0 0
        %10753 = vmatprep.subr.bf16.mxu0 0
        %10754 = vmatpush2.bf16.msra.mxu0 0
        %10755 = vmatprep.subr.bf16.mxu0 0
        %10756 = vmatpush2.bf16.msra.mxu0 0
        %10757 = vmatprep.subr.bf16.mxu0 0
        %10758 = vmatpush2.bf16.msra.mxu0 0
        %10759 = vmatprep.subr.bf16.mxu0 0
        %10760 = vmatpush2.bf16.msra.mxu0 0
        %10761 = vmatprep.subr.bf16.mxu0 0
        %10762 = vmatpush2.bf16.msra.mxu0 0
        %10763 = vmatprep.subr.bf16.mxu0 0
        %10764 = vmatpush2.bf16.msra.mxu0 0
        %10765 = vmatprep.subr.bf16.mxu0 0
        %10766 = vmatpush2.bf16.msra.mxu0 0
        %10767 = vmatprep.mubr.bf16.mxu0 0
        %10768 = vmatmul.mubr.bf16.gmra.mxu0 %v10655
        %v10769 = vpop.f32.mrf.mxu0
        %v10770 = vadd.f32 0.0, %v10769
        %v10771 = vpop.f32.mrf.mxu0
        %v10772 = vpop.f32.mrf.mxu0
        %v10773 = vadd.f32 0.0, %v10772
        %v10774 = vpop.f32.mrf.mxu0
        %10775 = vmatprep.mubr.bf16.mxu0 0
        %10776 = vmatmul.mubr.bf16.gmra.mxu0 %v10656
        %v10777 = vpop.f32.mrf.mxu0
        %v10778 = vadd.f32 0.0, %v10777
        %v10779 = vpop.f32.mrf.mxu0
        %v10780 = vpop.f32.mrf.mxu0
        %v10781 = vadd.f32 0.0, %v10780
        %v10782 = vpop.f32.mrf.mxu0
        %10783 = vmatprep.mubr.bf16.mxu0 0
        %10784 = vmatmul.mubr.bf16.gmra.mxu0 %v10657
        %v10785 = vpop.f32.mrf.mxu0
        %v10786 = vadd.f32 0.0, %v10785
        %v10787 = vpop.f32.mrf.mxu0
        %v10788 = vpop.f32.mrf.mxu0
        %v10789 = vadd.f32 0.0, %v10788
        %v10790 = vpop.f32.mrf.mxu0
        %10791 = vmatprep.mubr.bf16.mxu0 0
        %10792 = vmatmul.mubr.bf16.gmra.mxu0 %v10658
        %v10793 = vpop.f32.mrf.mxu0
        %v10794 = vadd.f32 0.0, %v10793
        %v10795 = vpop.f32.mrf.mxu0
        %v10796 = vpop.f32.mrf.mxu0
        %v10797 = vadd.f32 0.0, %v10796
        %v10798 = vpop.f32.mrf.mxu0
        %10799 = vmatprep.mubr.bf16.mxu0 0
        %10800 = vmatmul.mubr.bf16.gmra.mxu0 %v10659
        %v10801 = vpop.f32.mrf.mxu0
        %v10802 = vadd.f32 0.0, %v10801
        %v10803 = vpop.f32.mrf.mxu0
        %v10804 = vpop.f32.mrf.mxu0
        %v10805 = vadd.f32 0.0, %v10804
        %v10806 = vpop.f32.mrf.mxu0
        %10807 = vmatprep.mubr.bf16.mxu0 0
        %10808 = vmatmul.mubr.bf16.gmra.mxu0 %v10660
        %v10809 = vpop.f32.mrf.mxu0
        %v10810 = vadd.f32 0.0, %v10809
        %v10811 = vpop.f32.mrf.mxu0
        %v10812 = vpop.f32.mrf.mxu0
        %v10813 = vadd.f32 0.0, %v10812
        %v10814 = vpop.f32.mrf.mxu0
        %10815 = vmatprep.mubr.bf16.mxu0 0
        %10816 = vmatmul.mubr.bf16.gmra.mxu0 %v10661
        %v10817 = vpop.f32.mrf.mxu0
        %v10818 = vadd.f32 0.0, %v10817
        %v10819 = vpop.f32.mrf.mxu0
        %v10820 = vpop.f32.mrf.mxu0
        %v10821 = vadd.f32 0.0, %v10820
        %v10822 = vpop.f32.mrf.mxu0
        %10823 = vmatprep.mubr.bf16.mxu0 0
        %10824 = vmatmul.mubr.bf16.gmra.mxu0 %v10662
        %v10825 = vpop.f32.mrf.mxu0
        %v10826 = vadd.f32 0.0, %v10825
        %v10827 = vpop.f32.mrf.mxu0
        %v10828 = vpop.f32.mrf.mxu0
        %v10829 = vadd.f32 0.0, %v10828
        %v10830 = vpop.f32.mrf.mxu0
        %10831 = vmatprep.mubr.bf16.mxu0 0
        %10832 = vmatmul.mubr.bf16.gmra.mxu0 %v10663
        %v10833 = vpop.f32.mrf.mxu0
        %v10834 = vadd.f32 0.0, %v10833
        %v10835 = vpop.f32.mrf.mxu0
        %v10836 = vpop.f32.mrf.mxu0
        %v10837 = vadd.f32 0.0, %v10836
        %v10838 = vpop.f32.mrf.mxu0
        %10839 = vmatprep.mubr.bf16.mxu0 0
        %10840 = vmatmul.mubr.bf16.gmra.mxu0 %v10664
        %v10841 = vpop.f32.mrf.mxu0
        %v10842 = vadd.f32 0.0, %v10841
        %v10843 = vpop.f32.mrf.mxu0
        %v10844 = vpop.f32.mrf.mxu0
        %v10845 = vadd.f32 0.0, %v10844
        %v10846 = vpop.f32.mrf.mxu0
        %10847 = vmatprep.mubr.bf16.mxu0 0
        %10848 = vmatmul.mubr.bf16.gmra.mxu0 %v10665
        %v10849 = vpop.f32.mrf.mxu0
        %v10850 = vadd.f32 0.0, %v10849
        %v10851 = vpop.f32.mrf.mxu0
        %v10852 = vpop.f32.mrf.mxu0
        %v10853 = vadd.f32 0.0, %v10852
        %v10854 = vpop.f32.mrf.mxu0
        %10855 = vmatprep.mubr.bf16.mxu0 0
        %10856 = vmatmul.mubr.bf16.gmra.mxu0 %v10666
        %v10857 = vpop.f32.mrf.mxu0
        %v10858 = vadd.f32 0.0, %v10857
        %v10859 = vpop.f32.mrf.mxu0
        %v10860 = vpop.f32.mrf.mxu0
        %v10861 = vadd.f32 0.0, %v10860
        %v10862 = vpop.f32.mrf.mxu0
        %10863 = vmatprep.mubr.bf16.mxu0 0
        %10864 = vmatmul.mubr.bf16.gmra.mxu0 %v10667
        %v10865 = vpop.f32.mrf.mxu0
        %v10866 = vadd.f32 0.0, %v10865
        %v10867 = vpop.f32.mrf.mxu0
        %v10868 = vpop.f32.mrf.mxu0
        %v10869 = vadd.f32 0.0, %v10868
        %v10870 = vpop.f32.mrf.mxu0
        %10871 = vmatprep.mubr.bf16.mxu0 0
        %10872 = vmatmul.mubr.bf16.gmra.mxu0 %v10668
        %v10873 = vpop.f32.mrf.mxu0
        %v10874 = vadd.f32 0.0, %v10873
        %v10875 = vpop.f32.mrf.mxu0
        %v10876 = vpop.f32.mrf.mxu0
        %v10877 = vadd.f32 0.0, %v10876
        %v10878 = vpop.f32.mrf.mxu0
        %10879 = vmatprep.mubr.bf16.mxu0 0
        %10880 = vmatmul.mubr.bf16.gmra.mxu0 %v10669
        %v10881 = vpop.f32.mrf.mxu0
        %v10882 = vadd.f32 0.0, %v10881
        %v10883 = vpop.f32.mrf.mxu0
        %v10884 = vpop.f32.mrf.mxu0
        %v10885 = vadd.f32 0.0, %v10884
        %v10886 = vpop.f32.mrf.mxu0
        %10887 = vmatprep.mubr.bf16.mxu0 0
        %10888 = vmatmul.mubr.bf16.gmra.mxu0 %v10670
        %v10889 = vpop.f32.mrf.mxu0
        %v10890 = vadd.f32 0.0, %v10889
        %v10891 = vpop.f32.mrf.mxu0
        %v10892 = vpop.f32.mrf.mxu0
        %v10893 = vadd.f32 0.0, %v10892
        %v10894 = vpop.f32.mrf.mxu0
        %10895 = vdwg.mxu0
        %v10896 = vadd.f32 %v10399, %v10770
        %v10897 = vadd.f32 %v10400, %v10773
        %v10898 = vadd.f32 %v10401, %v10778
        %v10899 = vadd.f32 %v10402, %v10781
        %v10900 = vadd.f32 %v10403, %v10786
        %v10901 = vadd.f32 %v10404, %v10789
        %v10902 = vadd.f32 %v10405, %v10794
        %v10903 = vadd.f32 %v10406, %v10797
        %v10904 = vadd.f32 %v10407, %v10802
        %v10905 = vadd.f32 %v10408, %v10805
        %v10906 = vadd.f32 %v10409, %v10810
        %v10907 = vadd.f32 %v10410, %v10813
        %v10908 = vadd.f32 %v10411, %v10818
        %v10909 = vadd.f32 %v10412, %v10821
        %v10910 = vadd.f32 %v10413, %v10826
        %v10911 = vadd.f32 %v10414, %v10829
        %v10912 = vadd.f32 %v10415, %v10834
        %v10913 = vadd.f32 %v10416, %v10837
        %v10914 = vadd.f32 %v10417, %v10842
        %v10915 = vadd.f32 %v10418, %v10845
        %v10916 = vadd.f32 %v10419, %v10850
        %v10917 = vadd.f32 %v10420, %v10853
        %v10918 = vadd.f32 %v10421, %v10858
        %v10919 = vadd.f32 %v10422, %v10861
        %v10920 = vadd.f32 %v10423, %v10866
        %v10921 = vadd.f32 %v10424, %v10869
        %v10922 = vadd.f32 %v10425, %v10874
        %v10923 = vadd.f32 %v10426, %v10877
        %v10924 = vadd.f32 %v10427, %v10882
        %v10925 = vadd.f32 %v10428, %v10885
        %v10926 = vadd.f32 %v10429, %v10890
        %v10927 = vadd.f32 %v10430, %v10893
        %v10928 = vmax.f32 %v10896, 0.0
        %v10929 = vmax.f32 %v10897, 0.0
        %v10930 = vmax.f32 %v10898, 0.0
        %v10931 = vmax.f32 %v10899, 0.0
        %v10932 = vmax.f32 %v10900, 0.0
        %v10933 = vmax.f32 %v10901, 0.0
        %v10934 = vmax.f32 %v10902, 0.0
        %v10935 = vmax.f32 %v10903, 0.0
        %v10936 = vmax.f32 %v10904, 0.0
        %v10937 = vmax.f32 %v10905, 0.0
        %v10938 = vmax.f32 %v10906, 0.0
        %v10939 = vmax.f32 %v10907, 0.0
        %v10940 = vmax.f32 %v10908, 0.0
        %v10941 = vmax.f32 %v10909, 0.0
        %v10942 = vmax.f32 %v10910, 0.0
        %v10943 = vmax.f32 %v10911, 0.0
        %v10944 = vmax.f32 %v10912, 0.0
        %v10945 = vmax.f32 %v10913, 0.0
        %v10946 = vmax.f32 %v10914, 0.0
        %v10947 = vmax.f32 %v10915, 0.0
        %v10948 = vmax.f32 %v10916, 0.0
        %v10949 = vmax.f32 %v10917, 0.0
        %v10950 = vmax.f32 %v10918, 0.0
        %v10951 = vmax.f32 %v10919, 0.0
        %v10952 = vmax.f32 %v10920, 0.0
        %v10953 = vmax.f32 %v10921, 0.0
        %v10954 = vmax.f32 %v10922, 0.0
        %v10955 = vmax.f32 %v10923, 0.0
        %v10956 = vmax.f32 %v10924, 0.0
        %v10957 = vmax.f32 %v10925, 0.0
        %v10958 = vmax.f32 %v10926, 0.0
        %v10959 = vmax.f32 %v10927, 0.0
        %vm10960 = vcmask 261120
        %10961 = vst.msk [vmem:[%s190] sm:$0xff] %vm10960, %v10928
        %10962 = vst.msk [vmem:[%s190 + $0x8] sm:$0xff] %vm10960, %v10929
        %10963 = vst.msk [vmem:[%s190 + $0x10] sm:$0xff] %vm10960, %v10930
        %10964 = vst.msk [vmem:[%s190 + $0x18] sm:$0xff] %vm10960, %v10931
        %10965 = vst.msk [vmem:[%s190 + $0x20] sm:$0xff] %vm10960, %v10932
        %10966 = vst.msk [vmem:[%s190 + $0x28] sm:$0xff] %vm10960, %v10933
        %10967 = vst.msk [vmem:[%s190 + $0x30] sm:$0xff] %vm10960, %v10934
        %10968 = vst.msk [vmem:[%s190 + $0x38] sm:$0xff] %vm10960, %v10935
        %10969 = vst.msk [vmem:[%s190 + $0x40] sm:$0xff] %vm10960, %v10936
        %10970 = vst.msk [vmem:[%s190 + $0x48] sm:$0xff] %vm10960, %v10937
        %10971 = vst.msk [vmem:[%s190 + $0x50] sm:$0xff] %vm10960, %v10938
        %10972 = vst.msk [vmem:[%s190 + $0x58] sm:$0xff] %vm10960, %v10939
        %10973 = vst.msk [vmem:[%s190 + $0x60] sm:$0xff] %vm10960, %v10940
        %10974 = vst.msk [vmem:[%s190 + $0x68] sm:$0xff] %vm10960, %v10941
        %10975 = vst.msk [vmem:[%s190 + $0x70] sm:$0xff] %vm10960, %v10942
        %10976 = vst.msk [vmem:[%s190 + $0x78] sm:$0xff] %vm10960, %v10943
        %10977 = vst.msk [vmem:[%s190 + $0x80] sm:$0xff] %vm10960, %v10944
        %10978 = vst.msk [vmem:[%s190 + $0x88] sm:$0xff] %vm10960, %v10945
        %10979 = vst.msk [vmem:[%s190 + $0x90] sm:$0xff] %vm10960, %v10946
        %10980 = vst.msk [vmem:[%s190 + $0x98] sm:$0xff] %vm10960, %v10947
        %10981 = vst.msk [vmem:[%s190 + $0xa0] sm:$0xff] %vm10960, %v10948
        %10982 = vst.msk [vmem:[%s190 + $0xa8] sm:$0xff] %vm10960, %v10949
        %10983 = vst.msk [vmem:[%s190 + $0xb0] sm:$0xff] %vm10960, %v10950
        %10984 = vst.msk [vmem:[%s190 + $0xb8] sm:$0xff] %vm10960, %v10951
        %10985 = vst.msk [vmem:[%s190 + $0xc0] sm:$0xff] %vm10960, %v10952
        %10986 = vst.msk [vmem:[%s190 + $0xc8] sm:$0xff] %vm10960, %v10953
        %10987 = vst.msk [vmem:[%s190 + $0xd0] sm:$0xff] %vm10960, %v10954
        %10988 = vst.msk [vmem:[%s190 + $0xd8] sm:$0xff] %vm10960, %v10955
        %10989 = vst.msk [vmem:[%s190 + $0xe0] sm:$0xff] %vm10960, %v10956
        %10990 = vst.msk [vmem:[%s190 + $0xe8] sm:$0xff] %vm10960, %v10957
        %10991 = vst.msk [vmem:[%s190 + $0xf0] sm:$0xff] %vm10960, %v10958
        %10992 = vst.msk [vmem:[%s190 + $0xf8] sm:$0xff] %vm10960, %v10959
        %p10993 = scmp.lt.s32.totalorder %s17, 1
        %s10994 = scalar_select %p10993, %s17, 1
        %s10995 = smul.addr %s10994, 32
        %s10996 = smul.addr %s10995, 8
        %s10997 = scalar_lea.vmem %s3, %s10996
        // Predicated region
        $region37: #{tpu_custom_call.1} parent=31 // pred_check
          %p10998 = pneg %p103
        $region38: #{tpu_custom_call.1} parent=31 // pred_check_branch
          %11000 = sbr.rel (%p10998) target = $region40
        $region39: #{tpu_custom_call.1} parent=31 // pred_region
          _
        $region40: #{tpu_custom_call.1} parent=31 // pred_fallthru
          _
      $region32: #{tpu_custom_call.1} parent=5 // pred_fallthru
        _
      %p11001 = scmp.le.s32.totalorder 2, %s12
      // Predicated region
      $region41: #{tpu_custom_call.1} parent=5 // pred_check
        %p11002 = pneg %p11001
      $region42: #{tpu_custom_call.1} parent=5 // pred_check_branch
        %11004 = sbr.rel (%p11002) target = $region44
      $region43: #{tpu_custom_call.1} parent=5 // pred_region
        %s11005 = ssub.s32 %s12, 2
        // Predicated region
        $region45: #{tpu_custom_call.1} parent=43 // pred_check
          %p11006 = pneg %p109
        $region46: #{tpu_custom_call.1} parent=43 // pred_check_branch
          %11008 = sbr.rel (%p11006) target = $region48
        $region47: #{tpu_custom_call.1} parent=43 // pred_region
          %p11009 = scmp.lt.s32.totalorder %s18, 1
          %s11010 = scalar_select %p11009, %s18, 1
          %s11011 = smul.addr %s11010, 32
          %s11012 = smul.addr %s11011, 8
          %s11013 = scalar_lea.vmem %s3, %s11012
        $region48: #{tpu_custom_call.1} parent=43 // pred_fallthru
          _
      $region44: #{tpu_custom_call.1} parent=5 // pred_fallthru
        _
    $region6: #{tpu_custom_call.1} parent=1 // loop_footer
      %s16 = sadd.s32 1, %s12
    $region7: #{tpu_custom_call.1} parent=1 // loop_footer_branch
      %11 = sbr.rel target = $region3
    $region8: #{tpu_custom_call.1} parent=1 // loop_exit
      _
    %11014 = vsyncpa [#allocation5], 1
    %s11015 = scalar_lea.sflag [#allocation5], 1
    %11016 = vsyncpa %s11015, 1

</llo_original>
